<compile_context>
chip_gen: v7x
topology: tpu7x:2x2x1
jax: 0.10.0
libtpu: 0.0.40
codegen_flags: <defaults>
</compile_context>

<pallas_src>
import numpy as np

import jax
import jax.numpy as jnp
from jax.experimental import pallas as pl
from jax.experimental.pallas import tpu as pltpu

DIM = 64

# ---- layer-1 / "A2" phase-split layout constants -----------------------------
# Layer-1 output h1 (14x14x64) is produced directly in a layout indexed by
#   (p = row parity, q = col parity, g = parity of the phase column index,
#    alpha = padded phase row, v' = halved phase column)
# so that layer-2's 25 tap reads are contiguous row slices.
_AR = 10                      # alpha extent 0..8, padded to 10
_VR = 8                       # v' extent 0..4, padded to 8 (sublane aligned)
_SUB_ROWS = _AR * _VR         # 80 rows per (p,q,g) sub-buffer
_A2_ROWS = 8 * _SUB_ROWS      # 640 rows total per image


def _l1_layout():
    """Gather indices (into the 196 layer-1 output positions) + validity mask
    that place layer-1's output directly into the phase-split layout."""
    rows = np.zeros((2, 2, 2, _AR, _VR), np.int32)
    mask = np.zeros((2, 2, 2, _AR, _VR), np.float32)
    for p in range(2):
        for q in range(2):
            for g in range(2):
                for a in range(_AR):
                    for vp in range(_VR):
                        beta = 2 * vp + g
                        i1 = 2 * (a - 1) + p        # h1 row held at this slot
                        j1 = 2 * (beta - 1) + q     # h1 col held at this slot
                        if 0 <= i1 < 14 and 0 <= j1 < 14:
                            rows[p, q, g, a, vp] = i1 * 14 + j1
                            mask[p, q, g, a, vp] = 1.0
    return rows.reshape(-1), mask.reshape(-1, 1)


_ROW_SRC, _L1_MASK = _l1_layout()


# ------------------------------- fused kernel ---------------------------------
def _disc_kernel(p1_ref, m_ref, w1_ref, b1_ref, w2_ref, b2_ref,
                 w3_ref, b3_ref, wo_ref, o_ref):
    B = p1_ref.shape[0]
    f32 = jnp.float32
    bf16 = jnp.bfloat16

    # ---- layer 1: one MXU matmul (B*640, 25) @ (25, 64), bias, ReLU, mask ----
    h1 = jnp.dot(p1_ref[...].reshape(B * _A2_ROWS, 25), w1_ref[...],
                 preferred_element_type=f32)
    h1 = jnp.maximum(h1 + b1_ref[...], 0.0)
    # mask kills rows that correspond to conv padding / layout padding
    h1 = (h1.reshape(B, _A2_ROWS, DIM) * m_ref[...][None]).astype(bf16)

    # ---- layer 2: two column-parity groups, taps K-folded into K=1600 --------
    out2 = []
    for qj in range(2):                       # output column parity j' = 2v + qj
        pieces = []
        for kh in range(5):
            p, dh = kh % 2, kh // 2
            for kw in range(5):
                q, dw = kw % 2, kw // 2
                g = (qj + dw) % 2
                e = (qj + dw) // 2
                sb = p * 4 + q * 2 + g
                start = sb * _SUB_ROWS + dh * _VR + e
                pieces.append(h1[:, start:start + 7 * _VR, :])     # (B,56,64)
        patches = jnp.concatenate(pieces, axis=-1)                 # (B,56,1600)
        acc = jnp.dot(patches.reshape(B * 56, 25 * DIM), w2_ref[...],
                      preferred_element_type=f32)
        acc = jnp.maximum(acc + b2_ref[...], 0.0)
        # rows m = i'*8 + v ; valid v < 4 - qj, rest is garbage (never stored)
        out2.append(acc.reshape(B, 7, 8, 2 * DIM).astype(bf16))

    # ---- scatter layer-2 output into layer-3 phase buffers (A3) --------------
    zblk = jnp.zeros((B, 8, 2 * DIM), bf16)
    zrow = jnp.zeros((B, 1, 2 * DIM), bf16)
    groups = [[zblk] for _ in range(4)]       # alpha3 == 0 -> conv padding rows
    for qj in range(2):
        nv = 4 - qj                           # valid output columns in this group
        for ip in range(7):                   # layer-2 output row i'
            p3, u = ip % 2, ip // 2
            blk = jnp.concatenate(
                [zrow, out2[qj][:, ip, 0:nv, :],
                 jnp.zeros((B, 7 - nv, 2 * DIM), bf16)], axis=1)   # (B,8,128)
            groups[p3 * 2 + qj].append(blk)   # lands at alpha3 = u + 1
    a3 = []
    for f in range(4):
        g = groups[f] + [zblk] * (7 - len(groups[f]))
        a3.append(jnp.concatenate(g, axis=1))                      # (B,56,128)

    # ---- layer 3 (taps K-folded into K=3200) + fused flatten / Linear --------
    pieces = []
    for kh in range(5):
        dh = kh // 2
        for kw in range(5):
            dw = kw // 2
            f = (kh % 2) * 2 + (kw % 2)
            r0 = dh * 8 + dw
            pieces.append(a3[f][:, r0:r0 + 32, :])                 # (B,32,128)
    patches = jnp.concatenate(pieces, axis=-1)                     # (B,32,3200)
    acc = jnp.dot(patches.reshape(B * 32, 25 * 2 * DIM), w3_ref[...],
                  preferred_element_type=f32)
    h3 = jnp.maximum(acc + b3_ref[...], 0.0).reshape(B, 32, 4 * DIM)

    # fused flatten + Linear: wo_ref is pre-permuted to rows m = i3*8 + j3 with
    # zeros on the padded (j3 >= 4) rows, so garbage rows contribute nothing.
    prod = h3 * wo_ref[...][None]                                  # (B,32,256)
    res = jnp.sum(jnp.sum(prod, axis=2, keepdims=True), axis=1, keepdims=True)
    o_ref[...] = jnp.broadcast_to(res[:, 0, :], (B, 128)).astype(o_ref.dtype)


# --------------------------------- wrapper -------------------------------------
def discriminator_forward(params, x, *, block=8):
    """x: anything reshapeable to (-1, 1, 28, 28) (NCHW, like PyTorch)."""
    x = jnp.asarray(x, jnp.float32).reshape(-1, 1, 28, 28)
    n = x.shape[0]
    bb = int(max(1, min(block, n)))           # images per grid step
    n_pad = -(-n // bb) * bb

    # ---- layer-1 im2col, pre-ordered into the phase-split layout (cheap glue,
    #      cin = 1 so the patch tensor is only ~31 KB bf16 per image) ----------
    xp = jnp.pad(x[:, 0], ((0, 0), (2, 2), (2, 2)))                # (n,32,32)
    taps = jnp.stack([xp[:, kh:kh + 28:2, kw:kw + 28:2]
                      for kh in range(5) for kw in range(5)], axis=-1)
    taps = taps.reshape(n, 196, 25)
    patches = jnp.take(taps, jnp.asarray(_ROW_SRC), axis=1)        # (n,640,25)
    patches = patches.astype(jnp.bfloat16)
    if n_pad != n:
        patches = jnp.pad(patches, ((0, n_pad - n), (0, 0), (0, 0)))
    mask = jnp.asarray(_L1_MASK)                                   # (640,1) f32

    # ---- weights in kernel-friendly (tap-major K) layouts ---------------------
    w1 = params["w1"].reshape(DIM, 25).T.astype(jnp.bfloat16)              # (25,64)
    b1 = params["b1"].reshape(1, DIM).astype(jnp.float32)
    w2 = jnp.transpose(params["w2"], (2, 3, 1, 0)).reshape(25 * DIM, 2 * DIM)
    w2 = w2.astype(jnp.bfloat16)                                           # (1600,128)
    b2 = params["b2"].reshape(1, 2 * DIM).astype(jnp.float32)
    w3 = jnp.transpose(params["w3"], (2, 3, 1, 0)).reshape(25 * 2 * DIM, 4 * DIM)
    w3 = w3.astype(jnp.bfloat16)                                           # (3200,256)
    b3 = params["b3"].reshape(1, 4 * DIM).astype(jnp.float32)
    # Linear weight: PyTorch flatten order is (C, H, W); permute to the kernel's
    # row order m = i3*8 + j3 (j3 padded 4 -> 8 with zeros).
    wo = params["wo"].reshape(4 * DIM, 4, 4)
    wo = jnp.transpose(wo, (1, 2, 0))
    wo = jnp.pad(wo, ((0, 0), (0, 4), (0, 0))).reshape(32, 4 * DIM)
    wo = wo.astype(jnp.float32)

    grid = n_pad // bb                        # >= 2 keeps both v7x TCs busy when n >= 2*block
    out = pl.pallas_call(
        _disc_kernel,
        out_shape=jax.ShapeDtypeStruct((n_pad, 128), jnp.float32),
        grid=(grid,),
        in_specs=[
            pl.BlockSpec((bb, _A2_ROWS, 25), lambda i: (i, 0, 0)),
            pl.BlockSpec((_A2_ROWS, 1), lambda i: (0, 0)),         # VMEM-resident
            pl.BlockSpec((25, DIM), lambda i: (0, 0)),
            pl.BlockSpec((1, DIM), lambda i: (0, 0)),
            pl.BlockSpec((25 * DIM, 2 * DIM), lambda i: (0, 0)),
            pl.BlockSpec((1, 2 * DIM), lambda i: (0, 0)),
            pl.BlockSpec((25 * 2 * DIM, 4 * DIM), lambda i: (0, 0)),
            pl.BlockSpec((1, 4 * DIM), lambda i: (0, 0)),
            pl.BlockSpec((32, 4 * DIM), lambda i: (0, 0)),
        ],
        out_specs=pl.BlockSpec((bb, 128), lambda i: (i, 0)),
        compiler_params=pltpu.CompilerParams(
            dimension_semantics=("parallel",),
            vmem_limit_bytes=32 * 1024 * 1024,      # safe on v5e/v6e/v7x
        ),
    )(patches, mask, w1, b1, w2, b2, w3, b3, wo)
    return out[:n, 0] + params["bo"][0]


# ----------------------------- params / reference ------------------------------
def init_params(key):
    """Deterministic synthetic init (PyTorch-shaped tensors)."""
    ks = jax.random.split(key, 8)

    def u(k, shape, fan_in):
        b = 2.0 / float(fan_in) ** 0.5
        return jax.random.uniform(k, shape, jnp.float32, -b, b)

    return {
        "w1": u(ks[0], (DIM, 1, 5, 5), 25),
        "b1": u(ks[1], (DIM,), 25),
        "w2": u(ks[2], (2 * DIM, DIM, 5, 5), 25 * DIM),
        "b2": u(ks[3], (2 * DIM,), 25 * DIM),
        "w3": u(ks[4], (4 * DIM, 2 * DIM, 5, 5), 25 * 2 * DIM),
        "b3": u(ks[5], (4 * DIM,), 25 * 2 * DIM),
        "wo": u(ks[6], (1, 4 * 4 * 4 * DIM), 4 * 4 * 4 * DIM),
        "bo": u(ks[7], (1,), 4 * 4 * 4 * DIM),
    }


def reference_forward(params, x):
    x = jnp.asarray(x, jnp.float32).reshape(-1, 1, 28, 28)
    h = x
    for w, b in ((params["w1"], params["b1"]),
                 (params["w2"], params["b2"]),
                 (params["w3"], params["b3"])):
        h = jax.lax.conv_general_dilated(
            h, w, window_strides=(2, 2), padding=((2, 2), (2, 2)),
            dimension_numbers=("NCHW", "OIHW", "NCHW"),
            precision=jax.lax.Precision.HIGHEST)
        h = jnp.maximum(h + b.reshape(1, -1, 1, 1), 0.0)
    flat = h.reshape(h.shape[0], -1)                 # PyTorch (C,H,W) flatten
    out = flat @ params["wo"].T + params["bo"]
    return out.reshape(-1)


if __name__ == "__main__":
    key = jax.random.PRNGKey(0)
    pkey, xkey = jax.random.split(key)
    params = init_params(pkey)
    x = jax.random.normal(xkey, (2, 1, 28, 28), jnp.float32)

    fwd = jax.jit(discriminator_forward)
    out = jax.block_until_ready(fwd(params, x))
    assert out.shape == (2,), out.shape

    ref = reference_forward(params, x)
    err = float(jnp.max(jnp.abs(out - ref)))
    scale = max(float(jnp.max(jnp.abs(ref))), 1.0)
    assert err <= 5e-2 * scale, f"mismatch: err={err}, ref_scale={scale}"

    print("KERNEL_OK")
</pallas_src>

<mosaic_0001>
module attributes {stable_mosaic.version = 11 : i64} {
  func.func @_disc_kernel(%arg0: i32, %arg1: memref<2x640x25xbf16, #tpu.memory_space<vmem>>, %arg2: memref<640x1xf32, #tpu.memory_space<vmem>>, %arg3: memref<25x64xbf16, #tpu.memory_space<vmem>>, %arg4: memref<1x64xf32, #tpu.memory_space<vmem>>, %arg5: memref<1600x128xbf16, #tpu.memory_space<vmem>>, %arg6: memref<1x128xf32, #tpu.memory_space<vmem>>, %arg7: memref<3200x256xbf16, #tpu.memory_space<vmem>>, %arg8: memref<1x256xf32, #tpu.memory_space<vmem>>, %arg9: memref<32x256xf32, #tpu.memory_space<vmem>>, %arg10: memref<2x128xf32, #tpu.memory_space<vmem>>) attributes {dimension_semantics = [#tpu.dimension_semantics<parallel>], iteration_bounds = array<i64: 1>, scalar_prefetch = 0 : i64, scratch_operands = 0 : i64, tpu.core_type = #tpu.core_type<tc>, window_params = [{transform_indices = @transform_0, window_bounds = array<i64: 2, 640, 25>}, {pipeline_mode = #tpu.pipeline_mode<synchronous>, transform_indices = @transform_1, window_bounds = array<i64: 640, 1>}, {pipeline_mode = #tpu.pipeline_mode<synchronous>, transform_indices = @transform_2, window_bounds = array<i64: 25, 64>}, {pipeline_mode = #tpu.pipeline_mode<synchronous>, transform_indices = @transform_3, window_bounds = array<i64: 1, 64>}, {pipeline_mode = #tpu.pipeline_mode<synchronous>, transform_indices = @transform_4, window_bounds = array<i64: 1600, 128>}, {pipeline_mode = #tpu.pipeline_mode<synchronous>, transform_indices = @transform_5, window_bounds = array<i64: 1, 128>}, {pipeline_mode = #tpu.pipeline_mode<synchronous>, transform_indices = @transform_6, window_bounds = array<i64: 3200, 256>}, {pipeline_mode = #tpu.pipeline_mode<synchronous>, transform_indices = @transform_7, window_bounds = array<i64: 1, 256>}, {pipeline_mode = #tpu.pipeline_mode<synchronous>, transform_indices = @transform_8, window_bounds = array<i64: 32, 256>}, {transform_indices = @transform_9, window_bounds = array<i64: 2, 128>}]} {
    %c0 = arith.constant 0 : index
    %c0_0 = arith.constant 0 : index
    %c0_1 = arith.constant 0 : index
    %0 = vector.load %arg1[%c0, %c0_0, %c0_1] : memref<2x640x25xbf16, #tpu.memory_space<vmem>>, vector<2x640x25xbf16>
    %1 = vector.shape_cast %0 : vector<2x640x25xbf16> to vector<1280x25xbf16>
    %c0_2 = arith.constant 0 : index
    %c0_3 = arith.constant 0 : index
    %2 = vector.load %arg3[%c0_2, %c0_3] : memref<25x64xbf16, #tpu.memory_space<vmem>>, vector<25x64xbf16>
    %cst = arith.constant dense<0.000000e+00> : vector<1280x64xf32>
    %3 = tpu.matmul %1, %2, %cst {dimension_numbers = #tpu.dot_dimension_numbers<[1], [0], [0], [1], [0, 0, 1, 1], [], []>} : vector<1280x25xbf16>, vector<25x64xbf16>, vector<1280x64xf32> -> vector<1280x64xf32>
    %c0_4 = arith.constant 0 : index
    %c0_5 = arith.constant 0 : index
    %4 = vector.load %arg4[%c0_4, %c0_5] : memref<1x64xf32, #tpu.memory_space<vmem>>, vector<1x64xf32>
    %5 = vector.broadcast %4 : vector<1x64xf32> to vector<1280x64xf32>
    %6 = arith.addf %3, %5 : vector<1280x64xf32>
    %cst_6 = arith.constant 0.000000e+00 : f32
    %7 = vector.broadcast %cst_6 : f32 to vector<1280x64xf32>
    %8 = arith.maximumf %6, %7 : vector<1280x64xf32>
    %9 = vector.shape_cast %8 : vector<1280x64xf32> to vector<2x640x64xf32>
    %c0_7 = arith.constant 0 : index
    %c0_8 = arith.constant 0 : index
    %10 = vector.load %arg2[%c0_7, %c0_8] : memref<640x1xf32, #tpu.memory_space<vmem>>, vector<640x1xf32>
    %11 = vector.shape_cast %10 : vector<640x1xf32> to vector<1x640x1xf32>
    %12 = vector.broadcast %11 : vector<1x640x1xf32> to vector<2x640x64xf32>
    %13 = arith.mulf %9, %12 : vector<2x640x64xf32>
    %14 = arith.truncf %13 : vector<2x640x64xf32> to vector<2x640x64xbf16>
    %15 = vector.extract_strided_slice %14 {offsets = [0, 0, 0], sizes = [2, 56, 64], strides = [1, 1, 1]} : vector<2x640x64xbf16> to vector<2x56x64xbf16>
    %16 = vector.extract_strided_slice %14 {offsets = [0, 160, 0], sizes = [2, 56, 64], strides = [1, 1, 1]} : vector<2x640x64xbf16> to vector<2x56x64xbf16>
    %17 = vector.extract_strided_slice %14 {offsets = [0, 80, 0], sizes = [2, 56, 64], strides = [1, 1, 1]} : vector<2x640x64xbf16> to vector<2x56x64xbf16>
    %18 = vector.extract_strided_slice %14 {offsets = [0, 240, 0], sizes = [2, 56, 64], strides = [1, 1, 1]} : vector<2x640x64xbf16> to vector<2x56x64xbf16>
    %19 = vector.extract_strided_slice %14 {offsets = [0, 1, 0], sizes = [2, 56, 64], strides = [1, 1, 1]} : vector<2x640x64xbf16> to vector<2x56x64xbf16>
    %20 = vector.extract_strided_slice %14 {offsets = [0, 320, 0], sizes = [2, 56, 64], strides = [1, 1, 1]} : vector<2x640x64xbf16> to vector<2x56x64xbf16>
    %21 = vector.extract_strided_slice %14 {offsets = [0, 480, 0], sizes = [2, 56, 64], strides = [1, 1, 1]} : vector<2x640x64xbf16> to vector<2x56x64xbf16>
    %22 = vector.extract_strided_slice %14 {offsets = [0, 400, 0], sizes = [2, 56, 64], strides = [1, 1, 1]} : vector<2x640x64xbf16> to vector<2x56x64xbf16>
    %23 = vector.extract_strided_slice %14 {offsets = [0, 560, 0], sizes = [2, 56, 64], strides = [1, 1, 1]} : vector<2x640x64xbf16> to vector<2x56x64xbf16>
    %24 = vector.extract_strided_slice %14 {offsets = [0, 321, 0], sizes = [2, 56, 64], strides = [1, 1, 1]} : vector<2x640x64xbf16> to vector<2x56x64xbf16>
    %25 = vector.extract_strided_slice %14 {offsets = [0, 8, 0], sizes = [2, 56, 64], strides = [1, 1, 1]} : vector<2x640x64xbf16> to vector<2x56x64xbf16>
    %26 = vector.extract_strided_slice %14 {offsets = [0, 168, 0], sizes = [2, 56, 64], strides = [1, 1, 1]} : vector<2x640x64xbf16> to vector<2x56x64xbf16>
    %27 = vector.extract_strided_slice %14 {offsets = [0, 88, 0], sizes = [2, 56, 64], strides = [1, 1, 1]} : vector<2x640x64xbf16> to vector<2x56x64xbf16>
    %28 = vector.extract_strided_slice %14 {offsets = [0, 248, 0], sizes = [2, 56, 64], strides = [1, 1, 1]} : vector<2x640x64xbf16> to vector<2x56x64xbf16>
    %29 = vector.extract_strided_slice %14 {offsets = [0, 9, 0], sizes = [2, 56, 64], strides = [1, 1, 1]} : vector<2x640x64xbf16> to vector<2x56x64xbf16>
    %30 = vector.extract_strided_slice %14 {offsets = [0, 328, 0], sizes = [2, 56, 64], strides = [1, 1, 1]} : vector<2x640x64xbf16> to vector<2x56x64xbf16>
    %31 = vector.extract_strided_slice %14 {offsets = [0, 488, 0], sizes = [2, 56, 64], strides = [1, 1, 1]} : vector<2x640x64xbf16> to vector<2x56x64xbf16>
    %32 = vector.extract_strided_slice %14 {offsets = [0, 408, 0], sizes = [2, 56, 64], strides = [1, 1, 1]} : vector<2x640x64xbf16> to vector<2x56x64xbf16>
    %33 = vector.extract_strided_slice %14 {offsets = [0, 568, 0], sizes = [2, 56, 64], strides = [1, 1, 1]} : vector<2x640x64xbf16> to vector<2x56x64xbf16>
    %34 = vector.extract_strided_slice %14 {offsets = [0, 329, 0], sizes = [2, 56, 64], strides = [1, 1, 1]} : vector<2x640x64xbf16> to vector<2x56x64xbf16>
    %35 = vector.extract_strided_slice %14 {offsets = [0, 16, 0], sizes = [2, 56, 64], strides = [1, 1, 1]} : vector<2x640x64xbf16> to vector<2x56x64xbf16>
    %36 = vector.extract_strided_slice %14 {offsets = [0, 176, 0], sizes = [2, 56, 64], strides = [1, 1, 1]} : vector<2x640x64xbf16> to vector<2x56x64xbf16>
    %37 = vector.extract_strided_slice %14 {offsets = [0, 96, 0], sizes = [2, 56, 64], strides = [1, 1, 1]} : vector<2x640x64xbf16> to vector<2x56x64xbf16>
    %38 = vector.extract_strided_slice %14 {offsets = [0, 256, 0], sizes = [2, 56, 64], strides = [1, 1, 1]} : vector<2x640x64xbf16> to vector<2x56x64xbf16>
    %39 = vector.extract_strided_slice %14 {offsets = [0, 17, 0], sizes = [2, 56, 64], strides = [1, 1, 1]} : vector<2x640x64xbf16> to vector<2x56x64xbf16>
    %40 = tpu.concatenate %15, %16, %17, %18, %19, %20, %21, %22, %23, %24, %25, %26, %27, %28, %29, %30 in 2 : vector<2x56x64xbf16>, vector<2x56x64xbf16>, vector<2x56x64xbf16>, vector<2x56x64xbf16>, vector<2x56x64xbf16>, vector<2x56x64xbf16>, vector<2x56x64xbf16>, vector<2x56x64xbf16>, vector<2x56x64xbf16>, vector<2x56x64xbf16>, vector<2x56x64xbf16>, vector<2x56x64xbf16>, vector<2x56x64xbf16>, vector<2x56x64xbf16>, vector<2x56x64xbf16>, vector<2x56x64xbf16> -> vector<2x56x1024xbf16>
    %41 = tpu.concatenate %31, %32, %33, %34, %35, %36, %37, %38, %39 in 2 : vector<2x56x64xbf16>, vector<2x56x64xbf16>, vector<2x56x64xbf16>, vector<2x56x64xbf16>, vector<2x56x64xbf16>, vector<2x56x64xbf16>, vector<2x56x64xbf16>, vector<2x56x64xbf16>, vector<2x56x64xbf16> -> vector<2x56x576xbf16>
    %42 = tpu.concatenate %40, %41 in 2 : vector<2x56x1024xbf16>, vector<2x56x576xbf16> -> vector<2x56x1600xbf16>
    %43 = vector.shape_cast %42 : vector<2x56x1600xbf16> to vector<112x1600xbf16>
    %c0_9 = arith.constant 0 : index
    %c0_10 = arith.constant 0 : index
    %44 = vector.load %arg5[%c0_9, %c0_10] : memref<1600x128xbf16, #tpu.memory_space<vmem>>, vector<1600x128xbf16>
    %cst_11 = arith.constant dense<0.000000e+00> : vector<112x128xf32>
    %45 = tpu.matmul %43, %44, %cst_11 {dimension_numbers = #tpu.dot_dimension_numbers<[1], [0], [0], [1], [0, 0, 1, 1], [], []>} : vector<112x1600xbf16>, vector<1600x128xbf16>, vector<112x128xf32> -> vector<112x128xf32>
    %c0_12 = arith.constant 0 : index
    %c0_13 = arith.constant 0 : index
    %46 = vector.load %arg6[%c0_12, %c0_13] : memref<1x128xf32, #tpu.memory_space<vmem>>, vector<1x128xf32>
    %47 = vector.broadcast %46 : vector<1x128xf32> to vector<112x128xf32>
    %48 = arith.addf %45, %47 : vector<112x128xf32>
    %cst_14 = arith.constant 0.000000e+00 : f32
    %49 = vector.broadcast %cst_14 : f32 to vector<112x128xf32>
    %50 = arith.maximumf %48, %49 : vector<112x128xf32>
    %51 = vector.shape_cast %50 : vector<112x128xf32> to vector<2x7x8x128xf32>
    %52 = arith.truncf %51 : vector<2x7x8x128xf32> to vector<2x7x8x128xbf16>
    %53 = vector.extract_strided_slice %14 {offsets = [0, 80, 0], sizes = [2, 56, 64], strides = [1, 1, 1]} : vector<2x640x64xbf16> to vector<2x56x64xbf16>
    %54 = vector.extract_strided_slice %14 {offsets = [0, 240, 0], sizes = [2, 56, 64], strides = [1, 1, 1]} : vector<2x640x64xbf16> to vector<2x56x64xbf16>
    %55 = vector.extract_strided_slice %14 {offsets = [0, 1, 0], sizes = [2, 56, 64], strides = [1, 1, 1]} : vector<2x640x64xbf16> to vector<2x56x64xbf16>
    %56 = vector.extract_strided_slice %14 {offsets = [0, 161, 0], sizes = [2, 56, 64], strides = [1, 1, 1]} : vector<2x640x64xbf16> to vector<2x56x64xbf16>
    %57 = vector.extract_strided_slice %14 {offsets = [0, 81, 0], sizes = [2, 56, 64], strides = [1, 1, 1]} : vector<2x640x64xbf16> to vector<2x56x64xbf16>
    %58 = vector.extract_strided_slice %14 {offsets = [0, 400, 0], sizes = [2, 56, 64], strides = [1, 1, 1]} : vector<2x640x64xbf16> to vector<2x56x64xbf16>
    %59 = vector.extract_strided_slice %14 {offsets = [0, 560, 0], sizes = [2, 56, 64], strides = [1, 1, 1]} : vector<2x640x64xbf16> to vector<2x56x64xbf16>
    %60 = vector.extract_strided_slice %14 {offsets = [0, 321, 0], sizes = [2, 56, 64], strides = [1, 1, 1]} : vector<2x640x64xbf16> to vector<2x56x64xbf16>
    %61 = vector.extract_strided_slice %14 {offsets = [0, 481, 0], sizes = [2, 56, 64], strides = [1, 1, 1]} : vector<2x640x64xbf16> to vector<2x56x64xbf16>
    %62 = vector.extract_strided_slice %14 {offsets = [0, 401, 0], sizes = [2, 56, 64], strides = [1, 1, 1]} : vector<2x640x64xbf16> to vector<2x56x64xbf16>
    %63 = vector.extract_strided_slice %14 {offsets = [0, 88, 0], sizes = [2, 56, 64], strides = [1, 1, 1]} : vector<2x640x64xbf16> to vector<2x56x64xbf16>
    %64 = vector.extract_strided_slice %14 {offsets = [0, 248, 0], sizes = [2, 56, 64], strides = [1, 1, 1]} : vector<2x640x64xbf16> to vector<2x56x64xbf16>
    %65 = vector.extract_strided_slice %14 {offsets = [0, 9, 0], sizes = [2, 56, 64], strides = [1, 1, 1]} : vector<2x640x64xbf16> to vector<2x56x64xbf16>
    %66 = vector.extract_strided_slice %14 {offsets = [0, 169, 0], sizes = [2, 56, 64], strides = [1, 1, 1]} : vector<2x640x64xbf16> to vector<2x56x64xbf16>
    %67 = vector.extract_strided_slice %14 {offsets = [0, 89, 0], sizes = [2, 56, 64], strides = [1, 1, 1]} : vector<2x640x64xbf16> to vector<2x56x64xbf16>
    %68 = vector.extract_strided_slice %14 {offsets = [0, 408, 0], sizes = [2, 56, 64], strides = [1, 1, 1]} : vector<2x640x64xbf16> to vector<2x56x64xbf16>
    %69 = vector.extract_strided_slice %14 {offsets = [0, 568, 0], sizes = [2, 56, 64], strides = [1, 1, 1]} : vector<2x640x64xbf16> to vector<2x56x64xbf16>
    %70 = vector.extract_strided_slice %14 {offsets = [0, 329, 0], sizes = [2, 56, 64], strides = [1, 1, 1]} : vector<2x640x64xbf16> to vector<2x56x64xbf16>
    %71 = vector.extract_strided_slice %14 {offsets = [0, 489, 0], sizes = [2, 56, 64], strides = [1, 1, 1]} : vector<2x640x64xbf16> to vector<2x56x64xbf16>
    %72 = vector.extract_strided_slice %14 {offsets = [0, 409, 0], sizes = [2, 56, 64], strides = [1, 1, 1]} : vector<2x640x64xbf16> to vector<2x56x64xbf16>
    %73 = vector.extract_strided_slice %14 {offsets = [0, 96, 0], sizes = [2, 56, 64], strides = [1, 1, 1]} : vector<2x640x64xbf16> to vector<2x56x64xbf16>
    %74 = vector.extract_strided_slice %14 {offsets = [0, 256, 0], sizes = [2, 56, 64], strides = [1, 1, 1]} : vector<2x640x64xbf16> to vector<2x56x64xbf16>
    %75 = vector.extract_strided_slice %14 {offsets = [0, 17, 0], sizes = [2, 56, 64], strides = [1, 1, 1]} : vector<2x640x64xbf16> to vector<2x56x64xbf16>
    %76 = vector.extract_strided_slice %14 {offsets = [0, 177, 0], sizes = [2, 56, 64], strides = [1, 1, 1]} : vector<2x640x64xbf16> to vector<2x56x64xbf16>
    %77 = vector.extract_strided_slice %14 {offsets = [0, 97, 0], sizes = [2, 56, 64], strides = [1, 1, 1]} : vector<2x640x64xbf16> to vector<2x56x64xbf16>
    %78 = tpu.concatenate %53, %54, %55, %56, %57, %58, %59, %60, %61, %62, %63, %64, %65, %66, %67, %68 in 2 : vector<2x56x64xbf16>, vector<2x56x64xbf16>, vector<2x56x64xbf16>, vector<2x56x64xbf16>, vector<2x56x64xbf16>, vector<2x56x64xbf16>, vector<2x56x64xbf16>, vector<2x56x64xbf16>, vector<2x56x64xbf16>, vector<2x56x64xbf16>, vector<2x56x64xbf16>, vector<2x56x64xbf16>, vector<2x56x64xbf16>, vector<2x56x64xbf16>, vector<2x56x64xbf16>, vector<2x56x64xbf16> -> vector<2x56x1024xbf16>
    %79 = tpu.concatenate %69, %70, %71, %72, %73, %74, %75, %76, %77 in 2 : vector<2x56x64xbf16>, vector<2x56x64xbf16>, vector<2x56x64xbf16>, vector<2x56x64xbf16>, vector<2x56x64xbf16>, vector<2x56x64xbf16>, vector<2x56x64xbf16>, vector<2x56x64xbf16>, vector<2x56x64xbf16> -> vector<2x56x576xbf16>
    %80 = tpu.concatenate %78, %79 in 2 : vector<2x56x1024xbf16>, vector<2x56x576xbf16> -> vector<2x56x1600xbf16>
    %81 = vector.shape_cast %80 : vector<2x56x1600xbf16> to vector<112x1600xbf16>
    %c0_15 = arith.constant 0 : index
    %c0_16 = arith.constant 0 : index
    %82 = vector.load %arg5[%c0_15, %c0_16] : memref<1600x128xbf16, #tpu.memory_space<vmem>>, vector<1600x128xbf16>
    %cst_17 = arith.constant dense<0.000000e+00> : vector<112x128xf32>
    %83 = tpu.matmul %81, %82, %cst_17 {dimension_numbers = #tpu.dot_dimension_numbers<[1], [0], [0], [1], [0, 0, 1, 1], [], []>} : vector<112x1600xbf16>, vector<1600x128xbf16>, vector<112x128xf32> -> vector<112x128xf32>
    %c0_18 = arith.constant 0 : index
    %c0_19 = arith.constant 0 : index
    %84 = vector.load %arg6[%c0_18, %c0_19] : memref<1x128xf32, #tpu.memory_space<vmem>>, vector<1x128xf32>
    %85 = vector.broadcast %84 : vector<1x128xf32> to vector<112x128xf32>
    %86 = arith.addf %83, %85 : vector<112x128xf32>
    %cst_20 = arith.constant 0.000000e+00 : f32
    %87 = vector.broadcast %cst_20 : f32 to vector<112x128xf32>
    %88 = arith.maximumf %86, %87 : vector<112x128xf32>
    %89 = vector.shape_cast %88 : vector<112x128xf32> to vector<2x7x8x128xf32>
    %90 = arith.truncf %89 : vector<2x7x8x128xf32> to vector<2x7x8x128xbf16>
    %cst_21 = arith.constant 0.000000e+00 : bf16
    %91 = vector.broadcast %cst_21 : bf16 to vector<2x8x128xbf16>
    %cst_22 = arith.constant 0.000000e+00 : bf16
    %92 = vector.broadcast %cst_22 : bf16 to vector<2x1x128xbf16>
    %93 = vector.extract_strided_slice %52 {offsets = [0, 0, 0, 0], sizes = [2, 1, 4, 128], strides = [1, 1, 1, 1]} : vector<2x7x8x128xbf16> to vector<2x1x4x128xbf16>
    %94 = vector.shape_cast %93 : vector<2x1x4x128xbf16> to vector<2x4x128xbf16>
    %cst_23 = arith.constant 0.000000e+00 : bf16
    %95 = vector.broadcast %cst_23 : bf16 to vector<2x3x128xbf16>
    %96 = tpu.concatenate %92, %94, %95 in 1 : vector<2x1x128xbf16>, vector<2x4x128xbf16>, vector<2x3x128xbf16> -> vector<2x8x128xbf16>
    %97 = vector.extract_strided_slice %52 {offsets = [0, 1, 0, 0], sizes = [2, 1, 4, 128], strides = [1, 1, 1, 1]} : vector<2x7x8x128xbf16> to vector<2x1x4x128xbf16>
    %98 = vector.shape_cast %97 : vector<2x1x4x128xbf16> to vector<2x4x128xbf16>
    %cst_24 = arith.constant 0.000000e+00 : bf16
    %99 = vector.broadcast %cst_24 : bf16 to vector<2x3x128xbf16>
    %100 = tpu.concatenate %92, %98, %99 in 1 : vector<2x1x128xbf16>, vector<2x4x128xbf16>, vector<2x3x128xbf16> -> vector<2x8x128xbf16>
    %101 = vector.extract_strided_slice %52 {offsets = [0, 2, 0, 0], sizes = [2, 1, 4, 128], strides = [1, 1, 1, 1]} : vector<2x7x8x128xbf16> to vector<2x1x4x128xbf16>
    %102 = vector.shape_cast %101 : vector<2x1x4x128xbf16> to vector<2x4x128xbf16>
    %cst_25 = arith.constant 0.000000e+00 : bf16
    %103 = vector.broadcast %cst_25 : bf16 to vector<2x3x128xbf16>
    %104 = tpu.concatenate %92, %102, %103 in 1 : vector<2x1x128xbf16>, vector<2x4x128xbf16>, vector<2x3x128xbf16> -> vector<2x8x128xbf16>
    %105 = vector.extract_strided_slice %52 {offsets = [0, 3, 0, 0], sizes = [2, 1, 4, 128], strides = [1, 1, 1, 1]} : vector<2x7x8x128xbf16> to vector<2x1x4x128xbf16>
    %106 = vector.shape_cast %105 : vector<2x1x4x128xbf16> to vector<2x4x128xbf16>
    %cst_26 = arith.constant 0.000000e+00 : bf16
    %107 = vector.broadcast %cst_26 : bf16 to vector<2x3x128xbf16>
    %108 = tpu.concatenate %92, %106, %107 in 1 : vector<2x1x128xbf16>, vector<2x4x128xbf16>, vector<2x3x128xbf16> -> vector<2x8x128xbf16>
    %109 = vector.extract_strided_slice %52 {offsets = [0, 4, 0, 0], sizes = [2, 1, 4, 128], strides = [1, 1, 1, 1]} : vector<2x7x8x128xbf16> to vector<2x1x4x128xbf16>
    %110 = vector.shape_cast %109 : vector<2x1x4x128xbf16> to vector<2x4x128xbf16>
    %cst_27 = arith.constant 0.000000e+00 : bf16
    %111 = vector.broadcast %cst_27 : bf16 to vector<2x3x128xbf16>
    %112 = tpu.concatenate %92, %110, %111 in 1 : vector<2x1x128xbf16>, vector<2x4x128xbf16>, vector<2x3x128xbf16> -> vector<2x8x128xbf16>
    %113 = vector.extract_strided_slice %52 {offsets = [0, 5, 0, 0], sizes = [2, 1, 4, 128], strides = [1, 1, 1, 1]} : vector<2x7x8x128xbf16> to vector<2x1x4x128xbf16>
    %114 = vector.shape_cast %113 : vector<2x1x4x128xbf16> to vector<2x4x128xbf16>
    %cst_28 = arith.constant 0.000000e+00 : bf16
    %115 = vector.broadcast %cst_28 : bf16 to vector<2x3x128xbf16>
    %116 = tpu.concatenate %92, %114, %115 in 1 : vector<2x1x128xbf16>, vector<2x4x128xbf16>, vector<2x3x128xbf16> -> vector<2x8x128xbf16>
    %117 = vector.extract_strided_slice %52 {offsets = [0, 6, 0, 0], sizes = [2, 1, 4, 128], strides = [1, 1, 1, 1]} : vector<2x7x8x128xbf16> to vector<2x1x4x128xbf16>
    %118 = vector.shape_cast %117 : vector<2x1x4x128xbf16> to vector<2x4x128xbf16>
    %cst_29 = arith.constant 0.000000e+00 : bf16
    %119 = vector.broadcast %cst_29 : bf16 to vector<2x3x128xbf16>
    %120 = tpu.concatenate %92, %118, %119 in 1 : vector<2x1x128xbf16>, vector<2x4x128xbf16>, vector<2x3x128xbf16> -> vector<2x8x128xbf16>
    %121 = vector.extract_strided_slice %90 {offsets = [0, 0, 0, 0], sizes = [2, 1, 3, 128], strides = [1, 1, 1, 1]} : vector<2x7x8x128xbf16> to vector<2x1x3x128xbf16>
    %122 = vector.shape_cast %121 : vector<2x1x3x128xbf16> to vector<2x3x128xbf16>
    %cst_30 = arith.constant 0.000000e+00 : bf16
    %123 = vector.broadcast %cst_30 : bf16 to vector<2x4x128xbf16>
    %124 = tpu.concatenate %92, %122, %123 in 1 : vector<2x1x128xbf16>, vector<2x3x128xbf16>, vector<2x4x128xbf16> -> vector<2x8x128xbf16>
    %125 = vector.extract_strided_slice %90 {offsets = [0, 1, 0, 0], sizes = [2, 1, 3, 128], strides = [1, 1, 1, 1]} : vector<2x7x8x128xbf16> to vector<2x1x3x128xbf16>
    %126 = vector.shape_cast %125 : vector<2x1x3x128xbf16> to vector<2x3x128xbf16>
    %cst_31 = arith.constant 0.000000e+00 : bf16
    %127 = vector.broadcast %cst_31 : bf16 to vector<2x4x128xbf16>
    %128 = tpu.concatenate %92, %126, %127 in 1 : vector<2x1x128xbf16>, vector<2x3x128xbf16>, vector<2x4x128xbf16> -> vector<2x8x128xbf16>
    %129 = vector.extract_strided_slice %90 {offsets = [0, 2, 0, 0], sizes = [2, 1, 3, 128], strides = [1, 1, 1, 1]} : vector<2x7x8x128xbf16> to vector<2x1x3x128xbf16>
    %130 = vector.shape_cast %129 : vector<2x1x3x128xbf16> to vector<2x3x128xbf16>
    %cst_32 = arith.constant 0.000000e+00 : bf16
    %131 = vector.broadcast %cst_32 : bf16 to vector<2x4x128xbf16>
    %132 = tpu.concatenate %92, %130, %131 in 1 : vector<2x1x128xbf16>, vector<2x3x128xbf16>, vector<2x4x128xbf16> -> vector<2x8x128xbf16>
    %133 = vector.extract_strided_slice %90 {offsets = [0, 3, 0, 0], sizes = [2, 1, 3, 128], strides = [1, 1, 1, 1]} : vector<2x7x8x128xbf16> to vector<2x1x3x128xbf16>
    %134 = vector.shape_cast %133 : vector<2x1x3x128xbf16> to vector<2x3x128xbf16>
    %cst_33 = arith.constant 0.000000e+00 : bf16
    %135 = vector.broadcast %cst_33 : bf16 to vector<2x4x128xbf16>
    %136 = tpu.concatenate %92, %134, %135 in 1 : vector<2x1x128xbf16>, vector<2x3x128xbf16>, vector<2x4x128xbf16> -> vector<2x8x128xbf16>
    %137 = vector.extract_strided_slice %90 {offsets = [0, 4, 0, 0], sizes = [2, 1, 3, 128], strides = [1, 1, 1, 1]} : vector<2x7x8x128xbf16> to vector<2x1x3x128xbf16>
    %138 = vector.shape_cast %137 : vector<2x1x3x128xbf16> to vector<2x3x128xbf16>
    %cst_34 = arith.constant 0.000000e+00 : bf16
    %139 = vector.broadcast %cst_34 : bf16 to vector<2x4x128xbf16>
    %140 = tpu.concatenate %92, %138, %139 in 1 : vector<2x1x128xbf16>, vector<2x3x128xbf16>, vector<2x4x128xbf16> -> vector<2x8x128xbf16>
    %141 = vector.extract_strided_slice %90 {offsets = [0, 5, 0, 0], sizes = [2, 1, 3, 128], strides = [1, 1, 1, 1]} : vector<2x7x8x128xbf16> to vector<2x1x3x128xbf16>
    %142 = vector.shape_cast %141 : vector<2x1x3x128xbf16> to vector<2x3x128xbf16>
    %cst_35 = arith.constant 0.000000e+00 : bf16
    %143 = vector.broadcast %cst_35 : bf16 to vector<2x4x128xbf16>
    %144 = tpu.concatenate %92, %142, %143 in 1 : vector<2x1x128xbf16>, vector<2x3x128xbf16>, vector<2x4x128xbf16> -> vector<2x8x128xbf16>
    %145 = vector.extract_strided_slice %90 {offsets = [0, 6, 0, 0], sizes = [2, 1, 3, 128], strides = [1, 1, 1, 1]} : vector<2x7x8x128xbf16> to vector<2x1x3x128xbf16>
    %146 = vector.shape_cast %145 : vector<2x1x3x128xbf16> to vector<2x3x128xbf16>
    %cst_36 = arith.constant 0.000000e+00 : bf16
    %147 = vector.broadcast %cst_36 : bf16 to vector<2x4x128xbf16>
    %148 = tpu.concatenate %92, %146, %147 in 1 : vector<2x1x128xbf16>, vector<2x3x128xbf16>, vector<2x4x128xbf16> -> vector<2x8x128xbf16>
    %149 = tpu.concatenate %91, %96, %104, %112, %120, %91, %91 in 1 : vector<2x8x128xbf16>, vector<2x8x128xbf16>, vector<2x8x128xbf16>, vector<2x8x128xbf16>, vector<2x8x128xbf16>, vector<2x8x128xbf16>, vector<2x8x128xbf16> -> vector<2x56x128xbf16>
    %150 = tpu.concatenate %91, %124, %132, %140, %148, %91, %91 in 1 : vector<2x8x128xbf16>, vector<2x8x128xbf16>, vector<2x8x128xbf16>, vector<2x8x128xbf16>, vector<2x8x128xbf16>, vector<2x8x128xbf16>, vector<2x8x128xbf16> -> vector<2x56x128xbf16>
    %151 = tpu.concatenate %91, %100, %108, %116, %91, %91, %91 in 1 : vector<2x8x128xbf16>, vector<2x8x128xbf16>, vector<2x8x128xbf16>, vector<2x8x128xbf16>, vector<2x8x128xbf16>, vector<2x8x128xbf16>, vector<2x8x128xbf16> -> vector<2x56x128xbf16>
    %152 = tpu.concatenate %91, %128, %136, %144, %91, %91, %91 in 1 : vector<2x8x128xbf16>, vector<2x8x128xbf16>, vector<2x8x128xbf16>, vector<2x8x128xbf16>, vector<2x8x128xbf16>, vector<2x8x128xbf16>, vector<2x8x128xbf16> -> vector<2x56x128xbf16>
    %153 = vector.extract_strided_slice %149 {offsets = [0, 0, 0], sizes = [2, 32, 128], strides = [1, 1, 1]} : vector<2x56x128xbf16> to vector<2x32x128xbf16>
    %154 = vector.extract_strided_slice %150 {offsets = [0, 0, 0], sizes = [2, 32, 128], strides = [1, 1, 1]} : vector<2x56x128xbf16> to vector<2x32x128xbf16>
    %155 = vector.extract_strided_slice %149 {offsets = [0, 1, 0], sizes = [2, 32, 128], strides = [1, 1, 1]} : vector<2x56x128xbf16> to vector<2x32x128xbf16>
    %156 = vector.extract_strided_slice %150 {offsets = [0, 1, 0], sizes = [2, 32, 128], strides = [1, 1, 1]} : vector<2x56x128xbf16> to vector<2x32x128xbf16>
    %157 = vector.extract_strided_slice %149 {offsets = [0, 2, 0], sizes = [2, 32, 128], strides = [1, 1, 1]} : vector<2x56x128xbf16> to vector<2x32x128xbf16>
    %158 = vector.extract_strided_slice %151 {offsets = [0, 0, 0], sizes = [2, 32, 128], strides = [1, 1, 1]} : vector<2x56x128xbf16> to vector<2x32x128xbf16>
    %159 = vector.extract_strided_slice %152 {offsets = [0, 0, 0], sizes = [2, 32, 128], strides = [1, 1, 1]} : vector<2x56x128xbf16> to vector<2x32x128xbf16>
    %160 = vector.extract_strided_slice %151 {offsets = [0, 1, 0], sizes = [2, 32, 128], strides = [1, 1, 1]} : vector<2x56x128xbf16> to vector<2x32x128xbf16>
    %161 = vector.extract_strided_slice %152 {offsets = [0, 1, 0], sizes = [2, 32, 128], strides = [1, 1, 1]} : vector<2x56x128xbf16> to vector<2x32x128xbf16>
    %162 = vector.extract_strided_slice %151 {offsets = [0, 2, 0], sizes = [2, 32, 128], strides = [1, 1, 1]} : vector<2x56x128xbf16> to vector<2x32x128xbf16>
    %163 = vector.extract_strided_slice %149 {offsets = [0, 8, 0], sizes = [2, 32, 128], strides = [1, 1, 1]} : vector<2x56x128xbf16> to vector<2x32x128xbf16>
    %164 = vector.extract_strided_slice %150 {offsets = [0, 8, 0], sizes = [2, 32, 128], strides = [1, 1, 1]} : vector<2x56x128xbf16> to vector<2x32x128xbf16>
    %165 = vector.extract_strided_slice %149 {offsets = [0, 9, 0], sizes = [2, 32, 128], strides = [1, 1, 1]} : vector<2x56x128xbf16> to vector<2x32x128xbf16>
    %166 = vector.extract_strided_slice %150 {offsets = [0, 9, 0], sizes = [2, 32, 128], strides = [1, 1, 1]} : vector<2x56x128xbf16> to vector<2x32x128xbf16>
    %167 = vector.extract_strided_slice %149 {offsets = [0, 10, 0], sizes = [2, 32, 128], strides = [1, 1, 1]} : vector<2x56x128xbf16> to vector<2x32x128xbf16>
    %168 = vector.extract_strided_slice %151 {offsets = [0, 8, 0], sizes = [2, 32, 128], strides = [1, 1, 1]} : vector<2x56x128xbf16> to vector<2x32x128xbf16>
    %169 = vector.extract_strided_slice %152 {offsets = [0, 8, 0], sizes = [2, 32, 128], strides = [1, 1, 1]} : vector<2x56x128xbf16> to vector<2x32x128xbf16>
    %170 = vector.extract_strided_slice %151 {offsets = [0, 9, 0], sizes = [2, 32, 128], strides = [1, 1, 1]} : vector<2x56x128xbf16> to vector<2x32x128xbf16>
    %171 = vector.extract_strided_slice %152 {offsets = [0, 9, 0], sizes = [2, 32, 128], strides = [1, 1, 1]} : vector<2x56x128xbf16> to vector<2x32x128xbf16>
    %172 = vector.extract_strided_slice %151 {offsets = [0, 10, 0], sizes = [2, 32, 128], strides = [1, 1, 1]} : vector<2x56x128xbf16> to vector<2x32x128xbf16>
    %173 = vector.extract_strided_slice %149 {offsets = [0, 16, 0], sizes = [2, 32, 128], strides = [1, 1, 1]} : vector<2x56x128xbf16> to vector<2x32x128xbf16>
    %174 = vector.extract_strided_slice %150 {offsets = [0, 16, 0], sizes = [2, 32, 128], strides = [1, 1, 1]} : vector<2x56x128xbf16> to vector<2x32x128xbf16>
    %175 = vector.extract_strided_slice %149 {offsets = [0, 17, 0], sizes = [2, 32, 128], strides = [1, 1, 1]} : vector<2x56x128xbf16> to vector<2x32x128xbf16>
    %176 = vector.extract_strided_slice %150 {offsets = [0, 17, 0], sizes = [2, 32, 128], strides = [1, 1, 1]} : vector<2x56x128xbf16> to vector<2x32x128xbf16>
    %177 = vector.extract_strided_slice %149 {offsets = [0, 18, 0], sizes = [2, 32, 128], strides = [1, 1, 1]} : vector<2x56x128xbf16> to vector<2x32x128xbf16>
    %178 = tpu.concatenate %153, %154, %155, %156, %157, %158, %159, %160, %161, %162, %163, %164, %165, %166, %167, %168 in 2 : vector<2x32x128xbf16>, vector<2x32x128xbf16>, vector<2x32x128xbf16>, vector<2x32x128xbf16>, vector<2x32x128xbf16>, vector<2x32x128xbf16>, vector<2x32x128xbf16>, vector<2x32x128xbf16>, vector<2x32x128xbf16>, vector<2x32x128xbf16>, vector<2x32x128xbf16>, vector<2x32x128xbf16>, vector<2x32x128xbf16>, vector<2x32x128xbf16>, vector<2x32x128xbf16>, vector<2x32x128xbf16> -> vector<2x32x2048xbf16>
    %179 = tpu.concatenate %169, %170, %171, %172, %173, %174, %175, %176, %177 in 2 : vector<2x32x128xbf16>, vector<2x32x128xbf16>, vector<2x32x128xbf16>, vector<2x32x128xbf16>, vector<2x32x128xbf16>, vector<2x32x128xbf16>, vector<2x32x128xbf16>, vector<2x32x128xbf16>, vector<2x32x128xbf16> -> vector<2x32x1152xbf16>
    %180 = tpu.concatenate %178, %179 in 2 : vector<2x32x2048xbf16>, vector<2x32x1152xbf16> -> vector<2x32x3200xbf16>
    %181 = vector.shape_cast %180 : vector<2x32x3200xbf16> to vector<64x3200xbf16>
    %c0_37 = arith.constant 0 : index
    %c0_38 = arith.constant 0 : index
    %182 = vector.load %arg7[%c0_37, %c0_38] : memref<3200x256xbf16, #tpu.memory_space<vmem>>, vector<3200x256xbf16>
    %cst_39 = arith.constant dense<0.000000e+00> : vector<64x256xf32>
    %183 = tpu.matmul %181, %182, %cst_39 {dimension_numbers = #tpu.dot_dimension_numbers<[1], [0], [0], [1], [0, 0, 1, 1], [], []>} : vector<64x3200xbf16>, vector<3200x256xbf16>, vector<64x256xf32> -> vector<64x256xf32>
    %c0_40 = arith.constant 0 : index
    %c0_41 = arith.constant 0 : index
    %184 = vector.load %arg8[%c0_40, %c0_41] : memref<1x256xf32, #tpu.memory_space<vmem>>, vector<1x256xf32>
    %185 = vector.broadcast %184 : vector<1x256xf32> to vector<64x256xf32>
    %186 = arith.addf %183, %185 : vector<64x256xf32>
    %cst_42 = arith.constant 0.000000e+00 : f32
    %187 = vector.broadcast %cst_42 : f32 to vector<64x256xf32>
    %188 = arith.maximumf %186, %187 : vector<64x256xf32>
    %189 = vector.shape_cast %188 : vector<64x256xf32> to vector<2x32x256xf32>
    %c0_43 = arith.constant 0 : index
    %c0_44 = arith.constant 0 : index
    %190 = vector.load %arg9[%c0_43, %c0_44] : memref<32x256xf32, #tpu.memory_space<vmem>>, vector<32x256xf32>
    %191 = vector.shape_cast %190 : vector<32x256xf32> to vector<1x32x256xf32>
    %192 = vector.broadcast %191 : vector<1x32x256xf32> to vector<2x32x256xf32>
    %193 = arith.mulf %189, %192 : vector<2x32x256xf32>
    %cst_45 = arith.constant dense<0.000000e+00> : vector<2x32xf32>
    %194 = vector.multi_reduction <add>, %193, %cst_45 [2] : vector<2x32x256xf32> to vector<2x32xf32>
    %195 = vector.shape_cast %194 : vector<2x32xf32> to vector<2x32x1xf32>
    %cst_46 = arith.constant dense<0.000000e+00> : vector<2x1xf32>
    %196 = vector.multi_reduction <add>, %195, %cst_46 [1] : vector<2x32x1xf32> to vector<2x1xf32>
    %197 = vector.shape_cast %196 : vector<2x1xf32> to vector<2x1x1xf32>
    %198 = vector.shape_cast %197 : vector<2x1x1xf32> to vector<2x1xf32>
    %199 = vector.shape_cast %198 : vector<2x1xf32> to vector<2x1xf32>
    %200 = vector.broadcast %199 : vector<2x1xf32> to vector<2x128xf32>
    %c0_47 = arith.constant 0 : index
    %c0_48 = arith.constant 0 : index
    %201 = vector.load %arg10[%c0_47, %c0_48] : memref<2x128xf32, #tpu.memory_space<vmem>>, vector<2x128xf32>
    tpu.vector_store %arg10[%c0_47, %c0_48], %200 {strides = array<i32>} : memref<2x128xf32, #tpu.memory_space<vmem>>, vector<2x128xf32>,
    return
  }
  func.func @transform_0(%arg0: i32) -> (i32, i32, i32) {
    %c0_i32 = arith.constant 0 : i32
    %c0_i32_0 = arith.constant 0 : i32
    %c0_i32_1 = arith.constant 0 : i32
    return %arg0, %c0_i32, %c0_i32_0 : i32, i32, i32
  }
  func.func @transform_1(%arg0: i32) -> (i32, i32) {
    %c0_i32 = arith.constant 0 : i32
    %c0_i32_0 = arith.constant 0 : i32
    %c0_i32_1 = arith.constant 0 : i32
    return %c0_i32, %c0_i32_0 : i32, i32
  }
  func.func @transform_2(%arg0: i32) -> (i32, i32) {
    %c0_i32 = arith.constant 0 : i32
    %c0_i32_0 = arith.constant 0 : i32
    %c0_i32_1 = arith.constant 0 : i32
    return %c0_i32, %c0_i32_0 : i32, i32
  }
  func.func @transform_3(%arg0: i32) -> (i32, i32) {
    %c0_i32 = arith.constant 0 : i32
    %c0_i32_0 = arith.constant 0 : i32
    %c0_i32_1 = arith.constant 0 : i32
    return %c0_i32, %c0_i32_0 : i32, i32
  }
  func.func @transform_4(%arg0: i32) -> (i32, i32) {
    %c0_i32 = arith.constant 0 : i32
    %c0_i32_0 = arith.constant 0 : i32
    %c0_i32_1 = arith.constant 0 : i32
    return %c0_i32, %c0_i32_0 : i32, i32
  }
  func.func @transform_5(%arg0: i32) -> (i32, i32) {
    %c0_i32 = arith.constant 0 : i32
    %c0_i32_0 = arith.constant 0 : i32
    %c0_i32_1 = arith.constant 0 : i32
    return %c0_i32, %c0_i32_0 : i32, i32
  }
  func.func @transform_6(%arg0: i32) -> (i32, i32) {
    %c0_i32 = arith.constant 0 : i32
    %c0_i32_0 = arith.constant 0 : i32
    %c0_i32_1 = arith.constant 0 : i32
    return %c0_i32, %c0_i32_0 : i32, i32
  }
  func.func @transform_7(%arg0: i32) -> (i32, i32) {
    %c0_i32 = arith.constant 0 : i32
    %c0_i32_0 = arith.constant 0 : i32
    %c0_i32_1 = arith.constant 0 : i32
    return %c0_i32, %c0_i32_0 : i32, i32
  }
  func.func @transform_8(%arg0: i32) -> (i32, i32) {
    %c0_i32 = arith.constant 0 : i32
    %c0_i32_0 = arith.constant 0 : i32
    %c0_i32_1 = arith.constant 0 : i32
    return %c0_i32, %c0_i32_0 : i32, i32
  }
  func.func @transform_9(%arg0: i32) -> (i32, i32) {
    %c0_i32 = arith.constant 0 : i32
    %c0_i32_0 = arith.constant 0 : i32
    return %arg0, %c0_i32 : i32, i32
  }
}

</mosaic_0001>

<llo_original>
// kernel: discriminator_forward.1
$region0: #{discriminator_forward.1}
  #allocation0 [shape = 'u32[]', space=smem, size = 0x4, offset = 0x4, fixed_abs, tag = 'smem constant byte address 0x4 - core index']
  #allocation1 [shape = 'u32[144,128]{1,0:T(1,128)}', space=vmem, size = 0x12000, scoped, tag = 'internal scratch']
  %s0 = inlined_call_operand.vmem [shape: bf16[2,640,25], index: 0, kind: input, shape index: {}]
  %s1 = inlined_call_operand.vmem [shape: f32[640,1], index: 1, kind: input, shape index: {}]
  %s2 = inlined_call_operand.vmem [shape: bf16[25,64], index: 2, kind: input, shape index: {}]
  %s3 = inlined_call_operand.vmem [shape: f32[1,64], index: 3, kind: input, shape index: {}]
  %s4 = inlined_call_operand.vmem [shape: bf16[1600,128], index: 4, kind: input, shape index: {}]
  %s5 = inlined_call_operand.vmem [shape: f32[1,128], index: 5, kind: input, shape index: {}]
  %s6 = inlined_call_operand.vmem [shape: bf16[3200,256], index: 6, kind: input, shape index: {}]
  %s7 = inlined_call_operand.vmem [shape: f32[1,256], index: 7, kind: input, shape index: {}]
  %s8 = inlined_call_operand.vmem [shape: f32[32,256], index: 8, kind: input, shape index: {}]
  %s9 = inlined_call_operand.vmem [shape: f32[2,128], index: 9, kind: output, shape index: {}]
  %s10 = sld [smem:[#allocation0]]
  $region46: #{discriminator_forward.1} parent=0
    _
  %s12 = ssub.s32 1, %s10
  %s13 = scalar_select 0, %s12, %s10
  // Predicated region
  $region2: #{discriminator_forward.1} parent=0 // pred_check
    _
  $region3: #{discriminator_forward.1} parent=0 // pred_check_branch
    %15 = sbr.rel (0) target = $region5
  $region4: #{discriminator_forward.1} parent=0 // pred_region
    _
  $region5: #{discriminator_forward.1} parent=0 // pred_fallthru
    _
  // Predicated region
  $region6: #{discriminator_forward.1} parent=0 // pred_check
    _
  $region7: #{discriminator_forward.1} parent=0 // pred_check_branch
    %17 = sbr.rel (0) target = $region9
  $region8: #{discriminator_forward.1} parent=0 // pred_region
    _
  $region9: #{discriminator_forward.1} parent=0 // pred_fallthru
    _
  // Predicated region
  $region10: #{discriminator_forward.1} parent=0 // pred_check
    _
  $region11: #{discriminator_forward.1} parent=0 // pred_check_branch
    %19 = sbr.rel (0) target = $region13
  $region12: #{discriminator_forward.1} parent=0 // pred_region
    _
  $region13: #{discriminator_forward.1} parent=0 // pred_fallthru
    _
  // Predicated region
  $region14: #{discriminator_forward.1} parent=0 // pred_check
    _
  $region15: #{discriminator_forward.1} parent=0 // pred_check_branch
    %21 = sbr.rel (0) target = $region17
  $region16: #{discriminator_forward.1} parent=0 // pred_region
    _
  $region17: #{discriminator_forward.1} parent=0 // pred_fallthru
    _
  // Predicated region
  $region18: #{discriminator_forward.1} parent=0 // pred_check
    _
  $region19: #{discriminator_forward.1} parent=0 // pred_check_branch
    %23 = sbr.rel (0) target = $region21
  $region20: #{discriminator_forward.1} parent=0 // pred_region
    _
  $region21: #{discriminator_forward.1} parent=0 // pred_fallthru
    _
  // Predicated region
  $region22: #{discriminator_forward.1} parent=0 // pred_check
    _
  $region23: #{discriminator_forward.1} parent=0 // pred_check_branch
    %25 = sbr.rel (0) target = $region25
  $region24: #{discriminator_forward.1} parent=0 // pred_region
    _
  $region25: #{discriminator_forward.1} parent=0 // pred_fallthru
    _
  // Predicated region
  $region26: #{discriminator_forward.1} parent=0 // pred_check
    _
  $region27: #{discriminator_forward.1} parent=0 // pred_check_branch
    %27 = sbr.rel (0) target = $region29
  $region28: #{discriminator_forward.1} parent=0 // pred_region
    _
  $region29: #{discriminator_forward.1} parent=0 // pred_fallthru
    _
  // Predicated region
  $region30: #{discriminator_forward.1} parent=0 // pred_check
    _
  $region31: #{discriminator_forward.1} parent=0 // pred_check_branch
    %29 = sbr.rel (0) target = $region33
  $region32: #{discriminator_forward.1} parent=0 // pred_region
    _
  $region33: #{discriminator_forward.1} parent=0 // pred_fallthru
    _
  // Predicated region
  $region34: #{discriminator_forward.1} parent=0 // pred_check
    _
  $region35: #{discriminator_forward.1} parent=0 // pred_check_branch
    %31 = sbr.rel (0) target = $region37
  $region36: #{discriminator_forward.1} parent=0 // pred_region
    _
  $region37: #{discriminator_forward.1} parent=0 // pred_fallthru
    _
  %v33 = vld [vmem:[%s0] sm:$0xf]
  %v34 = vld [vmem:[%s0 + $0x4] sm:$0xf]
  %v35 = vld [vmem:[%s0 + $0x8] sm:$0xf]
  %v36 = vld [vmem:[%s0 + $0xc] sm:$0xf]
  %v37 = vld [vmem:[%s0 + $0x10] sm:$0xf]
  %v38 = vld [vmem:[%s0 + $0x14] sm:$0xf]
  %v39 = vld [vmem:[%s0 + $0x18] sm:$0xf]
  %v40 = vld [vmem:[%s0 + $0x1c] sm:$0xf]
  %v41 = vld [vmem:[%s0 + $0x20] sm:$0xf]
  %v42 = vld [vmem:[%s0 + $0x24] sm:$0xf]
  %v43 = vld [vmem:[%s0 + $0x28] sm:$0xf]
  %v44 = vld [vmem:[%s0 + $0x2c] sm:$0xf]
  %v45 = vld [vmem:[%s0 + $0x30] sm:$0xf]
  %v46 = vld [vmem:[%s0 + $0x34] sm:$0xf]
  %v47 = vld [vmem:[%s0 + $0x38] sm:$0xf]
  %v48 = vld [vmem:[%s0 + $0x3c] sm:$0xf]
  %v49 = vld [vmem:[%s0 + $0x40] sm:$0xf]
  %v50 = vld [vmem:[%s0 + $0x44] sm:$0xf]
  %v51 = vld [vmem:[%s0 + $0x48] sm:$0xf]
  %v52 = vld [vmem:[%s0 + $0x4c] sm:$0xf]
  %v53 = vld [vmem:[%s0 + $0x50] sm:$0xf]
  %v54 = vld [vmem:[%s0 + $0x54] sm:$0xf]
  %v55 = vld [vmem:[%s0 + $0x58] sm:$0xf]
  %v56 = vld [vmem:[%s0 + $0x5c] sm:$0xf]
  %v57 = vld [vmem:[%s0 + $0x60] sm:$0xf]
  %v58 = vld [vmem:[%s0 + $0x64] sm:$0xf]
  %v59 = vld [vmem:[%s0 + $0x68] sm:$0xf]
  %v60 = vld [vmem:[%s0 + $0x6c] sm:$0xf]
  %v61 = vld [vmem:[%s0 + $0x70] sm:$0xf]
  %v62 = vld [vmem:[%s0 + $0x74] sm:$0xf]
  %v63 = vld [vmem:[%s0 + $0x78] sm:$0xf]
  %v64 = vld [vmem:[%s0 + $0x7c] sm:$0xf]
  %v65 = vld [vmem:[%s0 + $0x80] sm:$0xf]
  %v66 = vld [vmem:[%s0 + $0x84] sm:$0xf]
  %v67 = vld [vmem:[%s0 + $0x88] sm:$0xf]
  %v68 = vld [vmem:[%s0 + $0x8c] sm:$0xf]
  %v69 = vld [vmem:[%s0 + $0x90] sm:$0xf]
  %v70 = vld [vmem:[%s0 + $0x94] sm:$0xf]
  %v71 = vld [vmem:[%s0 + $0x98] sm:$0xf]
  %v72 = vld [vmem:[%s0 + $0x9c] sm:$0xf]
  %v73 = vld [vmem:[%s0 + $0xa0] sm:$0xf]
  %v74 = vld [vmem:[%s0 + $0xa4] sm:$0xf]
  %v75 = vld [vmem:[%s0 + $0xa8] sm:$0xf]
  %v76 = vld [vmem:[%s0 + $0xac] sm:$0xf]
  %v77 = vld [vmem:[%s0 + $0xb0] sm:$0xf]
  %v78 = vld [vmem:[%s0 + $0xb4] sm:$0xf]
  %v79 = vld [vmem:[%s0 + $0xb8] sm:$0xf]
  %v80 = vld [vmem:[%s0 + $0xbc] sm:$0xf]
  %v81 = vld [vmem:[%s0 + $0xc0] sm:$0xf]
  %v82 = vld [vmem:[%s0 + $0xc4] sm:$0xf]
  %v83 = vld [vmem:[%s0 + $0xc8] sm:$0xf]
  %v84 = vld [vmem:[%s0 + $0xcc] sm:$0xf]
  %v85 = vld [vmem:[%s0 + $0xd0] sm:$0xf]
  %v86 = vld [vmem:[%s0 + $0xd4] sm:$0xf]
  %v87 = vld [vmem:[%s0 + $0xd8] sm:$0xf]
  %v88 = vld [vmem:[%s0 + $0xdc] sm:$0xf]
  %v89 = vld [vmem:[%s0 + $0xe0] sm:$0xf]
  %v90 = vld [vmem:[%s0 + $0xe4] sm:$0xf]
  %v91 = vld [vmem:[%s0 + $0xe8] sm:$0xf]
  %v92 = vld [vmem:[%s0 + $0xec] sm:$0xf]
  %v93 = vld [vmem:[%s0 + $0xf0] sm:$0xf]
  %v94 = vld [vmem:[%s0 + $0xf4] sm:$0xf]
  %v95 = vld [vmem:[%s0 + $0xf8] sm:$0xf]
  %v96 = vld [vmem:[%s0 + $0xfc] sm:$0xf]
  %v97 = vld [vmem:[%s0 + $0x100] sm:$0xf]
  %v98 = vld [vmem:[%s0 + $0x104] sm:$0xf]
  %v99 = vld [vmem:[%s0 + $0x108] sm:$0xf]
  %v100 = vld [vmem:[%s0 + $0x10c] sm:$0xf]
  %v101 = vld [vmem:[%s0 + $0x110] sm:$0xf]
  %v102 = vld [vmem:[%s0 + $0x114] sm:$0xf]
  %v103 = vld [vmem:[%s0 + $0x118] sm:$0xf]
  %v104 = vld [vmem:[%s0 + $0x11c] sm:$0xf]
  %v105 = vld [vmem:[%s0 + $0x120] sm:$0xf]
  %v106 = vld [vmem:[%s0 + $0x124] sm:$0xf]
  %v107 = vld [vmem:[%s0 + $0x128] sm:$0xf]
  %v108 = vld [vmem:[%s0 + $0x12c] sm:$0xf]
  %v109 = vld [vmem:[%s0 + $0x130] sm:$0xf]
  %v110 = vld [vmem:[%s0 + $0x134] sm:$0xf]
  %v111 = vld [vmem:[%s0 + $0x138] sm:$0xf]
  %v112 = vld [vmem:[%s0 + $0x13c] sm:$0xf]
  %v113 = vld [vmem:[%s0 + $0x140] sm:$0xf]
  %v114 = vld [vmem:[%s0 + $0x144] sm:$0xf]
  %v115 = vld [vmem:[%s0 + $0x148] sm:$0xf]
  %v116 = vld [vmem:[%s0 + $0x14c] sm:$0xf]
  %v117 = vld [vmem:[%s0 + $0x150] sm:$0xf]
  %v118 = vld [vmem:[%s0 + $0x154] sm:$0xf]
  %v119 = vld [vmem:[%s0 + $0x158] sm:$0xf]
  %v120 = vld [vmem:[%s0 + $0x15c] sm:$0xf]
  %v121 = vld [vmem:[%s0 + $0x160] sm:$0xf]
  %v122 = vld [vmem:[%s0 + $0x164] sm:$0xf]
  %v123 = vld [vmem:[%s0 + $0x168] sm:$0xf]
  %v124 = vld [vmem:[%s0 + $0x16c] sm:$0xf]
  %v125 = vld [vmem:[%s0 + $0x170] sm:$0xf]
  %v126 = vld [vmem:[%s0 + $0x174] sm:$0xf]
  %v127 = vld [vmem:[%s0 + $0x178] sm:$0xf]
  %v128 = vld [vmem:[%s0 + $0x17c] sm:$0xf]
  %v129 = vld [vmem:[%s0 + $0x180] sm:$0xf]
  %v130 = vld [vmem:[%s0 + $0x184] sm:$0xf]
  %v131 = vld [vmem:[%s0 + $0x188] sm:$0xf]
  %v132 = vld [vmem:[%s0 + $0x18c] sm:$0xf]
  %v133 = vld [vmem:[%s0 + $0x190] sm:$0xf]
  %v134 = vld [vmem:[%s0 + $0x194] sm:$0xf]
  %v135 = vld [vmem:[%s0 + $0x198] sm:$0xf]
  %v136 = vld [vmem:[%s0 + $0x19c] sm:$0xf]
  %v137 = vld [vmem:[%s0 + $0x1a0] sm:$0xf]
  %v138 = vld [vmem:[%s0 + $0x1a4] sm:$0xf]
  %v139 = vld [vmem:[%s0 + $0x1a8] sm:$0xf]
  %v140 = vld [vmem:[%s0 + $0x1ac] sm:$0xf]
  %v141 = vld [vmem:[%s0 + $0x1b0] sm:$0xf]
  %v142 = vld [vmem:[%s0 + $0x1b4] sm:$0xf]
  %v143 = vld [vmem:[%s0 + $0x1b8] sm:$0xf]
  %v144 = vld [vmem:[%s0 + $0x1bc] sm:$0xf]
  %v145 = vld [vmem:[%s0 + $0x1c0] sm:$0xf]
  %v146 = vld [vmem:[%s0 + $0x1c4] sm:$0xf]
  %v147 = vld [vmem:[%s0 + $0x1c8] sm:$0xf]
  %v148 = vld [vmem:[%s0 + $0x1cc] sm:$0xf]
  %v149 = vld [vmem:[%s0 + $0x1d0] sm:$0xf]
  %v150 = vld [vmem:[%s0 + $0x1d4] sm:$0xf]
  %v151 = vld [vmem:[%s0 + $0x1d8] sm:$0xf]
  %v152 = vld [vmem:[%s0 + $0x1dc] sm:$0xf]
  %v153 = vld [vmem:[%s0 + $0x1e0] sm:$0xf]
  %v154 = vld [vmem:[%s0 + $0x1e4] sm:$0xf]
  %v155 = vld [vmem:[%s0 + $0x1e8] sm:$0xf]
  %v156 = vld [vmem:[%s0 + $0x1ec] sm:$0xf]
  %v157 = vld [vmem:[%s0 + $0x1f0] sm:$0xf]
  %v158 = vld [vmem:[%s0 + $0x1f4] sm:$0xf]
  %v159 = vld [vmem:[%s0 + $0x1f8] sm:$0xf]
  %v160 = vld [vmem:[%s0 + $0x1fc] sm:$0xf]
  %v161 = vld [vmem:[%s0 + $0x200] sm:$0xf]
  %v162 = vld [vmem:[%s0 + $0x204] sm:$0xf]
  %v163 = vld [vmem:[%s0 + $0x208] sm:$0xf]
  %v164 = vld [vmem:[%s0 + $0x20c] sm:$0xf]
  %v165 = vld [vmem:[%s0 + $0x210] sm:$0xf]
  %v166 = vld [vmem:[%s0 + $0x214] sm:$0xf]
  %v167 = vld [vmem:[%s0 + $0x218] sm:$0xf]
  %v168 = vld [vmem:[%s0 + $0x21c] sm:$0xf]
  %v169 = vld [vmem:[%s0 + $0x220] sm:$0xf]
  %v170 = vld [vmem:[%s0 + $0x224] sm:$0xf]
  %v171 = vld [vmem:[%s0 + $0x228] sm:$0xf]
  %v172 = vld [vmem:[%s0 + $0x22c] sm:$0xf]
  %v173 = vld [vmem:[%s0 + $0x230] sm:$0xf]
  %v174 = vld [vmem:[%s0 + $0x234] sm:$0xf]
  %v175 = vld [vmem:[%s0 + $0x238] sm:$0xf]
  %v176 = vld [vmem:[%s0 + $0x23c] sm:$0xf]
  %v177 = vld [vmem:[%s0 + $0x240] sm:$0xf]
  %v178 = vld [vmem:[%s0 + $0x244] sm:$0xf]
  %v179 = vld [vmem:[%s0 + $0x248] sm:$0xf]
  %v180 = vld [vmem:[%s0 + $0x24c] sm:$0xf]
  %v181 = vld [vmem:[%s0 + $0x250] sm:$0xf]
  %v182 = vld [vmem:[%s0 + $0x254] sm:$0xf]
  %v183 = vld [vmem:[%s0 + $0x258] sm:$0xf]
  %v184 = vld [vmem:[%s0 + $0x25c] sm:$0xf]
  %v185 = vld [vmem:[%s0 + $0x260] sm:$0xf]
  %v186 = vld [vmem:[%s0 + $0x264] sm:$0xf]
  %v187 = vld [vmem:[%s0 + $0x268] sm:$0xf]
  %v188 = vld [vmem:[%s0 + $0x26c] sm:$0xf]
  %v189 = vld [vmem:[%s0 + $0x270] sm:$0xf]
  %v190 = vld [vmem:[%s0 + $0x274] sm:$0xf]
  %v191 = vld [vmem:[%s0 + $0x278] sm:$0xf]
  %v192 = vld [vmem:[%s0 + $0x27c] sm:$0xf]
  %v193 = vld [vmem:[%s2] sm:$0xf]
  %v194 = vld [vmem:[%s2 + $0x4] sm:$0xf]
  %v195 = vld [vmem:[%s2 + $0x8] sm:$0xf]
  %v196 = vld [vmem:[%s2 + $0xc] sm:$0x1]
  %v197 = vld [vmem:[%s3] sm:$0x1]
  %v199 = vlaneseq
  %v200 = vshrl.u32 %v199, 7
  %v201 = vsub.s32 0, %v200
  %v202 = vrot.slane %v197, %v201
  %v364 = vunpack.c.l.b16 %v33
  %v365 = vunpack.c.l.b16 %v34
  %v366 = vunpack.c.l.b16 %v35
  %v367 = vunpack.c.l.b16 %v36
  %v368 = vunpack.c.l.b16 %v37
  %v369 = vunpack.c.l.b16 %v38
  %v370 = vunpack.c.l.b16 %v39
  %v371 = vunpack.c.l.b16 %v40
  %v372 = vunpack.c.l.b16 %v41
  %v373 = vunpack.c.l.b16 %v42
  %v374 = vunpack.c.l.b16 %v43
  %v375 = vunpack.c.l.b16 %v44
  %v376 = vunpack.c.l.b16 %v45
  %v377 = vunpack.c.l.b16 %v46
  %v378 = vunpack.c.l.b16 %v47
  %v379 = vunpack.c.l.b16 %v48
  %v380 = vunpack.c.l.b16 %v49
  %v381 = vunpack.c.l.b16 %v50
  %v382 = vunpack.c.l.b16 %v51
  %v383 = vunpack.c.l.b16 %v52
  %v384 = vunpack.c.l.b16 %v53
  %v385 = vunpack.c.l.b16 %v54
  %v386 = vunpack.c.l.b16 %v55
  %v387 = vunpack.c.l.b16 %v56
  %v388 = vunpack.c.l.b16 %v57
  %v389 = vunpack.c.l.b16 %v58
  %v390 = vunpack.c.l.b16 %v59
  %v391 = vunpack.c.l.b16 %v60
  %v392 = vunpack.c.l.b16 %v61
  %v393 = vunpack.c.l.b16 %v62
  %v394 = vunpack.c.l.b16 %v63
  %v395 = vunpack.c.l.b16 %v64
  %v396 = vunpack.c.l.b16 %v65
  %v397 = vunpack.c.l.b16 %v66
  %v398 = vunpack.c.l.b16 %v67
  %v399 = vunpack.c.l.b16 %v68
  %v400 = vunpack.c.l.b16 %v69
  %v401 = vunpack.c.l.b16 %v70
  %v402 = vunpack.c.l.b16 %v71
  %v403 = vunpack.c.l.b16 %v72
  %v404 = vunpack.c.l.b16 %v73
  %v405 = vunpack.c.l.b16 %v74
  %v406 = vunpack.c.l.b16 %v75
  %v407 = vunpack.c.l.b16 %v76
  %v408 = vunpack.c.l.b16 %v77
  %v409 = vunpack.c.l.b16 %v78
  %v410 = vunpack.c.l.b16 %v79
  %v411 = vunpack.c.l.b16 %v80
  %v412 = vunpack.c.l.b16 %v81
  %v413 = vunpack.c.l.b16 %v82
  %v414 = vunpack.c.l.b16 %v83
  %v415 = vunpack.c.l.b16 %v84
  %v416 = vunpack.c.l.b16 %v85
  %v417 = vunpack.c.l.b16 %v86
  %v418 = vunpack.c.l.b16 %v87
  %v419 = vunpack.c.l.b16 %v88
  %v420 = vunpack.c.l.b16 %v89
  %v421 = vunpack.c.l.b16 %v90
  %v422 = vunpack.c.l.b16 %v91
  %v423 = vunpack.c.l.b16 %v92
  %v424 = vunpack.c.l.b16 %v93
  %v425 = vunpack.c.l.b16 %v94
  %v426 = vunpack.c.l.b16 %v95
  %v427 = vunpack.c.l.b16 %v96
  %v428 = vunpack.c.l.b16 %v97
  %v429 = vunpack.c.l.b16 %v98
  %v430 = vunpack.c.l.b16 %v99
  %v431 = vunpack.c.l.b16 %v100
  %v432 = vunpack.c.l.b16 %v101
  %v433 = vunpack.c.l.b16 %v102
  %v434 = vunpack.c.l.b16 %v103
  %v435 = vunpack.c.l.b16 %v104
  %v436 = vunpack.c.l.b16 %v105
  %v437 = vunpack.c.l.b16 %v106
  %v438 = vunpack.c.l.b16 %v107
  %v439 = vunpack.c.l.b16 %v108
  %v440 = vunpack.c.l.b16 %v109
  %v441 = vunpack.c.l.b16 %v110
  %v442 = vunpack.c.l.b16 %v111
  %v443 = vunpack.c.l.b16 %v112
  %v444 = vunpack.c.l.b16 %v113
  %v445 = vunpack.c.l.b16 %v114
  %v446 = vunpack.c.l.b16 %v115
  %v447 = vunpack.c.l.b16 %v116
  %v448 = vunpack.c.l.b16 %v117
  %v449 = vunpack.c.l.b16 %v118
  %v450 = vunpack.c.l.b16 %v119
  %v451 = vunpack.c.l.b16 %v120
  %v452 = vunpack.c.l.b16 %v121
  %v453 = vunpack.c.l.b16 %v122
  %v454 = vunpack.c.l.b16 %v123
  %v455 = vunpack.c.l.b16 %v124
  %v456 = vunpack.c.l.b16 %v125
  %v457 = vunpack.c.l.b16 %v126
  %v458 = vunpack.c.l.b16 %v127
  %v459 = vunpack.c.l.b16 %v128
  %v460 = vunpack.c.l.b16 %v129
  %v461 = vunpack.c.l.b16 %v130
  %v462 = vunpack.c.l.b16 %v131
  %v463 = vunpack.c.l.b16 %v132
  %v464 = vunpack.c.l.b16 %v133
  %v465 = vunpack.c.l.b16 %v134
  %v466 = vunpack.c.l.b16 %v135
  %v467 = vunpack.c.l.b16 %v136
  %v468 = vunpack.c.l.b16 %v137
  %v469 = vunpack.c.l.b16 %v138
  %v470 = vunpack.c.l.b16 %v139
  %v471 = vunpack.c.l.b16 %v140
  %v472 = vunpack.c.l.b16 %v141
  %v473 = vunpack.c.l.b16 %v142
  %v474 = vunpack.c.l.b16 %v143
  %v475 = vunpack.c.l.b16 %v144
  %v476 = vunpack.c.l.b16 %v145
  %v477 = vunpack.c.l.b16 %v146
  %v478 = vunpack.c.l.b16 %v147
  %v479 = vunpack.c.l.b16 %v148
  %v480 = vunpack.c.l.b16 %v149
  %v481 = vunpack.c.l.b16 %v150
  %v482 = vunpack.c.l.b16 %v151
  %v483 = vunpack.c.l.b16 %v152
  %v484 = vunpack.c.l.b16 %v153
  %v485 = vunpack.c.l.b16 %v154
  %v486 = vunpack.c.l.b16 %v155
  %v487 = vunpack.c.l.b16 %v156
  %v488 = vunpack.c.l.b16 %v157
  %v489 = vunpack.c.l.b16 %v158
  %v490 = vunpack.c.l.b16 %v159
  %v491 = vunpack.c.l.b16 %v160
  %v492 = vunpack.c.l.b16 %v161
  %v493 = vunpack.c.l.b16 %v162
  %v494 = vunpack.c.l.b16 %v163
  %v495 = vunpack.c.l.b16 %v164
  %v496 = vunpack.c.l.b16 %v165
  %v497 = vunpack.c.l.b16 %v166
  %v498 = vunpack.c.l.b16 %v167
  %v499 = vunpack.c.l.b16 %v168
  %v500 = vunpack.c.l.b16 %v169
  %v501 = vunpack.c.l.b16 %v170
  %v502 = vunpack.c.l.b16 %v171
  %v503 = vunpack.c.l.b16 %v172
  %v504 = vunpack.c.l.b16 %v173
  %v505 = vunpack.c.l.b16 %v174
  %v506 = vunpack.c.l.b16 %v175
  %v507 = vunpack.c.l.b16 %v176
  %v508 = vunpack.c.l.b16 %v177
  %v509 = vunpack.c.l.b16 %v178
  %v510 = vunpack.c.l.b16 %v179
  %v511 = vunpack.c.l.b16 %v180
  %v512 = vunpack.c.l.b16 %v181
  %v513 = vunpack.c.l.b16 %v182
  %v514 = vunpack.c.l.b16 %v183
  %v515 = vunpack.c.l.b16 %v184
  %v516 = vunpack.c.l.b16 %v185
  %v517 = vunpack.c.l.b16 %v186
  %v518 = vunpack.c.l.b16 %v187
  %v519 = vunpack.c.l.b16 %v188
  %v520 = vunpack.c.l.b16 %v189
  %v521 = vunpack.c.l.b16 %v190
  %v522 = vunpack.c.l.b16 %v191
  %v523 = vunpack.c.l.b16 %v192
  %v524 = vpack.c.b16 %v365, %v364
  %v525 = vpack.c.b16 %v367, %v366
  %v526 = vpack.c.b16 %v369, %v368
  %v527 = vpack.c.b16 %v371, %v370
  %v528 = vpack.c.b16 %v373, %v372
  %v529 = vpack.c.b16 %v375, %v374
  %v530 = vpack.c.b16 %v377, %v376
  %v531 = vpack.c.b16 %v379, %v378
  %v532 = vpack.c.b16 %v381, %v380
  %v533 = vpack.c.b16 %v383, %v382
  %v534 = vpack.c.b16 %v385, %v384
  %v535 = vpack.c.b16 %v387, %v386
  %v536 = vpack.c.b16 %v389, %v388
  %v537 = vpack.c.b16 %v391, %v390
  %v538 = vpack.c.b16 %v393, %v392
  %v539 = vpack.c.b16 %v395, %v394
  %v540 = vpack.c.b16 %v397, %v396
  %v541 = vpack.c.b16 %v399, %v398
  %v542 = vpack.c.b16 %v401, %v400
  %v543 = vpack.c.b16 %v403, %v402
  %v544 = vpack.c.b16 %v405, %v404
  %v545 = vpack.c.b16 %v407, %v406
  %v546 = vpack.c.b16 %v409, %v408
  %v547 = vpack.c.b16 %v411, %v410
  %v548 = vpack.c.b16 %v413, %v412
  %v549 = vpack.c.b16 %v415, %v414
  %v550 = vpack.c.b16 %v417, %v416
  %v551 = vpack.c.b16 %v419, %v418
  %v552 = vpack.c.b16 %v421, %v420
  %v553 = vpack.c.b16 %v423, %v422
  %v554 = vpack.c.b16 %v425, %v424
  %v555 = vpack.c.b16 %v427, %v426
  %v556 = vpack.c.b16 %v429, %v428
  %v557 = vpack.c.b16 %v431, %v430
  %v558 = vpack.c.b16 %v433, %v432
  %v559 = vpack.c.b16 %v435, %v434
  %v560 = vpack.c.b16 %v437, %v436
  %v561 = vpack.c.b16 %v439, %v438
  %v562 = vpack.c.b16 %v441, %v440
  %v563 = vpack.c.b16 %v443, %v442
  %v564 = vpack.c.b16 %v445, %v444
  %v565 = vpack.c.b16 %v447, %v446
  %v566 = vpack.c.b16 %v449, %v448
  %v567 = vpack.c.b16 %v451, %v450
  %v568 = vpack.c.b16 %v453, %v452
  %v569 = vpack.c.b16 %v455, %v454
  %v570 = vpack.c.b16 %v457, %v456
  %v571 = vpack.c.b16 %v459, %v458
  %v572 = vpack.c.b16 %v461, %v460
  %v573 = vpack.c.b16 %v463, %v462
  %v574 = vpack.c.b16 %v465, %v464
  %v575 = vpack.c.b16 %v467, %v466
  %v576 = vpack.c.b16 %v469, %v468
  %v577 = vpack.c.b16 %v471, %v470
  %v578 = vpack.c.b16 %v473, %v472
  %v579 = vpack.c.b16 %v475, %v474
  %v580 = vpack.c.b16 %v477, %v476
  %v581 = vpack.c.b16 %v479, %v478
  %v582 = vpack.c.b16 %v481, %v480
  %v583 = vpack.c.b16 %v483, %v482
  %v584 = vpack.c.b16 %v485, %v484
  %v585 = vpack.c.b16 %v487, %v486
  %v586 = vpack.c.b16 %v489, %v488
  %v587 = vpack.c.b16 %v491, %v490
  %v588 = vpack.c.b16 %v493, %v492
  %v589 = vpack.c.b16 %v495, %v494
  %v590 = vpack.c.b16 %v497, %v496
  %v591 = vpack.c.b16 %v499, %v498
  %v592 = vpack.c.b16 %v501, %v500
  %v593 = vpack.c.b16 %v503, %v502
  %v594 = vpack.c.b16 %v505, %v504
  %v595 = vpack.c.b16 %v507, %v506
  %v596 = vpack.c.b16 %v509, %v508
  %v597 = vpack.c.b16 %v511, %v510
  %v598 = vpack.c.b16 %v513, %v512
  %v599 = vpack.c.b16 %v515, %v514
  %v600 = vpack.c.b16 %v517, %v516
  %v601 = vpack.c.b16 %v519, %v518
  %v602 = vpack.c.b16 %v521, %v520
  %v603 = vpack.c.b16 %v523, %v522
  %v608 = vunpack.c.l.b16 %v193
  %v609 = vunpack.c.l.b16 %v194
  %v610 = vunpack.c.l.b16 %v195
  %v611 = vunpack.c.l.b16 %v196
  %v612 = vpack.c.b16 %v609, %v608
  %v613 = vpack.c.b16 %v611, %v610
  %vm615 = vcmask 203776
  %v617 = vsel %vm615, %v524, 0
  %v620 = vsel %vm615, %v525, 0
  %v623 = vsel %vm615, %v526, 0
  %v626 = vsel %vm615, %v527, 0
  %v629 = vsel %vm615, %v528, 0
  %v632 = vsel %vm615, %v529, 0
  %v635 = vsel %vm615, %v530, 0
  %v638 = vsel %vm615, %v531, 0
  %v641 = vsel %vm615, %v532, 0
  %v644 = vsel %vm615, %v533, 0
  %v647 = vsel %vm615, %v534, 0
  %v650 = vsel %vm615, %v535, 0
  %v653 = vsel %vm615, %v536, 0
  %v656 = vsel %vm615, %v537, 0
  %v659 = vsel %vm615, %v538, 0
  %v662 = vsel %vm615, %v539, 0
  %v665 = vsel %vm615, %v540, 0
  %v668 = vsel %vm615, %v541, 0
  %v671 = vsel %vm615, %v542, 0
  %v674 = vsel %vm615, %v543, 0
  %v677 = vsel %vm615, %v544, 0
  %v680 = vsel %vm615, %v545, 0
  %v683 = vsel %vm615, %v546, 0
  %v686 = vsel %vm615, %v547, 0
  %v689 = vsel %vm615, %v548, 0
  %v692 = vsel %vm615, %v549, 0
  %v695 = vsel %vm615, %v550, 0
  %v698 = vsel %vm615, %v551, 0
  %v701 = vsel %vm615, %v552, 0
  %v704 = vsel %vm615, %v553, 0
  %v707 = vsel %vm615, %v554, 0
  %v710 = vsel %vm615, %v555, 0
  %v713 = vsel %vm615, %v556, 0
  %v716 = vsel %vm615, %v557, 0
  %v719 = vsel %vm615, %v558, 0
  %v722 = vsel %vm615, %v559, 0
  %v725 = vsel %vm615, %v560, 0
  %v728 = vsel %vm615, %v561, 0
  %v731 = vsel %vm615, %v562, 0
  %v734 = vsel %vm615, %v563, 0
  %v737 = vsel %vm615, %v564, 0
  %v740 = vsel %vm615, %v565, 0
  %v743 = vsel %vm615, %v566, 0
  %v746 = vsel %vm615, %v567, 0
  %v749 = vsel %vm615, %v568, 0
  %v752 = vsel %vm615, %v569, 0
  %v755 = vsel %vm615, %v570, 0
  %v758 = vsel %vm615, %v571, 0
  %v761 = vsel %vm615, %v572, 0
  %v764 = vsel %vm615, %v573, 0
  %v767 = vsel %vm615, %v574, 0
  %v770 = vsel %vm615, %v575, 0
  %v773 = vsel %vm615, %v576, 0
  %v776 = vsel %vm615, %v577, 0
  %v779 = vsel %vm615, %v578, 0
  %v782 = vsel %vm615, %v579, 0
  %v785 = vsel %vm615, %v580, 0
  %v788 = vsel %vm615, %v581, 0
  %v791 = vsel %vm615, %v582, 0
  %v794 = vsel %vm615, %v583, 0
  %v797 = vsel %vm615, %v584, 0
  %v800 = vsel %vm615, %v585, 0
  %v803 = vsel %vm615, %v586, 0
  %v806 = vsel %vm615, %v587, 0
  %v809 = vsel %vm615, %v588, 0
  %v812 = vsel %vm615, %v589, 0
  %v815 = vsel %vm615, %v590, 0
  %v818 = vsel %vm615, %v591, 0
  %v821 = vsel %vm615, %v592, 0
  %v824 = vsel %vm615, %v593, 0
  %v827 = vsel %vm615, %v594, 0
  %v830 = vsel %vm615, %v595, 0
  %v833 = vsel %vm615, %v596, 0
  %v836 = vsel %vm615, %v597, 0
  %v839 = vsel %vm615, %v598, 0
  %v842 = vsel %vm615, %v599, 0
  %v845 = vsel %vm615, %v600, 0
  %v848 = vsel %vm615, %v601, 0
  %v851 = vsel %vm615, %v602, 0
  %v854 = vsel %vm615, %v603, 0
  %vm856 = vcmask 1043456
  %vm857 = vcmask 1044480
  %v858 = vsel %vm856, 4294967295, 65535
  %v859 = vsel %vm857, %v858, 0
  %v861 = vand.u32 %v613, %v859
  %863 = vmatprep.subr.bf16.mxu0 0
  %864 = vmatpush1.bf16.msra.mxu0 %v612
  %865 = vmatprep.subr.bf16.mxu0 0
  %866 = vmatpush1.bf16.msra.mxu0 %v861
  %867 = vmatprep.subr.bf16.mxu0 0
  %868 = vmatpush1.bf16.msra.mxu0 0
  %869 = vmatprep.subr.bf16.mxu0 0
  %870 = vmatpush1.bf16.msra.mxu0 0
  %871 = vmatprep.subr.bf16.mxu0 0
  %872 = vmatpush1.bf16.msra.mxu0 0
  %873 = vmatprep.subr.bf16.mxu0 0
  %874 = vmatpush1.bf16.msra.mxu0 0
  %875 = vmatprep.subr.bf16.mxu0 0
  %876 = vmatpush1.bf16.msra.mxu0 0
  %877 = vmatprep.subr.bf16.mxu0 0
  %878 = vmatpush1.bf16.msra.mxu0 0
  %879 = vmatprep.subr.bf16.mxu0 0
  %880 = vmatpush1.bf16.msra.mxu0 0
  %881 = vmatprep.subr.bf16.mxu0 0
  %882 = vmatpush1.bf16.msra.mxu0 0
  %883 = vmatprep.subr.bf16.mxu0 0
  %884 = vmatpush1.bf16.msra.mxu0 0
  %885 = vmatprep.subr.bf16.mxu0 0
  %886 = vmatpush1.bf16.msra.mxu0 0
  %887 = vmatprep.subr.bf16.mxu0 0
  %888 = vmatpush1.bf16.msra.mxu0 0
  %889 = vmatprep.subr.bf16.mxu0 0
  %890 = vmatpush1.bf16.msra.mxu0 0
  %891 = vmatprep.subr.bf16.mxu0 0
  %892 = vmatpush1.bf16.msra.mxu0 0
  %893 = vmatprep.subr.bf16.mxu0 0
  %894 = vmatpush1.bf16.msra.mxu0 0
  %895 = vmatprep.mubr.bf16.mxu0 0
  %896 = vmatmul.mubr.bf16.gmra.mrb[0].mxu0 %v617
  %v897 = vpop.f32.mrb[0].mxu0
  %v898 = vadd.f32 %v202, %v897
  %v899 = vpop.f32.mrb[0].mxu0
  %v900 = vpop.f32.mrb[0].mxu0
  %v901 = vadd.f32 %v202, %v900
  %v902 = vpop.f32.mrb[0].mxu0
  %903 = vmatprep.mubr.bf16.mxu0 0
  %904 = vmatmul.mubr.bf16.gmra.mrb[0].mxu0 %v620
  %v905 = vpop.f32.mrb[0].mxu0
  %v906 = vadd.f32 %v202, %v905
  %v907 = vpop.f32.mrb[0].mxu0
  %v908 = vpop.f32.mrb[0].mxu0
  %v909 = vadd.f32 %v202, %v908
  %v910 = vpop.f32.mrb[0].mxu0
  %911 = vmatprep.mubr.bf16.mxu0 0
  %912 = vmatmul.mubr.bf16.gmra.mrb[0].mxu0 %v623
  %v913 = vpop.f32.mrb[0].mxu0
  %v914 = vadd.f32 %v202, %v913
  %v915 = vpop.f32.mrb[0].mxu0
  %v916 = vpop.f32.mrb[0].mxu0
  %v917 = vadd.f32 %v202, %v916
  %v918 = vpop.f32.mrb[0].mxu0
  %919 = vmatprep.mubr.bf16.mxu0 0
  %920 = vmatmul.mubr.bf16.gmra.mrb[0].mxu0 %v626
  %v921 = vpop.f32.mrb[0].mxu0
  %v922 = vadd.f32 %v202, %v921
  %v923 = vpop.f32.mrb[0].mxu0
  %v924 = vpop.f32.mrb[0].mxu0
  %v925 = vadd.f32 %v202, %v924
  %v926 = vpop.f32.mrb[0].mxu0
  %927 = vmatprep.mubr.bf16.mxu0 0
  %928 = vmatmul.mubr.bf16.gmra.mrb[0].mxu0 %v629
  %v929 = vpop.f32.mrb[0].mxu0
  %v930 = vadd.f32 %v202, %v929
  %v931 = vpop.f32.mrb[0].mxu0
  %v932 = vpop.f32.mrb[0].mxu0
  %v933 = vadd.f32 %v202, %v932
  %v934 = vpop.f32.mrb[0].mxu0
  %935 = vmatprep.mubr.bf16.mxu0 0
  %936 = vmatmul.mubr.bf16.gmra.mrb[0].mxu0 %v632
  %v937 = vpop.f32.mrb[0].mxu0
  %v938 = vadd.f32 %v202, %v937
  %v939 = vpop.f32.mrb[0].mxu0
  %v940 = vpop.f32.mrb[0].mxu0
  %v941 = vadd.f32 %v202, %v940
  %v942 = vpop.f32.mrb[0].mxu0
  %943 = vmatprep.mubr.bf16.mxu0 0
  %944 = vmatmul.mubr.bf16.gmra.mrb[0].mxu0 %v635
  %v945 = vpop.f32.mrb[0].mxu0
  %v946 = vadd.f32 %v202, %v945
  %v947 = vpop.f32.mrb[0].mxu0
  %v948 = vpop.f32.mrb[0].mxu0
  %v949 = vadd.f32 %v202, %v948
  %v950 = vpop.f32.mrb[0].mxu0
  %951 = vmatprep.mubr.bf16.mxu0 0
  %952 = vmatmul.mubr.bf16.gmra.mrb[0].mxu0 %v638
  %v953 = vpop.f32.mrb[0].mxu0
  %v954 = vadd.f32 %v202, %v953
  %v955 = vpop.f32.mrb[0].mxu0
  %v956 = vpop.f32.mrb[0].mxu0
  %v957 = vadd.f32 %v202, %v956
  %v958 = vpop.f32.mrb[0].mxu0
  %959 = vmatprep.mubr.bf16.mxu0 0
  %960 = vmatmul.mubr.bf16.gmra.mrb[0].mxu0 %v641
  %v961 = vpop.f32.mrb[0].mxu0
  %v962 = vadd.f32 %v202, %v961
  %v963 = vpop.f32.mrb[0].mxu0
  %v964 = vpop.f32.mrb[0].mxu0
  %v965 = vadd.f32 %v202, %v964
  %v966 = vpop.f32.mrb[0].mxu0
  %967 = vmatprep.mubr.bf16.mxu0 0
  %968 = vmatmul.mubr.bf16.gmra.mrb[0].mxu0 %v644
  %v969 = vpop.f32.mrb[0].mxu0
  %v970 = vadd.f32 %v202, %v969
  %v971 = vpop.f32.mrb[0].mxu0
  %v972 = vpop.f32.mrb[0].mxu0
  %v973 = vadd.f32 %v202, %v972
  %v974 = vpop.f32.mrb[0].mxu0
  %975 = vmatprep.mubr.bf16.mxu0 0
  %976 = vmatmul.mubr.bf16.gmra.mrb[0].mxu0 %v647
  %v977 = vpop.f32.mrb[0].mxu0
  %v978 = vadd.f32 %v202, %v977
  %v979 = vpop.f32.mrb[0].mxu0
  %v980 = vpop.f32.mrb[0].mxu0
  %v981 = vadd.f32 %v202, %v980
  %v982 = vpop.f32.mrb[0].mxu0
  %983 = vmatprep.mubr.bf16.mxu0 0
  %984 = vmatmul.mubr.bf16.gmra.mrb[0].mxu0 %v650
  %v985 = vpop.f32.mrb[0].mxu0
  %v986 = vadd.f32 %v202, %v985
  %v987 = vpop.f32.mrb[0].mxu0
  %v988 = vpop.f32.mrb[0].mxu0
  %v989 = vadd.f32 %v202, %v988
  %v990 = vpop.f32.mrb[0].mxu0
  %991 = vmatprep.mubr.bf16.mxu0 0
  %992 = vmatmul.mubr.bf16.gmra.mrb[0].mxu0 %v653
  %v993 = vpop.f32.mrb[0].mxu0
  %v994 = vadd.f32 %v202, %v993
  %v995 = vpop.f32.mrb[0].mxu0
  %v996 = vpop.f32.mrb[0].mxu0
  %v997 = vadd.f32 %v202, %v996
  %v998 = vpop.f32.mrb[0].mxu0
  %999 = vmatprep.mubr.bf16.mxu0 0
  %1000 = vmatmul.mubr.bf16.gmra.mrb[0].mxu0 %v656
  %v1001 = vpop.f32.mrb[0].mxu0
  %v1002 = vadd.f32 %v202, %v1001
  %v1003 = vpop.f32.mrb[0].mxu0
  %v1004 = vpop.f32.mrb[0].mxu0
  %v1005 = vadd.f32 %v202, %v1004
  %v1006 = vpop.f32.mrb[0].mxu0
  %1007 = vmatprep.mubr.bf16.mxu0 0
  %1008 = vmatmul.mubr.bf16.gmra.mrb[0].mxu0 %v659
  %v1009 = vpop.f32.mrb[0].mxu0
  %v1010 = vadd.f32 %v202, %v1009
  %v1011 = vpop.f32.mrb[0].mxu0
  %v1012 = vpop.f32.mrb[0].mxu0
  %v1013 = vadd.f32 %v202, %v1012
  %v1014 = vpop.f32.mrb[0].mxu0
  %1015 = vmatprep.mubr.bf16.mxu0 0
  %1016 = vmatmul.mubr.bf16.gmra.mrb[0].mxu0 %v662
  %v1017 = vpop.f32.mrb[0].mxu0
  %v1018 = vadd.f32 %v202, %v1017
  %v1019 = vpop.f32.mrb[0].mxu0
  %v1020 = vpop.f32.mrb[0].mxu0
  %v1021 = vadd.f32 %v202, %v1020
  %v1022 = vpop.f32.mrb[0].mxu0
  %1023 = vmatprep.mubr.bf16.mxu0 0
  %1024 = vmatmul.mubr.bf16.gmra.mrb[0].mxu0 %v665
  %v1025 = vpop.f32.mrb[0].mxu0
  %v1026 = vadd.f32 %v202, %v1025
  %v1027 = vpop.f32.mrb[0].mxu0
  %v1028 = vpop.f32.mrb[0].mxu0
  %v1029 = vadd.f32 %v202, %v1028
  %v1030 = vpop.f32.mrb[0].mxu0
  %1031 = vmatprep.mubr.bf16.mxu0 0
  %1032 = vmatmul.mubr.bf16.gmra.mrb[0].mxu0 %v668
  %v1033 = vpop.f32.mrb[0].mxu0
  %v1034 = vadd.f32 %v202, %v1033
  %v1035 = vpop.f32.mrb[0].mxu0
  %v1036 = vpop.f32.mrb[0].mxu0
  %v1037 = vadd.f32 %v202, %v1036
  %v1038 = vpop.f32.mrb[0].mxu0
  %1039 = vmatprep.mubr.bf16.mxu0 0
  %1040 = vmatmul.mubr.bf16.gmra.mrb[0].mxu0 %v671
  %v1041 = vpop.f32.mrb[0].mxu0
  %v1042 = vadd.f32 %v202, %v1041
  %v1043 = vpop.f32.mrb[0].mxu0
  %v1044 = vpop.f32.mrb[0].mxu0
  %v1045 = vadd.f32 %v202, %v1044
  %v1046 = vpop.f32.mrb[0].mxu0
  %1047 = vmatprep.mubr.bf16.mxu0 0
  %1048 = vmatmul.mubr.bf16.gmra.mrb[0].mxu0 %v674
  %v1049 = vpop.f32.mrb[0].mxu0
  %v1050 = vadd.f32 %v202, %v1049
  %v1051 = vpop.f32.mrb[0].mxu0
  %v1052 = vpop.f32.mrb[0].mxu0
  %v1053 = vadd.f32 %v202, %v1052
  %v1054 = vpop.f32.mrb[0].mxu0
  %1055 = vmatprep.mubr.bf16.mxu0 0
  %1056 = vmatmul.mubr.bf16.gmra.mrb[0].mxu0 %v677
  %v1057 = vpop.f32.mrb[0].mxu0
  %v1058 = vadd.f32 %v202, %v1057
  %v1059 = vpop.f32.mrb[0].mxu0
  %v1060 = vpop.f32.mrb[0].mxu0
  %v1061 = vadd.f32 %v202, %v1060
  %v1062 = vpop.f32.mrb[0].mxu0
  %1063 = vmatprep.mubr.bf16.mxu0 0
  %1064 = vmatmul.mubr.bf16.gmra.mrb[0].mxu0 %v680
  %v1065 = vpop.f32.mrb[0].mxu0
  %v1066 = vadd.f32 %v202, %v1065
  %v1067 = vpop.f32.mrb[0].mxu0
  %v1068 = vpop.f32.mrb[0].mxu0
  %v1069 = vadd.f32 %v202, %v1068
  %v1070 = vpop.f32.mrb[0].mxu0
  %1071 = vmatprep.mubr.bf16.mxu0 0
  %1072 = vmatmul.mubr.bf16.gmra.mrb[0].mxu0 %v683
  %v1073 = vpop.f32.mrb[0].mxu0
  %v1074 = vadd.f32 %v202, %v1073
  %v1075 = vpop.f32.mrb[0].mxu0
  %v1076 = vpop.f32.mrb[0].mxu0
  %v1077 = vadd.f32 %v202, %v1076
  %v1078 = vpop.f32.mrb[0].mxu0
  %1079 = vmatprep.mubr.bf16.mxu0 0
  %1080 = vmatmul.mubr.bf16.gmra.mrb[0].mxu0 %v686
  %v1081 = vpop.f32.mrb[0].mxu0
  %v1082 = vadd.f32 %v202, %v1081
  %v1083 = vpop.f32.mrb[0].mxu0
  %v1084 = vpop.f32.mrb[0].mxu0
  %v1085 = vadd.f32 %v202, %v1084
  %v1086 = vpop.f32.mrb[0].mxu0
  %1087 = vmatprep.mubr.bf16.mxu0 0
  %1088 = vmatmul.mubr.bf16.gmra.mrb[0].mxu0 %v689
  %v1089 = vpop.f32.mrb[0].mxu0
  %v1090 = vadd.f32 %v202, %v1089
  %v1091 = vpop.f32.mrb[0].mxu0
  %v1092 = vpop.f32.mrb[0].mxu0
  %v1093 = vadd.f32 %v202, %v1092
  %v1094 = vpop.f32.mrb[0].mxu0
  %1095 = vmatprep.mubr.bf16.mxu0 0
  %1096 = vmatmul.mubr.bf16.gmra.mrb[0].mxu0 %v692
  %v1097 = vpop.f32.mrb[0].mxu0
  %v1098 = vadd.f32 %v202, %v1097
  %v1099 = vpop.f32.mrb[0].mxu0
  %v1100 = vpop.f32.mrb[0].mxu0
  %v1101 = vadd.f32 %v202, %v1100
  %v1102 = vpop.f32.mrb[0].mxu0
  %1103 = vmatprep.mubr.bf16.mxu0 0
  %1104 = vmatmul.mubr.bf16.gmra.mrb[0].mxu0 %v695
  %v1105 = vpop.f32.mrb[0].mxu0
  %v1106 = vadd.f32 %v202, %v1105
  %v1107 = vpop.f32.mrb[0].mxu0
  %v1108 = vpop.f32.mrb[0].mxu0
  %v1109 = vadd.f32 %v202, %v1108
  %v1110 = vpop.f32.mrb[0].mxu0
  %1111 = vmatprep.mubr.bf16.mxu0 0
  %1112 = vmatmul.mubr.bf16.gmra.mrb[0].mxu0 %v698
  %v1113 = vpop.f32.mrb[0].mxu0
  %v1114 = vadd.f32 %v202, %v1113
  %v1115 = vpop.f32.mrb[0].mxu0
  %v1116 = vpop.f32.mrb[0].mxu0
  %v1117 = vadd.f32 %v202, %v1116
  %v1118 = vpop.f32.mrb[0].mxu0
  %1119 = vmatprep.mubr.bf16.mxu0 0
  %1120 = vmatmul.mubr.bf16.gmra.mrb[0].mxu0 %v701
  %v1121 = vpop.f32.mrb[0].mxu0
  %v1122 = vadd.f32 %v202, %v1121
  %v1123 = vpop.f32.mrb[0].mxu0
  %v1124 = vpop.f32.mrb[0].mxu0
  %v1125 = vadd.f32 %v202, %v1124
  %v1126 = vpop.f32.mrb[0].mxu0
  %1127 = vmatprep.mubr.bf16.mxu0 0
  %1128 = vmatmul.mubr.bf16.gmra.mrb[0].mxu0 %v704
  %v1129 = vpop.f32.mrb[0].mxu0
  %v1130 = vadd.f32 %v202, %v1129
  %v1131 = vpop.f32.mrb[0].mxu0
  %v1132 = vpop.f32.mrb[0].mxu0
  %v1133 = vadd.f32 %v202, %v1132
  %v1134 = vpop.f32.mrb[0].mxu0
  %1135 = vmatprep.mubr.bf16.mxu0 0
  %1136 = vmatmul.mubr.bf16.gmra.mrb[0].mxu0 %v707
  %v1137 = vpop.f32.mrb[0].mxu0
  %v1138 = vadd.f32 %v202, %v1137
  %v1139 = vpop.f32.mrb[0].mxu0
  %v1140 = vpop.f32.mrb[0].mxu0
  %v1141 = vadd.f32 %v202, %v1140
  %v1142 = vpop.f32.mrb[0].mxu0
  %1143 = vmatprep.mubr.bf16.mxu0 0
  %1144 = vmatmul.mubr.bf16.gmra.mrb[0].mxu0 %v710
  %v1145 = vpop.f32.mrb[0].mxu0
  %v1146 = vadd.f32 %v202, %v1145
  %v1147 = vpop.f32.mrb[0].mxu0
  %v1148 = vpop.f32.mrb[0].mxu0
  %v1149 = vadd.f32 %v202, %v1148
  %v1150 = vpop.f32.mrb[0].mxu0
  %1151 = vmatprep.mubr.bf16.mxu0 0
  %1152 = vmatmul.mubr.bf16.gmra.mrb[0].mxu0 %v713
  %v1153 = vpop.f32.mrb[0].mxu0
  %v1154 = vadd.f32 %v202, %v1153
  %v1155 = vpop.f32.mrb[0].mxu0
  %v1156 = vpop.f32.mrb[0].mxu0
  %v1157 = vadd.f32 %v202, %v1156
  %v1158 = vpop.f32.mrb[0].mxu0
  %1159 = vmatprep.mubr.bf16.mxu0 0
  %1160 = vmatmul.mubr.bf16.gmra.mrb[0].mxu0 %v716
  %v1161 = vpop.f32.mrb[0].mxu0
  %v1162 = vadd.f32 %v202, %v1161
  %v1163 = vpop.f32.mrb[0].mxu0
  %v1164 = vpop.f32.mrb[0].mxu0
  %v1165 = vadd.f32 %v202, %v1164
  %v1166 = vpop.f32.mrb[0].mxu0
  %1167 = vmatprep.mubr.bf16.mxu0 0
  %1168 = vmatmul.mubr.bf16.gmra.mrb[0].mxu0 %v719
  %v1169 = vpop.f32.mrb[0].mxu0
  %v1170 = vadd.f32 %v202, %v1169
  %v1171 = vpop.f32.mrb[0].mxu0
  %v1172 = vpop.f32.mrb[0].mxu0
  %v1173 = vadd.f32 %v202, %v1172
  %v1174 = vpop.f32.mrb[0].mxu0
  %1175 = vmatprep.mubr.bf16.mxu0 0
  %1176 = vmatmul.mubr.bf16.gmra.mrb[0].mxu0 %v722
  %v1177 = vpop.f32.mrb[0].mxu0
  %v1178 = vadd.f32 %v202, %v1177
  %v1179 = vpop.f32.mrb[0].mxu0
  %v1180 = vpop.f32.mrb[0].mxu0
  %v1181 = vadd.f32 %v202, %v1180
  %v1182 = vpop.f32.mrb[0].mxu0
  %1183 = vmatprep.mubr.bf16.mxu0 0
  %1184 = vmatmul.mubr.bf16.gmra.mrb[0].mxu0 %v725
  %v1185 = vpop.f32.mrb[0].mxu0
  %v1186 = vadd.f32 %v202, %v1185
  %v1187 = vpop.f32.mrb[0].mxu0
  %v1188 = vpop.f32.mrb[0].mxu0
  %v1189 = vadd.f32 %v202, %v1188
  %v1190 = vpop.f32.mrb[0].mxu0
  %1191 = vmatprep.mubr.bf16.mxu0 0
  %1192 = vmatmul.mubr.bf16.gmra.mrb[0].mxu0 %v728
  %v1193 = vpop.f32.mrb[0].mxu0
  %v1194 = vadd.f32 %v202, %v1193
  %v1195 = vpop.f32.mrb[0].mxu0
  %v1196 = vpop.f32.mrb[0].mxu0
  %v1197 = vadd.f32 %v202, %v1196
  %v1198 = vpop.f32.mrb[0].mxu0
  %1199 = vmatprep.mubr.bf16.mxu0 0
  %1200 = vmatmul.mubr.bf16.gmra.mrb[0].mxu0 %v731
  %v1201 = vpop.f32.mrb[0].mxu0
  %v1202 = vadd.f32 %v202, %v1201
  %v1203 = vpop.f32.mrb[0].mxu0
  %v1204 = vpop.f32.mrb[0].mxu0
  %v1205 = vadd.f32 %v202, %v1204
  %v1206 = vpop.f32.mrb[0].mxu0
  %1207 = vmatprep.mubr.bf16.mxu0 0
  %1208 = vmatmul.mubr.bf16.gmra.mrb[0].mxu0 %v734
  %v1209 = vpop.f32.mrb[0].mxu0
  %v1210 = vpop.f32.mrb[0].mxu0
  %v1211 = vpop.f32.mrb[0].mxu0
  %v1212 = vpop.f32.mrb[0].mxu0
  %1213 = vmatprep.mubr.bf16.mxu0 0
  %1214 = vmatmul.mubr.bf16.gmra.mrb[0].mxu0 %v737
  %v1215 = vpop.f32.mrb[0].mxu0
  %v1216 = vadd.f32 %v202, %v1215
  %v1217 = vpop.f32.mrb[0].mxu0
  %v1218 = vpop.f32.mrb[0].mxu0
  %v1219 = vadd.f32 %v202, %v1218
  %v1220 = vpop.f32.mrb[0].mxu0
  %1221 = vmatprep.mubr.bf16.mxu0 0
  %1222 = vmatmul.mubr.bf16.gmra.mrb[0].mxu0 %v740
  %v1223 = vpop.f32.mrb[0].mxu0
  %v1224 = vadd.f32 %v202, %v1223
  %v1225 = vpop.f32.mrb[0].mxu0
  %v1226 = vpop.f32.mrb[0].mxu0
  %v1227 = vadd.f32 %v202, %v1226
  %v1228 = vpop.f32.mrb[0].mxu0
  %1229 = vmatprep.mubr.bf16.mxu0 0
  %1230 = vmatmul.mubr.bf16.gmra.mrb[0].mxu0 %v743
  %v1231 = vpop.f32.mrb[0].mxu0
  %v1232 = vadd.f32 %v202, %v1231
  %v1233 = vpop.f32.mrb[0].mxu0
  %v1234 = vpop.f32.mrb[0].mxu0
  %v1235 = vadd.f32 %v202, %v1234
  %v1236 = vpop.f32.mrb[0].mxu0
  %1237 = vmatprep.mubr.bf16.mxu0 0
  %1238 = vmatmul.mubr.bf16.gmra.mrb[0].mxu0 %v746
  %v1239 = vpop.f32.mrb[0].mxu0
  %v1240 = vadd.f32 %v202, %v1239
  %v1241 = vpop.f32.mrb[0].mxu0
  %v1242 = vpop.f32.mrb[0].mxu0
  %v1243 = vadd.f32 %v202, %v1242
  %v1244 = vpop.f32.mrb[0].mxu0
  %1245 = vmatprep.mubr.bf16.mxu0 0
  %1246 = vmatmul.mubr.bf16.gmra.mrb[0].mxu0 %v749
  %v1247 = vpop.f32.mrb[0].mxu0
  %v1248 = vadd.f32 %v202, %v1247
  %v1249 = vpop.f32.mrb[0].mxu0
  %v1250 = vpop.f32.mrb[0].mxu0
  %v1251 = vadd.f32 %v202, %v1250
  %v1252 = vpop.f32.mrb[0].mxu0
  %1253 = vmatprep.mubr.bf16.mxu0 0
  %1254 = vmatmul.mubr.bf16.gmra.mrb[0].mxu0 %v752
  %v1255 = vpop.f32.mrb[0].mxu0
  %v1256 = vadd.f32 %v202, %v1255
  %v1257 = vpop.f32.mrb[0].mxu0
  %v1258 = vpop.f32.mrb[0].mxu0
  %v1259 = vadd.f32 %v202, %v1258
  %v1260 = vpop.f32.mrb[0].mxu0
  %1261 = vmatprep.mubr.bf16.mxu0 0
  %1262 = vmatmul.mubr.bf16.gmra.mrb[0].mxu0 %v755
  %v1263 = vpop.f32.mrb[0].mxu0
  %v1264 = vadd.f32 %v202, %v1263
  %v1265 = vpop.f32.mrb[0].mxu0
  %v1266 = vpop.f32.mrb[0].mxu0
  %v1267 = vadd.f32 %v202, %v1266
  %v1268 = vpop.f32.mrb[0].mxu0
  %1269 = vmatprep.mubr.bf16.mxu0 0
  %1270 = vmatmul.mubr.bf16.gmra.mrb[0].mxu0 %v758
  %v1271 = vpop.f32.mrb[0].mxu0
  %v1272 = vadd.f32 %v202, %v1271
  %v1273 = vpop.f32.mrb[0].mxu0
  %v1274 = vpop.f32.mrb[0].mxu0
  %v1275 = vadd.f32 %v202, %v1274
  %v1276 = vpop.f32.mrb[0].mxu0
  %1277 = vmatprep.mubr.bf16.mxu0 0
  %1278 = vmatmul.mubr.bf16.gmra.mrb[0].mxu0 %v761
  %v1279 = vpop.f32.mrb[0].mxu0
  %v1280 = vadd.f32 %v202, %v1279
  %v1281 = vpop.f32.mrb[0].mxu0
  %v1282 = vpop.f32.mrb[0].mxu0
  %v1283 = vadd.f32 %v202, %v1282
  %v1284 = vpop.f32.mrb[0].mxu0
  %1285 = vmatprep.mubr.bf16.mxu0 0
  %1286 = vmatmul.mubr.bf16.gmra.mrb[0].mxu0 %v764
  %v1287 = vpop.f32.mrb[0].mxu0
  %v1288 = vadd.f32 %v202, %v1287
  %v1289 = vpop.f32.mrb[0].mxu0
  %v1290 = vpop.f32.mrb[0].mxu0
  %v1291 = vadd.f32 %v202, %v1290
  %v1292 = vpop.f32.mrb[0].mxu0
  %1293 = vmatprep.mubr.bf16.mxu0 0
  %1294 = vmatmul.mubr.bf16.gmra.mrb[0].mxu0 %v767
  %v1295 = vpop.f32.mrb[0].mxu0
  %v1296 = vadd.f32 %v202, %v1295
  %v1297 = vpop.f32.mrb[0].mxu0
  %v1298 = vpop.f32.mrb[0].mxu0
  %v1299 = vadd.f32 %v202, %v1298
  %v1300 = vpop.f32.mrb[0].mxu0
  %1301 = vmatprep.mubr.bf16.mxu0 0
  %1302 = vmatmul.mubr.bf16.gmra.mrb[0].mxu0 %v770
  %v1303 = vpop.f32.mrb[0].mxu0
  %v1304 = vadd.f32 %v202, %v1303
  %v1305 = vpop.f32.mrb[0].mxu0
  %v1306 = vpop.f32.mrb[0].mxu0
  %v1307 = vadd.f32 %v202, %v1306
  %v1308 = vpop.f32.mrb[0].mxu0
  %1309 = vmatprep.mubr.bf16.mxu0 0
  %1310 = vmatmul.mubr.bf16.gmra.mrb[0].mxu0 %v773
  %v1311 = vpop.f32.mrb[0].mxu0
  %v1312 = vadd.f32 %v202, %v1311
  %v1313 = vpop.f32.mrb[0].mxu0
  %v1314 = vpop.f32.mrb[0].mxu0
  %v1315 = vadd.f32 %v202, %v1314
  %v1316 = vpop.f32.mrb[0].mxu0
  %1317 = vmatprep.mubr.bf16.mxu0 0
  %1318 = vmatmul.mubr.bf16.gmra.mrb[0].mxu0 %v776
  %v1319 = vpop.f32.mrb[0].mxu0
  %v1320 = vadd.f32 %v202, %v1319
  %v1321 = vpop.f32.mrb[0].mxu0
  %v1322 = vpop.f32.mrb[0].mxu0
  %v1323 = vadd.f32 %v202, %v1322
  %v1324 = vpop.f32.mrb[0].mxu0
  %1325 = vmatprep.mubr.bf16.mxu0 0
  %1326 = vmatmul.mubr.bf16.gmra.mrb[0].mxu0 %v779
  %v1327 = vpop.f32.mrb[0].mxu0
  %v1328 = vadd.f32 %v202, %v1327
  %v1329 = vpop.f32.mrb[0].mxu0
  %v1330 = vpop.f32.mrb[0].mxu0
  %v1331 = vadd.f32 %v202, %v1330
  %v1332 = vpop.f32.mrb[0].mxu0
  %1333 = vmatprep.mubr.bf16.mxu0 0
  %1334 = vmatmul.mubr.bf16.gmra.mrb[0].mxu0 %v782
  %v1335 = vpop.f32.mrb[0].mxu0
  %v1336 = vadd.f32 %v202, %v1335
  %v1337 = vpop.f32.mrb[0].mxu0
  %v1338 = vpop.f32.mrb[0].mxu0
  %v1339 = vadd.f32 %v202, %v1338
  %v1340 = vpop.f32.mrb[0].mxu0
  %1341 = vmatprep.mubr.bf16.mxu0 0
  %1342 = vmatmul.mubr.bf16.gmra.mrb[0].mxu0 %v785
  %v1343 = vpop.f32.mrb[0].mxu0
  %v1344 = vadd.f32 %v202, %v1343
  %v1345 = vpop.f32.mrb[0].mxu0
  %v1346 = vpop.f32.mrb[0].mxu0
  %v1347 = vadd.f32 %v202, %v1346
  %v1348 = vpop.f32.mrb[0].mxu0
  %1349 = vmatprep.mubr.bf16.mxu0 0
  %1350 = vmatmul.mubr.bf16.gmra.mrb[0].mxu0 %v788
  %v1351 = vpop.f32.mrb[0].mxu0
  %v1352 = vadd.f32 %v202, %v1351
  %v1353 = vpop.f32.mrb[0].mxu0
  %v1354 = vpop.f32.mrb[0].mxu0
  %v1355 = vadd.f32 %v202, %v1354
  %v1356 = vpop.f32.mrb[0].mxu0
  %1357 = vmatprep.mubr.bf16.mxu0 0
  %1358 = vmatmul.mubr.bf16.gmra.mrb[0].mxu0 %v791
  %v1359 = vpop.f32.mrb[0].mxu0
  %v1360 = vadd.f32 %v202, %v1359
  %v1361 = vpop.f32.mrb[0].mxu0
  %v1362 = vpop.f32.mrb[0].mxu0
  %v1363 = vadd.f32 %v202, %v1362
  %v1364 = vpop.f32.mrb[0].mxu0
  %1365 = vmatprep.mubr.bf16.mxu0 0
  %1366 = vmatmul.mubr.bf16.gmra.mrb[0].mxu0 %v794
  %v1367 = vpop.f32.mrb[0].mxu0
  %v1368 = vadd.f32 %v202, %v1367
  %v1369 = vpop.f32.mrb[0].mxu0
  %v1370 = vpop.f32.mrb[0].mxu0
  %v1371 = vadd.f32 %v202, %v1370
  %v1372 = vpop.f32.mrb[0].mxu0
  %1373 = vmatprep.mubr.bf16.mxu0 0
  %1374 = vmatmul.mubr.bf16.gmra.mrb[0].mxu0 %v797
  %v1375 = vpop.f32.mrb[0].mxu0
  %v1376 = vadd.f32 %v202, %v1375
  %v1377 = vpop.f32.mrb[0].mxu0
  %v1378 = vpop.f32.mrb[0].mxu0
  %v1379 = vadd.f32 %v202, %v1378
  %v1380 = vpop.f32.mrb[0].mxu0
  %1381 = vmatprep.mubr.bf16.mxu0 0
  %1382 = vmatmul.mubr.bf16.gmra.mrb[0].mxu0 %v800
  %v1383 = vpop.f32.mrb[0].mxu0
  %v1384 = vadd.f32 %v202, %v1383
  %v1385 = vpop.f32.mrb[0].mxu0
  %v1386 = vpop.f32.mrb[0].mxu0
  %v1387 = vadd.f32 %v202, %v1386
  %v1388 = vpop.f32.mrb[0].mxu0
  %1389 = vmatprep.mubr.bf16.mxu0 0
  %1390 = vmatmul.mubr.bf16.gmra.mrb[0].mxu0 %v803
  %v1391 = vpop.f32.mrb[0].mxu0
  %v1392 = vadd.f32 %v202, %v1391
  %v1393 = vpop.f32.mrb[0].mxu0
  %v1394 = vpop.f32.mrb[0].mxu0
  %v1395 = vadd.f32 %v202, %v1394
  %v1396 = vpop.f32.mrb[0].mxu0
  %1397 = vmatprep.mubr.bf16.mxu0 0
  %1398 = vmatmul.mubr.bf16.gmra.mrb[0].mxu0 %v806
  %v1399 = vpop.f32.mrb[0].mxu0
  %v1400 = vadd.f32 %v202, %v1399
  %v1401 = vpop.f32.mrb[0].mxu0
  %v1402 = vpop.f32.mrb[0].mxu0
  %v1403 = vadd.f32 %v202, %v1402
  %v1404 = vpop.f32.mrb[0].mxu0
  %1405 = vmatprep.mubr.bf16.mxu0 0
  %1406 = vmatmul.mubr.bf16.gmra.mrb[0].mxu0 %v809
  %v1407 = vpop.f32.mrb[0].mxu0
  %v1408 = vadd.f32 %v202, %v1407
  %v1409 = vpop.f32.mrb[0].mxu0
  %v1410 = vpop.f32.mrb[0].mxu0
  %v1411 = vadd.f32 %v202, %v1410
  %v1412 = vpop.f32.mrb[0].mxu0
  %1413 = vmatprep.mubr.bf16.mxu0 0
  %1414 = vmatmul.mubr.bf16.gmra.mrb[0].mxu0 %v812
  %v1415 = vpop.f32.mrb[0].mxu0
  %v1416 = vadd.f32 %v202, %v1415
  %v1417 = vpop.f32.mrb[0].mxu0
  %v1418 = vpop.f32.mrb[0].mxu0
  %v1419 = vadd.f32 %v202, %v1418
  %v1420 = vpop.f32.mrb[0].mxu0
  %1421 = vmatprep.mubr.bf16.mxu0 0
  %1422 = vmatmul.mubr.bf16.gmra.mrb[0].mxu0 %v815
  %v1423 = vpop.f32.mrb[0].mxu0
  %v1424 = vadd.f32 %v202, %v1423
  %v1425 = vpop.f32.mrb[0].mxu0
  %v1426 = vpop.f32.mrb[0].mxu0
  %v1427 = vadd.f32 %v202, %v1426
  %v1428 = vpop.f32.mrb[0].mxu0
  %1429 = vmatprep.mubr.bf16.mxu0 0
  %1430 = vmatmul.mubr.bf16.gmra.mrb[0].mxu0 %v818
  %v1431 = vpop.f32.mrb[0].mxu0
  %v1432 = vadd.f32 %v202, %v1431
  %v1433 = vpop.f32.mrb[0].mxu0
  %v1434 = vpop.f32.mrb[0].mxu0
  %v1435 = vadd.f32 %v202, %v1434
  %v1436 = vpop.f32.mrb[0].mxu0
  %1437 = vmatprep.mubr.bf16.mxu0 0
  %1438 = vmatmul.mubr.bf16.gmra.mrb[0].mxu0 %v821
  %v1439 = vpop.f32.mrb[0].mxu0
  %v1440 = vadd.f32 %v202, %v1439
  %v1441 = vpop.f32.mrb[0].mxu0
  %v1442 = vpop.f32.mrb[0].mxu0
  %v1443 = vadd.f32 %v202, %v1442
  %v1444 = vpop.f32.mrb[0].mxu0
  %1445 = vmatprep.mubr.bf16.mxu0 0
  %1446 = vmatmul.mubr.bf16.gmra.mrb[0].mxu0 %v824
  %v1447 = vpop.f32.mrb[0].mxu0
  %v1448 = vadd.f32 %v202, %v1447
  %v1449 = vpop.f32.mrb[0].mxu0
  %v1450 = vpop.f32.mrb[0].mxu0
  %v1451 = vadd.f32 %v202, %v1450
  %v1452 = vpop.f32.mrb[0].mxu0
  %1453 = vmatprep.mubr.bf16.mxu0 0
  %1454 = vmatmul.mubr.bf16.gmra.mrb[0].mxu0 %v827
  %v1455 = vpop.f32.mrb[0].mxu0
  %v1456 = vadd.f32 %v202, %v1455
  %v1457 = vpop.f32.mrb[0].mxu0
  %v1458 = vpop.f32.mrb[0].mxu0
  %v1459 = vadd.f32 %v202, %v1458
  %v1460 = vpop.f32.mrb[0].mxu0
  %1461 = vmatprep.mubr.bf16.mxu0 0
  %1462 = vmatmul.mubr.bf16.gmra.mrb[0].mxu0 %v830
  %v1463 = vpop.f32.mrb[0].mxu0
  %v1464 = vadd.f32 %v202, %v1463
  %v1465 = vpop.f32.mrb[0].mxu0
  %v1466 = vpop.f32.mrb[0].mxu0
  %v1467 = vadd.f32 %v202, %v1466
  %v1468 = vpop.f32.mrb[0].mxu0
  %1469 = vmatprep.mubr.bf16.mxu0 0
  %1470 = vmatmul.mubr.bf16.gmra.mrb[0].mxu0 %v833
  %v1471 = vpop.f32.mrb[0].mxu0
  %v1472 = vadd.f32 %v202, %v1471
  %v1473 = vpop.f32.mrb[0].mxu0
  %v1474 = vpop.f32.mrb[0].mxu0
  %v1475 = vadd.f32 %v202, %v1474
  %v1476 = vpop.f32.mrb[0].mxu0
  %1477 = vmatprep.mubr.bf16.mxu0 0
  %1478 = vmatmul.mubr.bf16.gmra.mrb[0].mxu0 %v836
  %v1479 = vpop.f32.mrb[0].mxu0
  %v1480 = vadd.f32 %v202, %v1479
  %v1481 = vpop.f32.mrb[0].mxu0
  %v1482 = vpop.f32.mrb[0].mxu0
  %v1483 = vadd.f32 %v202, %v1482
  %v1484 = vpop.f32.mrb[0].mxu0
  %1485 = vmatprep.mubr.bf16.mxu0 0
  %1486 = vmatmul.mubr.bf16.gmra.mrb[0].mxu0 %v839
  %v1487 = vpop.f32.mrb[0].mxu0
  %v1488 = vadd.f32 %v202, %v1487
  %v1489 = vpop.f32.mrb[0].mxu0
  %v1490 = vpop.f32.mrb[0].mxu0
  %v1491 = vadd.f32 %v202, %v1490
  %v1492 = vpop.f32.mrb[0].mxu0
  %1493 = vmatprep.mubr.bf16.mxu0 0
  %1494 = vmatmul.mubr.bf16.gmra.mrb[0].mxu0 %v842
  %v1495 = vpop.f32.mrb[0].mxu0
  %v1496 = vadd.f32 %v202, %v1495
  %v1497 = vpop.f32.mrb[0].mxu0
  %v1498 = vpop.f32.mrb[0].mxu0
  %v1499 = vadd.f32 %v202, %v1498
  %v1500 = vpop.f32.mrb[0].mxu0
  %1501 = vmatprep.mubr.bf16.mxu0 0
  %1502 = vmatmul.mubr.bf16.gmra.mrb[0].mxu0 %v845
  %v1503 = vpop.f32.mrb[0].mxu0
  %v1504 = vadd.f32 %v202, %v1503
  %v1505 = vpop.f32.mrb[0].mxu0
  %v1506 = vpop.f32.mrb[0].mxu0
  %v1507 = vadd.f32 %v202, %v1506
  %v1508 = vpop.f32.mrb[0].mxu0
  %1509 = vmatprep.mubr.bf16.mxu0 0
  %1510 = vmatmul.mubr.bf16.gmra.mrb[0].mxu0 %v848
  %v1511 = vpop.f32.mrb[0].mxu0
  %v1512 = vadd.f32 %v202, %v1511
  %v1513 = vpop.f32.mrb[0].mxu0
  %v1514 = vpop.f32.mrb[0].mxu0
  %v1515 = vadd.f32 %v202, %v1514
  %v1516 = vpop.f32.mrb[0].mxu0
  %1517 = vmatprep.mubr.bf16.mxu0 0
  %1518 = vmatmul.mubr.bf16.gmra.mrb[0].mxu0 %v851
  %v1519 = vpop.f32.mrb[0].mxu0
  %v1520 = vadd.f32 %v202, %v1519
  %v1521 = vpop.f32.mrb[0].mxu0
  %v1522 = vpop.f32.mrb[0].mxu0
  %v1523 = vadd.f32 %v202, %v1522
  %v1524 = vpop.f32.mrb[0].mxu0
  %1525 = vmatprep.mubr.bf16.mxu0 0
  %1526 = vmatmul.mubr.bf16.gmra.mrb[0].mxu0 %v854
  %v1527 = vpop.f32.mrb[0].mxu0
  %v1528 = vpop.f32.mrb[0].mxu0
  %v1529 = vpop.f32.mrb[0].mxu0
  %v1530 = vpop.f32.mrb[0].mxu0
  %1531 = vdwg.mxu0
  %v1532 = vmax.f32 %v898, 0.0
  %v1533 = vmax.f32 %v901, 0.0
  %v1534 = vmax.f32 %v906, 0.0
  %v1535 = vmax.f32 %v909, 0.0
  %v1536 = vmax.f32 %v914, 0.0
  %v1537 = vmax.f32 %v917, 0.0
  %v1538 = vmax.f32 %v922, 0.0
  %v1539 = vmax.f32 %v925, 0.0
  %v1540 = vmax.f32 %v930, 0.0
  %v1541 = vmax.f32 %v933, 0.0
  %v1542 = vmax.f32 %v938, 0.0
  %v1543 = vmax.f32 %v941, 0.0
  %v1544 = vmax.f32 %v946, 0.0
  %v1545 = vmax.f32 %v949, 0.0
  %v1546 = vmax.f32 %v954, 0.0
  %v1547 = vmax.f32 %v957, 0.0
  %v1548 = vmax.f32 %v962, 0.0
  %v1549 = vmax.f32 %v965, 0.0
  %v1550 = vmax.f32 %v970, 0.0
  %v1551 = vmax.f32 %v973, 0.0
  %v1552 = vmax.f32 %v978, 0.0
  %v1553 = vmax.f32 %v981, 0.0
  %v1554 = vmax.f32 %v986, 0.0
  %v1555 = vmax.f32 %v989, 0.0
  %v1556 = vmax.f32 %v994, 0.0
  %v1557 = vmax.f32 %v997, 0.0
  %v1558 = vmax.f32 %v1002, 0.0
  %v1559 = vmax.f32 %v1005, 0.0
  %v1560 = vmax.f32 %v1010, 0.0
  %v1561 = vmax.f32 %v1013, 0.0
  %v1562 = vmax.f32 %v1018, 0.0
  %v1563 = vmax.f32 %v1021, 0.0
  %v1564 = vmax.f32 %v1026, 0.0
  %v1565 = vmax.f32 %v1029, 0.0
  %v1566 = vmax.f32 %v1034, 0.0
  %v1567 = vmax.f32 %v1037, 0.0
  %v1568 = vmax.f32 %v1042, 0.0
  %v1569 = vmax.f32 %v1045, 0.0
  %v1570 = vmax.f32 %v1050, 0.0
  %v1571 = vmax.f32 %v1053, 0.0
  %v1572 = vmax.f32 %v1058, 0.0
  %v1573 = vmax.f32 %v1061, 0.0
  %v1574 = vmax.f32 %v1066, 0.0
  %v1575 = vmax.f32 %v1069, 0.0
  %v1576 = vmax.f32 %v1074, 0.0
  %v1577 = vmax.f32 %v1077, 0.0
  %v1578 = vmax.f32 %v1082, 0.0
  %v1579 = vmax.f32 %v1085, 0.0
  %v1580 = vmax.f32 %v1090, 0.0
  %v1581 = vmax.f32 %v1093, 0.0
  %v1582 = vmax.f32 %v1098, 0.0
  %v1583 = vmax.f32 %v1101, 0.0
  %v1584 = vmax.f32 %v1106, 0.0
  %v1585 = vmax.f32 %v1109, 0.0
  %v1586 = vmax.f32 %v1114, 0.0
  %v1587 = vmax.f32 %v1117, 0.0
  %v1588 = vmax.f32 %v1122, 0.0
  %v1589 = vmax.f32 %v1125, 0.0
  %v1590 = vmax.f32 %v1130, 0.0
  %v1591 = vmax.f32 %v1133, 0.0
  %v1592 = vmax.f32 %v1138, 0.0
  %v1593 = vmax.f32 %v1141, 0.0
  %v1594 = vmax.f32 %v1146, 0.0
  %v1595 = vmax.f32 %v1149, 0.0
  %v1596 = vmax.f32 %v1154, 0.0
  %v1597 = vmax.f32 %v1157, 0.0
  %v1598 = vmax.f32 %v1162, 0.0
  %v1599 = vmax.f32 %v1165, 0.0
  %v1600 = vmax.f32 %v1170, 0.0
  %v1601 = vmax.f32 %v1173, 0.0
  %v1602 = vmax.f32 %v1178, 0.0
  %v1603 = vmax.f32 %v1181, 0.0
  %v1604 = vmax.f32 %v1186, 0.0
  %v1605 = vmax.f32 %v1189, 0.0
  %v1606 = vmax.f32 %v1194, 0.0
  %v1607 = vmax.f32 %v1197, 0.0
  %v1608 = vmax.f32 %v1202, 0.0
  %v1609 = vmax.f32 %v1205, 0.0
  %v1610 = vmax.f32 %v1216, 0.0
  %v1611 = vmax.f32 %v1219, 0.0
  %v1612 = vmax.f32 %v1224, 0.0
  %v1613 = vmax.f32 %v1227, 0.0
  %v1614 = vmax.f32 %v1232, 0.0
  %v1615 = vmax.f32 %v1235, 0.0
  %v1616 = vmax.f32 %v1240, 0.0
  %v1617 = vmax.f32 %v1243, 0.0
  %v1618 = vmax.f32 %v1248, 0.0
  %v1619 = vmax.f32 %v1251, 0.0
  %v1620 = vmax.f32 %v1256, 0.0
  %v1621 = vmax.f32 %v1259, 0.0
  %v1622 = vmax.f32 %v1264, 0.0
  %v1623 = vmax.f32 %v1267, 0.0
  %v1624 = vmax.f32 %v1272, 0.0
  %v1625 = vmax.f32 %v1275, 0.0
  %v1626 = vmax.f32 %v1280, 0.0
  %v1627 = vmax.f32 %v1283, 0.0
  %v1628 = vmax.f32 %v1288, 0.0
  %v1629 = vmax.f32 %v1291, 0.0
  %v1630 = vmax.f32 %v1296, 0.0
  %v1631 = vmax.f32 %v1299, 0.0
  %v1632 = vmax.f32 %v1304, 0.0
  %v1633 = vmax.f32 %v1307, 0.0
  %v1634 = vmax.f32 %v1312, 0.0
  %v1635 = vmax.f32 %v1315, 0.0
  %v1636 = vmax.f32 %v1320, 0.0
  %v1637 = vmax.f32 %v1323, 0.0
  %v1638 = vmax.f32 %v1328, 0.0
  %v1639 = vmax.f32 %v1331, 0.0
  %v1640 = vmax.f32 %v1336, 0.0
  %v1641 = vmax.f32 %v1339, 0.0
  %v1642 = vmax.f32 %v1344, 0.0
  %v1643 = vmax.f32 %v1347, 0.0
  %v1644 = vmax.f32 %v1352, 0.0
  %v1645 = vmax.f32 %v1355, 0.0
  %v1646 = vmax.f32 %v1360, 0.0
  %v1647 = vmax.f32 %v1363, 0.0
  %v1648 = vmax.f32 %v1368, 0.0
  %v1649 = vmax.f32 %v1371, 0.0
  %v1650 = vmax.f32 %v1376, 0.0
  %v1651 = vmax.f32 %v1379, 0.0
  %v1652 = vmax.f32 %v1384, 0.0
  %v1653 = vmax.f32 %v1387, 0.0
  %v1654 = vmax.f32 %v1392, 0.0
  %v1655 = vmax.f32 %v1395, 0.0
  %v1656 = vmax.f32 %v1400, 0.0
  %v1657 = vmax.f32 %v1403, 0.0
  %v1658 = vmax.f32 %v1408, 0.0
  %v1659 = vmax.f32 %v1411, 0.0
  %v1660 = vmax.f32 %v1416, 0.0
  %v1661 = vmax.f32 %v1419, 0.0
  %v1662 = vmax.f32 %v1424, 0.0
  %v1663 = vmax.f32 %v1427, 0.0
  %v1664 = vmax.f32 %v1432, 0.0
  %v1665 = vmax.f32 %v1435, 0.0
  %v1666 = vmax.f32 %v1440, 0.0
  %v1667 = vmax.f32 %v1443, 0.0
  %v1668 = vmax.f32 %v1448, 0.0
  %v1669 = vmax.f32 %v1451, 0.0
  %v1670 = vmax.f32 %v1456, 0.0
  %v1671 = vmax.f32 %v1459, 0.0
  %v1672 = vmax.f32 %v1464, 0.0
  %v1673 = vmax.f32 %v1467, 0.0
  %v1674 = vmax.f32 %v1472, 0.0
  %v1675 = vmax.f32 %v1475, 0.0
  %v1676 = vmax.f32 %v1480, 0.0
  %v1677 = vmax.f32 %v1483, 0.0
  %v1678 = vmax.f32 %v1488, 0.0
  %v1679 = vmax.f32 %v1491, 0.0
  %v1680 = vmax.f32 %v1496, 0.0
  %v1681 = vmax.f32 %v1499, 0.0
  %v1682 = vmax.f32 %v1504, 0.0
  %v1683 = vmax.f32 %v1507, 0.0
  %v1684 = vmax.f32 %v1512, 0.0
  %v1685 = vmax.f32 %v1515, 0.0
  %v1686 = vmax.f32 %v1520, 0.0
  %v1687 = vmax.f32 %v1523, 0.0
  %v1688 = vld [vmem:[%s1] sm:$0xff]
  %v1689 = vld [vmem:[%s1 + $0x8] sm:$0xff]
  %v1690 = vld [vmem:[%s1 + $0x10] sm:$0xff]
  %v1691 = vld [vmem:[%s1 + $0x18] sm:$0xff]
  %v1692 = vld [vmem:[%s1 + $0x20] sm:$0xff]
  %v1693 = vld [vmem:[%s1 + $0x28] sm:$0xff]
  %v1694 = vld [vmem:[%s1 + $0x30] sm:$0xff]
  %v1695 = vld [vmem:[%s1 + $0x38] sm:$0xff]
  %v1696 = vld [vmem:[%s1 + $0x40] sm:$0xff]
  %v1697 = vld [vmem:[%s1 + $0x48] sm:$0xff]
  %v1698 = vld [vmem:[%s1 + $0x50] sm:$0xff]
  %v1699 = vld [vmem:[%s1 + $0x58] sm:$0xff]
  %v1700 = vld [vmem:[%s1 + $0x60] sm:$0xff]
  %v1701 = vld [vmem:[%s1 + $0x68] sm:$0xff]
  %v1702 = vld [vmem:[%s1 + $0x70] sm:$0xff]
  %v1703 = vld [vmem:[%s1 + $0x78] sm:$0xff]
  %v1704 = vld [vmem:[%s1 + $0x80] sm:$0xff]
  %v1705 = vld [vmem:[%s1 + $0x88] sm:$0xff]
  %v1706 = vld [vmem:[%s1 + $0x90] sm:$0xff]
  %v1707 = vld [vmem:[%s1 + $0x98] sm:$0xff]
  %v1708 = vld [vmem:[%s1 + $0xa0] sm:$0xff]
  %v1709 = vld [vmem:[%s1 + $0xa8] sm:$0xff]
  %v1710 = vld [vmem:[%s1 + $0xb0] sm:$0xff]
  %v1711 = vld [vmem:[%s1 + $0xb8] sm:$0xff]
  %v1712 = vld [vmem:[%s1 + $0xc0] sm:$0xff]
  %v1713 = vld [vmem:[%s1 + $0xc8] sm:$0xff]
  %v1714 = vld [vmem:[%s1 + $0xd0] sm:$0xff]
  %v1715 = vld [vmem:[%s1 + $0xd8] sm:$0xff]
  %v1716 = vld [vmem:[%s1 + $0xe0] sm:$0xff]
  %v1717 = vld [vmem:[%s1 + $0xe8] sm:$0xff]
  %v1718 = vld [vmem:[%s1 + $0xf0] sm:$0xff]
  %v1719 = vld [vmem:[%s1 + $0xf8] sm:$0xff]
  %v1720 = vld [vmem:[%s1 + $0x100] sm:$0xff]
  %v1721 = vld [vmem:[%s1 + $0x108] sm:$0xff]
  %v1722 = vld [vmem:[%s1 + $0x110] sm:$0xff]
  %v1723 = vld [vmem:[%s1 + $0x118] sm:$0xff]
  %v1724 = vld [vmem:[%s1 + $0x120] sm:$0xff]
  %v1725 = vld [vmem:[%s1 + $0x128] sm:$0xff]
  %v1726 = vld [vmem:[%s1 + $0x130] sm:$0xff]
  %v1727 = vld [vmem:[%s1 + $0x138] sm:$0xff]
  %v1728 = vld [vmem:[%s1 + $0x140] sm:$0xff]
  %v1729 = vld [vmem:[%s1 + $0x148] sm:$0xff]
  %v1730 = vld [vmem:[%s1 + $0x150] sm:$0xff]
  %v1731 = vld [vmem:[%s1 + $0x158] sm:$0xff]
  %v1732 = vld [vmem:[%s1 + $0x160] sm:$0xff]
  %v1733 = vld [vmem:[%s1 + $0x168] sm:$0xff]
  %v1734 = vld [vmem:[%s1 + $0x170] sm:$0xff]
  %v1735 = vld [vmem:[%s1 + $0x178] sm:$0xff]
  %v1736 = vld [vmem:[%s1 + $0x180] sm:$0xff]
  %v1737 = vld [vmem:[%s1 + $0x188] sm:$0xff]
  %v1738 = vld [vmem:[%s1 + $0x190] sm:$0xff]
  %v1739 = vld [vmem:[%s1 + $0x198] sm:$0xff]
  %v1740 = vld [vmem:[%s1 + $0x1a0] sm:$0xff]
  %v1741 = vld [vmem:[%s1 + $0x1a8] sm:$0xff]
  %v1742 = vld [vmem:[%s1 + $0x1b0] sm:$0xff]
  %v1743 = vld [vmem:[%s1 + $0x1b8] sm:$0xff]
  %v1744 = vld [vmem:[%s1 + $0x1c0] sm:$0xff]
  %v1745 = vld [vmem:[%s1 + $0x1c8] sm:$0xff]
  %v1746 = vld [vmem:[%s1 + $0x1d0] sm:$0xff]
  %v1747 = vld [vmem:[%s1 + $0x1d8] sm:$0xff]
  %v1748 = vld [vmem:[%s1 + $0x1e0] sm:$0xff]
  %v1749 = vld [vmem:[%s1 + $0x1e8] sm:$0xff]
  %v1750 = vld [vmem:[%s1 + $0x1f0] sm:$0xff]
  %v1751 = vld [vmem:[%s1 + $0x1f8] sm:$0xff]
  %v1752 = vld [vmem:[%s1 + $0x200] sm:$0xff]
  %v1753 = vld [vmem:[%s1 + $0x208] sm:$0xff]
  %v1754 = vld [vmem:[%s1 + $0x210] sm:$0xff]
  %v1755 = vld [vmem:[%s1 + $0x218] sm:$0xff]
  %v1756 = vld [vmem:[%s1 + $0x220] sm:$0xff]
  %v1757 = vld [vmem:[%s1 + $0x228] sm:$0xff]
  %v1758 = vld [vmem:[%s1 + $0x230] sm:$0xff]
  %v1759 = vld [vmem:[%s1 + $0x238] sm:$0xff]
  %v1760 = vld [vmem:[%s1 + $0x240] sm:$0xff]
  %v1761 = vld [vmem:[%s1 + $0x248] sm:$0xff]
  %v1762 = vld [vmem:[%s1 + $0x250] sm:$0xff]
  %v1763 = vld [vmem:[%s1 + $0x258] sm:$0xff]
  %v1764 = vld [vmem:[%s1 + $0x260] sm:$0xff]
  %v1765 = vld [vmem:[%s1 + $0x268] sm:$0xff]
  %1767 = vset.pattern.permute.xlu0 0
  %1768 = vperm.xlu0 %1767, %v1688
  %v1769 = vpop.permute.xlu0 %1768
  %1772 = vset.pattern.permute.xlu0 0
  %1773 = vperm.xlu0 %1772, %v1689
  %v1774 = vpop.permute.xlu0 %1773
  %1777 = vset.pattern.permute.xlu0 0
  %1778 = vperm.xlu0 %1777, %v1690
  %v1779 = vpop.permute.xlu0 %1778
  %1782 = vset.pattern.permute.xlu0 0
  %1783 = vperm.xlu0 %1782, %v1691
  %v1784 = vpop.permute.xlu0 %1783
  %1787 = vset.pattern.permute.xlu0 0
  %1788 = vperm.xlu0 %1787, %v1692
  %v1789 = vpop.permute.xlu0 %1788
  %1792 = vset.pattern.permute.xlu0 0
  %1793 = vperm.xlu0 %1792, %v1693
  %v1794 = vpop.permute.xlu0 %1793
  %1797 = vset.pattern.permute.xlu0 0
  %1798 = vperm.xlu0 %1797, %v1694
  %v1799 = vpop.permute.xlu0 %1798
  %1802 = vset.pattern.permute.xlu0 0
  %1803 = vperm.xlu0 %1802, %v1695
  %v1804 = vpop.permute.xlu0 %1803
  %1807 = vset.pattern.permute.xlu0 0
  %1808 = vperm.xlu0 %1807, %v1696
  %v1809 = vpop.permute.xlu0 %1808
  %1812 = vset.pattern.permute.xlu0 0
  %1813 = vperm.xlu0 %1812, %v1697
  %v1814 = vpop.permute.xlu0 %1813
  %1817 = vset.pattern.permute.xlu0 0
  %1818 = vperm.xlu0 %1817, %v1698
  %v1819 = vpop.permute.xlu0 %1818
  %1822 = vset.pattern.permute.xlu0 0
  %1823 = vperm.xlu0 %1822, %v1699
  %v1824 = vpop.permute.xlu0 %1823
  %1827 = vset.pattern.permute.xlu0 0
  %1828 = vperm.xlu0 %1827, %v1700
  %v1829 = vpop.permute.xlu0 %1828
  %1832 = vset.pattern.permute.xlu0 0
  %1833 = vperm.xlu0 %1832, %v1701
  %v1834 = vpop.permute.xlu0 %1833
  %1837 = vset.pattern.permute.xlu0 0
  %1838 = vperm.xlu0 %1837, %v1702
  %v1839 = vpop.permute.xlu0 %1838
  %1842 = vset.pattern.permute.xlu0 0
  %1843 = vperm.xlu0 %1842, %v1703
  %v1844 = vpop.permute.xlu0 %1843
  %1847 = vset.pattern.permute.xlu0 0
  %1848 = vperm.xlu0 %1847, %v1704
  %v1849 = vpop.permute.xlu0 %1848
  %1852 = vset.pattern.permute.xlu0 0
  %1853 = vperm.xlu0 %1852, %v1705
  %v1854 = vpop.permute.xlu0 %1853
  %1857 = vset.pattern.permute.xlu0 0
  %1858 = vperm.xlu0 %1857, %v1706
  %v1859 = vpop.permute.xlu0 %1858
  %1862 = vset.pattern.permute.xlu0 0
  %1863 = vperm.xlu0 %1862, %v1707
  %v1864 = vpop.permute.xlu0 %1863
  %1867 = vset.pattern.permute.xlu0 0
  %1868 = vperm.xlu0 %1867, %v1708
  %v1869 = vpop.permute.xlu0 %1868
  %1872 = vset.pattern.permute.xlu0 0
  %1873 = vperm.xlu0 %1872, %v1709
  %v1874 = vpop.permute.xlu0 %1873
  %1877 = vset.pattern.permute.xlu0 0
  %1878 = vperm.xlu0 %1877, %v1710
  %v1879 = vpop.permute.xlu0 %1878
  %1882 = vset.pattern.permute.xlu0 0
  %1883 = vperm.xlu0 %1882, %v1711
  %v1884 = vpop.permute.xlu0 %1883
  %1887 = vset.pattern.permute.xlu0 0
  %1888 = vperm.xlu0 %1887, %v1712
  %v1889 = vpop.permute.xlu0 %1888
  %1892 = vset.pattern.permute.xlu0 0
  %1893 = vperm.xlu0 %1892, %v1713
  %v1894 = vpop.permute.xlu0 %1893
  %1897 = vset.pattern.permute.xlu0 0
  %1898 = vperm.xlu0 %1897, %v1714
  %v1899 = vpop.permute.xlu0 %1898
  %1902 = vset.pattern.permute.xlu0 0
  %1903 = vperm.xlu0 %1902, %v1715
  %v1904 = vpop.permute.xlu0 %1903
  %1907 = vset.pattern.permute.xlu0 0
  %1908 = vperm.xlu0 %1907, %v1716
  %v1909 = vpop.permute.xlu0 %1908
  %1912 = vset.pattern.permute.xlu0 0
  %1913 = vperm.xlu0 %1912, %v1717
  %v1914 = vpop.permute.xlu0 %1913
  %1917 = vset.pattern.permute.xlu0 0
  %1918 = vperm.xlu0 %1917, %v1718
  %v1919 = vpop.permute.xlu0 %1918
  %1922 = vset.pattern.permute.xlu0 0
  %1923 = vperm.xlu0 %1922, %v1719
  %v1924 = vpop.permute.xlu0 %1923
  %1927 = vset.pattern.permute.xlu0 0
  %1928 = vperm.xlu0 %1927, %v1720
  %v1929 = vpop.permute.xlu0 %1928
  %1932 = vset.pattern.permute.xlu0 0
  %1933 = vperm.xlu0 %1932, %v1721
  %v1934 = vpop.permute.xlu0 %1933
  %1937 = vset.pattern.permute.xlu0 0
  %1938 = vperm.xlu0 %1937, %v1722
  %v1939 = vpop.permute.xlu0 %1938
  %1942 = vset.pattern.permute.xlu0 0
  %1943 = vperm.xlu0 %1942, %v1723
  %v1944 = vpop.permute.xlu0 %1943
  %1947 = vset.pattern.permute.xlu0 0
  %1948 = vperm.xlu0 %1947, %v1724
  %v1949 = vpop.permute.xlu0 %1948
  %1952 = vset.pattern.permute.xlu0 0
  %1953 = vperm.xlu0 %1952, %v1725
  %v1954 = vpop.permute.xlu0 %1953
  %1957 = vset.pattern.permute.xlu0 0
  %1958 = vperm.xlu0 %1957, %v1726
  %v1959 = vpop.permute.xlu0 %1958
  %1962 = vset.pattern.permute.xlu0 0
  %1963 = vperm.xlu0 %1962, %v1727
  %v1964 = vpop.permute.xlu0 %1963
  %1967 = vset.pattern.permute.xlu0 0
  %1968 = vperm.xlu0 %1967, %v1728
  %v1969 = vpop.permute.xlu0 %1968
  %1972 = vset.pattern.permute.xlu0 0
  %1973 = vperm.xlu0 %1972, %v1729
  %v1974 = vpop.permute.xlu0 %1973
  %1977 = vset.pattern.permute.xlu0 0
  %1978 = vperm.xlu0 %1977, %v1730
  %v1979 = vpop.permute.xlu0 %1978
  %1982 = vset.pattern.permute.xlu0 0
  %1983 = vperm.xlu0 %1982, %v1731
  %v1984 = vpop.permute.xlu0 %1983
  %1987 = vset.pattern.permute.xlu0 0
  %1988 = vperm.xlu0 %1987, %v1732
  %v1989 = vpop.permute.xlu0 %1988
  %1992 = vset.pattern.permute.xlu0 0
  %1993 = vperm.xlu0 %1992, %v1733
  %v1994 = vpop.permute.xlu0 %1993
  %1997 = vset.pattern.permute.xlu0 0
  %1998 = vperm.xlu0 %1997, %v1734
  %v1999 = vpop.permute.xlu0 %1998
  %2002 = vset.pattern.permute.xlu0 0
  %2003 = vperm.xlu0 %2002, %v1735
  %v2004 = vpop.permute.xlu0 %2003
  %2007 = vset.pattern.permute.xlu0 0
  %2008 = vperm.xlu0 %2007, %v1736
  %v2009 = vpop.permute.xlu0 %2008
  %2012 = vset.pattern.permute.xlu0 0
  %2013 = vperm.xlu0 %2012, %v1737
  %v2014 = vpop.permute.xlu0 %2013
  %2017 = vset.pattern.permute.xlu0 0
  %2018 = vperm.xlu0 %2017, %v1738
  %v2019 = vpop.permute.xlu0 %2018
  %2022 = vset.pattern.permute.xlu0 0
  %2023 = vperm.xlu0 %2022, %v1739
  %v2024 = vpop.permute.xlu0 %2023
  %2027 = vset.pattern.permute.xlu0 0
  %2028 = vperm.xlu0 %2027, %v1740
  %v2029 = vpop.permute.xlu0 %2028
  %2032 = vset.pattern.permute.xlu0 0
  %2033 = vperm.xlu0 %2032, %v1741
  %v2034 = vpop.permute.xlu0 %2033
  %2037 = vset.pattern.permute.xlu0 0
  %2038 = vperm.xlu0 %2037, %v1742
  %v2039 = vpop.permute.xlu0 %2038
  %2042 = vset.pattern.permute.xlu0 0
  %2043 = vperm.xlu0 %2042, %v1743
  %v2044 = vpop.permute.xlu0 %2043
  %2047 = vset.pattern.permute.xlu0 0
  %2048 = vperm.xlu0 %2047, %v1744
  %v2049 = vpop.permute.xlu0 %2048
  %2052 = vset.pattern.permute.xlu0 0
  %2053 = vperm.xlu0 %2052, %v1745
  %v2054 = vpop.permute.xlu0 %2053
  %2057 = vset.pattern.permute.xlu0 0
  %2058 = vperm.xlu0 %2057, %v1746
  %v2059 = vpop.permute.xlu0 %2058
  %2062 = vset.pattern.permute.xlu0 0
  %2063 = vperm.xlu0 %2062, %v1747
  %v2064 = vpop.permute.xlu0 %2063
  %2067 = vset.pattern.permute.xlu0 0
  %2068 = vperm.xlu0 %2067, %v1748
  %v2069 = vpop.permute.xlu0 %2068
  %2072 = vset.pattern.permute.xlu0 0
  %2073 = vperm.xlu0 %2072, %v1749
  %v2074 = vpop.permute.xlu0 %2073
  %2077 = vset.pattern.permute.xlu0 0
  %2078 = vperm.xlu0 %2077, %v1750
  %v2079 = vpop.permute.xlu0 %2078
  %2082 = vset.pattern.permute.xlu0 0
  %2083 = vperm.xlu0 %2082, %v1751
  %v2084 = vpop.permute.xlu0 %2083
  %2087 = vset.pattern.permute.xlu0 0
  %2088 = vperm.xlu0 %2087, %v1752
  %v2089 = vpop.permute.xlu0 %2088
  %2092 = vset.pattern.permute.xlu0 0
  %2093 = vperm.xlu0 %2092, %v1753
  %v2094 = vpop.permute.xlu0 %2093
  %2097 = vset.pattern.permute.xlu0 0
  %2098 = vperm.xlu0 %2097, %v1754
  %v2099 = vpop.permute.xlu0 %2098
  %2102 = vset.pattern.permute.xlu0 0
  %2103 = vperm.xlu0 %2102, %v1755
  %v2104 = vpop.permute.xlu0 %2103
  %2107 = vset.pattern.permute.xlu0 0
  %2108 = vperm.xlu0 %2107, %v1756
  %v2109 = vpop.permute.xlu0 %2108
  %2112 = vset.pattern.permute.xlu0 0
  %2113 = vperm.xlu0 %2112, %v1757
  %v2114 = vpop.permute.xlu0 %2113
  %2117 = vset.pattern.permute.xlu0 0
  %2118 = vperm.xlu0 %2117, %v1758
  %v2119 = vpop.permute.xlu0 %2118
  %2122 = vset.pattern.permute.xlu0 0
  %2123 = vperm.xlu0 %2122, %v1759
  %v2124 = vpop.permute.xlu0 %2123
  %2127 = vset.pattern.permute.xlu0 0
  %2128 = vperm.xlu0 %2127, %v1760
  %v2129 = vpop.permute.xlu0 %2128
  %2132 = vset.pattern.permute.xlu0 0
  %2133 = vperm.xlu0 %2132, %v1761
  %v2134 = vpop.permute.xlu0 %2133
  %2137 = vset.pattern.permute.xlu0 0
  %2138 = vperm.xlu0 %2137, %v1762
  %v2139 = vpop.permute.xlu0 %2138
  %2142 = vset.pattern.permute.xlu0 0
  %2143 = vperm.xlu0 %2142, %v1763
  %v2144 = vpop.permute.xlu0 %2143
  %2147 = vset.pattern.permute.xlu0 0
  %2148 = vperm.xlu0 %2147, %v1764
  %v2149 = vpop.permute.xlu0 %2148
  %2152 = vset.pattern.permute.xlu0 0
  %2153 = vperm.xlu0 %2152, %v1765
  %v2154 = vpop.permute.xlu0 %2153
  %v2156 = vmul.f32 %v1532, %v1769
  %v2157 = vmul.f32 %v1533, %v1774
  %v2158 = vmul.f32 %v1534, %v1779
  %v2159 = vmul.f32 %v1535, %v1784
  %v2160 = vmul.f32 %v1536, %v1789
  %v2161 = vmul.f32 %v1537, %v1794
  %v2162 = vmul.f32 %v1538, %v1799
  %v2163 = vmul.f32 %v1539, %v1804
  %v2164 = vmul.f32 %v1540, %v1809
  %v2165 = vmul.f32 %v1541, %v1814
  %v2166 = vmul.f32 %v1542, %v1819
  %v2167 = vmul.f32 %v1543, %v1824
  %v2168 = vmul.f32 %v1544, %v1829
  %v2169 = vmul.f32 %v1545, %v1834
  %v2170 = vmul.f32 %v1546, %v1839
  %v2171 = vmul.f32 %v1547, %v1844
  %v2172 = vmul.f32 %v1548, %v1849
  %v2173 = vmul.f32 %v1549, %v1854
  %v2174 = vmul.f32 %v1550, %v1859
  %v2175 = vmul.f32 %v1551, %v1864
  %v2176 = vmul.f32 %v1552, %v1869
  %v2177 = vmul.f32 %v1553, %v1874
  %v2178 = vmul.f32 %v1554, %v1879
  %v2179 = vmul.f32 %v1555, %v1884
  %v2180 = vmul.f32 %v1556, %v1889
  %v2181 = vmul.f32 %v1557, %v1894
  %v2182 = vmul.f32 %v1558, %v1899
  %v2183 = vmul.f32 %v1559, %v1904
  %v2184 = vmul.f32 %v1560, %v1909
  %v2185 = vmul.f32 %v1561, %v1914
  %v2186 = vmul.f32 %v1562, %v1919
  %v2187 = vmul.f32 %v1563, %v1924
  %v2188 = vmul.f32 %v1564, %v1929
  %v2189 = vmul.f32 %v1565, %v1934
  %v2190 = vmul.f32 %v1566, %v1939
  %v2191 = vmul.f32 %v1567, %v1944
  %v2192 = vmul.f32 %v1568, %v1949
  %v2193 = vmul.f32 %v1569, %v1954
  %v2194 = vmul.f32 %v1570, %v1959
  %v2195 = vmul.f32 %v1571, %v1964
  %v2196 = vmul.f32 %v1572, %v1969
  %v2197 = vmul.f32 %v1573, %v1974
  %v2198 = vmul.f32 %v1574, %v1979
  %v2199 = vmul.f32 %v1575, %v1984
  %v2200 = vmul.f32 %v1576, %v1989
  %v2201 = vmul.f32 %v1577, %v1994
  %v2202 = vmul.f32 %v1578, %v1999
  %v2203 = vmul.f32 %v1579, %v2004
  %v2204 = vmul.f32 %v1580, %v2009
  %v2205 = vmul.f32 %v1581, %v2014
  %v2206 = vmul.f32 %v1582, %v2019
  %v2207 = vmul.f32 %v1583, %v2024
  %v2208 = vmul.f32 %v1584, %v2029
  %v2209 = vmul.f32 %v1585, %v2034
  %v2210 = vmul.f32 %v1586, %v2039
  %v2211 = vmul.f32 %v1587, %v2044
  %v2212 = vmul.f32 %v1588, %v2049
  %v2213 = vmul.f32 %v1589, %v2054
  %v2214 = vmul.f32 %v1590, %v2059
  %v2215 = vmul.f32 %v1591, %v2064
  %v2216 = vmul.f32 %v1592, %v2069
  %v2217 = vmul.f32 %v1593, %v2074
  %v2218 = vmul.f32 %v1594, %v2079
  %v2219 = vmul.f32 %v1595, %v2084
  %v2220 = vmul.f32 %v1596, %v2089
  %v2221 = vmul.f32 %v1597, %v2094
  %v2222 = vmul.f32 %v1598, %v2099
  %v2223 = vmul.f32 %v1599, %v2104
  %v2224 = vmul.f32 %v1600, %v2109
  %v2225 = vmul.f32 %v1601, %v2114
  %v2226 = vmul.f32 %v1602, %v2119
  %v2227 = vmul.f32 %v1603, %v2124
  %v2228 = vmul.f32 %v1604, %v2129
  %v2229 = vmul.f32 %v1605, %v2134
  %v2230 = vmul.f32 %v1606, %v2139
  %v2231 = vmul.f32 %v1607, %v2144
  %v2232 = vmul.f32 %v1608, %v2149
  %v2233 = vmul.f32 %v1609, %v2154
  %v2234 = vmul.f32 %v1610, %v1769
  %v2235 = vmul.f32 %v1611, %v1774
  %v2236 = vmul.f32 %v1612, %v1779
  %v2237 = vmul.f32 %v1613, %v1784
  %v2238 = vmul.f32 %v1614, %v1789
  %v2239 = vmul.f32 %v1615, %v1794
  %v2240 = vmul.f32 %v1616, %v1799
  %v2241 = vmul.f32 %v1617, %v1804
  %v2242 = vmul.f32 %v1618, %v1809
  %v2243 = vmul.f32 %v1619, %v1814
  %v2244 = vmul.f32 %v1620, %v1819
  %v2245 = vmul.f32 %v1621, %v1824
  %v2246 = vmul.f32 %v1622, %v1829
  %v2247 = vmul.f32 %v1623, %v1834
  %v2248 = vmul.f32 %v1624, %v1839
  %v2249 = vmul.f32 %v1625, %v1844
  %v2250 = vmul.f32 %v1626, %v1849
  %v2251 = vmul.f32 %v1627, %v1854
  %v2252 = vmul.f32 %v1628, %v1859
  %v2253 = vmul.f32 %v1629, %v1864
  %v2254 = vmul.f32 %v1630, %v1869
  %v2255 = vmul.f32 %v1631, %v1874
  %v2256 = vmul.f32 %v1632, %v1879
  %v2257 = vmul.f32 %v1633, %v1884
  %v2258 = vmul.f32 %v1634, %v1889
  %v2259 = vmul.f32 %v1635, %v1894
  %v2260 = vmul.f32 %v1636, %v1899
  %v2261 = vmul.f32 %v1637, %v1904
  %v2262 = vmul.f32 %v1638, %v1909
  %v2263 = vmul.f32 %v1639, %v1914
  %v2264 = vmul.f32 %v1640, %v1919
  %v2265 = vmul.f32 %v1641, %v1924
  %v2266 = vmul.f32 %v1642, %v1929
  %v2267 = vmul.f32 %v1643, %v1934
  %v2268 = vmul.f32 %v1644, %v1939
  %v2269 = vmul.f32 %v1645, %v1944
  %v2270 = vmul.f32 %v1646, %v1949
  %v2271 = vmul.f32 %v1647, %v1954
  %v2272 = vmul.f32 %v1648, %v1959
  %v2273 = vmul.f32 %v1649, %v1964
  %v2274 = vmul.f32 %v1650, %v1969
  %v2275 = vmul.f32 %v1651, %v1974
  %v2276 = vmul.f32 %v1652, %v1979
  %v2277 = vmul.f32 %v1653, %v1984
  %v2278 = vmul.f32 %v1654, %v1989
  %v2279 = vmul.f32 %v1655, %v1994
  %v2280 = vmul.f32 %v1656, %v1999
  %v2281 = vmul.f32 %v1657, %v2004
  %v2282 = vmul.f32 %v1658, %v2009
  %v2283 = vmul.f32 %v1659, %v2014
  %v2284 = vmul.f32 %v1660, %v2019
  %v2285 = vmul.f32 %v1661, %v2024
  %v2286 = vmul.f32 %v1662, %v2029
  %v2287 = vmul.f32 %v1663, %v2034
  %v2288 = vmul.f32 %v1664, %v2039
  %v2289 = vmul.f32 %v1665, %v2044
  %v2290 = vmul.f32 %v1666, %v2049
  %v2291 = vmul.f32 %v1667, %v2054
  %v2292 = vmul.f32 %v1668, %v2059
  %v2293 = vmul.f32 %v1669, %v2064
  %v2294 = vmul.f32 %v1670, %v2069
  %v2295 = vmul.f32 %v1671, %v2074
  %v2296 = vmul.f32 %v1672, %v2079
  %v2297 = vmul.f32 %v1673, %v2084
  %v2298 = vmul.f32 %v1674, %v2089
  %v2299 = vmul.f32 %v1675, %v2094
  %v2300 = vmul.f32 %v1676, %v2099
  %v2301 = vmul.f32 %v1677, %v2104
  %v2302 = vmul.f32 %v1678, %v2109
  %v2303 = vmul.f32 %v1679, %v2114
  %v2304 = vmul.f32 %v1680, %v2119
  %v2305 = vmul.f32 %v1681, %v2124
  %v2306 = vmul.f32 %v1682, %v2129
  %v2307 = vmul.f32 %v1683, %v2134
  %v2308 = vmul.f32 %v1684, %v2139
  %v2309 = vmul.f32 %v1685, %v2144
  %v2310 = vmul.f32 %v1686, %v2149
  %v2311 = vmul.f32 %v1687, %v2154
  %v2312 = vpack.c.bf16 %v2157, %v2156
  %v2313 = vpack.c.bf16 %v2159, %v2158
  %v2314 = vpack.c.bf16 %v2161, %v2160
  %v2315 = vpack.c.bf16 %v2163, %v2162
  %v2316 = vpack.c.bf16 %v2165, %v2164
  %v2317 = vpack.c.bf16 %v2167, %v2166
  %v2318 = vpack.c.bf16 %v2169, %v2168
  %v2319 = vpack.c.bf16 %v2171, %v2170
  %v2320 = vpack.c.bf16 %v2173, %v2172
  %v2321 = vpack.c.bf16 %v2175, %v2174
  %v2322 = vpack.c.bf16 %v2177, %v2176
  %v2323 = vpack.c.bf16 %v2179, %v2178
  %v2324 = vpack.c.bf16 %v2181, %v2180
  %v2325 = vpack.c.bf16 %v2183, %v2182
  %v2326 = vpack.c.bf16 %v2185, %v2184
  %v2327 = vpack.c.bf16 %v2187, %v2186
  %v2328 = vpack.c.bf16 %v2189, %v2188
  %v2329 = vpack.c.bf16 %v2191, %v2190
  %v2330 = vpack.c.bf16 %v2193, %v2192
  %v2331 = vpack.c.bf16 %v2195, %v2194
  %v2332 = vpack.c.bf16 %v2197, %v2196
  %v2333 = vpack.c.bf16 %v2199, %v2198
  %v2334 = vpack.c.bf16 %v2201, %v2200
  %v2335 = vpack.c.bf16 %v2203, %v2202
  %v2336 = vpack.c.bf16 %v2205, %v2204
  %v2337 = vpack.c.bf16 %v2207, %v2206
  %v2338 = vpack.c.bf16 %v2209, %v2208
  %v2339 = vpack.c.bf16 %v2211, %v2210
  %v2340 = vpack.c.bf16 %v2213, %v2212
  %v2341 = vpack.c.bf16 %v2215, %v2214
  %v2342 = vpack.c.bf16 %v2217, %v2216
  %v2343 = vpack.c.bf16 %v2219, %v2218
  %v2344 = vpack.c.bf16 %v2221, %v2220
  %v2345 = vpack.c.bf16 %v2223, %v2222
  %v2346 = vpack.c.bf16 %v2225, %v2224
  %v2347 = vpack.c.bf16 %v2227, %v2226
  %v2348 = vpack.c.bf16 %v2229, %v2228
  %v2349 = vpack.c.bf16 %v2231, %v2230
  %v2350 = vpack.c.bf16 %v2233, %v2232
  %v2351 = vpack.c.bf16 %v2235, %v2234
  %v2352 = vpack.c.bf16 %v2237, %v2236
  %v2353 = vpack.c.bf16 %v2239, %v2238
  %v2354 = vpack.c.bf16 %v2241, %v2240
  %v2355 = vpack.c.bf16 %v2243, %v2242
  %v2356 = vpack.c.bf16 %v2245, %v2244
  %v2357 = vpack.c.bf16 %v2247, %v2246
  %v2358 = vpack.c.bf16 %v2249, %v2248
  %v2359 = vpack.c.bf16 %v2251, %v2250
  %v2360 = vpack.c.bf16 %v2253, %v2252
  %v2361 = vpack.c.bf16 %v2255, %v2254
  %v2362 = vpack.c.bf16 %v2257, %v2256
  %v2363 = vpack.c.bf16 %v2259, %v2258
  %v2364 = vpack.c.bf16 %v2261, %v2260
  %v2365 = vpack.c.bf16 %v2263, %v2262
  %v2366 = vpack.c.bf16 %v2265, %v2264
  %v2367 = vpack.c.bf16 %v2267, %v2266
  %v2368 = vpack.c.bf16 %v2269, %v2268
  %v2369 = vpack.c.bf16 %v2271, %v2270
  %v2370 = vpack.c.bf16 %v2273, %v2272
  %v2371 = vpack.c.bf16 %v2275, %v2274
  %v2372 = vpack.c.bf16 %v2277, %v2276
  %v2373 = vpack.c.bf16 %v2279, %v2278
  %v2374 = vpack.c.bf16 %v2281, %v2280
  %v2375 = vpack.c.bf16 %v2283, %v2282
  %v2376 = vpack.c.bf16 %v2285, %v2284
  %v2377 = vpack.c.bf16 %v2287, %v2286
  %v2378 = vpack.c.bf16 %v2289, %v2288
  %v2379 = vpack.c.bf16 %v2291, %v2290
  %v2380 = vpack.c.bf16 %v2293, %v2292
  %v2381 = vpack.c.bf16 %v2295, %v2294
  %v2382 = vpack.c.bf16 %v2297, %v2296
  %v2383 = vpack.c.bf16 %v2299, %v2298
  %v2384 = vpack.c.bf16 %v2301, %v2300
  %v2385 = vpack.c.bf16 %v2303, %v2302
  %v2386 = vpack.c.bf16 %v2305, %v2304
  %v2387 = vpack.c.bf16 %v2307, %v2306
  %v2388 = vpack.c.bf16 %v2309, %v2308
  %v2389 = vpack.c.bf16 %v2311, %v2310
  %2398 = vrot.lane.b32.xlu0 %v2322, 64
  %v2399 = vpop.permute.xlu0 %2398
  %2400 = vrot.lane.b32.xlu0 %v2323, 64
  %v2401 = vpop.permute.xlu0 %2400
  %2402 = vrot.lane.b32.xlu0 %v2324, 64
  %v2403 = vpop.permute.xlu0 %2402
  %2404 = vrot.lane.b32.xlu0 %v2325, 64
  %v2405 = vpop.permute.xlu0 %2404
  %2406 = vrot.lane.b32.xlu0 %v2361, 64
  %v2407 = vpop.permute.xlu0 %2406
  %2408 = vrot.lane.b32.xlu0 %v2362, 64
  %v2409 = vpop.permute.xlu0 %2408
  %2410 = vrot.lane.b32.xlu0 %v2363, 64
  %v2411 = vpop.permute.xlu0 %2410
  %2412 = vrot.lane.b32.xlu0 %v2364, 64
  %v2413 = vpop.permute.xlu0 %2412
  %2422 = vrot.lane.b32.xlu0 %v2327, 64
  %v2423 = vpop.permute.xlu0 %2422
  %2424 = vrot.lane.b32.xlu0 %v2328, 64
  %v2425 = vpop.permute.xlu0 %2424
  %2426 = vrot.lane.b32.xlu0 %v2329, 64
  %v2427 = vpop.permute.xlu0 %2426
  %2428 = vrot.lane.b32.xlu0 %v2330, 64
  %v2429 = vpop.permute.xlu0 %2428
  %2430 = vrot.lane.b32.xlu0 %v2366, 64
  %v2431 = vpop.permute.xlu0 %2430
  %2432 = vrot.lane.b32.xlu0 %v2367, 64
  %v2433 = vpop.permute.xlu0 %2432
  %2434 = vrot.lane.b32.xlu0 %v2368, 64
  %v2435 = vpop.permute.xlu0 %2434
  %2436 = vrot.lane.b32.xlu0 %v2369, 64
  %v2437 = vpop.permute.xlu0 %2436
  %vm2438 = vsmask.f32 7424
  %v2440 = vshrl.u32 %v2312, 16
  %v2442 = vshll.u32 %v2312, 16
  %v2444 = vrot.slane %v2442, 1
  %v2445 = vor.u32 %v2440, %v2444
  %v2447 = vshll.u32 %v2313, 16
  %v2449 = vrot.slane %v2447, 1
  %v2450 = vsel %vm2438, %v2445, %v2449
  %v2451 = vshrl.u32 %v2313, 16
  %v2453 = vor.u32 %v2451, %v2449
  %v2455 = vshll.u32 %v2314, 16
  %v2457 = vrot.slane %v2455, 1
  %v2458 = vsel %vm2438, %v2453, %v2457
  %v2459 = vshrl.u32 %v2314, 16
  %v2461 = vor.u32 %v2459, %v2457
  %v2463 = vshll.u32 %v2315, 16
  %v2465 = vrot.slane %v2463, 1
  %v2466 = vsel %vm2438, %v2461, %v2465
  %v2467 = vshrl.u32 %v2315, 16
  %v2469 = vor.u32 %v2467, %v2465
  %v2471 = vshrl.u32 %v2351, 16
  %v2473 = vshll.u32 %v2351, 16
  %v2475 = vrot.slane %v2473, 1
  %v2476 = vor.u32 %v2471, %v2475
  %v2478 = vshll.u32 %v2352, 16
  %v2480 = vrot.slane %v2478, 1
  %v2481 = vsel %vm2438, %v2476, %v2480
  %v2482 = vshrl.u32 %v2352, 16
  %v2484 = vor.u32 %v2482, %v2480
  %v2486 = vshll.u32 %v2353, 16
  %v2488 = vrot.slane %v2486, 1
  %v2489 = vsel %vm2438, %v2484, %v2488
  %v2490 = vshrl.u32 %v2353, 16
  %v2492 = vor.u32 %v2490, %v2488
  %v2494 = vshll.u32 %v2354, 16
  %v2496 = vrot.slane %v2494, 1
  %v2497 = vsel %vm2438, %v2492, %v2496
  %v2498 = vshrl.u32 %v2354, 16
  %v2500 = vor.u32 %v2498, %v2496
  %2509 = vrot.lane.b32.xlu0 %v2332, 64
  %v2510 = vpop.permute.xlu0 %2509
  %2511 = vrot.lane.b32.xlu0 %v2333, 64
  %v2512 = vpop.permute.xlu0 %2511
  %2513 = vrot.lane.b32.xlu0 %v2334, 64
  %v2514 = vpop.permute.xlu0 %2513
  %2515 = vrot.lane.b32.xlu0 %v2335, 64
  %v2516 = vpop.permute.xlu0 %2515
  %2517 = vrot.lane.b32.xlu0 %v2371, 64
  %v2518 = vpop.permute.xlu0 %2517
  %2519 = vrot.lane.b32.xlu0 %v2372, 64
  %v2520 = vpop.permute.xlu0 %2519
  %2521 = vrot.lane.b32.xlu0 %v2373, 64
  %v2522 = vpop.permute.xlu0 %2521
  %2523 = vrot.lane.b32.xlu0 %v2374, 64
  %v2524 = vpop.permute.xlu0 %2523
  %2533 = vrot.lane.b32.xlu0 %v2337, 64
  %v2534 = vpop.permute.xlu0 %2533
  %2535 = vrot.lane.b32.xlu0 %v2338, 64
  %v2536 = vpop.permute.xlu0 %2535
  %2537 = vrot.lane.b32.xlu0 %v2339, 64
  %v2538 = vpop.permute.xlu0 %2537
  %2539 = vrot.lane.b32.xlu0 %v2340, 64
  %v2540 = vpop.permute.xlu0 %2539
  %2541 = vrot.lane.b32.xlu0 %v2376, 64
  %v2542 = vpop.permute.xlu0 %2541
  %2543 = vrot.lane.b32.xlu0 %v2377, 64
  %v2544 = vpop.permute.xlu0 %2543
  %2545 = vrot.lane.b32.xlu0 %v2378, 64
  %v2546 = vpop.permute.xlu0 %2545
  %2547 = vrot.lane.b32.xlu0 %v2379, 64
  %v2548 = vpop.permute.xlu0 %2547
  %v2550 = vshrl.u32 %v2332, 16
  %v2552 = vshll.u32 %v2332, 16
  %v2554 = vrot.slane %v2552, 1
  %v2555 = vor.u32 %v2550, %v2554
  %v2557 = vshll.u32 %v2333, 16
  %v2559 = vrot.slane %v2557, 1
  %v2560 = vsel %vm2438, %v2555, %v2559
  %v2561 = vshrl.u32 %v2333, 16
  %v2563 = vor.u32 %v2561, %v2559
  %v2565 = vshll.u32 %v2334, 16
  %v2567 = vrot.slane %v2565, 1
  %v2568 = vsel %vm2438, %v2563, %v2567
  %v2569 = vshrl.u32 %v2334, 16
  %v2571 = vor.u32 %v2569, %v2567
  %v2573 = vshll.u32 %v2335, 16
  %v2575 = vrot.slane %v2573, 1
  %v2576 = vsel %vm2438, %v2571, %v2575
  %v2577 = vshrl.u32 %v2335, 16
  %v2579 = vor.u32 %v2577, %v2575
  %v2581 = vshrl.u32 %v2371, 16
  %v2583 = vshll.u32 %v2371, 16
  %v2585 = vrot.slane %v2583, 1
  %v2586 = vor.u32 %v2581, %v2585
  %v2588 = vshll.u32 %v2372, 16
  %v2590 = vrot.slane %v2588, 1
  %v2591 = vsel %vm2438, %v2586, %v2590
  %v2592 = vshrl.u32 %v2372, 16
  %v2594 = vor.u32 %v2592, %v2590
  %v2596 = vshll.u32 %v2373, 16
  %v2598 = vrot.slane %v2596, 1
  %v2599 = vsel %vm2438, %v2594, %v2598
  %v2600 = vshrl.u32 %v2373, 16
  %v2602 = vor.u32 %v2600, %v2598
  %v2604 = vshll.u32 %v2374, 16
  %v2606 = vrot.slane %v2604, 1
  %v2607 = vsel %vm2438, %v2602, %v2606
  %v2608 = vshrl.u32 %v2374, 16
  %v2610 = vor.u32 %v2608, %v2606
  %2611 = vrot.lane.b32.xlu0 %v2560, 64
  %v2612 = vpop.permute.xlu0 %2611
  %2613 = vrot.lane.b32.xlu0 %v2568, 64
  %v2614 = vpop.permute.xlu0 %2613
  %2615 = vrot.lane.b32.xlu0 %v2576, 64
  %v2616 = vpop.permute.xlu0 %2615
  %2617 = vrot.lane.b32.xlu0 %v2579, 64
  %v2618 = vpop.permute.xlu0 %2617
  %2619 = vrot.lane.b32.xlu0 %v2591, 64
  %v2620 = vpop.permute.xlu0 %2619
  %2621 = vrot.lane.b32.xlu0 %v2599, 64
  %v2622 = vpop.permute.xlu0 %2621
  %2623 = vrot.lane.b32.xlu0 %v2607, 64
  %v2624 = vpop.permute.xlu0 %2623
  %2625 = vrot.lane.b32.xlu0 %v2610, 64
  %v2626 = vpop.permute.xlu0 %2625
  %vm2635 = vcmask 1043456
  %v2636 = vrot.slane %v2312, 4
  %v2637 = vrot.slane %v2313, 4
  %v2638 = vsel %vm2635, %v2636, %v2637
  %v2639 = vrot.slane %v2314, 4
  %v2640 = vsel %vm2635, %v2637, %v2639
  %v2641 = vrot.slane %v2315, 4
  %v2642 = vsel %vm2635, %v2639, %v2641
  %v2643 = vrot.slane %v2351, 4
  %v2644 = vrot.slane %v2352, 4
  %v2645 = vsel %vm2635, %v2643, %v2644
  %v2646 = vrot.slane %v2353, 4
  %v2647 = vsel %vm2635, %v2644, %v2646
  %v2648 = vrot.slane %v2354, 4
  %v2649 = vsel %vm2635, %v2646, %v2648
  %v2650 = vrot.slane %v2322, 4
  %v2651 = vrot.slane %v2323, 4
  %v2652 = vsel %vm2635, %v2650, %v2651
  %v2653 = vrot.slane %v2324, 4
  %v2654 = vsel %vm2635, %v2651, %v2653
  %v2655 = vrot.slane %v2325, 4
  %v2656 = vsel %vm2635, %v2653, %v2655
  %v2657 = vrot.slane %v2361, 4
  %v2658 = vrot.slane %v2362, 4
  %v2659 = vsel %vm2635, %v2657, %v2658
  %v2660 = vrot.slane %v2363, 4
  %v2661 = vsel %vm2635, %v2658, %v2660
  %v2662 = vrot.slane %v2364, 4
  %v2663 = vsel %vm2635, %v2660, %v2662
  %2664 = vrot.lane.b32.xlu0 %v2652, 64
  %v2665 = vpop.permute.xlu0 %2664
  %2666 = vrot.lane.b32.xlu0 %v2654, 64
  %v2667 = vpop.permute.xlu0 %2666
  %2668 = vrot.lane.b32.xlu0 %v2656, 64
  %v2669 = vpop.permute.xlu0 %2668
  %2670 = vrot.lane.b32.xlu0 %v2655, 64
  %v2671 = vpop.permute.xlu0 %2670
  %2672 = vrot.lane.b32.xlu0 %v2659, 64
  %v2673 = vpop.permute.xlu0 %2672
  %2674 = vrot.lane.b32.xlu0 %v2661, 64
  %v2675 = vpop.permute.xlu0 %2674
  %2676 = vrot.lane.b32.xlu0 %v2663, 64
  %v2677 = vpop.permute.xlu0 %2676
  %2678 = vrot.lane.b32.xlu0 %v2662, 64
  %v2679 = vpop.permute.xlu0 %2678
  %v2688 = vrot.slane %v2317, 4
  %v2689 = vrot.slane %v2318, 4
  %v2690 = vsel %vm2635, %v2688, %v2689
  %v2691 = vrot.slane %v2319, 4
  %v2692 = vsel %vm2635, %v2689, %v2691
  %v2693 = vrot.slane %v2320, 4
  %v2694 = vsel %vm2635, %v2691, %v2693
  %v2695 = vrot.slane %v2356, 4
  %v2696 = vrot.slane %v2357, 4
  %v2697 = vsel %vm2635, %v2695, %v2696
  %v2698 = vrot.slane %v2358, 4
  %v2699 = vsel %vm2635, %v2696, %v2698
  %v2700 = vrot.slane %v2359, 4
  %v2701 = vsel %vm2635, %v2698, %v2700
  %v2702 = vrot.slane %v2327, 4
  %v2703 = vrot.slane %v2328, 4
  %v2704 = vsel %vm2635, %v2702, %v2703
  %v2705 = vrot.slane %v2329, 4
  %v2706 = vsel %vm2635, %v2703, %v2705
  %v2707 = vrot.slane %v2330, 4
  %v2708 = vsel %vm2635, %v2705, %v2707
  %v2709 = vrot.slane %v2366, 4
  %v2710 = vrot.slane %v2367, 4
  %v2711 = vsel %vm2635, %v2709, %v2710
  %v2712 = vrot.slane %v2368, 4
  %v2713 = vsel %vm2635, %v2710, %v2712
  %v2714 = vrot.slane %v2369, 4
  %v2715 = vsel %vm2635, %v2712, %v2714
  %2716 = vrot.lane.b32.xlu0 %v2704, 64
  %v2717 = vpop.permute.xlu0 %2716
  %2718 = vrot.lane.b32.xlu0 %v2706, 64
  %v2719 = vpop.permute.xlu0 %2718
  %2720 = vrot.lane.b32.xlu0 %v2708, 64
  %v2721 = vpop.permute.xlu0 %2720
  %2722 = vrot.lane.b32.xlu0 %v2707, 64
  %v2723 = vpop.permute.xlu0 %2722
  %2724 = vrot.lane.b32.xlu0 %v2711, 64
  %v2725 = vpop.permute.xlu0 %2724
  %2726 = vrot.lane.b32.xlu0 %v2713, 64
  %v2727 = vpop.permute.xlu0 %2726
  %2728 = vrot.lane.b32.xlu0 %v2715, 64
  %v2729 = vpop.permute.xlu0 %2728
  %2730 = vrot.lane.b32.xlu0 %v2714, 64
  %v2731 = vpop.permute.xlu0 %2730
  %vm2732 = vsmask.f32 3328
  %v2733 = vrot.slane %v2440, 4
  %v2734 = vrot.slane %v2442, 5
  %v2735 = vor.u32 %v2733, %v2734
  %v2736 = vrot.slane %v2451, 4
  %v2737 = vrot.slane %v2447, 5
  %v2738 = vor.u32 %v2736, %v2737
  %v2739 = vsel %vm2732, %v2735, %v2738
  %v2740 = vrot.slane %v2459, 4
  %v2741 = vrot.slane %v2455, 5
  %v2742 = vor.u32 %v2740, %v2741
  %v2743 = vsel %vm2732, %v2738, %v2742
  %v2744 = vrot.slane %v2467, 4
  %v2745 = vrot.slane %v2463, 5
  %v2746 = vor.u32 %v2744, %v2745
  %v2747 = vsel %vm2732, %v2742, %v2746
  %v2749 = vshll.u32 %v2316, 16
  %v2751 = vrot.slane %v2749, 5
  %v2752 = vsel %vm2732, %v2746, %v2751
  %v2753 = vrot.slane %v2471, 4
  %v2754 = vrot.slane %v2473, 5
  %v2755 = vor.u32 %v2753, %v2754
  %v2756 = vrot.slane %v2482, 4
  %v2757 = vrot.slane %v2478, 5
  %v2758 = vor.u32 %v2756, %v2757
  %v2759 = vsel %vm2732, %v2755, %v2758
  %v2760 = vrot.slane %v2490, 4
  %v2761 = vrot.slane %v2486, 5
  %v2762 = vor.u32 %v2760, %v2761
  %v2763 = vsel %vm2732, %v2758, %v2762
  %v2764 = vrot.slane %v2498, 4
  %v2765 = vrot.slane %v2494, 5
  %v2766 = vor.u32 %v2764, %v2765
  %v2767 = vsel %vm2732, %v2762, %v2766
  %v2769 = vshll.u32 %v2355, 16
  %v2771 = vrot.slane %v2769, 5
  %v2772 = vsel %vm2732, %v2766, %v2771
  %v2773 = vrot.slane %v2332, 4
  %v2774 = vrot.slane %v2333, 4
  %v2775 = vsel %vm2635, %v2773, %v2774
  %v2776 = vrot.slane %v2334, 4
  %v2777 = vsel %vm2635, %v2774, %v2776
  %v2778 = vrot.slane %v2335, 4
  %v2779 = vsel %vm2635, %v2776, %v2778
  %v2780 = vrot.slane %v2371, 4
  %v2781 = vrot.slane %v2372, 4
  %v2782 = vsel %vm2635, %v2780, %v2781
  %v2783 = vrot.slane %v2373, 4
  %v2784 = vsel %vm2635, %v2781, %v2783
  %v2785 = vrot.slane %v2374, 4
  %v2786 = vsel %vm2635, %v2783, %v2785
  %2787 = vrot.lane.b32.xlu0 %v2775, 64
  %v2788 = vpop.permute.xlu0 %2787
  %2789 = vrot.lane.b32.xlu0 %v2777, 64
  %v2790 = vpop.permute.xlu0 %2789
  %2791 = vrot.lane.b32.xlu0 %v2779, 64
  %v2792 = vpop.permute.xlu0 %2791
  %2793 = vrot.lane.b32.xlu0 %v2778, 64
  %v2794 = vpop.permute.xlu0 %2793
  %2795 = vrot.lane.b32.xlu0 %v2782, 64
  %v2796 = vpop.permute.xlu0 %2795
  %2797 = vrot.lane.b32.xlu0 %v2784, 64
  %v2798 = vpop.permute.xlu0 %2797
  %2799 = vrot.lane.b32.xlu0 %v2786, 64
  %v2800 = vpop.permute.xlu0 %2799
  %2801 = vrot.lane.b32.xlu0 %v2785, 64
  %v2802 = vpop.permute.xlu0 %2801
  %vm2803 = vcmask 523264
  %v2805 = vsel %vm2803, %v2312, %v2399
  %v2807 = vsel %vm2803, %v2313, %v2401
  %v2809 = vsel %vm2803, %v2314, %v2403
  %v2811 = vsel %vm2803, %v2315, %v2405
  %v2813 = vsel %vm2803, %v2351, %v2407
  %v2815 = vsel %vm2803, %v2352, %v2409
  %v2817 = vsel %vm2803, %v2353, %v2411
  %v2819 = vsel %vm2803, %v2354, %v2413
  %v2822 = vsel %vm2803, %v2317, %v2423
  %v2825 = vsel %vm2803, %v2318, %v2425
  %v2828 = vsel %vm2803, %v2319, %v2427
  %v2831 = vsel %vm2803, %v2320, %v2429
  %v2834 = vsel %vm2803, %v2356, %v2431
  %v2837 = vsel %vm2803, %v2357, %v2433
  %v2840 = vsel %vm2803, %v2358, %v2435
  %v2843 = vsel %vm2803, %v2359, %v2437
  %v2846 = vsel %vm2803, %v2450, %v2510
  %v2849 = vsel %vm2803, %v2458, %v2512
  %v2852 = vsel %vm2803, %v2466, %v2514
  %v2855 = vsel %vm2803, %v2469, %v2516
  %v2858 = vsel %vm2803, %v2481, %v2518
  %v2861 = vsel %vm2803, %v2489, %v2520
  %v2864 = vsel %vm2803, %v2497, %v2522
  %v2867 = vsel %vm2803, %v2500, %v2524
  %v2870 = vsel %vm2803, %v2342, %v2534
  %v2873 = vsel %vm2803, %v2343, %v2536
  %v2876 = vsel %vm2803, %v2344, %v2538
  %v2879 = vsel %vm2803, %v2345, %v2540
  %v2882 = vsel %vm2803, %v2381, %v2542
  %v2885 = vsel %vm2803, %v2382, %v2544
  %v2888 = vsel %vm2803, %v2383, %v2546
  %v2891 = vsel %vm2803, %v2384, %v2548
  %v2894 = vsel %vm2803, %v2347, %v2612
  %v2897 = vsel %vm2803, %v2348, %v2614
  %v2900 = vsel %vm2803, %v2349, %v2616
  %v2903 = vsel %vm2803, %v2350, %v2618
  %v2906 = vsel %vm2803, %v2386, %v2620
  %v2909 = vsel %vm2803, %v2387, %v2622
  %v2912 = vsel %vm2803, %v2388, %v2624
  %v2915 = vsel %vm2803, %v2389, %v2626
  %v2918 = vsel %vm2803, %v2638, %v2665
  %v2921 = vsel %vm2803, %v2640, %v2667
  %v2924 = vsel %vm2803, %v2642, %v2669
  %v2927 = vsel %vm2803, %v2641, %v2671
  %v2930 = vsel %vm2803, %v2645, %v2673
  %v2933 = vsel %vm2803, %v2647, %v2675
  %v2936 = vsel %vm2803, %v2649, %v2677
  %v2939 = vsel %vm2803, %v2648, %v2679
  %v2942 = vsel %vm2803, %v2690, %v2717
  %v2945 = vsel %vm2803, %v2692, %v2719
  %v2948 = vsel %vm2803, %v2694, %v2721
  %v2951 = vsel %vm2803, %v2693, %v2723
  %v2954 = vsel %vm2803, %v2697, %v2725
  %v2957 = vsel %vm2803, %v2699, %v2727
  %v2960 = vsel %vm2803, %v2701, %v2729
  %v2963 = vsel %vm2803, %v2700, %v2731
  %v2966 = vsel %vm2803, %v2739, %v2788
  %v2969 = vsel %vm2803, %v2743, %v2790
  %v2972 = vsel %vm2803, %v2747, %v2792
  %v2975 = vsel %vm2803, %v2752, %v2794
  %v2978 = vsel %vm2803, %v2759, %v2796
  %v2981 = vsel %vm2803, %v2763, %v2798
  %v2984 = vsel %vm2803, %v2767, %v2800
  %v2987 = vsel %vm2803, %v2772, %v2802
  %v2989 = vshll.u32 %v2336, 16
  %v2991 = vrot.slane %v2989, 1
  %v2992 = vsel %vm2438, %v2579, %v2991
  %v2994 = vshll.u32 %v2375, 16
  %v2996 = vrot.slane %v2994, 1
  %v2997 = vsel %vm2438, %v2610, %v2996
  %2998 = vrot.lane.b32.xlu0 %v2992, 64
  %v2999 = vpop.permute.xlu0 %2998
  %3000 = vrot.lane.b32.xlu0 %v2997, 64
  %v3001 = vpop.permute.xlu0 %3000
  %v3004 = vrot.slane %v2316, 4
  %v3005 = vsel %vm2635, %v2641, %v3004
  %v3006 = vrot.slane %v2355, 4
  %v3007 = vsel %vm2635, %v2648, %v3006
  %v3010 = vrot.slane %v2326, 4
  %v3011 = vsel %vm2635, %v2655, %v3010
  %v3012 = vrot.slane %v2365, 4
  %v3013 = vsel %vm2635, %v2662, %v3012
  %3014 = vrot.lane.b32.xlu0 %v2651, 64
  %v3015 = vpop.permute.xlu0 %3014
  %3016 = vrot.lane.b32.xlu0 %v3011, 64
  %v3017 = vpop.permute.xlu0 %3016
  %3018 = vrot.lane.b32.xlu0 %v2658, 64
  %v3019 = vpop.permute.xlu0 %3018
  %3020 = vrot.lane.b32.xlu0 %v3013, 64
  %v3021 = vpop.permute.xlu0 %3020
  %v3024 = vrot.slane %v2321, 4
  %v3025 = vsel %vm2635, %v2693, %v3024
  %v3026 = vrot.slane %v2360, 4
  %v3027 = vsel %vm2635, %v2700, %v3026
  %v3030 = vrot.slane %v2331, 4
  %v3031 = vsel %vm2635, %v2707, %v3030
  %v3032 = vrot.slane %v2370, 4
  %v3033 = vsel %vm2635, %v2714, %v3032
  %3034 = vrot.lane.b32.xlu0 %v2703, 64
  %v3035 = vpop.permute.xlu0 %3034
  %3036 = vrot.lane.b32.xlu0 %v3031, 64
  %v3037 = vpop.permute.xlu0 %3036
  %3038 = vrot.lane.b32.xlu0 %v2710, 64
  %v3039 = vpop.permute.xlu0 %3038
  %3040 = vrot.lane.b32.xlu0 %v3033, 64
  %v3041 = vpop.permute.xlu0 %3040
  %v3042 = vshrl.u32 %v2316, 16
  %v3044 = vrot.slane %v3042, 4
  %v3045 = vor.u32 %v3044, %v2751
  %v3046 = vsel %vm2732, %v2746, %v3045
  %v3047 = vshrl.u32 %v2355, 16
  %v3049 = vrot.slane %v3047, 4
  %v3050 = vor.u32 %v3049, %v2771
  %v3051 = vsel %vm2732, %v2766, %v3050
  %v3053 = vsel %vm2803, %v2350, %v2999
  %v3055 = vsel %vm2803, %v2389, %v3001
  %v3058 = vsel %vm2803, %v2637, %v3015
  %v3061 = vsel %vm2803, %v3005, %v3017
  %v3064 = vsel %vm2803, %v2644, %v3019
  %v3067 = vsel %vm2803, %v3007, %v3021
  %v3070 = vsel %vm2803, %v2689, %v3035
  %v3073 = vsel %vm2803, %v3025, %v3037
  %v3076 = vsel %vm2803, %v2696, %v3039
  %v3079 = vsel %vm2803, %v3027, %v3041
  %v3112 = vrot.slane %v2870, 4
  %v3113 = vrot.slane %v2873, 4
  %v3114 = vsel %vm2635, %v3112, %v3113
  %v3115 = vrot.slane %v2894, 4
  %v3116 = vrot.slane %v2897, 4
  %v3117 = vsel %vm2635, %v3115, %v3116
  %v3118 = vrot.slane %v3058, 4
  %v3119 = vrot.slane %v2921, 4
  %v3120 = vsel %vm2635, %v3118, %v3119
  %v3121 = vrot.slane %v3070, 4
  %v3122 = vrot.slane %v2945, 4
  %v3123 = vsel %vm2635, %v3121, %v3122
  %v3124 = vrot.slane %v2738, 4
  %v3125 = vrot.slane %v2743, 4
  %v3126 = vsel %vm2635, %v3124, %v3125
  %v3127 = vrot.slane %v2876, 4
  %v3128 = vsel %vm2635, %v3113, %v3127
  %v3129 = vrot.slane %v2900, 4
  %v3130 = vsel %vm2635, %v3116, %v3129
  %v3131 = vrot.slane %v2924, 4
  %v3132 = vsel %vm2635, %v3119, %v3131
  %v3133 = vrot.slane %v2948, 4
  %v3134 = vsel %vm2635, %v3122, %v3133
  %v3135 = vrot.slane %v2747, 4
  %v3136 = vsel %vm2635, %v3125, %v3135
  %v3137 = vrot.slane %v2879, 4
  %v3138 = vsel %vm2635, %v3127, %v3137
  %v3139 = vrot.slane %v3053, 4
  %v3140 = vsel %vm2635, %v3129, %v3139
  %v3141 = vrot.slane %v3061, 4
  %v3142 = vsel %vm2635, %v3131, %v3141
  %v3143 = vrot.slane %v3073, 4
  %v3144 = vsel %vm2635, %v3133, %v3143
  %v3145 = vrot.slane %v3046, 4
  %v3146 = vsel %vm2635, %v3135, %v3145
  %v3147 = vrot.slane %v2882, 4
  %v3148 = vrot.slane %v2885, 4
  %v3149 = vsel %vm2635, %v3147, %v3148
  %v3150 = vrot.slane %v2906, 4
  %v3151 = vrot.slane %v2909, 4
  %v3152 = vsel %vm2635, %v3150, %v3151
  %v3153 = vrot.slane %v3064, 4
  %v3154 = vrot.slane %v2933, 4
  %v3155 = vsel %vm2635, %v3153, %v3154
  %v3156 = vrot.slane %v3076, 4
  %v3157 = vrot.slane %v2957, 4
  %v3158 = vsel %vm2635, %v3156, %v3157
  %v3159 = vrot.slane %v2758, 4
  %v3160 = vrot.slane %v2763, 4
  %v3161 = vsel %vm2635, %v3159, %v3160
  %v3162 = vrot.slane %v2888, 4
  %v3163 = vsel %vm2635, %v3148, %v3162
  %v3164 = vrot.slane %v2912, 4
  %v3165 = vsel %vm2635, %v3151, %v3164
  %v3166 = vrot.slane %v2936, 4
  %v3167 = vsel %vm2635, %v3154, %v3166
  %v3168 = vrot.slane %v2960, 4
  %v3169 = vsel %vm2635, %v3157, %v3168
  %v3170 = vrot.slane %v2767, 4
  %v3171 = vsel %vm2635, %v3160, %v3170
  %v3172 = vrot.slane %v2891, 4
  %v3173 = vsel %vm2635, %v3162, %v3172
  %v3174 = vrot.slane %v3055, 4
  %v3175 = vsel %vm2635, %v3164, %v3174
  %v3176 = vrot.slane %v3067, 4
  %v3177 = vsel %vm2635, %v3166, %v3176
  %v3178 = vrot.slane %v3079, 4
  %v3179 = vsel %vm2635, %v3168, %v3178
  %v3180 = vrot.slane %v3051, 4
  %v3181 = vsel %vm2635, %v3170, %v3180
  %v3224 = vunpack.c.l.b16 %v2805
  %v3225 = vunpack.c.l.b16 %v2822
  %v3226 = vunpack.c.l.b16 %v2846
  %v3227 = vunpack.c.l.b16 %v2870
  %v3228 = vunpack.c.l.b16 %v2894
  %v3229 = vunpack.c.l.b16 %v2918
  %v3230 = vunpack.c.l.b16 %v2942
  %v3231 = vunpack.c.l.b16 %v2966
  %v3232 = vunpack.c.l.b16 %v3114
  %v3233 = vunpack.c.l.b16 %v3117
  %v3234 = vunpack.c.l.b16 %v3120
  %v3235 = vunpack.c.l.b16 %v3123
  %v3236 = vunpack.c.l.b16 %v3126
  %v3237 = vunpack.c.h.b16 %v2805
  %v3238 = vunpack.c.h.b16 %v2822
  %v3239 = vunpack.c.h.b16 %v2846
  %v3240 = vunpack.c.h.b16 %v2870
  %v3241 = vunpack.c.h.b16 %v2894
  %v3242 = vunpack.c.h.b16 %v2918
  %v3243 = vunpack.c.h.b16 %v2942
  %v3244 = vunpack.c.h.b16 %v2966
  %v3245 = vunpack.c.h.b16 %v3114
  %v3246 = vunpack.c.h.b16 %v3117
  %v3247 = vunpack.c.h.b16 %v3120
  %v3248 = vunpack.c.h.b16 %v3123
  %v3249 = vunpack.c.h.b16 %v3126
  %v3250 = vunpack.c.l.b16 %v2807
  %v3251 = vunpack.c.l.b16 %v2825
  %v3252 = vunpack.c.l.b16 %v2849
  %v3253 = vunpack.c.l.b16 %v2873
  %v3254 = vunpack.c.l.b16 %v2897
  %v3255 = vunpack.c.l.b16 %v2921
  %v3256 = vunpack.c.l.b16 %v2945
  %v3257 = vunpack.c.l.b16 %v2969
  %v3258 = vunpack.c.l.b16 %v3128
  %v3259 = vunpack.c.l.b16 %v3130
  %v3260 = vunpack.c.l.b16 %v3132
  %v3261 = vunpack.c.l.b16 %v3134
  %v3262 = vunpack.c.l.b16 %v3136
  %v3263 = vunpack.c.h.b16 %v2807
  %v3264 = vunpack.c.h.b16 %v2825
  %v3265 = vunpack.c.h.b16 %v2849
  %v3266 = vunpack.c.h.b16 %v2873
  %v3267 = vunpack.c.h.b16 %v2897
  %v3268 = vunpack.c.h.b16 %v2921
  %v3269 = vunpack.c.h.b16 %v2945
  %v3270 = vunpack.c.h.b16 %v2969
  %v3271 = vunpack.c.h.b16 %v3128
  %v3272 = vunpack.c.h.b16 %v3130
  %v3273 = vunpack.c.h.b16 %v3132
  %v3274 = vunpack.c.h.b16 %v3134
  %v3275 = vunpack.c.h.b16 %v3136
  %v3276 = vunpack.c.l.b16 %v2809
  %v3277 = vunpack.c.l.b16 %v2828
  %v3278 = vunpack.c.l.b16 %v2852
  %v3279 = vunpack.c.l.b16 %v2876
  %v3280 = vunpack.c.l.b16 %v2900
  %v3281 = vunpack.c.l.b16 %v2924
  %v3282 = vunpack.c.l.b16 %v2948
  %v3283 = vunpack.c.l.b16 %v2972
  %v3284 = vunpack.c.l.b16 %v3138
  %v3285 = vunpack.c.l.b16 %v3140
  %v3286 = vunpack.c.l.b16 %v3142
  %v3287 = vunpack.c.l.b16 %v3144
  %v3288 = vunpack.c.l.b16 %v3146
  %v3289 = vunpack.c.h.b16 %v2809
  %v3290 = vunpack.c.h.b16 %v2828
  %v3291 = vunpack.c.h.b16 %v2852
  %v3292 = vunpack.c.h.b16 %v2876
  %v3293 = vunpack.c.h.b16 %v2900
  %v3294 = vunpack.c.h.b16 %v2924
  %v3295 = vunpack.c.h.b16 %v2948
  %v3296 = vunpack.c.h.b16 %v2972
  %v3297 = vunpack.c.h.b16 %v3138
  %v3298 = vunpack.c.h.b16 %v3140
  %v3299 = vunpack.c.h.b16 %v3142
  %v3300 = vunpack.c.h.b16 %v3144
  %v3301 = vunpack.c.h.b16 %v3146
  %v3302 = vunpack.c.l.b16 %v2811
  %v3303 = vunpack.c.l.b16 %v2831
  %v3304 = vunpack.c.l.b16 %v2855
  %v3305 = vunpack.c.l.b16 %v2879
  %v3306 = vunpack.c.l.b16 %v2903
  %v3307 = vunpack.c.l.b16 %v2927
  %v3308 = vunpack.c.l.b16 %v2951
  %v3309 = vunpack.c.l.b16 %v2975
  %v3310 = vunpack.c.l.b16 %v3137
  %v3311 = vunpack.c.l.b16 %v3139
  %v3312 = vunpack.c.l.b16 %v3141
  %v3313 = vunpack.c.l.b16 %v3143
  %v3314 = vunpack.c.l.b16 %v3145
  %v3315 = vunpack.c.l.b16 %v2813
  %v3316 = vunpack.c.l.b16 %v2834
  %v3317 = vunpack.c.l.b16 %v2858
  %v3318 = vunpack.c.l.b16 %v2882
  %v3319 = vunpack.c.l.b16 %v2906
  %v3320 = vunpack.c.l.b16 %v2930
  %v3321 = vunpack.c.l.b16 %v2954
  %v3322 = vunpack.c.l.b16 %v2978
  %v3323 = vunpack.c.l.b16 %v3149
  %v3324 = vunpack.c.l.b16 %v3152
  %v3325 = vunpack.c.l.b16 %v3155
  %v3326 = vunpack.c.l.b16 %v3158
  %v3327 = vunpack.c.l.b16 %v3161
  %v3328 = vunpack.c.h.b16 %v2813
  %v3329 = vunpack.c.h.b16 %v2834
  %v3330 = vunpack.c.h.b16 %v2858
  %v3331 = vunpack.c.h.b16 %v2882
  %v3332 = vunpack.c.h.b16 %v2906
  %v3333 = vunpack.c.h.b16 %v2930
  %v3334 = vunpack.c.h.b16 %v2954
  %v3335 = vunpack.c.h.b16 %v2978
  %v3336 = vunpack.c.h.b16 %v3149
  %v3337 = vunpack.c.h.b16 %v3152
  %v3338 = vunpack.c.h.b16 %v3155
  %v3339 = vunpack.c.h.b16 %v3158
  %v3340 = vunpack.c.h.b16 %v3161
  %v3341 = vunpack.c.l.b16 %v2815
  %v3342 = vunpack.c.l.b16 %v2837
  %v3343 = vunpack.c.l.b16 %v2861
  %v3344 = vunpack.c.l.b16 %v2885
  %v3345 = vunpack.c.l.b16 %v2909
  %v3346 = vunpack.c.l.b16 %v2933
  %v3347 = vunpack.c.l.b16 %v2957
  %v3348 = vunpack.c.l.b16 %v2981
  %v3349 = vunpack.c.l.b16 %v3163
  %v3350 = vunpack.c.l.b16 %v3165
  %v3351 = vunpack.c.l.b16 %v3167
  %v3352 = vunpack.c.l.b16 %v3169
  %v3353 = vunpack.c.l.b16 %v3171
  %v3354 = vunpack.c.h.b16 %v2815
  %v3355 = vunpack.c.h.b16 %v2837
  %v3356 = vunpack.c.h.b16 %v2861
  %v3357 = vunpack.c.h.b16 %v2885
  %v3358 = vunpack.c.h.b16 %v2909
  %v3359 = vunpack.c.h.b16 %v2933
  %v3360 = vunpack.c.h.b16 %v2957
  %v3361 = vunpack.c.h.b16 %v2981
  %v3362 = vunpack.c.h.b16 %v3163
  %v3363 = vunpack.c.h.b16 %v3165
  %v3364 = vunpack.c.h.b16 %v3167
  %v3365 = vunpack.c.h.b16 %v3169
  %v3366 = vunpack.c.h.b16 %v3171
  %v3367 = vunpack.c.l.b16 %v2817
  %v3368 = vunpack.c.l.b16 %v2840
  %v3369 = vunpack.c.l.b16 %v2864
  %v3370 = vunpack.c.l.b16 %v2888
  %v3371 = vunpack.c.l.b16 %v2912
  %v3372 = vunpack.c.l.b16 %v2936
  %v3373 = vunpack.c.l.b16 %v2960
  %v3374 = vunpack.c.l.b16 %v2984
  %v3375 = vunpack.c.l.b16 %v3173
  %v3376 = vunpack.c.l.b16 %v3175
  %v3377 = vunpack.c.l.b16 %v3177
  %v3378 = vunpack.c.l.b16 %v3179
  %v3379 = vunpack.c.l.b16 %v3181
  %v3380 = vunpack.c.h.b16 %v2817
  %v3381 = vunpack.c.h.b16 %v2840
  %v3382 = vunpack.c.h.b16 %v2864
  %v3383 = vunpack.c.h.b16 %v2888
  %v3384 = vunpack.c.h.b16 %v2912
  %v3385 = vunpack.c.h.b16 %v2936
  %v3386 = vunpack.c.h.b16 %v2960
  %v3387 = vunpack.c.h.b16 %v2984
  %v3388 = vunpack.c.h.b16 %v3173
  %v3389 = vunpack.c.h.b16 %v3175
  %v3390 = vunpack.c.h.b16 %v3177
  %v3391 = vunpack.c.h.b16 %v3179
  %v3392 = vunpack.c.h.b16 %v3181
  %v3393 = vunpack.c.l.b16 %v2819
  %v3394 = vunpack.c.l.b16 %v2843
  %v3395 = vunpack.c.l.b16 %v2867
  %v3396 = vunpack.c.l.b16 %v2891
  %v3397 = vunpack.c.l.b16 %v2915
  %v3398 = vunpack.c.l.b16 %v2939
  %v3399 = vunpack.c.l.b16 %v2963
  %v3400 = vunpack.c.l.b16 %v2987
  %v3401 = vunpack.c.l.b16 %v3172
  %v3402 = vunpack.c.l.b16 %v3174
  %v3403 = vunpack.c.l.b16 %v3176
  %v3404 = vunpack.c.l.b16 %v3178
  %v3405 = vunpack.c.l.b16 %v3180
  %v3406 = vld [vmem:[%s4] sm:$0xf]
  %v3407 = vld [vmem:[%s4 + $0x4] sm:$0xf]
  %v3408 = vld [vmem:[%s4 + $0x8] sm:$0xf]
  %v3409 = vld [vmem:[%s4 + $0xc] sm:$0xf]
  %v3410 = vld [vmem:[%s4 + $0x10] sm:$0xf]
  %v3411 = vld [vmem:[%s4 + $0x14] sm:$0xf]
  %v3412 = vld [vmem:[%s4 + $0x18] sm:$0xf]
  %v3413 = vld [vmem:[%s4 + $0x1c] sm:$0xf]
  %v3414 = vld [vmem:[%s4 + $0x20] sm:$0xf]
  %v3415 = vld [vmem:[%s4 + $0x24] sm:$0xf]
  %v3416 = vld [vmem:[%s4 + $0x28] sm:$0xf]
  %v3417 = vld [vmem:[%s4 + $0x2c] sm:$0xf]
  %v3418 = vld [vmem:[%s4 + $0x30] sm:$0xf]
  %v3419 = vld [vmem:[%s4 + $0x34] sm:$0xf]
  %v3420 = vld [vmem:[%s4 + $0x38] sm:$0xf]
  %v3421 = vld [vmem:[%s4 + $0x3c] sm:$0xf]
  %v3422 = vld [vmem:[%s4 + $0x40] sm:$0xf]
  %v3423 = vld [vmem:[%s4 + $0x44] sm:$0xf]
  %v3424 = vld [vmem:[%s4 + $0x48] sm:$0xf]
  %v3425 = vld [vmem:[%s4 + $0x4c] sm:$0xf]
  %v3426 = vld [vmem:[%s4 + $0x50] sm:$0xf]
  %v3427 = vld [vmem:[%s4 + $0x54] sm:$0xf]
  %v3428 = vld [vmem:[%s4 + $0x58] sm:$0xf]
  %v3429 = vld [vmem:[%s4 + $0x5c] sm:$0xf]
  %v3430 = vld [vmem:[%s4 + $0x60] sm:$0xf]
  %v3431 = vld [vmem:[%s4 + $0x64] sm:$0xf]
  %v3432 = vld [vmem:[%s4 + $0x68] sm:$0xf]
  %v3433 = vld [vmem:[%s4 + $0x6c] sm:$0xf]
  %v3434 = vld [vmem:[%s4 + $0x70] sm:$0xf]
  %v3435 = vld [vmem:[%s4 + $0x74] sm:$0xf]
  %v3436 = vld [vmem:[%s4 + $0x78] sm:$0xf]
  %v3437 = vld [vmem:[%s4 + $0x7c] sm:$0xf]
  %v3438 = vld [vmem:[%s4 + $0x80] sm:$0xf]
  %v3439 = vld [vmem:[%s4 + $0x84] sm:$0xf]
  %v3440 = vld [vmem:[%s4 + $0x88] sm:$0xf]
  %v3441 = vld [vmem:[%s4 + $0x8c] sm:$0xf]
  %v3442 = vld [vmem:[%s4 + $0x90] sm:$0xf]
  %v3443 = vld [vmem:[%s4 + $0x94] sm:$0xf]
  %v3444 = vld [vmem:[%s4 + $0x98] sm:$0xf]
  %v3445 = vld [vmem:[%s4 + $0x9c] sm:$0xf]
  %v3446 = vld [vmem:[%s4 + $0xa0] sm:$0xf]
  %v3447 = vld [vmem:[%s4 + $0xa4] sm:$0xf]
  %v3448 = vld [vmem:[%s4 + $0xa8] sm:$0xf]
  %v3449 = vld [vmem:[%s4 + $0xac] sm:$0xf]
  %v3450 = vld [vmem:[%s4 + $0xb0] sm:$0xf]
  %v3451 = vld [vmem:[%s4 + $0xb4] sm:$0xf]
  %v3452 = vld [vmem:[%s4 + $0xb8] sm:$0xf]
  %v3453 = vld [vmem:[%s4 + $0xbc] sm:$0xf]
  %v3454 = vld [vmem:[%s4 + $0xc0] sm:$0xf]
  %v3455 = vld [vmem:[%s4 + $0xc4] sm:$0xf]
  %v3456 = vld [vmem:[%s4 + $0xc8] sm:$0xf]
  %v3457 = vld [vmem:[%s4 + $0xcc] sm:$0xf]
  %v3458 = vld [vmem:[%s4 + $0xd0] sm:$0xf]
  %v3459 = vld [vmem:[%s4 + $0xd4] sm:$0xf]
  %v3460 = vld [vmem:[%s4 + $0xd8] sm:$0xf]
  %v3461 = vld [vmem:[%s4 + $0xdc] sm:$0xf]
  %v3462 = vld [vmem:[%s4 + $0xe0] sm:$0xf]
  %v3463 = vld [vmem:[%s4 + $0xe4] sm:$0xf]
  %v3464 = vld [vmem:[%s4 + $0xe8] sm:$0xf]
  %v3465 = vld [vmem:[%s4 + $0xec] sm:$0xf]
  %v3466 = vld [vmem:[%s4 + $0xf0] sm:$0xf]
  %v3467 = vld [vmem:[%s4 + $0xf4] sm:$0xf]
  %v3468 = vld [vmem:[%s4 + $0xf8] sm:$0xf]
  %v3469 = vld [vmem:[%s4 + $0xfc] sm:$0xf]
  %v3470 = vld [vmem:[%s4 + $0x100] sm:$0xf]
  %v3471 = vld [vmem:[%s4 + $0x104] sm:$0xf]
  %v3472 = vld [vmem:[%s4 + $0x108] sm:$0xf]
  %v3473 = vld [vmem:[%s4 + $0x10c] sm:$0xf]
  %v3474 = vld [vmem:[%s4 + $0x110] sm:$0xf]
  %v3475 = vld [vmem:[%s4 + $0x114] sm:$0xf]
  %v3476 = vld [vmem:[%s4 + $0x118] sm:$0xf]
  %v3477 = vld [vmem:[%s4 + $0x11c] sm:$0xf]
  %v3478 = vld [vmem:[%s4 + $0x120] sm:$0xf]
  %v3479 = vld [vmem:[%s4 + $0x124] sm:$0xf]
  %v3480 = vld [vmem:[%s4 + $0x128] sm:$0xf]
  %v3481 = vld [vmem:[%s4 + $0x12c] sm:$0xf]
  %v3482 = vld [vmem:[%s4 + $0x130] sm:$0xf]
  %v3483 = vld [vmem:[%s4 + $0x134] sm:$0xf]
  %v3484 = vld [vmem:[%s4 + $0x138] sm:$0xf]
  %v3485 = vld [vmem:[%s4 + $0x13c] sm:$0xf]
  %v3486 = vld [vmem:[%s4 + $0x140] sm:$0xf]
  %v3487 = vld [vmem:[%s4 + $0x144] sm:$0xf]
  %v3488 = vld [vmem:[%s4 + $0x148] sm:$0xf]
  %v3489 = vld [vmem:[%s4 + $0x14c] sm:$0xf]
  %v3490 = vld [vmem:[%s4 + $0x150] sm:$0xf]
  %v3491 = vld [vmem:[%s4 + $0x154] sm:$0xf]
  %v3492 = vld [vmem:[%s4 + $0x158] sm:$0xf]
  %v3493 = vld [vmem:[%s4 + $0x15c] sm:$0xf]
  %v3494 = vld [vmem:[%s4 + $0x160] sm:$0xf]
  %v3495 = vld [vmem:[%s4 + $0x164] sm:$0xf]
  %v3496 = vld [vmem:[%s4 + $0x168] sm:$0xf]
  %v3497 = vld [vmem:[%s4 + $0x16c] sm:$0xf]
  %v3498 = vld [vmem:[%s4 + $0x170] sm:$0xf]
  %v3499 = vld [vmem:[%s4 + $0x174] sm:$0xf]
  %v3500 = vld [vmem:[%s4 + $0x178] sm:$0xf]
  %v3501 = vld [vmem:[%s4 + $0x17c] sm:$0xf]
  %v3502 = vld [vmem:[%s4 + $0x180] sm:$0xf]
  %v3503 = vld [vmem:[%s4 + $0x184] sm:$0xf]
  %v3504 = vld [vmem:[%s4 + $0x188] sm:$0xf]
  %v3505 = vld [vmem:[%s4 + $0x18c] sm:$0xf]
  %v3506 = vld [vmem:[%s4 + $0x190] sm:$0xf]
  %v3507 = vld [vmem:[%s4 + $0x194] sm:$0xf]
  %v3508 = vld [vmem:[%s4 + $0x198] sm:$0xf]
  %v3509 = vld [vmem:[%s4 + $0x19c] sm:$0xf]
  %v3510 = vld [vmem:[%s4 + $0x1a0] sm:$0xf]
  %v3511 = vld [vmem:[%s4 + $0x1a4] sm:$0xf]
  %v3512 = vld [vmem:[%s4 + $0x1a8] sm:$0xf]
  %v3513 = vld [vmem:[%s4 + $0x1ac] sm:$0xf]
  %v3514 = vld [vmem:[%s4 + $0x1b0] sm:$0xf]
  %v3515 = vld [vmem:[%s4 + $0x1b4] sm:$0xf]
  %v3516 = vld [vmem:[%s4 + $0x1b8] sm:$0xf]
  %v3517 = vld [vmem:[%s4 + $0x1bc] sm:$0xf]
  %v3518 = vld [vmem:[%s4 + $0x1c0] sm:$0xf]
  %v3519 = vld [vmem:[%s4 + $0x1c4] sm:$0xf]
  %v3520 = vld [vmem:[%s4 + $0x1c8] sm:$0xf]
  %v3521 = vld [vmem:[%s4 + $0x1cc] sm:$0xf]
  %v3522 = vld [vmem:[%s4 + $0x1d0] sm:$0xf]
  %v3523 = vld [vmem:[%s4 + $0x1d4] sm:$0xf]
  %v3524 = vld [vmem:[%s4 + $0x1d8] sm:$0xf]
  %v3525 = vld [vmem:[%s4 + $0x1dc] sm:$0xf]
  %v3526 = vld [vmem:[%s4 + $0x1e0] sm:$0xf]
  %v3527 = vld [vmem:[%s4 + $0x1e4] sm:$0xf]
  %v3528 = vld [vmem:[%s4 + $0x1e8] sm:$0xf]
  %v3529 = vld [vmem:[%s4 + $0x1ec] sm:$0xf]
  %v3530 = vld [vmem:[%s4 + $0x1f0] sm:$0xf]
  %v3531 = vld [vmem:[%s4 + $0x1f4] sm:$0xf]
  %v3532 = vld [vmem:[%s4 + $0x1f8] sm:$0xf]
  %v3533 = vld [vmem:[%s4 + $0x1fc] sm:$0xf]
  %v3534 = vld [vmem:[%s4 + $0x200] sm:$0xf]
  %v3535 = vld [vmem:[%s4 + $0x204] sm:$0xf]
  %v3536 = vld [vmem:[%s4 + $0x208] sm:$0xf]
  %v3537 = vld [vmem:[%s4 + $0x20c] sm:$0xf]
  %v3538 = vld [vmem:[%s4 + $0x210] sm:$0xf]
  %v3539 = vld [vmem:[%s4 + $0x214] sm:$0xf]
  %v3540 = vld [vmem:[%s4 + $0x218] sm:$0xf]
  %v3541 = vld [vmem:[%s4 + $0x21c] sm:$0xf]
  %v3542 = vld [vmem:[%s4 + $0x220] sm:$0xf]
  %v3543 = vld [vmem:[%s4 + $0x224] sm:$0xf]
  %v3544 = vld [vmem:[%s4 + $0x228] sm:$0xf]
  %v3545 = vld [vmem:[%s4 + $0x22c] sm:$0xf]
  %v3546 = vld [vmem:[%s4 + $0x230] sm:$0xf]
  %v3547 = vld [vmem:[%s4 + $0x234] sm:$0xf]
  %v3548 = vld [vmem:[%s4 + $0x238] sm:$0xf]
  %v3549 = vld [vmem:[%s4 + $0x23c] sm:$0xf]
  %v3550 = vld [vmem:[%s4 + $0x240] sm:$0xf]
  %v3551 = vld [vmem:[%s4 + $0x244] sm:$0xf]
  %v3552 = vld [vmem:[%s4 + $0x248] sm:$0xf]
  %v3553 = vld [vmem:[%s4 + $0x24c] sm:$0xf]
  %v3554 = vld [vmem:[%s4 + $0x250] sm:$0xf]
  %v3555 = vld [vmem:[%s4 + $0x254] sm:$0xf]
  %v3556 = vld [vmem:[%s4 + $0x258] sm:$0xf]
  %v3557 = vld [vmem:[%s4 + $0x25c] sm:$0xf]
  %v3558 = vld [vmem:[%s4 + $0x260] sm:$0xf]
  %v3559 = vld [vmem:[%s4 + $0x264] sm:$0xf]
  %v3560 = vld [vmem:[%s4 + $0x268] sm:$0xf]
  %v3561 = vld [vmem:[%s4 + $0x26c] sm:$0xf]
  %v3562 = vld [vmem:[%s4 + $0x270] sm:$0xf]
  %v3563 = vld [vmem:[%s4 + $0x274] sm:$0xf]
  %v3564 = vld [vmem:[%s4 + $0x278] sm:$0xf]
  %v3565 = vld [vmem:[%s4 + $0x27c] sm:$0xf]
  %v3566 = vld [vmem:[%s4 + $0x280] sm:$0xf]
  %v3567 = vld [vmem:[%s4 + $0x284] sm:$0xf]
  %v3568 = vld [vmem:[%s4 + $0x288] sm:$0xf]
  %v3569 = vld [vmem:[%s4 + $0x28c] sm:$0xf]
  %v3570 = vld [vmem:[%s4 + $0x290] sm:$0xf]
  %v3571 = vld [vmem:[%s4 + $0x294] sm:$0xf]
  %v3572 = vld [vmem:[%s4 + $0x298] sm:$0xf]
  %v3573 = vld [vmem:[%s4 + $0x29c] sm:$0xf]
  %v3574 = vld [vmem:[%s4 + $0x2a0] sm:$0xf]
  %v3575 = vld [vmem:[%s4 + $0x2a4] sm:$0xf]
  %v3576 = vld [vmem:[%s4 + $0x2a8] sm:$0xf]
  %v3577 = vld [vmem:[%s4 + $0x2ac] sm:$0xf]
  %v3578 = vld [vmem:[%s4 + $0x2b0] sm:$0xf]
  %v3579 = vld [vmem:[%s4 + $0x2b4] sm:$0xf]
  %v3580 = vld [vmem:[%s4 + $0x2b8] sm:$0xf]
  %v3581 = vld [vmem:[%s4 + $0x2bc] sm:$0xf]
  %v3582 = vld [vmem:[%s4 + $0x2c0] sm:$0xf]
  %v3583 = vld [vmem:[%s4 + $0x2c4] sm:$0xf]
  %v3584 = vld [vmem:[%s4 + $0x2c8] sm:$0xf]
  %v3585 = vld [vmem:[%s4 + $0x2cc] sm:$0xf]
  %v3586 = vld [vmem:[%s4 + $0x2d0] sm:$0xf]
  %v3587 = vld [vmem:[%s4 + $0x2d4] sm:$0xf]
  %v3588 = vld [vmem:[%s4 + $0x2d8] sm:$0xf]
  %v3589 = vld [vmem:[%s4 + $0x2dc] sm:$0xf]
  %v3590 = vld [vmem:[%s4 + $0x2e0] sm:$0xf]
  %v3591 = vld [vmem:[%s4 + $0x2e4] sm:$0xf]
  %v3592 = vld [vmem:[%s4 + $0x2e8] sm:$0xf]
  %v3593 = vld [vmem:[%s4 + $0x2ec] sm:$0xf]
  %v3594 = vld [vmem:[%s4 + $0x2f0] sm:$0xf]
  %v3595 = vld [vmem:[%s4 + $0x2f4] sm:$0xf]
  %v3596 = vld [vmem:[%s4 + $0x2f8] sm:$0xf]
  %v3597 = vld [vmem:[%s4 + $0x2fc] sm:$0xf]
  %v3598 = vld [vmem:[%s4 + $0x300] sm:$0xf]
  %v3599 = vld [vmem:[%s4 + $0x304] sm:$0xf]
  %v3600 = vld [vmem:[%s4 + $0x308] sm:$0xf]
  %v3601 = vld [vmem:[%s4 + $0x30c] sm:$0xf]
  %v3602 = vld [vmem:[%s4 + $0x310] sm:$0xf]
  %v3603 = vld [vmem:[%s4 + $0x314] sm:$0xf]
  %v3604 = vld [vmem:[%s4 + $0x318] sm:$0xf]
  %v3605 = vld [vmem:[%s4 + $0x31c] sm:$0xf]
  %v3606 = vld [vmem:[%s5] sm:$0x1]
  %v3608 = vlaneseq
  %v3609 = vshrl.u32 %v3608, 7
  %v3610 = vsub.s32 0, %v3609
  %v3611 = vrot.slane %v3606, %v3610
  %v3613 = vpack.c.b16 %v3237, %v3224
  %v3614 = vpack.c.b16 %v3238, %v3225
  %v3615 = vpack.c.b16 %v3239, %v3226
  %v3616 = vpack.c.b16 %v3240, %v3227
  %v3617 = vpack.c.b16 %v3241, %v3228
  %v3618 = vpack.c.b16 %v3242, %v3229
  %v3619 = vpack.c.b16 %v3243, %v3230
  %v3620 = vpack.c.b16 %v3244, %v3231
  %v3621 = vpack.c.b16 %v3245, %v3232
  %v3622 = vpack.c.b16 %v3246, %v3233
  %v3623 = vpack.c.b16 %v3247, %v3234
  %v3624 = vpack.c.b16 %v3248, %v3235
  %v3625 = vpack.c.b16 %v3249, %v3236
  %v3626 = vpack.c.b16 %v3263, %v3250
  %v3627 = vpack.c.b16 %v3264, %v3251
  %v3628 = vpack.c.b16 %v3265, %v3252
  %v3629 = vpack.c.b16 %v3266, %v3253
  %v3630 = vpack.c.b16 %v3267, %v3254
  %v3631 = vpack.c.b16 %v3268, %v3255
  %v3632 = vpack.c.b16 %v3269, %v3256
  %v3633 = vpack.c.b16 %v3270, %v3257
  %v3634 = vpack.c.b16 %v3271, %v3258
  %v3635 = vpack.c.b16 %v3272, %v3259
  %v3636 = vpack.c.b16 %v3273, %v3260
  %v3637 = vpack.c.b16 %v3274, %v3261
  %v3638 = vpack.c.b16 %v3275, %v3262
  %v3639 = vpack.c.b16 %v3289, %v3276
  %v3640 = vpack.c.b16 %v3290, %v3277
  %v3641 = vpack.c.b16 %v3291, %v3278
  %v3642 = vpack.c.b16 %v3292, %v3279
  %v3643 = vpack.c.b16 %v3293, %v3280
  %v3644 = vpack.c.b16 %v3294, %v3281
  %v3645 = vpack.c.b16 %v3295, %v3282
  %v3646 = vpack.c.b16 %v3296, %v3283
  %v3647 = vpack.c.b16 %v3297, %v3284
  %v3648 = vpack.c.b16 %v3298, %v3285
  %v3649 = vpack.c.b16 %v3299, %v3286
  %v3650 = vpack.c.b16 %v3300, %v3287
  %v3651 = vpack.c.b16 %v3301, %v3288
  %v3652 = vpack.c.b16 %v3315, %v3302
  %v3653 = vpack.c.b16 %v3316, %v3303
  %v3654 = vpack.c.b16 %v3317, %v3304
  %v3655 = vpack.c.b16 %v3318, %v3305
  %v3656 = vpack.c.b16 %v3319, %v3306
  %v3657 = vpack.c.b16 %v3320, %v3307
  %v3658 = vpack.c.b16 %v3321, %v3308
  %v3659 = vpack.c.b16 %v3322, %v3309
  %v3660 = vpack.c.b16 %v3323, %v3310
  %v3661 = vpack.c.b16 %v3324, %v3311
  %v3662 = vpack.c.b16 %v3325, %v3312
  %v3663 = vpack.c.b16 %v3326, %v3313
  %v3664 = vpack.c.b16 %v3327, %v3314
  %v3665 = vpack.c.b16 %v3341, %v3328
  %v3666 = vpack.c.b16 %v3342, %v3329
  %v3667 = vpack.c.b16 %v3343, %v3330
  %v3668 = vpack.c.b16 %v3344, %v3331
  %v3669 = vpack.c.b16 %v3345, %v3332
  %v3670 = vpack.c.b16 %v3346, %v3333
  %v3671 = vpack.c.b16 %v3347, %v3334
  %v3672 = vpack.c.b16 %v3348, %v3335
  %v3673 = vpack.c.b16 %v3349, %v3336
  %v3674 = vpack.c.b16 %v3350, %v3337
  %v3675 = vpack.c.b16 %v3351, %v3338
  %v3676 = vpack.c.b16 %v3352, %v3339
  %v3677 = vpack.c.b16 %v3353, %v3340
  %v3678 = vpack.c.b16 %v3367, %v3354
  %v3679 = vpack.c.b16 %v3368, %v3355
  %v3680 = vpack.c.b16 %v3369, %v3356
  %v3681 = vpack.c.b16 %v3370, %v3357
  %v3682 = vpack.c.b16 %v3371, %v3358
  %v3683 = vpack.c.b16 %v3372, %v3359
  %v3684 = vpack.c.b16 %v3373, %v3360
  %v3685 = vpack.c.b16 %v3374, %v3361
  %v3686 = vpack.c.b16 %v3375, %v3362
  %v3687 = vpack.c.b16 %v3376, %v3363
  %v3688 = vpack.c.b16 %v3377, %v3364
  %v3689 = vpack.c.b16 %v3378, %v3365
  %v3690 = vpack.c.b16 %v3379, %v3366
  %v3691 = vpack.c.b16 %v3393, %v3380
  %v3692 = vpack.c.b16 %v3394, %v3381
  %v3693 = vpack.c.b16 %v3395, %v3382
  %v3694 = vpack.c.b16 %v3396, %v3383
  %v3695 = vpack.c.b16 %v3397, %v3384
  %v3696 = vpack.c.b16 %v3398, %v3385
  %v3697 = vpack.c.b16 %v3399, %v3386
  %v3698 = vpack.c.b16 %v3400, %v3387
  %v3699 = vpack.c.b16 %v3401, %v3388
  %v3700 = vpack.c.b16 %v3402, %v3389
  %v3701 = vpack.c.b16 %v3403, %v3390
  %v3702 = vpack.c.b16 %v3404, %v3391
  %v3703 = vpack.c.b16 %v3405, %v3392
  %v3988 = vunpack.c.l.b16 %v3406
  %v3989 = vunpack.c.l.b16 %v3407
  %v3990 = vunpack.c.l.b16 %v3408
  %v3991 = vunpack.c.l.b16 %v3409
  %v3992 = vunpack.c.l.b16 %v3410
  %v3993 = vunpack.c.l.b16 %v3411
  %v3994 = vunpack.c.l.b16 %v3412
  %v3995 = vunpack.c.l.b16 %v3413
  %v3996 = vunpack.c.l.b16 %v3414
  %v3997 = vunpack.c.l.b16 %v3415
  %v3998 = vunpack.c.l.b16 %v3416
  %v3999 = vunpack.c.l.b16 %v3417
  %v4000 = vunpack.c.l.b16 %v3418
  %v4001 = vunpack.c.l.b16 %v3419
  %v4002 = vunpack.c.l.b16 %v3420
  %v4003 = vunpack.c.l.b16 %v3421
  %v4004 = vunpack.c.l.b16 %v3422
  %v4005 = vunpack.c.l.b16 %v3423
  %v4006 = vunpack.c.l.b16 %v3424
  %v4007 = vunpack.c.l.b16 %v3425
  %v4008 = vunpack.c.l.b16 %v3426
  %v4009 = vunpack.c.l.b16 %v3427
  %v4010 = vunpack.c.l.b16 %v3428
  %v4011 = vunpack.c.l.b16 %v3429
  %v4012 = vunpack.c.l.b16 %v3430
  %v4013 = vunpack.c.l.b16 %v3431
  %v4014 = vunpack.c.l.b16 %v3432
  %v4015 = vunpack.c.l.b16 %v3433
  %v4016 = vunpack.c.l.b16 %v3434
  %v4017 = vunpack.c.l.b16 %v3435
  %v4018 = vunpack.c.l.b16 %v3436
  %v4019 = vunpack.c.l.b16 %v3437
  %v4020 = vunpack.c.l.b16 %v3438
  %v4021 = vunpack.c.l.b16 %v3439
  %v4022 = vunpack.c.l.b16 %v3440
  %v4023 = vunpack.c.l.b16 %v3441
  %v4024 = vunpack.c.l.b16 %v3442
  %v4025 = vunpack.c.l.b16 %v3443
  %v4026 = vunpack.c.l.b16 %v3444
  %v4027 = vunpack.c.l.b16 %v3445
  %v4028 = vunpack.c.l.b16 %v3446
  %v4029 = vunpack.c.l.b16 %v3447
  %v4030 = vunpack.c.l.b16 %v3448
  %v4031 = vunpack.c.l.b16 %v3449
  %v4032 = vunpack.c.l.b16 %v3450
  %v4033 = vunpack.c.l.b16 %v3451
  %v4034 = vunpack.c.l.b16 %v3452
  %v4035 = vunpack.c.l.b16 %v3453
  %v4036 = vunpack.c.l.b16 %v3454
  %v4037 = vunpack.c.l.b16 %v3455
  %v4038 = vunpack.c.l.b16 %v3456
  %v4039 = vunpack.c.l.b16 %v3457
  %v4040 = vunpack.c.l.b16 %v3458
  %v4041 = vunpack.c.l.b16 %v3459
  %v4042 = vunpack.c.l.b16 %v3460
  %v4043 = vunpack.c.l.b16 %v3461
  %v4044 = vunpack.c.l.b16 %v3462
  %v4045 = vunpack.c.l.b16 %v3463
  %v4046 = vunpack.c.l.b16 %v3464
  %v4047 = vunpack.c.l.b16 %v3465
  %v4048 = vunpack.c.l.b16 %v3466
  %v4049 = vunpack.c.l.b16 %v3467
  %v4050 = vunpack.c.l.b16 %v3468
  %v4051 = vunpack.c.l.b16 %v3469
  %v4052 = vunpack.c.l.b16 %v3470
  %v4053 = vunpack.c.l.b16 %v3471
  %v4054 = vunpack.c.l.b16 %v3472
  %v4055 = vunpack.c.l.b16 %v3473
  %v4056 = vunpack.c.l.b16 %v3474
  %v4057 = vunpack.c.l.b16 %v3475
  %v4058 = vunpack.c.l.b16 %v3476
  %v4059 = vunpack.c.l.b16 %v3477
  %v4060 = vunpack.c.l.b16 %v3478
  %v4061 = vunpack.c.l.b16 %v3479
  %v4062 = vunpack.c.l.b16 %v3480
  %v4063 = vunpack.c.l.b16 %v3481
  %v4064 = vunpack.c.l.b16 %v3482
  %v4065 = vunpack.c.l.b16 %v3483
  %v4066 = vunpack.c.l.b16 %v3484
  %v4067 = vunpack.c.l.b16 %v3485
  %v4068 = vunpack.c.l.b16 %v3486
  %v4069 = vunpack.c.l.b16 %v3487
  %v4070 = vunpack.c.l.b16 %v3488
  %v4071 = vunpack.c.l.b16 %v3489
  %v4072 = vunpack.c.l.b16 %v3490
  %v4073 = vunpack.c.l.b16 %v3491
  %v4074 = vunpack.c.l.b16 %v3492
  %v4075 = vunpack.c.l.b16 %v3493
  %v4076 = vunpack.c.l.b16 %v3494
  %v4077 = vunpack.c.l.b16 %v3495
  %v4078 = vunpack.c.l.b16 %v3496
  %v4079 = vunpack.c.l.b16 %v3497
  %v4080 = vunpack.c.l.b16 %v3498
  %v4081 = vunpack.c.l.b16 %v3499
  %v4082 = vunpack.c.l.b16 %v3500
  %v4083 = vunpack.c.l.b16 %v3501
  %v4084 = vunpack.c.l.b16 %v3502
  %v4085 = vunpack.c.l.b16 %v3503
  %v4086 = vunpack.c.l.b16 %v3504
  %v4087 = vunpack.c.l.b16 %v3505
  %v4088 = vunpack.c.l.b16 %v3506
  %v4089 = vunpack.c.l.b16 %v3507
  %v4090 = vunpack.c.l.b16 %v3508
  %v4091 = vunpack.c.l.b16 %v3509
  %v4092 = vunpack.c.l.b16 %v3510
  %v4093 = vunpack.c.l.b16 %v3511
  %v4094 = vunpack.c.l.b16 %v3512
  %v4095 = vunpack.c.l.b16 %v3513
  %v4096 = vunpack.c.l.b16 %v3514
  %v4097 = vunpack.c.l.b16 %v3515
  %v4098 = vunpack.c.l.b16 %v3516
  %v4099 = vunpack.c.l.b16 %v3517
  %v4100 = vunpack.c.l.b16 %v3518
  %v4101 = vunpack.c.l.b16 %v3519
  %v4102 = vunpack.c.l.b16 %v3520
  %v4103 = vunpack.c.l.b16 %v3521
  %v4104 = vunpack.c.l.b16 %v3522
  %v4105 = vunpack.c.l.b16 %v3523
  %v4106 = vunpack.c.l.b16 %v3524
  %v4107 = vunpack.c.l.b16 %v3525
  %v4108 = vunpack.c.l.b16 %v3526
  %v4109 = vunpack.c.l.b16 %v3527
  %v4110 = vunpack.c.l.b16 %v3528
  %v4111 = vunpack.c.l.b16 %v3529
  %v4112 = vunpack.c.l.b16 %v3530
  %v4113 = vunpack.c.l.b16 %v3531
  %v4114 = vunpack.c.l.b16 %v3532
  %v4115 = vunpack.c.l.b16 %v3533
  %v4116 = vunpack.c.l.b16 %v3534
  %v4117 = vunpack.c.l.b16 %v3535
  %v4118 = vunpack.c.l.b16 %v3536
  %v4119 = vunpack.c.l.b16 %v3537
  %v4120 = vunpack.c.l.b16 %v3538
  %v4121 = vunpack.c.l.b16 %v3539
  %v4122 = vunpack.c.l.b16 %v3540
  %v4123 = vunpack.c.l.b16 %v3541
  %v4124 = vunpack.c.l.b16 %v3542
  %v4125 = vunpack.c.l.b16 %v3543
  %v4126 = vunpack.c.l.b16 %v3544
  %v4127 = vunpack.c.l.b16 %v3545
  %v4128 = vunpack.c.l.b16 %v3546
  %v4129 = vunpack.c.l.b16 %v3547
  %v4130 = vunpack.c.l.b16 %v3548
  %v4131 = vunpack.c.l.b16 %v3549
  %v4132 = vunpack.c.l.b16 %v3550
  %v4133 = vunpack.c.l.b16 %v3551
  %v4134 = vunpack.c.l.b16 %v3552
  %v4135 = vunpack.c.l.b16 %v3553
  %v4136 = vunpack.c.l.b16 %v3554
  %v4137 = vunpack.c.l.b16 %v3555
  %v4138 = vunpack.c.l.b16 %v3556
  %v4139 = vunpack.c.l.b16 %v3557
  %v4140 = vunpack.c.l.b16 %v3558
  %v4141 = vunpack.c.l.b16 %v3559
  %v4142 = vunpack.c.l.b16 %v3560
  %v4143 = vunpack.c.l.b16 %v3561
  %v4144 = vunpack.c.l.b16 %v3562
  %v4145 = vunpack.c.l.b16 %v3563
  %v4146 = vunpack.c.l.b16 %v3564
  %v4147 = vunpack.c.l.b16 %v3565
  %v4148 = vunpack.c.l.b16 %v3566
  %v4149 = vunpack.c.l.b16 %v3567
  %v4150 = vunpack.c.l.b16 %v3568
  %v4151 = vunpack.c.l.b16 %v3569
  %v4152 = vunpack.c.l.b16 %v3570
  %v4153 = vunpack.c.l.b16 %v3571
  %v4154 = vunpack.c.l.b16 %v3572
  %v4155 = vunpack.c.l.b16 %v3573
  %v4156 = vunpack.c.l.b16 %v3574
  %v4157 = vunpack.c.l.b16 %v3575
  %v4158 = vunpack.c.l.b16 %v3576
  %v4159 = vunpack.c.l.b16 %v3577
  %v4160 = vunpack.c.l.b16 %v3578
  %v4161 = vunpack.c.l.b16 %v3579
  %v4162 = vunpack.c.l.b16 %v3580
  %v4163 = vunpack.c.l.b16 %v3581
  %v4164 = vunpack.c.l.b16 %v3582
  %v4165 = vunpack.c.l.b16 %v3583
  %v4166 = vunpack.c.l.b16 %v3584
  %v4167 = vunpack.c.l.b16 %v3585
  %v4168 = vunpack.c.l.b16 %v3586
  %v4169 = vunpack.c.l.b16 %v3587
  %v4170 = vunpack.c.l.b16 %v3588
  %v4171 = vunpack.c.l.b16 %v3589
  %v4172 = vunpack.c.l.b16 %v3590
  %v4173 = vunpack.c.l.b16 %v3591
  %v4174 = vunpack.c.l.b16 %v3592
  %v4175 = vunpack.c.l.b16 %v3593
  %v4176 = vunpack.c.l.b16 %v3594
  %v4177 = vunpack.c.l.b16 %v3595
  %v4178 = vunpack.c.l.b16 %v3596
  %v4179 = vunpack.c.l.b16 %v3597
  %v4180 = vunpack.c.l.b16 %v3598
  %v4181 = vunpack.c.l.b16 %v3599
  %v4182 = vunpack.c.l.b16 %v3600
  %v4183 = vunpack.c.l.b16 %v3601
  %v4184 = vunpack.c.l.b16 %v3602
  %v4185 = vunpack.c.l.b16 %v3603
  %v4186 = vunpack.c.l.b16 %v3604
  %v4187 = vunpack.c.l.b16 %v3605
  %v4188 = vpack.c.b16 %v3989, %v3988
  %v4189 = vpack.c.b16 %v3991, %v3990
  %v4190 = vpack.c.b16 %v3993, %v3992
  %v4191 = vpack.c.b16 %v3995, %v3994
  %v4192 = vpack.c.b16 %v3997, %v3996
  %v4193 = vpack.c.b16 %v3999, %v3998
  %v4194 = vpack.c.b16 %v4001, %v4000
  %v4195 = vpack.c.b16 %v4003, %v4002
  %v4196 = vpack.c.b16 %v4005, %v4004
  %v4197 = vpack.c.b16 %v4007, %v4006
  %v4198 = vpack.c.b16 %v4009, %v4008
  %v4199 = vpack.c.b16 %v4011, %v4010
  %v4200 = vpack.c.b16 %v4013, %v4012
  %v4201 = vpack.c.b16 %v4015, %v4014
  %v4202 = vpack.c.b16 %v4017, %v4016
  %v4203 = vpack.c.b16 %v4019, %v4018
  %v4204 = vpack.c.b16 %v4021, %v4020
  %v4205 = vpack.c.b16 %v4023, %v4022
  %v4206 = vpack.c.b16 %v4025, %v4024
  %v4207 = vpack.c.b16 %v4027, %v4026
  %v4208 = vpack.c.b16 %v4029, %v4028
  %v4209 = vpack.c.b16 %v4031, %v4030
  %v4210 = vpack.c.b16 %v4033, %v4032
  %v4211 = vpack.c.b16 %v4035, %v4034
  %v4212 = vpack.c.b16 %v4037, %v4036
  %v4213 = vpack.c.b16 %v4039, %v4038
  %v4214 = vpack.c.b16 %v4041, %v4040
  %v4215 = vpack.c.b16 %v4043, %v4042
  %v4216 = vpack.c.b16 %v4045, %v4044
  %v4217 = vpack.c.b16 %v4047, %v4046
  %v4218 = vpack.c.b16 %v4049, %v4048
  %v4219 = vpack.c.b16 %v4051, %v4050
  %v4220 = vpack.c.b16 %v4053, %v4052
  %v4221 = vpack.c.b16 %v4055, %v4054
  %v4222 = vpack.c.b16 %v4057, %v4056
  %v4223 = vpack.c.b16 %v4059, %v4058
  %v4224 = vpack.c.b16 %v4061, %v4060
  %v4225 = vpack.c.b16 %v4063, %v4062
  %v4226 = vpack.c.b16 %v4065, %v4064
  %v4227 = vpack.c.b16 %v4067, %v4066
  %v4228 = vpack.c.b16 %v4069, %v4068
  %v4229 = vpack.c.b16 %v4071, %v4070
  %v4230 = vpack.c.b16 %v4073, %v4072
  %v4231 = vpack.c.b16 %v4075, %v4074
  %v4232 = vpack.c.b16 %v4077, %v4076
  %v4233 = vpack.c.b16 %v4079, %v4078
  %v4234 = vpack.c.b16 %v4081, %v4080
  %v4235 = vpack.c.b16 %v4083, %v4082
  %v4236 = vpack.c.b16 %v4085, %v4084
  %v4237 = vpack.c.b16 %v4087, %v4086
  %v4238 = vpack.c.b16 %v4089, %v4088
  %v4239 = vpack.c.b16 %v4091, %v4090
  %v4240 = vpack.c.b16 %v4093, %v4092
  %v4241 = vpack.c.b16 %v4095, %v4094
  %v4242 = vpack.c.b16 %v4097, %v4096
  %v4243 = vpack.c.b16 %v4099, %v4098
  %v4244 = vpack.c.b16 %v4101, %v4100
  %v4245 = vpack.c.b16 %v4103, %v4102
  %v4246 = vpack.c.b16 %v4105, %v4104
  %v4247 = vpack.c.b16 %v4107, %v4106
  %v4248 = vpack.c.b16 %v4109, %v4108
  %v4249 = vpack.c.b16 %v4111, %v4110
  %v4250 = vpack.c.b16 %v4113, %v4112
  %v4251 = vpack.c.b16 %v4115, %v4114
  %v4252 = vpack.c.b16 %v4117, %v4116
  %v4253 = vpack.c.b16 %v4119, %v4118
  %v4254 = vpack.c.b16 %v4121, %v4120
  %v4255 = vpack.c.b16 %v4123, %v4122
  %v4256 = vpack.c.b16 %v4125, %v4124
  %v4257 = vpack.c.b16 %v4127, %v4126
  %v4258 = vpack.c.b16 %v4129, %v4128
  %v4259 = vpack.c.b16 %v4131, %v4130
  %v4260 = vpack.c.b16 %v4133, %v4132
  %v4261 = vpack.c.b16 %v4135, %v4134
  %v4262 = vpack.c.b16 %v4137, %v4136
  %v4263 = vpack.c.b16 %v4139, %v4138
  %v4264 = vpack.c.b16 %v4141, %v4140
  %v4265 = vpack.c.b16 %v4143, %v4142
  %v4266 = vpack.c.b16 %v4145, %v4144
  %v4267 = vpack.c.b16 %v4147, %v4146
  %v4268 = vpack.c.b16 %v4149, %v4148
  %v4269 = vpack.c.b16 %v4151, %v4150
  %v4270 = vpack.c.b16 %v4153, %v4152
  %v4271 = vpack.c.b16 %v4155, %v4154
  %v4272 = vpack.c.b16 %v4157, %v4156
  %v4273 = vpack.c.b16 %v4159, %v4158
  %v4274 = vpack.c.b16 %v4161, %v4160
  %v4275 = vpack.c.b16 %v4163, %v4162
  %v4276 = vpack.c.b16 %v4165, %v4164
  %v4277 = vpack.c.b16 %v4167, %v4166
  %v4278 = vpack.c.b16 %v4169, %v4168
  %v4279 = vpack.c.b16 %v4171, %v4170
  %v4280 = vpack.c.b16 %v4173, %v4172
  %v4281 = vpack.c.b16 %v4175, %v4174
  %v4282 = vpack.c.b16 %v4177, %v4176
  %v4283 = vpack.c.b16 %v4179, %v4178
  %v4284 = vpack.c.b16 %v4181, %v4180
  %v4285 = vpack.c.b16 %v4183, %v4182
  %v4286 = vpack.c.b16 %v4185, %v4184
  %v4287 = vpack.c.b16 %v4187, %v4186
  %v4389 = vsel %vm2803, %v3625, 0
  %v4392 = vsel %vm2803, %v3638, 0
  %v4395 = vsel %vm2803, %v3651, 0
  %v4398 = vsel %vm2803, %v3664, 0
  %v4401 = vsel %vm2803, %v3677, 0
  %v4404 = vsel %vm2803, %v3690, 0
  %v4407 = vsel %vm2803, %v3703, 0
  %4409 = vmatprep.subr.bf16.mxu0 0
  %4410 = vmatpush1.bf16.msra.mxu0 %v4188
  %4411 = vmatprep.subr.bf16.mxu0 0
  %4412 = vmatpush1.bf16.msra.mxu0 %v4189
  %4413 = vmatprep.subr.bf16.mxu0 0
  %4414 = vmatpush1.bf16.msra.mxu0 %v4190
  %4415 = vmatprep.subr.bf16.mxu0 0
  %4416 = vmatpush1.bf16.msra.mxu0 %v4191
  %4417 = vmatprep.subr.bf16.mxu0 0
  %4418 = vmatpush1.bf16.msra.mxu0 %v4192
  %4419 = vmatprep.subr.bf16.mxu0 0
  %4420 = vmatpush1.bf16.msra.mxu0 %v4193
  %4421 = vmatprep.subr.bf16.mxu0 0
  %4422 = vmatpush1.bf16.msra.mxu0 %v4194
  %4423 = vmatprep.subr.bf16.mxu0 0
  %4424 = vmatpush1.bf16.msra.mxu0 %v4195
  %4425 = vmatprep.subr.bf16.mxu0 0
  %4426 = vmatpush1.bf16.msra.mxu0 %v4196
  %4427 = vmatprep.subr.bf16.mxu0 0
  %4428 = vmatpush1.bf16.msra.mxu0 %v4197
  %4429 = vmatprep.subr.bf16.mxu0 0
  %4430 = vmatpush1.bf16.msra.mxu0 %v4198
  %4431 = vmatprep.subr.bf16.mxu0 0
  %4432 = vmatpush1.bf16.msra.mxu0 %v4199
  %4433 = vmatprep.subr.bf16.mxu0 0
  %4434 = vmatpush1.bf16.msra.mxu0 %v4200
  %4435 = vmatprep.subr.bf16.mxu0 0
  %4436 = vmatpush1.bf16.msra.mxu0 %v4201
  %4437 = vmatprep.subr.bf16.mxu0 0
  %4438 = vmatpush1.bf16.msra.mxu0 %v4202
  %4439 = vmatprep.subr.bf16.mxu0 0
  %4440 = vmatpush1.bf16.msra.mxu0 %v4203
  %4441 = vmatprep.mubr.bf16.mxu0 %v3614
  %4442 = vmatmul.mubr.bf16.gmra.mrb[0].mxu0 %v3613
  %v4443 = vpop.f32.mrb[0].mxu0
  %v4444 = vadd.f32 %v3611, %v4443
  %v4445 = vpop.f32.mrb[0].mxu0
  %v4446 = vpop.f32.mrb[0].mxu0
  %v4447 = vadd.f32 %v3611, %v4446
  %v4448 = vpop.f32.mrb[0].mxu0
  %4449 = vmatprep.mubr.bf16.mxu0 %v3627
  %4450 = vmatmul.mubr.bf16.gmra.mrb[0].mxu0 %v3626
  %v4451 = vpop.f32.mrb[0].mxu0
  %v4452 = vadd.f32 %v3611, %v4451
  %v4453 = vpop.f32.mrb[0].mxu0
  %v4454 = vpop.f32.mrb[0].mxu0
  %v4455 = vadd.f32 %v3611, %v4454
  %v4456 = vpop.f32.mrb[0].mxu0
  %4457 = vmatprep.mubr.bf16.mxu0 %v3640
  %4458 = vmatmul.mubr.bf16.gmra.mrb[0].mxu0 %v3639
  %v4459 = vpop.f32.mrb[0].mxu0
  %v4460 = vadd.f32 %v3611, %v4459
  %v4461 = vpop.f32.mrb[0].mxu0
  %v4462 = vpop.f32.mrb[0].mxu0
  %v4463 = vadd.f32 %v3611, %v4462
  %v4464 = vpop.f32.mrb[0].mxu0
  %4465 = vmatprep.mubr.bf16.mxu0 %v3653
  %4466 = vmatmul.mubr.bf16.gmra.mrb[0].mxu0 %v3652
  %v4467 = vpop.f32.mrb[0].mxu0
  %v4468 = vadd.f32 %v3611, %v4467
  %v4469 = vpop.f32.mrb[0].mxu0
  %v4470 = vpop.f32.mrb[0].mxu0
  %v4471 = vadd.f32 %v3611, %v4470
  %v4472 = vpop.f32.mrb[0].mxu0
  %4473 = vmatprep.mubr.bf16.mxu0 %v3666
  %4474 = vmatmul.mubr.bf16.gmra.mrb[0].mxu0 %v3665
  %v4475 = vpop.f32.mrb[0].mxu0
  %v4476 = vadd.f32 %v3611, %v4475
  %v4477 = vpop.f32.mrb[0].mxu0
  %v4478 = vpop.f32.mrb[0].mxu0
  %v4479 = vadd.f32 %v3611, %v4478
  %v4480 = vpop.f32.mrb[0].mxu0
  %4481 = vmatprep.mubr.bf16.mxu0 %v3679
  %4482 = vmatmul.mubr.bf16.gmra.mrb[0].mxu0 %v3678
  %v4483 = vpop.f32.mrb[0].mxu0
  %v4484 = vadd.f32 %v3611, %v4483
  %v4485 = vpop.f32.mrb[0].mxu0
  %v4486 = vpop.f32.mrb[0].mxu0
  %v4487 = vadd.f32 %v3611, %v4486
  %v4488 = vpop.f32.mrb[0].mxu0
  %4489 = vmatprep.mubr.bf16.mxu0 %v3692
  %4490 = vmatmul.mubr.bf16.gmra.mrb[0].mxu0 %v3691
  %v4491 = vpop.f32.mrb[0].mxu0
  %v4492 = vadd.f32 %v3611, %v4491
  %v4493 = vpop.f32.mrb[0].mxu0
  %v4494 = vpop.f32.mrb[0].mxu0
  %v4495 = vadd.f32 %v3611, %v4494
  %v4496 = vpop.f32.mrb[0].mxu0
  %4497 = vdwg.mxu0
  %4498 = vmatprep.subr.bf16.mxu0 0
  %4499 = vmatpush1.bf16.msra.mxu0 %v4204
  %4500 = vmatprep.subr.bf16.mxu0 0
  %4501 = vmatpush1.bf16.msra.mxu0 %v4205
  %4502 = vmatprep.subr.bf16.mxu0 0
  %4503 = vmatpush1.bf16.msra.mxu0 %v4206
  %4504 = vmatprep.subr.bf16.mxu0 0
  %4505 = vmatpush1.bf16.msra.mxu0 %v4207
  %4506 = vmatprep.subr.bf16.mxu0 0
  %4507 = vmatpush1.bf16.msra.mxu0 %v4208
  %4508 = vmatprep.subr.bf16.mxu0 0
  %4509 = vmatpush1.bf16.msra.mxu0 %v4209
  %4510 = vmatprep.subr.bf16.mxu0 0
  %4511 = vmatpush1.bf16.msra.mxu0 %v4210
  %4512 = vmatprep.subr.bf16.mxu0 0
  %4513 = vmatpush1.bf16.msra.mxu0 %v4211
  %4514 = vmatprep.subr.bf16.mxu0 0
  %4515 = vmatpush1.bf16.msra.mxu0 %v4212
  %4516 = vmatprep.subr.bf16.mxu0 0
  %4517 = vmatpush1.bf16.msra.mxu0 %v4213
  %4518 = vmatprep.subr.bf16.mxu0 0
  %4519 = vmatpush1.bf16.msra.mxu0 %v4214
  %4520 = vmatprep.subr.bf16.mxu0 0
  %4521 = vmatpush1.bf16.msra.mxu0 %v4215
  %4522 = vmatprep.subr.bf16.mxu0 0
  %4523 = vmatpush1.bf16.msra.mxu0 %v4216
  %4524 = vmatprep.subr.bf16.mxu0 0
  %4525 = vmatpush1.bf16.msra.mxu0 %v4217
  %4526 = vmatprep.subr.bf16.mxu0 0
  %4527 = vmatpush1.bf16.msra.mxu0 %v4218
  %4528 = vmatprep.subr.bf16.mxu0 0
  %4529 = vmatpush1.bf16.msra.mxu0 %v4219
  %4530 = vmatprep.mubr.bf16.mxu0 %v3616
  %4531 = vmatmul.mubr.bf16.gmra.mrb[0].mxu0 %v3615
  %v4532 = vpop.f32.mrb[0].mxu0
  %v4533 = vadd.f32 %v4444, %v4532
  %v4534 = vpop.f32.mrb[0].mxu0
  %v4535 = vpop.f32.mrb[0].mxu0
  %v4536 = vadd.f32 %v4447, %v4535
  %v4537 = vpop.f32.mrb[0].mxu0
  %4538 = vmatprep.mubr.bf16.mxu0 %v3629
  %4539 = vmatmul.mubr.bf16.gmra.mrb[0].mxu0 %v3628
  %v4540 = vpop.f32.mrb[0].mxu0
  %v4541 = vadd.f32 %v4452, %v4540
  %v4542 = vpop.f32.mrb[0].mxu0
  %v4543 = vpop.f32.mrb[0].mxu0
  %v4544 = vadd.f32 %v4455, %v4543
  %v4545 = vpop.f32.mrb[0].mxu0
  %4546 = vmatprep.mubr.bf16.mxu0 %v3642
  %4547 = vmatmul.mubr.bf16.gmra.mrb[0].mxu0 %v3641
  %v4548 = vpop.f32.mrb[0].mxu0
  %v4549 = vadd.f32 %v4460, %v4548
  %v4550 = vpop.f32.mrb[0].mxu0
  %v4551 = vpop.f32.mrb[0].mxu0
  %v4552 = vadd.f32 %v4463, %v4551
  %v4553 = vpop.f32.mrb[0].mxu0
  %4554 = vmatprep.mubr.bf16.mxu0 %v3655
  %4555 = vmatmul.mubr.bf16.gmra.mrb[0].mxu0 %v3654
  %v4556 = vpop.f32.mrb[0].mxu0
  %v4557 = vadd.f32 %v4468, %v4556
  %v4558 = vpop.f32.mrb[0].mxu0
  %v4559 = vpop.f32.mrb[0].mxu0
  %v4560 = vadd.f32 %v4471, %v4559
  %v4561 = vpop.f32.mrb[0].mxu0
  %4562 = vmatprep.mubr.bf16.mxu0 %v3668
  %4563 = vmatmul.mubr.bf16.gmra.mrb[0].mxu0 %v3667
  %v4564 = vpop.f32.mrb[0].mxu0
  %v4565 = vadd.f32 %v4476, %v4564
  %v4566 = vpop.f32.mrb[0].mxu0
  %v4567 = vpop.f32.mrb[0].mxu0
  %v4568 = vadd.f32 %v4479, %v4567
  %v4569 = vpop.f32.mrb[0].mxu0
  %4570 = vmatprep.mubr.bf16.mxu0 %v3681
  %4571 = vmatmul.mubr.bf16.gmra.mrb[0].mxu0 %v3680
  %v4572 = vpop.f32.mrb[0].mxu0
  %v4573 = vadd.f32 %v4484, %v4572
  %v4574 = vpop.f32.mrb[0].mxu0
  %v4575 = vpop.f32.mrb[0].mxu0
  %v4576 = vadd.f32 %v4487, %v4575
  %v4577 = vpop.f32.mrb[0].mxu0
  %4578 = vmatprep.mubr.bf16.mxu0 %v3694
  %4579 = vmatmul.mubr.bf16.gmra.mrb[0].mxu0 %v3693
  %v4580 = vpop.f32.mrb[0].mxu0
  %v4581 = vadd.f32 %v4492, %v4580
  %v4582 = vpop.f32.mrb[0].mxu0
  %v4583 = vpop.f32.mrb[0].mxu0
  %v4584 = vadd.f32 %v4495, %v4583
  %v4585 = vpop.f32.mrb[0].mxu0
  %4586 = vdwg.mxu0
  %4587 = vmatprep.subr.bf16.mxu0 0
  %4588 = vmatpush1.bf16.msra.mxu0 %v4220
  %4589 = vmatprep.subr.bf16.mxu0 0
  %4590 = vmatpush1.bf16.msra.mxu0 %v4221
  %4591 = vmatprep.subr.bf16.mxu0 0
  %4592 = vmatpush1.bf16.msra.mxu0 %v4222
  %4593 = vmatprep.subr.bf16.mxu0 0
  %4594 = vmatpush1.bf16.msra.mxu0 %v4223
  %4595 = vmatprep.subr.bf16.mxu0 0
  %4596 = vmatpush1.bf16.msra.mxu0 %v4224
  %4597 = vmatprep.subr.bf16.mxu0 0
  %4598 = vmatpush1.bf16.msra.mxu0 %v4225
  %4599 = vmatprep.subr.bf16.mxu0 0
  %4600 = vmatpush1.bf16.msra.mxu0 %v4226
  %4601 = vmatprep.subr.bf16.mxu0 0
  %4602 = vmatpush1.bf16.msra.mxu0 %v4227
  %4603 = vmatprep.subr.bf16.mxu0 0
  %4604 = vmatpush1.bf16.msra.mxu0 %v4228
  %4605 = vmatprep.subr.bf16.mxu0 0
  %4606 = vmatpush1.bf16.msra.mxu0 %v4229
  %4607 = vmatprep.subr.bf16.mxu0 0
  %4608 = vmatpush1.bf16.msra.mxu0 %v4230
  %4609 = vmatprep.subr.bf16.mxu0 0
  %4610 = vmatpush1.bf16.msra.mxu0 %v4231
  %4611 = vmatprep.subr.bf16.mxu0 0
  %4612 = vmatpush1.bf16.msra.mxu0 %v4232
  %4613 = vmatprep.subr.bf16.mxu0 0
  %4614 = vmatpush1.bf16.msra.mxu0 %v4233
  %4615 = vmatprep.subr.bf16.mxu0 0
  %4616 = vmatpush1.bf16.msra.mxu0 %v4234
  %4617 = vmatprep.subr.bf16.mxu0 0
  %4618 = vmatpush1.bf16.msra.mxu0 %v4235
  %4619 = vmatprep.mubr.bf16.mxu0 %v3618
  %4620 = vmatmul.mubr.bf16.gmra.mrb[0].mxu0 %v3617
  %v4621 = vpop.f32.mrb[0].mxu0
  %v4622 = vadd.f32 %v4533, %v4621
  %v4623 = vpop.f32.mrb[0].mxu0
  %v4624 = vpop.f32.mrb[0].mxu0
  %v4625 = vadd.f32 %v4536, %v4624
  %v4626 = vpop.f32.mrb[0].mxu0
  %4627 = vmatprep.mubr.bf16.mxu0 %v3631
  %4628 = vmatmul.mubr.bf16.gmra.mrb[0].mxu0 %v3630
  %v4629 = vpop.f32.mrb[0].mxu0
  %v4630 = vadd.f32 %v4541, %v4629
  %v4631 = vpop.f32.mrb[0].mxu0
  %v4632 = vpop.f32.mrb[0].mxu0
  %v4633 = vadd.f32 %v4544, %v4632
  %v4634 = vpop.f32.mrb[0].mxu0
  %4635 = vmatprep.mubr.bf16.mxu0 %v3644
  %4636 = vmatmul.mubr.bf16.gmra.mrb[0].mxu0 %v3643
  %v4637 = vpop.f32.mrb[0].mxu0
  %v4638 = vadd.f32 %v4549, %v4637
  %v4639 = vpop.f32.mrb[0].mxu0
  %v4640 = vpop.f32.mrb[0].mxu0
  %v4641 = vadd.f32 %v4552, %v4640
  %v4642 = vpop.f32.mrb[0].mxu0
  %4643 = vmatprep.mubr.bf16.mxu0 %v3657
  %4644 = vmatmul.mubr.bf16.gmra.mrb[0].mxu0 %v3656
  %v4645 = vpop.f32.mrb[0].mxu0
  %v4646 = vadd.f32 %v4557, %v4645
  %v4647 = vpop.f32.mrb[0].mxu0
  %v4648 = vpop.f32.mrb[0].mxu0
  %v4649 = vadd.f32 %v4560, %v4648
  %v4650 = vpop.f32.mrb[0].mxu0
  %4651 = vmatprep.mubr.bf16.mxu0 %v3670
  %4652 = vmatmul.mubr.bf16.gmra.mrb[0].mxu0 %v3669
  %v4653 = vpop.f32.mrb[0].mxu0
  %v4654 = vadd.f32 %v4565, %v4653
  %v4655 = vpop.f32.mrb[0].mxu0
  %v4656 = vpop.f32.mrb[0].mxu0
  %v4657 = vadd.f32 %v4568, %v4656
  %v4658 = vpop.f32.mrb[0].mxu0
  %4659 = vmatprep.mubr.bf16.mxu0 %v3683
  %4660 = vmatmul.mubr.bf16.gmra.mrb[0].mxu0 %v3682
  %v4661 = vpop.f32.mrb[0].mxu0
  %v4662 = vadd.f32 %v4573, %v4661
  %v4663 = vpop.f32.mrb[0].mxu0
  %v4664 = vpop.f32.mrb[0].mxu0
  %v4665 = vadd.f32 %v4576, %v4664
  %v4666 = vpop.f32.mrb[0].mxu0
  %4667 = vmatprep.mubr.bf16.mxu0 %v3696
  %4668 = vmatmul.mubr.bf16.gmra.mrb[0].mxu0 %v3695
  %v4669 = vpop.f32.mrb[0].mxu0
  %v4670 = vadd.f32 %v4581, %v4669
  %v4671 = vpop.f32.mrb[0].mxu0
  %v4672 = vpop.f32.mrb[0].mxu0
  %v4673 = vadd.f32 %v4584, %v4672
  %v4674 = vpop.f32.mrb[0].mxu0
  %4675 = vdwg.mxu0
  %4676 = vmatprep.subr.bf16.mxu0 0
  %4677 = vmatpush1.bf16.msra.mxu0 %v4236
  %4678 = vmatprep.subr.bf16.mxu0 0
  %4679 = vmatpush1.bf16.msra.mxu0 %v4237
  %4680 = vmatprep.subr.bf16.mxu0 0
  %4681 = vmatpush1.bf16.msra.mxu0 %v4238
  %4682 = vmatprep.subr.bf16.mxu0 0
  %4683 = vmatpush1.bf16.msra.mxu0 %v4239
  %4684 = vmatprep.subr.bf16.mxu0 0
  %4685 = vmatpush1.bf16.msra.mxu0 %v4240
  %4686 = vmatprep.subr.bf16.mxu0 0
  %4687 = vmatpush1.bf16.msra.mxu0 %v4241
  %4688 = vmatprep.subr.bf16.mxu0 0
  %4689 = vmatpush1.bf16.msra.mxu0 %v4242
  %4690 = vmatprep.subr.bf16.mxu0 0
  %4691 = vmatpush1.bf16.msra.mxu0 %v4243
  %4692 = vmatprep.subr.bf16.mxu0 0
  %4693 = vmatpush1.bf16.msra.mxu0 %v4244
  %4694 = vmatprep.subr.bf16.mxu0 0
  %4695 = vmatpush1.bf16.msra.mxu0 %v4245
  %4696 = vmatprep.subr.bf16.mxu0 0
  %4697 = vmatpush1.bf16.msra.mxu0 %v4246
  %4698 = vmatprep.subr.bf16.mxu0 0
  %4699 = vmatpush1.bf16.msra.mxu0 %v4247
  %4700 = vmatprep.subr.bf16.mxu0 0
  %4701 = vmatpush1.bf16.msra.mxu0 %v4248
  %4702 = vmatprep.subr.bf16.mxu0 0
  %4703 = vmatpush1.bf16.msra.mxu0 %v4249
  %4704 = vmatprep.subr.bf16.mxu0 0
  %4705 = vmatpush1.bf16.msra.mxu0 %v4250
  %4706 = vmatprep.subr.bf16.mxu0 0
  %4707 = vmatpush1.bf16.msra.mxu0 %v4251
  %4708 = vmatprep.mubr.bf16.mxu0 %v3620
  %4709 = vmatmul.mubr.bf16.gmra.mrb[0].mxu0 %v3619
  %v4710 = vpop.f32.mrb[0].mxu0
  %v4711 = vadd.f32 %v4622, %v4710
  %v4712 = vpop.f32.mrb[0].mxu0
  %v4713 = vpop.f32.mrb[0].mxu0
  %v4714 = vadd.f32 %v4625, %v4713
  %v4715 = vpop.f32.mrb[0].mxu0
  %4716 = vmatprep.mubr.bf16.mxu0 %v3633
  %4717 = vmatmul.mubr.bf16.gmra.mrb[0].mxu0 %v3632
  %v4718 = vpop.f32.mrb[0].mxu0
  %v4719 = vadd.f32 %v4630, %v4718
  %v4720 = vpop.f32.mrb[0].mxu0
  %v4721 = vpop.f32.mrb[0].mxu0
  %v4722 = vadd.f32 %v4633, %v4721
  %v4723 = vpop.f32.mrb[0].mxu0
  %4724 = vmatprep.mubr.bf16.mxu0 %v3646
  %4725 = vmatmul.mubr.bf16.gmra.mrb[0].mxu0 %v3645
  %v4726 = vpop.f32.mrb[0].mxu0
  %v4727 = vadd.f32 %v4638, %v4726
  %v4728 = vpop.f32.mrb[0].mxu0
  %v4729 = vpop.f32.mrb[0].mxu0
  %v4730 = vadd.f32 %v4641, %v4729
  %v4731 = vpop.f32.mrb[0].mxu0
  %4732 = vmatprep.mubr.bf16.mxu0 %v3659
  %4733 = vmatmul.mubr.bf16.gmra.mrb[0].mxu0 %v3658
  %v4734 = vpop.f32.mrb[0].mxu0
  %v4735 = vadd.f32 %v4646, %v4734
  %v4736 = vpop.f32.mrb[0].mxu0
  %v4737 = vpop.f32.mrb[0].mxu0
  %v4738 = vadd.f32 %v4649, %v4737
  %v4739 = vpop.f32.mrb[0].mxu0
  %4740 = vmatprep.mubr.bf16.mxu0 %v3672
  %4741 = vmatmul.mubr.bf16.gmra.mrb[0].mxu0 %v3671
  %v4742 = vpop.f32.mrb[0].mxu0
  %v4743 = vadd.f32 %v4654, %v4742
  %v4744 = vpop.f32.mrb[0].mxu0
  %v4745 = vpop.f32.mrb[0].mxu0
  %v4746 = vadd.f32 %v4657, %v4745
  %v4747 = vpop.f32.mrb[0].mxu0
  %4748 = vmatprep.mubr.bf16.mxu0 %v3685
  %4749 = vmatmul.mubr.bf16.gmra.mrb[0].mxu0 %v3684
  %v4750 = vpop.f32.mrb[0].mxu0
  %v4751 = vadd.f32 %v4662, %v4750
  %v4752 = vpop.f32.mrb[0].mxu0
  %v4753 = vpop.f32.mrb[0].mxu0
  %v4754 = vadd.f32 %v4665, %v4753
  %v4755 = vpop.f32.mrb[0].mxu0
  %4756 = vmatprep.mubr.bf16.mxu0 %v3698
  %4757 = vmatmul.mubr.bf16.gmra.mrb[0].mxu0 %v3697
  %v4758 = vpop.f32.mrb[0].mxu0
  %v4759 = vadd.f32 %v4670, %v4758
  %v4760 = vpop.f32.mrb[0].mxu0
  %v4761 = vpop.f32.mrb[0].mxu0
  %v4762 = vadd.f32 %v4673, %v4761
  %v4763 = vpop.f32.mrb[0].mxu0
  %4764 = vdwg.mxu0
  %4765 = vmatprep.subr.bf16.mxu0 0
  %4766 = vmatpush1.bf16.msra.mxu0 %v4252
  %4767 = vmatprep.subr.bf16.mxu0 0
  %4768 = vmatpush1.bf16.msra.mxu0 %v4253
  %4769 = vmatprep.subr.bf16.mxu0 0
  %4770 = vmatpush1.bf16.msra.mxu0 %v4254
  %4771 = vmatprep.subr.bf16.mxu0 0
  %4772 = vmatpush1.bf16.msra.mxu0 %v4255
  %4773 = vmatprep.subr.bf16.mxu0 0
  %4774 = vmatpush1.bf16.msra.mxu0 %v4256
  %4775 = vmatprep.subr.bf16.mxu0 0
  %4776 = vmatpush1.bf16.msra.mxu0 %v4257
  %4777 = vmatprep.subr.bf16.mxu0 0
  %4778 = vmatpush1.bf16.msra.mxu0 %v4258
  %4779 = vmatprep.subr.bf16.mxu0 0
  %4780 = vmatpush1.bf16.msra.mxu0 %v4259
  %4781 = vmatprep.subr.bf16.mxu0 0
  %4782 = vmatpush1.bf16.msra.mxu0 %v4260
  %4783 = vmatprep.subr.bf16.mxu0 0
  %4784 = vmatpush1.bf16.msra.mxu0 %v4261
  %4785 = vmatprep.subr.bf16.mxu0 0
  %4786 = vmatpush1.bf16.msra.mxu0 %v4262
  %4787 = vmatprep.subr.bf16.mxu0 0
  %4788 = vmatpush1.bf16.msra.mxu0 %v4263
  %4789 = vmatprep.subr.bf16.mxu0 0
  %4790 = vmatpush1.bf16.msra.mxu0 %v4264
  %4791 = vmatprep.subr.bf16.mxu0 0
  %4792 = vmatpush1.bf16.msra.mxu0 %v4265
  %4793 = vmatprep.subr.bf16.mxu0 0
  %4794 = vmatpush1.bf16.msra.mxu0 %v4266
  %4795 = vmatprep.subr.bf16.mxu0 0
  %4796 = vmatpush1.bf16.msra.mxu0 %v4267
  %4797 = vmatprep.mubr.bf16.mxu0 %v3622
  %4798 = vmatmul.mubr.bf16.gmra.mrb[0].mxu0 %v3621
  %v4799 = vpop.f32.mrb[0].mxu0
  %v4800 = vadd.f32 %v4711, %v4799
  %v4801 = vpop.f32.mrb[0].mxu0
  %v4802 = vpop.f32.mrb[0].mxu0
  %v4803 = vadd.f32 %v4714, %v4802
  %v4804 = vpop.f32.mrb[0].mxu0
  %4805 = vmatprep.mubr.bf16.mxu0 %v3635
  %4806 = vmatmul.mubr.bf16.gmra.mrb[0].mxu0 %v3634
  %v4807 = vpop.f32.mrb[0].mxu0
  %v4808 = vadd.f32 %v4719, %v4807
  %v4809 = vpop.f32.mrb[0].mxu0
  %v4810 = vpop.f32.mrb[0].mxu0
  %v4811 = vadd.f32 %v4722, %v4810
  %v4812 = vpop.f32.mrb[0].mxu0
  %4813 = vmatprep.mubr.bf16.mxu0 %v3648
  %4814 = vmatmul.mubr.bf16.gmra.mrb[0].mxu0 %v3647
  %v4815 = vpop.f32.mrb[0].mxu0
  %v4816 = vadd.f32 %v4727, %v4815
  %v4817 = vpop.f32.mrb[0].mxu0
  %v4818 = vpop.f32.mrb[0].mxu0
  %v4819 = vadd.f32 %v4730, %v4818
  %v4820 = vpop.f32.mrb[0].mxu0
  %4821 = vmatprep.mubr.bf16.mxu0 %v3661
  %4822 = vmatmul.mubr.bf16.gmra.mrb[0].mxu0 %v3660
  %v4823 = vpop.f32.mrb[0].mxu0
  %v4824 = vadd.f32 %v4735, %v4823
  %v4825 = vpop.f32.mrb[0].mxu0
  %v4826 = vpop.f32.mrb[0].mxu0
  %v4827 = vadd.f32 %v4738, %v4826
  %v4828 = vpop.f32.mrb[0].mxu0
  %4829 = vmatprep.mubr.bf16.mxu0 %v3674
  %4830 = vmatmul.mubr.bf16.gmra.mrb[0].mxu0 %v3673
  %v4831 = vpop.f32.mrb[0].mxu0
  %v4832 = vadd.f32 %v4743, %v4831
  %v4833 = vpop.f32.mrb[0].mxu0
  %v4834 = vpop.f32.mrb[0].mxu0
  %v4835 = vadd.f32 %v4746, %v4834
  %v4836 = vpop.f32.mrb[0].mxu0
  %4837 = vmatprep.mubr.bf16.mxu0 %v3687
  %4838 = vmatmul.mubr.bf16.gmra.mrb[0].mxu0 %v3686
  %v4839 = vpop.f32.mrb[0].mxu0
  %v4840 = vadd.f32 %v4751, %v4839
  %v4841 = vpop.f32.mrb[0].mxu0
  %v4842 = vpop.f32.mrb[0].mxu0
  %v4843 = vadd.f32 %v4754, %v4842
  %v4844 = vpop.f32.mrb[0].mxu0
  %4845 = vmatprep.mubr.bf16.mxu0 %v3700
  %4846 = vmatmul.mubr.bf16.gmra.mrb[0].mxu0 %v3699
  %v4847 = vpop.f32.mrb[0].mxu0
  %v4848 = vadd.f32 %v4759, %v4847
  %v4849 = vpop.f32.mrb[0].mxu0
  %v4850 = vpop.f32.mrb[0].mxu0
  %v4851 = vadd.f32 %v4762, %v4850
  %v4852 = vpop.f32.mrb[0].mxu0
  %4853 = vdwg.mxu0
  %4854 = vmatprep.subr.bf16.mxu0 0
  %4855 = vmatpush1.bf16.msra.mxu0 %v4268
  %4856 = vmatprep.subr.bf16.mxu0 0
  %4857 = vmatpush1.bf16.msra.mxu0 %v4269
  %4858 = vmatprep.subr.bf16.mxu0 0
  %4859 = vmatpush1.bf16.msra.mxu0 %v4270
  %4860 = vmatprep.subr.bf16.mxu0 0
  %4861 = vmatpush1.bf16.msra.mxu0 %v4271
  %4862 = vmatprep.subr.bf16.mxu0 0
  %4863 = vmatpush1.bf16.msra.mxu0 %v4272
  %4864 = vmatprep.subr.bf16.mxu0 0
  %4865 = vmatpush1.bf16.msra.mxu0 %v4273
  %4866 = vmatprep.subr.bf16.mxu0 0
  %4867 = vmatpush1.bf16.msra.mxu0 %v4274
  %4868 = vmatprep.subr.bf16.mxu0 0
  %4869 = vmatpush1.bf16.msra.mxu0 %v4275
  %4870 = vmatprep.subr.bf16.mxu0 0
  %4871 = vmatpush1.bf16.msra.mxu0 %v4276
  %4872 = vmatprep.subr.bf16.mxu0 0
  %4873 = vmatpush1.bf16.msra.mxu0 %v4277
  %4874 = vmatprep.subr.bf16.mxu0 0
  %4875 = vmatpush1.bf16.msra.mxu0 %v4278
  %4876 = vmatprep.subr.bf16.mxu0 0
  %4877 = vmatpush1.bf16.msra.mxu0 %v4279
  %4878 = vmatprep.subr.bf16.mxu0 0
  %4879 = vmatpush1.bf16.msra.mxu0 %v4280
  %4880 = vmatprep.subr.bf16.mxu0 0
  %4881 = vmatpush1.bf16.msra.mxu0 %v4281
  %4882 = vmatprep.subr.bf16.mxu0 0
  %4883 = vmatpush1.bf16.msra.mxu0 %v4282
  %4884 = vmatprep.subr.bf16.mxu0 0
  %4885 = vmatpush1.bf16.msra.mxu0 %v4283
  %4886 = vmatprep.mubr.bf16.mxu0 %v3624
  %4887 = vmatmul.mubr.bf16.gmra.mrb[0].mxu0 %v3623
  %v4888 = vpop.f32.mrb[0].mxu0
  %v4889 = vadd.f32 %v4800, %v4888
  %v4890 = vpop.f32.mrb[0].mxu0
  %v4891 = vpop.f32.mrb[0].mxu0
  %v4892 = vadd.f32 %v4803, %v4891
  %v4893 = vpop.f32.mrb[0].mxu0
  %4894 = vmatprep.mubr.bf16.mxu0 %v3637
  %4895 = vmatmul.mubr.bf16.gmra.mrb[0].mxu0 %v3636
  %v4896 = vpop.f32.mrb[0].mxu0
  %v4897 = vadd.f32 %v4808, %v4896
  %v4898 = vpop.f32.mrb[0].mxu0
  %v4899 = vpop.f32.mrb[0].mxu0
  %v4900 = vadd.f32 %v4811, %v4899
  %v4901 = vpop.f32.mrb[0].mxu0
  %4902 = vmatprep.mubr.bf16.mxu0 %v3650
  %4903 = vmatmul.mubr.bf16.gmra.mrb[0].mxu0 %v3649
  %v4904 = vpop.f32.mrb[0].mxu0
  %v4905 = vadd.f32 %v4816, %v4904
  %v4906 = vpop.f32.mrb[0].mxu0
  %v4907 = vpop.f32.mrb[0].mxu0
  %v4908 = vadd.f32 %v4819, %v4907
  %v4909 = vpop.f32.mrb[0].mxu0
  %4910 = vmatprep.mubr.bf16.mxu0 %v3663
  %4911 = vmatmul.mubr.bf16.gmra.mrb[0].mxu0 %v3662
  %v4912 = vpop.f32.mrb[0].mxu0
  %v4913 = vadd.f32 %v4824, %v4912
  %v4914 = vpop.f32.mrb[0].mxu0
  %v4915 = vpop.f32.mrb[0].mxu0
  %v4916 = vadd.f32 %v4827, %v4915
  %v4917 = vpop.f32.mrb[0].mxu0
  %4918 = vmatprep.mubr.bf16.mxu0 %v3676
  %4919 = vmatmul.mubr.bf16.gmra.mrb[0].mxu0 %v3675
  %v4920 = vpop.f32.mrb[0].mxu0
  %v4921 = vadd.f32 %v4832, %v4920
  %v4922 = vpop.f32.mrb[0].mxu0
  %v4923 = vpop.f32.mrb[0].mxu0
  %v4924 = vadd.f32 %v4835, %v4923
  %v4925 = vpop.f32.mrb[0].mxu0
  %4926 = vmatprep.mubr.bf16.mxu0 %v3689
  %4927 = vmatmul.mubr.bf16.gmra.mrb[0].mxu0 %v3688
  %v4928 = vpop.f32.mrb[0].mxu0
  %v4929 = vadd.f32 %v4840, %v4928
  %v4930 = vpop.f32.mrb[0].mxu0
  %v4931 = vpop.f32.mrb[0].mxu0
  %v4932 = vadd.f32 %v4843, %v4931
  %v4933 = vpop.f32.mrb[0].mxu0
  %4934 = vmatprep.mubr.bf16.mxu0 %v3702
  %4935 = vmatmul.mubr.bf16.gmra.mrb[0].mxu0 %v3701
  %v4936 = vpop.f32.mrb[0].mxu0
  %v4937 = vadd.f32 %v4848, %v4936
  %v4938 = vpop.f32.mrb[0].mxu0
  %v4939 = vpop.f32.mrb[0].mxu0
  %v4940 = vadd.f32 %v4851, %v4939
  %v4941 = vpop.f32.mrb[0].mxu0
  %4942 = vdwg.mxu0
  %4943 = vmatprep.subr.bf16.mxu0 0
  %4944 = vmatpush1.bf16.msra.mxu0 %v4284
  %4945 = vmatprep.subr.bf16.mxu0 0
  %4946 = vmatpush1.bf16.msra.mxu0 %v4285
  %4947 = vmatprep.subr.bf16.mxu0 0
  %4948 = vmatpush1.bf16.msra.mxu0 %v4286
  %4949 = vmatprep.subr.bf16.mxu0 0
  %4950 = vmatpush1.bf16.msra.mxu0 %v4287
  %4951 = vmatprep.subr.bf16.mxu0 0
  %4952 = vmatpush1.bf16.msra.mxu0 0
  %4953 = vmatprep.subr.bf16.mxu0 0
  %4954 = vmatpush1.bf16.msra.mxu0 0
  %4955 = vmatprep.subr.bf16.mxu0 0
  %4956 = vmatpush1.bf16.msra.mxu0 0
  %4957 = vmatprep.subr.bf16.mxu0 0
  %4958 = vmatpush1.bf16.msra.mxu0 0
  %4959 = vmatprep.subr.bf16.mxu0 0
  %4960 = vmatpush1.bf16.msra.mxu0 0
  %4961 = vmatprep.subr.bf16.mxu0 0
  %4962 = vmatpush1.bf16.msra.mxu0 0
  %4963 = vmatprep.subr.bf16.mxu0 0
  %4964 = vmatpush1.bf16.msra.mxu0 0
  %4965 = vmatprep.subr.bf16.mxu0 0
  %4966 = vmatpush1.bf16.msra.mxu0 0
  %4967 = vmatprep.subr.bf16.mxu0 0
  %4968 = vmatpush1.bf16.msra.mxu0 0
  %4969 = vmatprep.subr.bf16.mxu0 0
  %4970 = vmatpush1.bf16.msra.mxu0 0
  %4971 = vmatprep.subr.bf16.mxu0 0
  %4972 = vmatpush1.bf16.msra.mxu0 0
  %4973 = vmatprep.subr.bf16.mxu0 0
  %4974 = vmatpush1.bf16.msra.mxu0 0
  %4975 = vmatprep.mubr.bf16.mxu0 0
  %4976 = vmatmul.mubr.bf16.gmra.mrb[0].mxu0 %v4389
  %v4977 = vpop.f32.mrb[0].mxu0
  %v4978 = vadd.f32 %v4889, %v4977
  %v4979 = vpop.f32.mrb[0].mxu0
  %v4980 = vpop.f32.mrb[0].mxu0
  %v4981 = vadd.f32 %v4892, %v4980
  %v4982 = vpop.f32.mrb[0].mxu0
  %4983 = vmatprep.mubr.bf16.mxu0 0
  %4984 = vmatmul.mubr.bf16.gmra.mrb[0].mxu0 %v4392
  %v4985 = vpop.f32.mrb[0].mxu0
  %v4986 = vadd.f32 %v4897, %v4985
  %v4987 = vpop.f32.mrb[0].mxu0
  %v4988 = vpop.f32.mrb[0].mxu0
  %v4989 = vadd.f32 %v4900, %v4988
  %v4990 = vpop.f32.mrb[0].mxu0
  %4991 = vmatprep.mubr.bf16.mxu0 0
  %4992 = vmatmul.mubr.bf16.gmra.mrb[0].mxu0 %v4395
  %v4993 = vpop.f32.mrb[0].mxu0
  %v4994 = vadd.f32 %v4905, %v4993
  %v4995 = vpop.f32.mrb[0].mxu0
  %v4996 = vpop.f32.mrb[0].mxu0
  %v4997 = vadd.f32 %v4908, %v4996
  %v4998 = vpop.f32.mrb[0].mxu0
  %4999 = vmatprep.mubr.bf16.mxu0 0
  %5000 = vmatmul.mubr.bf16.gmra.mrb[0].mxu0 %v4398
  %v5001 = vpop.f32.mrb[0].mxu0
  %v5002 = vadd.f32 %v4913, %v5001
  %v5003 = vpop.f32.mrb[0].mxu0
  %v5004 = vpop.f32.mrb[0].mxu0
  %v5005 = vadd.f32 %v4916, %v5004
  %v5006 = vpop.f32.mrb[0].mxu0
  %5007 = vmatprep.mubr.bf16.mxu0 0
  %5008 = vmatmul.mubr.bf16.gmra.mrb[0].mxu0 %v4401
  %v5009 = vpop.f32.mrb[0].mxu0
  %v5010 = vadd.f32 %v4921, %v5009
  %v5011 = vpop.f32.mrb[0].mxu0
  %v5012 = vpop.f32.mrb[0].mxu0
  %v5013 = vadd.f32 %v4924, %v5012
  %v5014 = vpop.f32.mrb[0].mxu0
  %5015 = vmatprep.mubr.bf16.mxu0 0
  %5016 = vmatmul.mubr.bf16.gmra.mrb[0].mxu0 %v4404
  %v5017 = vpop.f32.mrb[0].mxu0
  %v5018 = vadd.f32 %v4929, %v5017
  %v5019 = vpop.f32.mrb[0].mxu0
  %v5020 = vpop.f32.mrb[0].mxu0
  %v5021 = vadd.f32 %v4932, %v5020
  %v5022 = vpop.f32.mrb[0].mxu0
  %5023 = vmatprep.mubr.bf16.mxu0 0
  %5024 = vmatmul.mubr.bf16.gmra.mrb[0].mxu0 %v4407
  %v5025 = vpop.f32.mrb[0].mxu0
  %v5026 = vadd.f32 %v4937, %v5025
  %v5027 = vpop.f32.mrb[0].mxu0
  %v5028 = vpop.f32.mrb[0].mxu0
  %v5029 = vadd.f32 %v4940, %v5028
  %v5030 = vpop.f32.mrb[0].mxu0
  %5031 = vdwg.mxu0
  %v5032 = vmax.f32 %v4978, 0.0
  %v5033 = vmax.f32 %v4981, 0.0
  %v5034 = vmax.f32 %v4986, 0.0
  %v5035 = vmax.f32 %v4989, 0.0
  %v5036 = vmax.f32 %v4994, 0.0
  %v5037 = vmax.f32 %v4997, 0.0
  %v5038 = vmax.f32 %v5002, 0.0
  %v5039 = vmax.f32 %v5005, 0.0
  %v5040 = vmax.f32 %v5010, 0.0
  %v5041 = vmax.f32 %v5013, 0.0
  %v5042 = vmax.f32 %v5018, 0.0
  %v5043 = vmax.f32 %v5021, 0.0
  %v5044 = vmax.f32 %v5026, 0.0
  %v5045 = vmax.f32 %v5029, 0.0
  %v5046 = vpack.c.bf16 %v5032, %v5032
  %v5047 = vpack.c.bf16 %v5033, %v5033
  %v5048 = vpack.c.bf16 %v5034, %v5034
  %v5049 = vpack.c.bf16 %v5035, %v5035
  %v5050 = vpack.c.bf16 %v5036, %v5036
  %v5051 = vpack.c.bf16 %v5037, %v5037
  %v5052 = vpack.c.bf16 %v5038, %v5038
  %v5053 = vpack.c.bf16 %v5039, %v5039
  %v5054 = vpack.c.bf16 %v5040, %v5040
  %v5055 = vpack.c.bf16 %v5041, %v5041
  %v5056 = vpack.c.bf16 %v5042, %v5042
  %v5057 = vpack.c.bf16 %v5043, %v5043
  %v5058 = vpack.c.bf16 %v5044, %v5044
  %v5059 = vpack.c.bf16 %v5045, %v5045
  %v5061 = vshrl.u32 %v2322, 16
  %v5063 = vshll.u32 %v2322, 16
  %v5065 = vrot.slane %v5063, 1
  %v5066 = vor.u32 %v5061, %v5065
  %v5068 = vshll.u32 %v2323, 16
  %v5070 = vrot.slane %v5068, 1
  %v5071 = vsel %vm2438, %v5066, %v5070
  %v5072 = vshrl.u32 %v2323, 16
  %v5074 = vor.u32 %v5072, %v5070
  %v5076 = vshll.u32 %v2324, 16
  %v5078 = vrot.slane %v5076, 1
  %v5079 = vsel %vm2438, %v5074, %v5078
  %v5080 = vshrl.u32 %v2324, 16
  %v5082 = vor.u32 %v5080, %v5078
  %v5084 = vshll.u32 %v2325, 16
  %v5086 = vrot.slane %v5084, 1
  %v5087 = vsel %vm2438, %v5082, %v5086
  %v5088 = vshrl.u32 %v2325, 16
  %v5090 = vor.u32 %v5088, %v5086
  %v5092 = vshrl.u32 %v2361, 16
  %v5094 = vshll.u32 %v2361, 16
  %v5096 = vrot.slane %v5094, 1
  %v5097 = vor.u32 %v5092, %v5096
  %v5099 = vshll.u32 %v2362, 16
  %v5101 = vrot.slane %v5099, 1
  %v5102 = vsel %vm2438, %v5097, %v5101
  %v5103 = vshrl.u32 %v2362, 16
  %v5105 = vor.u32 %v5103, %v5101
  %v5107 = vshll.u32 %v2363, 16
  %v5109 = vrot.slane %v5107, 1
  %v5110 = vsel %vm2438, %v5105, %v5109
  %v5111 = vshrl.u32 %v2363, 16
  %v5113 = vor.u32 %v5111, %v5109
  %v5115 = vshll.u32 %v2364, 16
  %v5117 = vrot.slane %v5115, 1
  %v5118 = vsel %vm2438, %v5113, %v5117
  %v5119 = vshrl.u32 %v2364, 16
  %v5121 = vor.u32 %v5119, %v5117
  %5122 = vrot.lane.b32.xlu0 %v5071, 64
  %v5123 = vpop.permute.xlu0 %5122
  %5124 = vrot.lane.b32.xlu0 %v5079, 64
  %v5125 = vpop.permute.xlu0 %5124
  %5126 = vrot.lane.b32.xlu0 %v5087, 64
  %v5127 = vpop.permute.xlu0 %5126
  %5128 = vrot.lane.b32.xlu0 %v5090, 64
  %v5129 = vpop.permute.xlu0 %5128
  %5130 = vrot.lane.b32.xlu0 %v5102, 64
  %v5131 = vpop.permute.xlu0 %5130
  %5132 = vrot.lane.b32.xlu0 %v5110, 64
  %v5133 = vpop.permute.xlu0 %5132
  %5134 = vrot.lane.b32.xlu0 %v5118, 64
  %v5135 = vpop.permute.xlu0 %5134
  %5136 = vrot.lane.b32.xlu0 %v5121, 64
  %v5137 = vpop.permute.xlu0 %5136
  %v5138 = vshrl.u32 %v2317, 16
  %v5140 = vshll.u32 %v2317, 16
  %v5142 = vrot.slane %v5140, 1
  %v5143 = vor.u32 %v5138, %v5142
  %v5144 = vshll.u32 %v2318, 16
  %v5146 = vrot.slane %v5144, 1
  %v5147 = vsel %vm2438, %v5143, %v5146
  %v5148 = vshrl.u32 %v2318, 16
  %v5150 = vor.u32 %v5148, %v5146
  %v5151 = vshll.u32 %v2319, 16
  %v5153 = vrot.slane %v5151, 1
  %v5154 = vsel %vm2438, %v5150, %v5153
  %v5155 = vshrl.u32 %v2319, 16
  %v5157 = vor.u32 %v5155, %v5153
  %v5158 = vshll.u32 %v2320, 16
  %v5160 = vrot.slane %v5158, 1
  %v5161 = vsel %vm2438, %v5157, %v5160
  %v5162 = vshrl.u32 %v2320, 16
  %v5164 = vor.u32 %v5162, %v5160
  %v5165 = vshrl.u32 %v2356, 16
  %v5167 = vshll.u32 %v2356, 16
  %v5169 = vrot.slane %v5167, 1
  %v5170 = vor.u32 %v5165, %v5169
  %v5171 = vshll.u32 %v2357, 16
  %v5173 = vrot.slane %v5171, 1
  %v5174 = vsel %vm2438, %v5170, %v5173
  %v5175 = vshrl.u32 %v2357, 16
  %v5177 = vor.u32 %v5175, %v5173
  %v5178 = vshll.u32 %v2358, 16
  %v5180 = vrot.slane %v5178, 1
  %v5181 = vsel %vm2438, %v5177, %v5180
  %v5182 = vshrl.u32 %v2358, 16
  %v5184 = vor.u32 %v5182, %v5180
  %v5185 = vshll.u32 %v2359, 16
  %v5187 = vrot.slane %v5185, 1
  %v5188 = vsel %vm2438, %v5184, %v5187
  %v5189 = vshrl.u32 %v2359, 16
  %v5191 = vor.u32 %v5189, %v5187
  %v5192 = vshrl.u32 %v2342, 16
  %v5194 = vshll.u32 %v2342, 16
  %v5196 = vrot.slane %v5194, 1
  %v5197 = vor.u32 %v5192, %v5196
  %v5198 = vshll.u32 %v2343, 16
  %v5200 = vrot.slane %v5198, 1
  %v5201 = vsel %vm2438, %v5197, %v5200
  %v5202 = vshrl.u32 %v2343, 16
  %v5204 = vor.u32 %v5202, %v5200
  %v5205 = vshll.u32 %v2344, 16
  %v5207 = vrot.slane %v5205, 1
  %v5208 = vsel %vm2438, %v5204, %v5207
  %v5209 = vshrl.u32 %v2344, 16
  %v5211 = vor.u32 %v5209, %v5207
  %v5212 = vshll.u32 %v2345, 16
  %v5214 = vrot.slane %v5212, 1
  %v5215 = vsel %vm2438, %v5211, %v5214
  %v5216 = vshrl.u32 %v2345, 16
  %v5218 = vor.u32 %v5216, %v5214
  %v5219 = vshrl.u32 %v2381, 16
  %v5221 = vshll.u32 %v2381, 16
  %v5223 = vrot.slane %v5221, 1
  %v5224 = vor.u32 %v5219, %v5223
  %v5225 = vshll.u32 %v2382, 16
  %v5227 = vrot.slane %v5225, 1
  %v5228 = vsel %vm2438, %v5224, %v5227
  %v5229 = vshrl.u32 %v2382, 16
  %v5231 = vor.u32 %v5229, %v5227
  %v5232 = vshll.u32 %v2383, 16
  %v5234 = vrot.slane %v5232, 1
  %v5235 = vsel %vm2438, %v5231, %v5234
  %v5236 = vshrl.u32 %v2383, 16
  %v5238 = vor.u32 %v5236, %v5234
  %v5239 = vshll.u32 %v2384, 16
  %v5241 = vrot.slane %v5239, 1
  %v5242 = vsel %vm2438, %v5238, %v5241
  %v5243 = vshrl.u32 %v2384, 16
  %v5245 = vor.u32 %v5243, %v5241
  %v5247 = vshrl.u32 %v2337, 16
  %v5249 = vshll.u32 %v2337, 16
  %v5251 = vrot.slane %v5249, 1
  %v5252 = vor.u32 %v5247, %v5251
  %v5254 = vshll.u32 %v2338, 16
  %v5256 = vrot.slane %v5254, 1
  %v5257 = vsel %vm2438, %v5252, %v5256
  %v5258 = vshrl.u32 %v2338, 16
  %v5260 = vor.u32 %v5258, %v5256
  %v5262 = vshll.u32 %v2339, 16
  %v5264 = vrot.slane %v5262, 1
  %v5265 = vsel %vm2438, %v5260, %v5264
  %v5266 = vshrl.u32 %v2339, 16
  %v5268 = vor.u32 %v5266, %v5264
  %v5270 = vshll.u32 %v2340, 16
  %v5272 = vrot.slane %v5270, 1
  %v5273 = vsel %vm2438, %v5268, %v5272
  %v5274 = vshrl.u32 %v2340, 16
  %v5276 = vor.u32 %v5274, %v5272
  %v5278 = vshrl.u32 %v2376, 16
  %v5280 = vshll.u32 %v2376, 16
  %v5282 = vrot.slane %v5280, 1
  %v5283 = vor.u32 %v5278, %v5282
  %v5285 = vshll.u32 %v2377, 16
  %v5287 = vrot.slane %v5285, 1
  %v5288 = vsel %vm2438, %v5283, %v5287
  %v5289 = vshrl.u32 %v2377, 16
  %v5291 = vor.u32 %v5289, %v5287
  %v5293 = vshll.u32 %v2378, 16
  %v5295 = vrot.slane %v5293, 1
  %v5296 = vsel %vm2438, %v5291, %v5295
  %v5297 = vshrl.u32 %v2378, 16
  %v5299 = vor.u32 %v5297, %v5295
  %v5301 = vshll.u32 %v2379, 16
  %v5303 = vrot.slane %v5301, 1
  %v5304 = vsel %vm2438, %v5299, %v5303
  %v5305 = vshrl.u32 %v2379, 16
  %v5307 = vor.u32 %v5305, %v5303
  %5308 = vrot.lane.b32.xlu0 %v5257, 64
  %v5309 = vpop.permute.xlu0 %5308
  %5310 = vrot.lane.b32.xlu0 %v5265, 64
  %v5311 = vpop.permute.xlu0 %5310
  %5312 = vrot.lane.b32.xlu0 %v5273, 64
  %v5313 = vpop.permute.xlu0 %5312
  %5314 = vrot.lane.b32.xlu0 %v5276, 64
  %v5315 = vpop.permute.xlu0 %5314
  %5316 = vrot.lane.b32.xlu0 %v5288, 64
  %v5317 = vpop.permute.xlu0 %5316
  %5318 = vrot.lane.b32.xlu0 %v5296, 64
  %v5319 = vpop.permute.xlu0 %5318
  %5320 = vrot.lane.b32.xlu0 %v5304, 64
  %v5321 = vpop.permute.xlu0 %5320
  %5322 = vrot.lane.b32.xlu0 %v5307, 64
  %v5323 = vpop.permute.xlu0 %5322
  %v5324 = vrot.slane %v5061, 4
  %v5325 = vrot.slane %v5063, 5
  %v5326 = vor.u32 %v5324, %v5325
  %v5327 = vrot.slane %v5072, 4
  %v5328 = vrot.slane %v5068, 5
  %v5329 = vor.u32 %v5327, %v5328
  %v5330 = vsel %vm2732, %v5326, %v5329
  %v5331 = vrot.slane %v5080, 4
  %v5332 = vrot.slane %v5076, 5
  %v5333 = vor.u32 %v5331, %v5332
  %v5334 = vsel %vm2732, %v5329, %v5333
  %v5335 = vrot.slane %v5088, 4
  %v5336 = vrot.slane %v5084, 5
  %v5337 = vor.u32 %v5335, %v5336
  %v5338 = vsel %vm2732, %v5333, %v5337
  %v5340 = vshll.u32 %v2326, 16
  %v5342 = vrot.slane %v5340, 5
  %v5343 = vsel %vm2732, %v5337, %v5342
  %v5344 = vrot.slane %v5092, 4
  %v5345 = vrot.slane %v5094, 5
  %v5346 = vor.u32 %v5344, %v5345
  %v5347 = vrot.slane %v5103, 4
  %v5348 = vrot.slane %v5099, 5
  %v5349 = vor.u32 %v5347, %v5348
  %v5350 = vsel %vm2732, %v5346, %v5349
  %v5351 = vrot.slane %v5111, 4
  %v5352 = vrot.slane %v5107, 5
  %v5353 = vor.u32 %v5351, %v5352
  %v5354 = vsel %vm2732, %v5349, %v5353
  %v5355 = vrot.slane %v5119, 4
  %v5356 = vrot.slane %v5115, 5
  %v5357 = vor.u32 %v5355, %v5356
  %v5358 = vsel %vm2732, %v5353, %v5357
  %v5360 = vshll.u32 %v2365, 16
  %v5362 = vrot.slane %v5360, 5
  %v5363 = vsel %vm2732, %v5357, %v5362
  %5364 = vrot.lane.b32.xlu0 %v5330, 64
  %v5365 = vpop.permute.xlu0 %5364
  %5366 = vrot.lane.b32.xlu0 %v5334, 64
  %v5367 = vpop.permute.xlu0 %5366
  %5368 = vrot.lane.b32.xlu0 %v5338, 64
  %v5369 = vpop.permute.xlu0 %5368
  %5370 = vrot.lane.b32.xlu0 %v5343, 64
  %v5371 = vpop.permute.xlu0 %5370
  %5372 = vrot.lane.b32.xlu0 %v5350, 64
  %v5373 = vpop.permute.xlu0 %5372
  %5374 = vrot.lane.b32.xlu0 %v5354, 64
  %v5375 = vpop.permute.xlu0 %5374
  %5376 = vrot.lane.b32.xlu0 %v5358, 64
  %v5377 = vpop.permute.xlu0 %5376
  %5378 = vrot.lane.b32.xlu0 %v5363, 64
  %v5379 = vpop.permute.xlu0 %5378
  %v5380 = vrot.slane %v5138, 4
  %v5381 = vrot.slane %v5140, 5
  %v5382 = vor.u32 %v5380, %v5381
  %v5383 = vrot.slane %v5148, 4
  %v5384 = vrot.slane %v5144, 5
  %v5385 = vor.u32 %v5383, %v5384
  %v5386 = vsel %vm2732, %v5382, %v5385
  %v5387 = vrot.slane %v5155, 4
  %v5388 = vrot.slane %v5151, 5
  %v5389 = vor.u32 %v5387, %v5388
  %v5390 = vsel %vm2732, %v5385, %v5389
  %v5391 = vrot.slane %v5162, 4
  %v5392 = vrot.slane %v5158, 5
  %v5393 = vor.u32 %v5391, %v5392
  %v5394 = vsel %vm2732, %v5389, %v5393
  %v5396 = vshll.u32 %v2321, 16
  %v5398 = vrot.slane %v5396, 5
  %v5399 = vsel %vm2732, %v5393, %v5398
  %v5400 = vrot.slane %v5165, 4
  %v5401 = vrot.slane %v5167, 5
  %v5402 = vor.u32 %v5400, %v5401
  %v5403 = vrot.slane %v5175, 4
  %v5404 = vrot.slane %v5171, 5
  %v5405 = vor.u32 %v5403, %v5404
  %v5406 = vsel %vm2732, %v5402, %v5405
  %v5407 = vrot.slane %v5182, 4
  %v5408 = vrot.slane %v5178, 5
  %v5409 = vor.u32 %v5407, %v5408
  %v5410 = vsel %vm2732, %v5405, %v5409
  %v5411 = vrot.slane %v5189, 4
  %v5412 = vrot.slane %v5185, 5
  %v5413 = vor.u32 %v5411, %v5412
  %v5414 = vsel %vm2732, %v5409, %v5413
  %v5416 = vshll.u32 %v2360, 16
  %v5418 = vrot.slane %v5416, 5
  %v5419 = vsel %vm2732, %v5413, %v5418
  %v5420 = vrot.slane %v2337, 4
  %v5421 = vrot.slane %v2338, 4
  %v5422 = vsel %vm2635, %v5420, %v5421
  %v5423 = vrot.slane %v2339, 4
  %v5424 = vsel %vm2635, %v5421, %v5423
  %v5425 = vrot.slane %v2340, 4
  %v5426 = vsel %vm2635, %v5423, %v5425
  %v5427 = vrot.slane %v2376, 4
  %v5428 = vrot.slane %v2377, 4
  %v5429 = vsel %vm2635, %v5427, %v5428
  %v5430 = vrot.slane %v2378, 4
  %v5431 = vsel %vm2635, %v5428, %v5430
  %v5432 = vrot.slane %v2379, 4
  %v5433 = vsel %vm2635, %v5430, %v5432
  %5434 = vrot.lane.b32.xlu0 %v5422, 64
  %v5435 = vpop.permute.xlu0 %5434
  %5436 = vrot.lane.b32.xlu0 %v5424, 64
  %v5437 = vpop.permute.xlu0 %5436
  %5438 = vrot.lane.b32.xlu0 %v5426, 64
  %v5439 = vpop.permute.xlu0 %5438
  %5440 = vrot.lane.b32.xlu0 %v5425, 64
  %v5441 = vpop.permute.xlu0 %5440
  %5442 = vrot.lane.b32.xlu0 %v5429, 64
  %v5443 = vpop.permute.xlu0 %5442
  %5444 = vrot.lane.b32.xlu0 %v5431, 64
  %v5445 = vpop.permute.xlu0 %5444
  %5446 = vrot.lane.b32.xlu0 %v5433, 64
  %v5447 = vpop.permute.xlu0 %5446
  %5448 = vrot.lane.b32.xlu0 %v5432, 64
  %v5449 = vpop.permute.xlu0 %5448
  %v5451 = vsel %vm2803, %v2450, %v5123
  %v5453 = vsel %vm2803, %v2458, %v5125
  %v5455 = vsel %vm2803, %v2466, %v5127
  %v5457 = vsel %vm2803, %v2469, %v5129
  %v5459 = vsel %vm2803, %v2481, %v5131
  %v5461 = vsel %vm2803, %v2489, %v5133
  %v5463 = vsel %vm2803, %v2497, %v5135
  %v5465 = vsel %vm2803, %v2500, %v5137
  %v5467 = vsel %vm2803, %v5147, %v2534
  %v5469 = vsel %vm2803, %v5154, %v2536
  %v5471 = vsel %vm2803, %v5161, %v2538
  %v5473 = vsel %vm2803, %v5164, %v2540
  %v5475 = vsel %vm2803, %v5174, %v2542
  %v5477 = vsel %vm2803, %v5181, %v2544
  %v5479 = vsel %vm2803, %v5188, %v2546
  %v5481 = vsel %vm2803, %v5191, %v2548
  %v5484 = vsel %vm2803, %v5201, %v5309
  %v5487 = vsel %vm2803, %v5208, %v5311
  %v5490 = vsel %vm2803, %v5215, %v5313
  %v5493 = vsel %vm2803, %v5218, %v5315
  %v5496 = vsel %vm2803, %v5228, %v5317
  %v5499 = vsel %vm2803, %v5235, %v5319
  %v5502 = vsel %vm2803, %v5242, %v5321
  %v5505 = vsel %vm2803, %v5245, %v5323
  %v5507 = vsel %vm2803, %v2739, %v5365
  %v5509 = vsel %vm2803, %v2743, %v5367
  %v5511 = vsel %vm2803, %v2747, %v5369
  %v5513 = vsel %vm2803, %v2752, %v5371
  %v5515 = vsel %vm2803, %v2759, %v5373
  %v5517 = vsel %vm2803, %v2763, %v5375
  %v5519 = vsel %vm2803, %v2767, %v5377
  %v5521 = vsel %vm2803, %v2772, %v5379
  %v5524 = vsel %vm2803, %v5386, %v5435
  %v5527 = vsel %vm2803, %v5390, %v5437
  %v5530 = vsel %vm2803, %v5394, %v5439
  %v5533 = vsel %vm2803, %v5399, %v5441
  %v5536 = vsel %vm2803, %v5406, %v5443
  %v5539 = vsel %vm2803, %v5410, %v5445
  %v5542 = vsel %vm2803, %v5414, %v5447
  %v5545 = vsel %vm2803, %v5419, %v5449
  %v5547 = vshll.u32 %v2346, 16
  %v5549 = vrot.slane %v5547, 1
  %v5550 = vsel %vm2438, %v5218, %v5549
  %v5552 = vshll.u32 %v2385, 16
  %v5554 = vrot.slane %v5552, 1
  %v5555 = vsel %vm2438, %v5245, %v5554
  %v5557 = vshll.u32 %v2341, 16
  %v5559 = vrot.slane %v5557, 1
  %v5560 = vsel %vm2438, %v5276, %v5559
  %v5562 = vshll.u32 %v2380, 16
  %v5564 = vrot.slane %v5562, 1
  %v5565 = vsel %vm2438, %v5307, %v5564
  %5566 = vrot.lane.b32.xlu0 %v5560, 64
  %v5567 = vpop.permute.xlu0 %5566
  %5568 = vrot.lane.b32.xlu0 %v5565, 64
  %v5569 = vpop.permute.xlu0 %5568
  %v5570 = vshrl.u32 %v2326, 16
  %v5572 = vrot.slane %v5570, 4
  %v5573 = vor.u32 %v5572, %v5342
  %v5574 = vsel %vm2732, %v5337, %v5573
  %v5575 = vshrl.u32 %v2365, 16
  %v5577 = vrot.slane %v5575, 4
  %v5578 = vor.u32 %v5577, %v5362
  %v5579 = vsel %vm2732, %v5357, %v5578
  %5580 = vrot.lane.b32.xlu0 %v5329, 64
  %v5581 = vpop.permute.xlu0 %5580
  %5582 = vrot.lane.b32.xlu0 %v5574, 64
  %v5583 = vpop.permute.xlu0 %5582
  %5584 = vrot.lane.b32.xlu0 %v5349, 64
  %v5585 = vpop.permute.xlu0 %5584
  %5586 = vrot.lane.b32.xlu0 %v5579, 64
  %v5587 = vpop.permute.xlu0 %5586
  %v5588 = vshrl.u32 %v2321, 16
  %v5590 = vrot.slane %v5588, 4
  %v5591 = vor.u32 %v5590, %v5398
  %v5592 = vsel %vm2732, %v5393, %v5591
  %v5593 = vshrl.u32 %v2360, 16
  %v5595 = vrot.slane %v5593, 4
  %v5596 = vor.u32 %v5595, %v5418
  %v5597 = vsel %vm2732, %v5413, %v5596
  %v5600 = vsel %vm2803, %v5550, %v5567
  %v5603 = vsel %vm2803, %v5555, %v5569
  %v5606 = vsel %vm2803, %v2738, %v5581
  %v5609 = vsel %vm2803, %v3046, %v5583
  %v5612 = vsel %vm2803, %v2758, %v5585
  %v5615 = vsel %vm2803, %v3051, %v5587
  %v5632 = vrot.slane %v5484, 4
  %v5633 = vrot.slane %v5487, 4
  %v5634 = vsel %vm2635, %v5632, %v5633
  %v5635 = vrot.slane %v5606, 4
  %v5636 = vrot.slane %v5509, 4
  %v5637 = vsel %vm2635, %v5635, %v5636
  %v5638 = vrot.slane %v5385, 4
  %v5639 = vrot.slane %v5390, 4
  %v5640 = vsel %vm2635, %v5638, %v5639
  %v5641 = vrot.slane %v5490, 4
  %v5642 = vsel %vm2635, %v5633, %v5641
  %v5643 = vrot.slane %v5511, 4
  %v5644 = vsel %vm2635, %v5636, %v5643
  %v5645 = vrot.slane %v5394, 4
  %v5646 = vsel %vm2635, %v5639, %v5645
  %v5647 = vrot.slane %v5600, 4
  %v5648 = vsel %vm2635, %v5641, %v5647
  %v5649 = vrot.slane %v5609, 4
  %v5650 = vsel %vm2635, %v5643, %v5649
  %v5651 = vrot.slane %v5592, 4
  %v5652 = vsel %vm2635, %v5645, %v5651
  %v5653 = vrot.slane %v5496, 4
  %v5654 = vrot.slane %v5499, 4
  %v5655 = vsel %vm2635, %v5653, %v5654
  %v5656 = vrot.slane %v5612, 4
  %v5657 = vrot.slane %v5517, 4
  %v5658 = vsel %vm2635, %v5656, %v5657
  %v5659 = vrot.slane %v5405, 4
  %v5660 = vrot.slane %v5410, 4
  %v5661 = vsel %vm2635, %v5659, %v5660
  %v5662 = vrot.slane %v5502, 4
  %v5663 = vsel %vm2635, %v5654, %v5662
  %v5664 = vrot.slane %v5519, 4
  %v5665 = vsel %vm2635, %v5657, %v5664
  %v5666 = vrot.slane %v5414, 4
  %v5667 = vsel %vm2635, %v5660, %v5666
  %v5668 = vrot.slane %v5603, 4
  %v5669 = vsel %vm2635, %v5662, %v5668
  %v5670 = vrot.slane %v5615, 4
  %v5671 = vsel %vm2635, %v5664, %v5670
  %v5672 = vrot.slane %v5597, 4
  %v5673 = vsel %vm2635, %v5666, %v5672
  %v5704 = vunpack.c.l.b16 %v5451
  %v5705 = vunpack.c.l.b16 %v5467
  %v5706 = vunpack.c.l.b16 %v5484
  %v5707 = vunpack.c.l.b16 %v5507
  %v5708 = vunpack.c.l.b16 %v5524
  %v5709 = vunpack.c.l.b16 %v5634
  %v5710 = vunpack.c.l.b16 %v5637
  %v5711 = vunpack.c.l.b16 %v5640
  %v5712 = vunpack.c.h.b16 %v5451
  %v5713 = vunpack.c.h.b16 %v5467
  %v5714 = vunpack.c.h.b16 %v5484
  %v5715 = vunpack.c.h.b16 %v5507
  %v5716 = vunpack.c.h.b16 %v5524
  %v5717 = vunpack.c.h.b16 %v5634
  %v5718 = vunpack.c.h.b16 %v5637
  %v5719 = vunpack.c.h.b16 %v5640
  %v5720 = vunpack.c.l.b16 %v5453
  %v5721 = vunpack.c.l.b16 %v5469
  %v5722 = vunpack.c.l.b16 %v5487
  %v5723 = vunpack.c.l.b16 %v5509
  %v5724 = vunpack.c.l.b16 %v5527
  %v5725 = vunpack.c.l.b16 %v5642
  %v5726 = vunpack.c.l.b16 %v5644
  %v5727 = vunpack.c.l.b16 %v5646
  %v5728 = vunpack.c.h.b16 %v5453
  %v5729 = vunpack.c.h.b16 %v5469
  %v5730 = vunpack.c.h.b16 %v5487
  %v5731 = vunpack.c.h.b16 %v5509
  %v5732 = vunpack.c.h.b16 %v5527
  %v5733 = vunpack.c.h.b16 %v5642
  %v5734 = vunpack.c.h.b16 %v5644
  %v5735 = vunpack.c.h.b16 %v5646
  %v5736 = vunpack.c.l.b16 %v5455
  %v5737 = vunpack.c.l.b16 %v5471
  %v5738 = vunpack.c.l.b16 %v5490
  %v5739 = vunpack.c.l.b16 %v5511
  %v5740 = vunpack.c.l.b16 %v5530
  %v5741 = vunpack.c.l.b16 %v5648
  %v5742 = vunpack.c.l.b16 %v5650
  %v5743 = vunpack.c.l.b16 %v5652
  %v5744 = vunpack.c.h.b16 %v5455
  %v5745 = vunpack.c.h.b16 %v5471
  %v5746 = vunpack.c.h.b16 %v5490
  %v5747 = vunpack.c.h.b16 %v5511
  %v5748 = vunpack.c.h.b16 %v5530
  %v5749 = vunpack.c.h.b16 %v5648
  %v5750 = vunpack.c.h.b16 %v5650
  %v5751 = vunpack.c.h.b16 %v5652
  %v5752 = vunpack.c.l.b16 %v5457
  %v5753 = vunpack.c.l.b16 %v5473
  %v5754 = vunpack.c.l.b16 %v5493
  %v5755 = vunpack.c.l.b16 %v5513
  %v5756 = vunpack.c.l.b16 %v5533
  %v5757 = vunpack.c.l.b16 %v5647
  %v5758 = vunpack.c.l.b16 %v5649
  %v5759 = vunpack.c.l.b16 %v5651
  %v5760 = vunpack.c.l.b16 %v5459
  %v5761 = vunpack.c.l.b16 %v5475
  %v5762 = vunpack.c.l.b16 %v5496
  %v5763 = vunpack.c.l.b16 %v5515
  %v5764 = vunpack.c.l.b16 %v5536
  %v5765 = vunpack.c.l.b16 %v5655
  %v5766 = vunpack.c.l.b16 %v5658
  %v5767 = vunpack.c.l.b16 %v5661
  %v5768 = vunpack.c.h.b16 %v5459
  %v5769 = vunpack.c.h.b16 %v5475
  %v5770 = vunpack.c.h.b16 %v5496
  %v5771 = vunpack.c.h.b16 %v5515
  %v5772 = vunpack.c.h.b16 %v5536
  %v5773 = vunpack.c.h.b16 %v5655
  %v5774 = vunpack.c.h.b16 %v5658
  %v5775 = vunpack.c.h.b16 %v5661
  %v5776 = vunpack.c.l.b16 %v5461
  %v5777 = vunpack.c.l.b16 %v5477
  %v5778 = vunpack.c.l.b16 %v5499
  %v5779 = vunpack.c.l.b16 %v5517
  %v5780 = vunpack.c.l.b16 %v5539
  %v5781 = vunpack.c.l.b16 %v5663
  %v5782 = vunpack.c.l.b16 %v5665
  %v5783 = vunpack.c.l.b16 %v5667
  %v5784 = vunpack.c.h.b16 %v5461
  %v5785 = vunpack.c.h.b16 %v5477
  %v5786 = vunpack.c.h.b16 %v5499
  %v5787 = vunpack.c.h.b16 %v5517
  %v5788 = vunpack.c.h.b16 %v5539
  %v5789 = vunpack.c.h.b16 %v5663
  %v5790 = vunpack.c.h.b16 %v5665
  %v5791 = vunpack.c.h.b16 %v5667
  %v5792 = vunpack.c.l.b16 %v5463
  %v5793 = vunpack.c.l.b16 %v5479
  %v5794 = vunpack.c.l.b16 %v5502
  %v5795 = vunpack.c.l.b16 %v5519
  %v5796 = vunpack.c.l.b16 %v5542
  %v5797 = vunpack.c.l.b16 %v5669
  %v5798 = vunpack.c.l.b16 %v5671
  %v5799 = vunpack.c.l.b16 %v5673
  %v5800 = vunpack.c.h.b16 %v5463
  %v5801 = vunpack.c.h.b16 %v5479
  %v5802 = vunpack.c.h.b16 %v5502
  %v5803 = vunpack.c.h.b16 %v5519
  %v5804 = vunpack.c.h.b16 %v5542
  %v5805 = vunpack.c.h.b16 %v5669
  %v5806 = vunpack.c.h.b16 %v5671
  %v5807 = vunpack.c.h.b16 %v5673
  %v5808 = vunpack.c.l.b16 %v5465
  %v5809 = vunpack.c.l.b16 %v5481
  %v5810 = vunpack.c.l.b16 %v5505
  %v5811 = vunpack.c.l.b16 %v5521
  %v5812 = vunpack.c.l.b16 %v5545
  %v5813 = vunpack.c.l.b16 %v5668
  %v5814 = vunpack.c.l.b16 %v5670
  %v5815 = vunpack.c.l.b16 %v5672
  %v5816 = vpack.c.b16 %v5712, %v5704
  %v5817 = vpack.c.b16 %v5713, %v5705
  %v5818 = vpack.c.b16 %v5714, %v5706
  %v5819 = vpack.c.b16 %v5715, %v5707
  %v5820 = vpack.c.b16 %v5716, %v5708
  %v5821 = vpack.c.b16 %v5717, %v5709
  %v5822 = vpack.c.b16 %v5718, %v5710
  %v5823 = vpack.c.b16 %v5719, %v5711
  %v5824 = vpack.c.b16 %v5728, %v5720
  %v5825 = vpack.c.b16 %v5729, %v5721
  %v5826 = vpack.c.b16 %v5730, %v5722
  %v5827 = vpack.c.b16 %v5731, %v5723
  %v5828 = vpack.c.b16 %v5732, %v5724
  %v5829 = vpack.c.b16 %v5733, %v5725
  %v5830 = vpack.c.b16 %v5734, %v5726
  %v5831 = vpack.c.b16 %v5735, %v5727
  %v5832 = vpack.c.b16 %v5744, %v5736
  %v5833 = vpack.c.b16 %v5745, %v5737
  %v5834 = vpack.c.b16 %v5746, %v5738
  %v5835 = vpack.c.b16 %v5747, %v5739
  %v5836 = vpack.c.b16 %v5748, %v5740
  %v5837 = vpack.c.b16 %v5749, %v5741
  %v5838 = vpack.c.b16 %v5750, %v5742
  %v5839 = vpack.c.b16 %v5751, %v5743
  %v5840 = vpack.c.b16 %v5760, %v5752
  %v5841 = vpack.c.b16 %v5761, %v5753
  %v5842 = vpack.c.b16 %v5762, %v5754
  %v5843 = vpack.c.b16 %v5763, %v5755
  %v5844 = vpack.c.b16 %v5764, %v5756
  %v5845 = vpack.c.b16 %v5765, %v5757
  %v5846 = vpack.c.b16 %v5766, %v5758
  %v5847 = vpack.c.b16 %v5767, %v5759
  %v5848 = vpack.c.b16 %v5776, %v5768
  %v5849 = vpack.c.b16 %v5777, %v5769
  %v5850 = vpack.c.b16 %v5778, %v5770
  %v5851 = vpack.c.b16 %v5779, %v5771
  %v5852 = vpack.c.b16 %v5780, %v5772
  %v5853 = vpack.c.b16 %v5781, %v5773
  %v5854 = vpack.c.b16 %v5782, %v5774
  %v5855 = vpack.c.b16 %v5783, %v5775
  %v5856 = vpack.c.b16 %v5792, %v5784
  %v5857 = vpack.c.b16 %v5793, %v5785
  %v5858 = vpack.c.b16 %v5794, %v5786
  %v5859 = vpack.c.b16 %v5795, %v5787
  %v5860 = vpack.c.b16 %v5796, %v5788
  %v5861 = vpack.c.b16 %v5797, %v5789
  %v5862 = vpack.c.b16 %v5798, %v5790
  %v5863 = vpack.c.b16 %v5799, %v5791
  %v5864 = vpack.c.b16 %v5808, %v5800
  %v5865 = vpack.c.b16 %v5809, %v5801
  %v5866 = vpack.c.b16 %v5810, %v5802
  %v5867 = vpack.c.b16 %v5811, %v5803
  %v5868 = vpack.c.b16 %v5812, %v5804
  %v5869 = vpack.c.b16 %v5813, %v5805
  %v5870 = vpack.c.b16 %v5814, %v5806
  %v5871 = vpack.c.b16 %v5815, %v5807
  %v5922 = vsel %vm2803, %v5823, 0
  %v5925 = vsel %vm2803, %v5831, 0
  %v5928 = vsel %vm2803, %v5839, 0
  %v5931 = vsel %vm2803, %v5847, 0
  %v5934 = vsel %vm2803, %v5855, 0
  %v5937 = vsel %vm2803, %v5863, 0
  %v5940 = vsel %vm2803, %v5871, 0
  %5942 = vmatprep.subr.bf16.mxu0 0
  %5943 = vmatpush1.bf16.msra.mxu0 %v4188
  %5944 = vmatprep.subr.bf16.mxu0 0
  %5945 = vmatpush1.bf16.msra.mxu0 %v4189
  %5946 = vmatprep.subr.bf16.mxu0 0
  %5947 = vmatpush1.bf16.msra.mxu0 %v4190
  %5948 = vmatprep.subr.bf16.mxu0 0
  %5949 = vmatpush1.bf16.msra.mxu0 %v4191
  %5950 = vmatprep.subr.bf16.mxu0 0
  %5951 = vmatpush1.bf16.msra.mxu0 %v4192
  %5952 = vmatprep.subr.bf16.mxu0 0
  %5953 = vmatpush1.bf16.msra.mxu0 %v4193
  %5954 = vmatprep.subr.bf16.mxu0 0
  %5955 = vmatpush1.bf16.msra.mxu0 %v4194
  %5956 = vmatprep.subr.bf16.mxu0 0
  %5957 = vmatpush1.bf16.msra.mxu0 %v4195
  %5958 = vmatprep.subr.bf16.mxu0 0
  %5959 = vmatpush1.bf16.msra.mxu0 %v4196
  %5960 = vmatprep.subr.bf16.mxu0 0
  %5961 = vmatpush1.bf16.msra.mxu0 %v4197
  %5962 = vmatprep.subr.bf16.mxu0 0
  %5963 = vmatpush1.bf16.msra.mxu0 %v4198
  %5964 = vmatprep.subr.bf16.mxu0 0
  %5965 = vmatpush1.bf16.msra.mxu0 %v4199
  %5966 = vmatprep.subr.bf16.mxu0 0
  %5967 = vmatpush1.bf16.msra.mxu0 %v4200
  %5968 = vmatprep.subr.bf16.mxu0 0
  %5969 = vmatpush1.bf16.msra.mxu0 %v4201
  %5970 = vmatprep.subr.bf16.mxu0 0
  %5971 = vmatpush1.bf16.msra.mxu0 %v4202
  %5972 = vmatprep.subr.bf16.mxu0 0
  %5973 = vmatpush1.bf16.msra.mxu0 %v4203
  %5974 = vmatprep.mubr.bf16.mxu0 %v5816
  %5975 = vmatmul.mubr.bf16.gmra.mrb[0].mxu0 %v3614
  %v5976 = vpop.f32.mrb[0].mxu0
  %v5977 = vadd.f32 %v3611, %v5976
  %v5978 = vpop.f32.mrb[0].mxu0
  %v5979 = vpop.f32.mrb[0].mxu0
  %v5980 = vadd.f32 %v3611, %v5979
  %v5981 = vpop.f32.mrb[0].mxu0
  %5982 = vmatprep.mubr.bf16.mxu0 %v5824
  %5983 = vmatmul.mubr.bf16.gmra.mrb[0].mxu0 %v3627
  %v5984 = vpop.f32.mrb[0].mxu0
  %v5985 = vadd.f32 %v3611, %v5984
  %v5986 = vpop.f32.mrb[0].mxu0
  %v5987 = vpop.f32.mrb[0].mxu0
  %v5988 = vadd.f32 %v3611, %v5987
  %v5989 = vpop.f32.mrb[0].mxu0
  %5990 = vmatprep.mubr.bf16.mxu0 %v5832
  %5991 = vmatmul.mubr.bf16.gmra.mrb[0].mxu0 %v3640
  %v5992 = vpop.f32.mrb[0].mxu0
  %v5993 = vadd.f32 %v3611, %v5992
  %v5994 = vpop.f32.mrb[0].mxu0
  %v5995 = vpop.f32.mrb[0].mxu0
  %v5996 = vadd.f32 %v3611, %v5995
  %v5997 = vpop.f32.mrb[0].mxu0
  %5998 = vmatprep.mubr.bf16.mxu0 %v5840
  %5999 = vmatmul.mubr.bf16.gmra.mrb[0].mxu0 %v3653
  %v6000 = vpop.f32.mrb[0].mxu0
  %v6001 = vadd.f32 %v3611, %v6000
  %v6002 = vpop.f32.mrb[0].mxu0
  %v6003 = vpop.f32.mrb[0].mxu0
  %v6004 = vadd.f32 %v3611, %v6003
  %v6005 = vpop.f32.mrb[0].mxu0
  %6006 = vmatprep.mubr.bf16.mxu0 %v5848
  %6007 = vmatmul.mubr.bf16.gmra.mrb[0].mxu0 %v3666
  %v6008 = vpop.f32.mrb[0].mxu0
  %v6009 = vadd.f32 %v3611, %v6008
  %v6010 = vpop.f32.mrb[0].mxu0
  %v6011 = vpop.f32.mrb[0].mxu0
  %v6012 = vadd.f32 %v3611, %v6011
  %v6013 = vpop.f32.mrb[0].mxu0
  %6014 = vmatprep.mubr.bf16.mxu0 %v5856
  %6015 = vmatmul.mubr.bf16.gmra.mrb[0].mxu0 %v3679
  %v6016 = vpop.f32.mrb[0].mxu0
  %v6017 = vadd.f32 %v3611, %v6016
  %v6018 = vpop.f32.mrb[0].mxu0
  %v6019 = vpop.f32.mrb[0].mxu0
  %v6020 = vadd.f32 %v3611, %v6019
  %v6021 = vpop.f32.mrb[0].mxu0
  %6022 = vmatprep.mubr.bf16.mxu0 %v5864
  %6023 = vmatmul.mubr.bf16.gmra.mrb[0].mxu0 %v3692
  %v6024 = vpop.f32.mrb[0].mxu0
  %v6025 = vadd.f32 %v3611, %v6024
  %v6026 = vpop.f32.mrb[0].mxu0
  %v6027 = vpop.f32.mrb[0].mxu0
  %v6028 = vadd.f32 %v3611, %v6027
  %v6029 = vpop.f32.mrb[0].mxu0
  %6030 = vdwg.mxu0
  %6031 = vmatprep.subr.bf16.mxu0 0
  %6032 = vmatpush1.bf16.msra.mxu0 %v4204
  %6033 = vmatprep.subr.bf16.mxu0 0
  %6034 = vmatpush1.bf16.msra.mxu0 %v4205
  %6035 = vmatprep.subr.bf16.mxu0 0
  %6036 = vmatpush1.bf16.msra.mxu0 %v4206
  %6037 = vmatprep.subr.bf16.mxu0 0
  %6038 = vmatpush1.bf16.msra.mxu0 %v4207
  %6039 = vmatprep.subr.bf16.mxu0 0
  %6040 = vmatpush1.bf16.msra.mxu0 %v4208
  %6041 = vmatprep.subr.bf16.mxu0 0
  %6042 = vmatpush1.bf16.msra.mxu0 %v4209
  %6043 = vmatprep.subr.bf16.mxu0 0
  %6044 = vmatpush1.bf16.msra.mxu0 %v4210
  %6045 = vmatprep.subr.bf16.mxu0 0
  %6046 = vmatpush1.bf16.msra.mxu0 %v4211
  %6047 = vmatprep.subr.bf16.mxu0 0
  %6048 = vmatpush1.bf16.msra.mxu0 %v4212
  %6049 = vmatprep.subr.bf16.mxu0 0
  %6050 = vmatpush1.bf16.msra.mxu0 %v4213
  %6051 = vmatprep.subr.bf16.mxu0 0
  %6052 = vmatpush1.bf16.msra.mxu0 %v4214
  %6053 = vmatprep.subr.bf16.mxu0 0
  %6054 = vmatpush1.bf16.msra.mxu0 %v4215
  %6055 = vmatprep.subr.bf16.mxu0 0
  %6056 = vmatpush1.bf16.msra.mxu0 %v4216
  %6057 = vmatprep.subr.bf16.mxu0 0
  %6058 = vmatpush1.bf16.msra.mxu0 %v4217
  %6059 = vmatprep.subr.bf16.mxu0 0
  %6060 = vmatpush1.bf16.msra.mxu0 %v4218
  %6061 = vmatprep.subr.bf16.mxu0 0
  %6062 = vmatpush1.bf16.msra.mxu0 %v4219
  %6063 = vmatprep.mubr.bf16.mxu0 %v3617
  %6064 = vmatmul.mubr.bf16.gmra.mrb[0].mxu0 %v5817
  %v6065 = vpop.f32.mrb[0].mxu0
  %v6066 = vadd.f32 %v5977, %v6065
  %v6067 = vpop.f32.mrb[0].mxu0
  %v6068 = vpop.f32.mrb[0].mxu0
  %v6069 = vadd.f32 %v5980, %v6068
  %v6070 = vpop.f32.mrb[0].mxu0
  %6071 = vmatprep.mubr.bf16.mxu0 %v3630
  %6072 = vmatmul.mubr.bf16.gmra.mrb[0].mxu0 %v5825
  %v6073 = vpop.f32.mrb[0].mxu0
  %v6074 = vadd.f32 %v5985, %v6073
  %v6075 = vpop.f32.mrb[0].mxu0
  %v6076 = vpop.f32.mrb[0].mxu0
  %v6077 = vadd.f32 %v5988, %v6076
  %v6078 = vpop.f32.mrb[0].mxu0
  %6079 = vmatprep.mubr.bf16.mxu0 %v3643
  %6080 = vmatmul.mubr.bf16.gmra.mrb[0].mxu0 %v5833
  %v6081 = vpop.f32.mrb[0].mxu0
  %v6082 = vadd.f32 %v5993, %v6081
  %v6083 = vpop.f32.mrb[0].mxu0
  %v6084 = vpop.f32.mrb[0].mxu0
  %v6085 = vadd.f32 %v5996, %v6084
  %v6086 = vpop.f32.mrb[0].mxu0
  %6087 = vmatprep.mubr.bf16.mxu0 %v3656
  %6088 = vmatmul.mubr.bf16.gmra.mrb[0].mxu0 %v5841
  %v6089 = vpop.f32.mrb[0].mxu0
  %v6090 = vadd.f32 %v6001, %v6089
  %v6091 = vpop.f32.mrb[0].mxu0
  %v6092 = vpop.f32.mrb[0].mxu0
  %v6093 = vadd.f32 %v6004, %v6092
  %v6094 = vpop.f32.mrb[0].mxu0
  %6095 = vmatprep.mubr.bf16.mxu0 %v3669
  %6096 = vmatmul.mubr.bf16.gmra.mrb[0].mxu0 %v5849
  %v6097 = vpop.f32.mrb[0].mxu0
  %v6098 = vadd.f32 %v6009, %v6097
  %v6099 = vpop.f32.mrb[0].mxu0
  %v6100 = vpop.f32.mrb[0].mxu0
  %v6101 = vadd.f32 %v6012, %v6100
  %v6102 = vpop.f32.mrb[0].mxu0
  %6103 = vmatprep.mubr.bf16.mxu0 %v3682
  %6104 = vmatmul.mubr.bf16.gmra.mrb[0].mxu0 %v5857
  %v6105 = vpop.f32.mrb[0].mxu0
  %v6106 = vadd.f32 %v6017, %v6105
  %v6107 = vpop.f32.mrb[0].mxu0
  %v6108 = vpop.f32.mrb[0].mxu0
  %v6109 = vadd.f32 %v6020, %v6108
  %v6110 = vpop.f32.mrb[0].mxu0
  %6111 = vmatprep.mubr.bf16.mxu0 %v3695
  %6112 = vmatmul.mubr.bf16.gmra.mrb[0].mxu0 %v5865
  %v6113 = vpop.f32.mrb[0].mxu0
  %v6114 = vadd.f32 %v6025, %v6113
  %v6115 = vpop.f32.mrb[0].mxu0
  %v6116 = vpop.f32.mrb[0].mxu0
  %v6117 = vadd.f32 %v6028, %v6116
  %v6118 = vpop.f32.mrb[0].mxu0
  %6119 = vdwg.mxu0
  %6120 = vmatprep.subr.bf16.mxu0 0
  %6121 = vmatpush1.bf16.msra.mxu0 %v4220
  %6122 = vmatprep.subr.bf16.mxu0 0
  %6123 = vmatpush1.bf16.msra.mxu0 %v4221
  %6124 = vmatprep.subr.bf16.mxu0 0
  %6125 = vmatpush1.bf16.msra.mxu0 %v4222
  %6126 = vmatprep.subr.bf16.mxu0 0
  %6127 = vmatpush1.bf16.msra.mxu0 %v4223
  %6128 = vmatprep.subr.bf16.mxu0 0
  %6129 = vmatpush1.bf16.msra.mxu0 %v4224
  %6130 = vmatprep.subr.bf16.mxu0 0
  %6131 = vmatpush1.bf16.msra.mxu0 %v4225
  %6132 = vmatprep.subr.bf16.mxu0 0
  %6133 = vmatpush1.bf16.msra.mxu0 %v4226
  %6134 = vmatprep.subr.bf16.mxu0 0
  %6135 = vmatpush1.bf16.msra.mxu0 %v4227
  %6136 = vmatprep.subr.bf16.mxu0 0
  %6137 = vmatpush1.bf16.msra.mxu0 %v4228
  %6138 = vmatprep.subr.bf16.mxu0 0
  %6139 = vmatpush1.bf16.msra.mxu0 %v4229
  %6140 = vmatprep.subr.bf16.mxu0 0
  %6141 = vmatpush1.bf16.msra.mxu0 %v4230
  %6142 = vmatprep.subr.bf16.mxu0 0
  %6143 = vmatpush1.bf16.msra.mxu0 %v4231
  %6144 = vmatprep.subr.bf16.mxu0 0
  %6145 = vmatpush1.bf16.msra.mxu0 %v4232
  %6146 = vmatprep.subr.bf16.mxu0 0
  %6147 = vmatpush1.bf16.msra.mxu0 %v4233
  %6148 = vmatprep.subr.bf16.mxu0 0
  %6149 = vmatpush1.bf16.msra.mxu0 %v4234
  %6150 = vmatprep.subr.bf16.mxu0 0
  %6151 = vmatpush1.bf16.msra.mxu0 %v4235
  %6152 = vmatprep.mubr.bf16.mxu0 %v3619
  %6153 = vmatmul.mubr.bf16.gmra.mrb[0].mxu0 %v5818
  %v6154 = vpop.f32.mrb[0].mxu0
  %v6155 = vadd.f32 %v6066, %v6154
  %v6156 = vpop.f32.mrb[0].mxu0
  %v6157 = vpop.f32.mrb[0].mxu0
  %v6158 = vadd.f32 %v6069, %v6157
  %v6159 = vpop.f32.mrb[0].mxu0
  %6160 = vmatprep.mubr.bf16.mxu0 %v3632
  %6161 = vmatmul.mubr.bf16.gmra.mrb[0].mxu0 %v5826
  %v6162 = vpop.f32.mrb[0].mxu0
  %v6163 = vadd.f32 %v6074, %v6162
  %v6164 = vpop.f32.mrb[0].mxu0
  %v6165 = vpop.f32.mrb[0].mxu0
  %v6166 = vadd.f32 %v6077, %v6165
  %v6167 = vpop.f32.mrb[0].mxu0
  %6168 = vmatprep.mubr.bf16.mxu0 %v3645
  %6169 = vmatmul.mubr.bf16.gmra.mrb[0].mxu0 %v5834
  %v6170 = vpop.f32.mrb[0].mxu0
  %v6171 = vadd.f32 %v6082, %v6170
  %v6172 = vpop.f32.mrb[0].mxu0
  %v6173 = vpop.f32.mrb[0].mxu0
  %v6174 = vadd.f32 %v6085, %v6173
  %v6175 = vpop.f32.mrb[0].mxu0
  %6176 = vmatprep.mubr.bf16.mxu0 %v3658
  %6177 = vmatmul.mubr.bf16.gmra.mrb[0].mxu0 %v5842
  %v6178 = vpop.f32.mrb[0].mxu0
  %v6179 = vadd.f32 %v6090, %v6178
  %v6180 = vpop.f32.mrb[0].mxu0
  %v6181 = vpop.f32.mrb[0].mxu0
  %v6182 = vadd.f32 %v6093, %v6181
  %v6183 = vpop.f32.mrb[0].mxu0
  %6184 = vmatprep.mubr.bf16.mxu0 %v3671
  %6185 = vmatmul.mubr.bf16.gmra.mrb[0].mxu0 %v5850
  %v6186 = vpop.f32.mrb[0].mxu0
  %v6187 = vadd.f32 %v6098, %v6186
  %v6188 = vpop.f32.mrb[0].mxu0
  %v6189 = vpop.f32.mrb[0].mxu0
  %v6190 = vadd.f32 %v6101, %v6189
  %v6191 = vpop.f32.mrb[0].mxu0
  %6192 = vmatprep.mubr.bf16.mxu0 %v3684
  %6193 = vmatmul.mubr.bf16.gmra.mrb[0].mxu0 %v5858
  %v6194 = vpop.f32.mrb[0].mxu0
  %v6195 = vadd.f32 %v6106, %v6194
  %v6196 = vpop.f32.mrb[0].mxu0
  %v6197 = vpop.f32.mrb[0].mxu0
  %v6198 = vadd.f32 %v6109, %v6197
  %v6199 = vpop.f32.mrb[0].mxu0
  %6200 = vmatprep.mubr.bf16.mxu0 %v3697
  %6201 = vmatmul.mubr.bf16.gmra.mrb[0].mxu0 %v5866
  %v6202 = vpop.f32.mrb[0].mxu0
  %v6203 = vadd.f32 %v6114, %v6202
  %v6204 = vpop.f32.mrb[0].mxu0
  %v6205 = vpop.f32.mrb[0].mxu0
  %v6206 = vadd.f32 %v6117, %v6205
  %v6207 = vpop.f32.mrb[0].mxu0
  %6208 = vdwg.mxu0
  %6209 = vmatprep.subr.bf16.mxu0 0
  %6210 = vmatpush1.bf16.msra.mxu0 %v4236
  %6211 = vmatprep.subr.bf16.mxu0 0
  %6212 = vmatpush1.bf16.msra.mxu0 %v4237
  %6213 = vmatprep.subr.bf16.mxu0 0
  %6214 = vmatpush1.bf16.msra.mxu0 %v4238
  %6215 = vmatprep.subr.bf16.mxu0 0
  %6216 = vmatpush1.bf16.msra.mxu0 %v4239
  %6217 = vmatprep.subr.bf16.mxu0 0
  %6218 = vmatpush1.bf16.msra.mxu0 %v4240
  %6219 = vmatprep.subr.bf16.mxu0 0
  %6220 = vmatpush1.bf16.msra.mxu0 %v4241
  %6221 = vmatprep.subr.bf16.mxu0 0
  %6222 = vmatpush1.bf16.msra.mxu0 %v4242
  %6223 = vmatprep.subr.bf16.mxu0 0
  %6224 = vmatpush1.bf16.msra.mxu0 %v4243
  %6225 = vmatprep.subr.bf16.mxu0 0
  %6226 = vmatpush1.bf16.msra.mxu0 %v4244
  %6227 = vmatprep.subr.bf16.mxu0 0
  %6228 = vmatpush1.bf16.msra.mxu0 %v4245
  %6229 = vmatprep.subr.bf16.mxu0 0
  %6230 = vmatpush1.bf16.msra.mxu0 %v4246
  %6231 = vmatprep.subr.bf16.mxu0 0
  %6232 = vmatpush1.bf16.msra.mxu0 %v4247
  %6233 = vmatprep.subr.bf16.mxu0 0
  %6234 = vmatpush1.bf16.msra.mxu0 %v4248
  %6235 = vmatprep.subr.bf16.mxu0 0
  %6236 = vmatpush1.bf16.msra.mxu0 %v4249
  %6237 = vmatprep.subr.bf16.mxu0 0
  %6238 = vmatpush1.bf16.msra.mxu0 %v4250
  %6239 = vmatprep.subr.bf16.mxu0 0
  %6240 = vmatpush1.bf16.msra.mxu0 %v4251
  %6241 = vmatprep.mubr.bf16.mxu0 %v5820
  %6242 = vmatmul.mubr.bf16.gmra.mrb[0].mxu0 %v5819
  %v6243 = vpop.f32.mrb[0].mxu0
  %v6244 = vadd.f32 %v6155, %v6243
  %v6245 = vpop.f32.mrb[0].mxu0
  %v6246 = vpop.f32.mrb[0].mxu0
  %v6247 = vadd.f32 %v6158, %v6246
  %v6248 = vpop.f32.mrb[0].mxu0
  %6249 = vmatprep.mubr.bf16.mxu0 %v5828
  %6250 = vmatmul.mubr.bf16.gmra.mrb[0].mxu0 %v5827
  %v6251 = vpop.f32.mrb[0].mxu0
  %v6252 = vadd.f32 %v6163, %v6251
  %v6253 = vpop.f32.mrb[0].mxu0
  %v6254 = vpop.f32.mrb[0].mxu0
  %v6255 = vadd.f32 %v6166, %v6254
  %v6256 = vpop.f32.mrb[0].mxu0
  %6257 = vmatprep.mubr.bf16.mxu0 %v5836
  %6258 = vmatmul.mubr.bf16.gmra.mrb[0].mxu0 %v5835
  %v6259 = vpop.f32.mrb[0].mxu0
  %v6260 = vadd.f32 %v6171, %v6259
  %v6261 = vpop.f32.mrb[0].mxu0
  %v6262 = vpop.f32.mrb[0].mxu0
  %v6263 = vadd.f32 %v6174, %v6262
  %v6264 = vpop.f32.mrb[0].mxu0
  %6265 = vmatprep.mubr.bf16.mxu0 %v5844
  %6266 = vmatmul.mubr.bf16.gmra.mrb[0].mxu0 %v5843
  %v6267 = vpop.f32.mrb[0].mxu0
  %v6268 = vadd.f32 %v6179, %v6267
  %v6269 = vpop.f32.mrb[0].mxu0
  %v6270 = vpop.f32.mrb[0].mxu0
  %v6271 = vadd.f32 %v6182, %v6270
  %v6272 = vpop.f32.mrb[0].mxu0
  %6273 = vmatprep.mubr.bf16.mxu0 %v5852
  %6274 = vmatmul.mubr.bf16.gmra.mrb[0].mxu0 %v5851
  %v6275 = vpop.f32.mrb[0].mxu0
  %v6276 = vadd.f32 %v6187, %v6275
  %v6277 = vpop.f32.mrb[0].mxu0
  %v6278 = vpop.f32.mrb[0].mxu0
  %v6279 = vadd.f32 %v6190, %v6278
  %v6280 = vpop.f32.mrb[0].mxu0
  %6281 = vmatprep.mubr.bf16.mxu0 %v5860
  %6282 = vmatmul.mubr.bf16.gmra.mrb[0].mxu0 %v5859
  %v6283 = vpop.f32.mrb[0].mxu0
  %v6284 = vadd.f32 %v6195, %v6283
  %v6285 = vpop.f32.mrb[0].mxu0
  %v6286 = vpop.f32.mrb[0].mxu0
  %v6287 = vadd.f32 %v6198, %v6286
  %v6288 = vpop.f32.mrb[0].mxu0
  %6289 = vmatprep.mubr.bf16.mxu0 %v5868
  %6290 = vmatmul.mubr.bf16.gmra.mrb[0].mxu0 %v5867
  %v6291 = vpop.f32.mrb[0].mxu0
  %v6292 = vadd.f32 %v6203, %v6291
  %v6293 = vpop.f32.mrb[0].mxu0
  %v6294 = vpop.f32.mrb[0].mxu0
  %v6295 = vadd.f32 %v6206, %v6294
  %v6296 = vpop.f32.mrb[0].mxu0
  %6297 = vdwg.mxu0
  %6298 = vmatprep.subr.bf16.mxu0 0
  %6299 = vmatpush1.bf16.msra.mxu0 %v4252
  %6300 = vmatprep.subr.bf16.mxu0 0
  %6301 = vmatpush1.bf16.msra.mxu0 %v4253
  %6302 = vmatprep.subr.bf16.mxu0 0
  %6303 = vmatpush1.bf16.msra.mxu0 %v4254
  %6304 = vmatprep.subr.bf16.mxu0 0
  %6305 = vmatpush1.bf16.msra.mxu0 %v4255
  %6306 = vmatprep.subr.bf16.mxu0 0
  %6307 = vmatpush1.bf16.msra.mxu0 %v4256
  %6308 = vmatprep.subr.bf16.mxu0 0
  %6309 = vmatpush1.bf16.msra.mxu0 %v4257
  %6310 = vmatprep.subr.bf16.mxu0 0
  %6311 = vmatpush1.bf16.msra.mxu0 %v4258
  %6312 = vmatprep.subr.bf16.mxu0 0
  %6313 = vmatpush1.bf16.msra.mxu0 %v4259
  %6314 = vmatprep.subr.bf16.mxu0 0
  %6315 = vmatpush1.bf16.msra.mxu0 %v4260
  %6316 = vmatprep.subr.bf16.mxu0 0
  %6317 = vmatpush1.bf16.msra.mxu0 %v4261
  %6318 = vmatprep.subr.bf16.mxu0 0
  %6319 = vmatpush1.bf16.msra.mxu0 %v4262
  %6320 = vmatprep.subr.bf16.mxu0 0
  %6321 = vmatpush1.bf16.msra.mxu0 %v4263
  %6322 = vmatprep.subr.bf16.mxu0 0
  %6323 = vmatpush1.bf16.msra.mxu0 %v4264
  %6324 = vmatprep.subr.bf16.mxu0 0
  %6325 = vmatpush1.bf16.msra.mxu0 %v4265
  %6326 = vmatprep.subr.bf16.mxu0 0
  %6327 = vmatpush1.bf16.msra.mxu0 %v4266
  %6328 = vmatprep.subr.bf16.mxu0 0
  %6329 = vmatpush1.bf16.msra.mxu0 %v4267
  %6330 = vmatprep.mubr.bf16.mxu0 %v5821
  %6331 = vmatmul.mubr.bf16.gmra.mrb[0].mxu0 %v3622
  %v6332 = vpop.f32.mrb[0].mxu0
  %v6333 = vadd.f32 %v6244, %v6332
  %v6334 = vpop.f32.mrb[0].mxu0
  %v6335 = vpop.f32.mrb[0].mxu0
  %v6336 = vadd.f32 %v6247, %v6335
  %v6337 = vpop.f32.mrb[0].mxu0
  %6338 = vmatprep.mubr.bf16.mxu0 %v5829
  %6339 = vmatmul.mubr.bf16.gmra.mrb[0].mxu0 %v3635
  %v6340 = vpop.f32.mrb[0].mxu0
  %v6341 = vadd.f32 %v6252, %v6340
  %v6342 = vpop.f32.mrb[0].mxu0
  %v6343 = vpop.f32.mrb[0].mxu0
  %v6344 = vadd.f32 %v6255, %v6343
  %v6345 = vpop.f32.mrb[0].mxu0
  %6346 = vmatprep.mubr.bf16.mxu0 %v5837
  %6347 = vmatmul.mubr.bf16.gmra.mrb[0].mxu0 %v3648
  %v6348 = vpop.f32.mrb[0].mxu0
  %v6349 = vadd.f32 %v6260, %v6348
  %v6350 = vpop.f32.mrb[0].mxu0
  %v6351 = vpop.f32.mrb[0].mxu0
  %v6352 = vadd.f32 %v6263, %v6351
  %v6353 = vpop.f32.mrb[0].mxu0
  %6354 = vmatprep.mubr.bf16.mxu0 %v5845
  %6355 = vmatmul.mubr.bf16.gmra.mrb[0].mxu0 %v3661
  %v6356 = vpop.f32.mrb[0].mxu0
  %v6357 = vadd.f32 %v6268, %v6356
  %v6358 = vpop.f32.mrb[0].mxu0
  %v6359 = vpop.f32.mrb[0].mxu0
  %v6360 = vadd.f32 %v6271, %v6359
  %v6361 = vpop.f32.mrb[0].mxu0
  %6362 = vmatprep.mubr.bf16.mxu0 %v5853
  %6363 = vmatmul.mubr.bf16.gmra.mrb[0].mxu0 %v3674
  %v6364 = vpop.f32.mrb[0].mxu0
  %v6365 = vadd.f32 %v6276, %v6364
  %v6366 = vpop.f32.mrb[0].mxu0
  %v6367 = vpop.f32.mrb[0].mxu0
  %v6368 = vadd.f32 %v6279, %v6367
  %v6369 = vpop.f32.mrb[0].mxu0
  %6370 = vmatprep.mubr.bf16.mxu0 %v5861
  %6371 = vmatmul.mubr.bf16.gmra.mrb[0].mxu0 %v3687
  %v6372 = vpop.f32.mrb[0].mxu0
  %v6373 = vadd.f32 %v6284, %v6372
  %v6374 = vpop.f32.mrb[0].mxu0
  %v6375 = vpop.f32.mrb[0].mxu0
  %v6376 = vadd.f32 %v6287, %v6375
  %v6377 = vpop.f32.mrb[0].mxu0
  %6378 = vmatprep.mubr.bf16.mxu0 %v5869
  %6379 = vmatmul.mubr.bf16.gmra.mrb[0].mxu0 %v3700
  %v6380 = vpop.f32.mrb[0].mxu0
  %v6381 = vadd.f32 %v6292, %v6380
  %v6382 = vpop.f32.mrb[0].mxu0
  %v6383 = vpop.f32.mrb[0].mxu0
  %v6384 = vadd.f32 %v6295, %v6383
  %v6385 = vpop.f32.mrb[0].mxu0
  %6386 = vdwg.mxu0
  %6387 = vmatprep.subr.bf16.mxu0 0
  %6388 = vmatpush1.bf16.msra.mxu0 %v4268
  %6389 = vmatprep.subr.bf16.mxu0 0
  %6390 = vmatpush1.bf16.msra.mxu0 %v4269
  %6391 = vmatprep.subr.bf16.mxu0 0
  %6392 = vmatpush1.bf16.msra.mxu0 %v4270
  %6393 = vmatprep.subr.bf16.mxu0 0
  %6394 = vmatpush1.bf16.msra.mxu0 %v4271
  %6395 = vmatprep.subr.bf16.mxu0 0
  %6396 = vmatpush1.bf16.msra.mxu0 %v4272
  %6397 = vmatprep.subr.bf16.mxu0 0
  %6398 = vmatpush1.bf16.msra.mxu0 %v4273
  %6399 = vmatprep.subr.bf16.mxu0 0
  %6400 = vmatpush1.bf16.msra.mxu0 %v4274
  %6401 = vmatprep.subr.bf16.mxu0 0
  %6402 = vmatpush1.bf16.msra.mxu0 %v4275
  %6403 = vmatprep.subr.bf16.mxu0 0
  %6404 = vmatpush1.bf16.msra.mxu0 %v4276
  %6405 = vmatprep.subr.bf16.mxu0 0
  %6406 = vmatpush1.bf16.msra.mxu0 %v4277
  %6407 = vmatprep.subr.bf16.mxu0 0
  %6408 = vmatpush1.bf16.msra.mxu0 %v4278
  %6409 = vmatprep.subr.bf16.mxu0 0
  %6410 = vmatpush1.bf16.msra.mxu0 %v4279
  %6411 = vmatprep.subr.bf16.mxu0 0
  %6412 = vmatpush1.bf16.msra.mxu0 %v4280
  %6413 = vmatprep.subr.bf16.mxu0 0
  %6414 = vmatpush1.bf16.msra.mxu0 %v4281
  %6415 = vmatprep.subr.bf16.mxu0 0
  %6416 = vmatpush1.bf16.msra.mxu0 %v4282
  %6417 = vmatprep.subr.bf16.mxu0 0
  %6418 = vmatpush1.bf16.msra.mxu0 %v4283
  %6419 = vmatprep.mubr.bf16.mxu0 %v5822
  %6420 = vmatmul.mubr.bf16.gmra.mrb[0].mxu0 %v3624
  %v6421 = vpop.f32.mrb[0].mxu0
  %v6422 = vadd.f32 %v6333, %v6421
  %v6423 = vpop.f32.mrb[0].mxu0
  %v6424 = vpop.f32.mrb[0].mxu0
  %v6425 = vadd.f32 %v6336, %v6424
  %v6426 = vpop.f32.mrb[0].mxu0
  %6427 = vmatprep.mubr.bf16.mxu0 %v5830
  %6428 = vmatmul.mubr.bf16.gmra.mrb[0].mxu0 %v3637
  %v6429 = vpop.f32.mrb[0].mxu0
  %v6430 = vadd.f32 %v6341, %v6429
  %v6431 = vpop.f32.mrb[0].mxu0
  %v6432 = vpop.f32.mrb[0].mxu0
  %v6433 = vadd.f32 %v6344, %v6432
  %v6434 = vpop.f32.mrb[0].mxu0
  %6435 = vmatprep.mubr.bf16.mxu0 %v5838
  %6436 = vmatmul.mubr.bf16.gmra.mrb[0].mxu0 %v3650
  %v6437 = vpop.f32.mrb[0].mxu0
  %v6438 = vadd.f32 %v6349, %v6437
  %v6439 = vpop.f32.mrb[0].mxu0
  %v6440 = vpop.f32.mrb[0].mxu0
  %v6441 = vadd.f32 %v6352, %v6440
  %v6442 = vpop.f32.mrb[0].mxu0
  %6443 = vmatprep.mubr.bf16.mxu0 %v5846
  %6444 = vmatmul.mubr.bf16.gmra.mrb[0].mxu0 %v3663
  %v6445 = vpop.f32.mrb[0].mxu0
  %v6446 = vadd.f32 %v6357, %v6445
  %v6447 = vpop.f32.mrb[0].mxu0
  %v6448 = vpop.f32.mrb[0].mxu0
  %v6449 = vadd.f32 %v6360, %v6448
  %v6450 = vpop.f32.mrb[0].mxu0
  %6451 = vmatprep.mubr.bf16.mxu0 %v5854
  %6452 = vmatmul.mubr.bf16.gmra.mrb[0].mxu0 %v3676
  %v6453 = vpop.f32.mrb[0].mxu0
  %v6454 = vadd.f32 %v6365, %v6453
  %v6455 = vpop.f32.mrb[0].mxu0
  %v6456 = vpop.f32.mrb[0].mxu0
  %v6457 = vadd.f32 %v6368, %v6456
  %v6458 = vpop.f32.mrb[0].mxu0
  %6459 = vmatprep.mubr.bf16.mxu0 %v5862
  %6460 = vmatmul.mubr.bf16.gmra.mrb[0].mxu0 %v3689
  %v6461 = vpop.f32.mrb[0].mxu0
  %v6462 = vadd.f32 %v6373, %v6461
  %v6463 = vpop.f32.mrb[0].mxu0
  %v6464 = vpop.f32.mrb[0].mxu0
  %v6465 = vadd.f32 %v6376, %v6464
  %v6466 = vpop.f32.mrb[0].mxu0
  %6467 = vmatprep.mubr.bf16.mxu0 %v5870
  %6468 = vmatmul.mubr.bf16.gmra.mrb[0].mxu0 %v3702
  %v6469 = vpop.f32.mrb[0].mxu0
  %v6470 = vadd.f32 %v6381, %v6469
  %v6471 = vpop.f32.mrb[0].mxu0
  %v6472 = vpop.f32.mrb[0].mxu0
  %v6473 = vadd.f32 %v6384, %v6472
  %v6474 = vpop.f32.mrb[0].mxu0
  %6475 = vdwg.mxu0
  %6476 = vmatprep.subr.bf16.mxu0 0
  %6477 = vmatpush1.bf16.msra.mxu0 %v4284
  %6478 = vmatprep.subr.bf16.mxu0 0
  %6479 = vmatpush1.bf16.msra.mxu0 %v4285
  %6480 = vmatprep.subr.bf16.mxu0 0
  %6481 = vmatpush1.bf16.msra.mxu0 %v4286
  %6482 = vmatprep.subr.bf16.mxu0 0
  %6483 = vmatpush1.bf16.msra.mxu0 %v4287
  %6484 = vmatprep.subr.bf16.mxu0 0
  %6485 = vmatpush1.bf16.msra.mxu0 0
  %6486 = vmatprep.subr.bf16.mxu0 0
  %6487 = vmatpush1.bf16.msra.mxu0 0
  %6488 = vmatprep.subr.bf16.mxu0 0
  %6489 = vmatpush1.bf16.msra.mxu0 0
  %6490 = vmatprep.subr.bf16.mxu0 0
  %6491 = vmatpush1.bf16.msra.mxu0 0
  %6492 = vmatprep.subr.bf16.mxu0 0
  %6493 = vmatpush1.bf16.msra.mxu0 0
  %6494 = vmatprep.subr.bf16.mxu0 0
  %6495 = vmatpush1.bf16.msra.mxu0 0
  %6496 = vmatprep.subr.bf16.mxu0 0
  %6497 = vmatpush1.bf16.msra.mxu0 0
  %6498 = vmatprep.subr.bf16.mxu0 0
  %6499 = vmatpush1.bf16.msra.mxu0 0
  %6500 = vmatprep.subr.bf16.mxu0 0
  %6501 = vmatpush1.bf16.msra.mxu0 0
  %6502 = vmatprep.subr.bf16.mxu0 0
  %6503 = vmatpush1.bf16.msra.mxu0 0
  %6504 = vmatprep.subr.bf16.mxu0 0
  %6505 = vmatpush1.bf16.msra.mxu0 0
  %6506 = vmatprep.subr.bf16.mxu0 0
  %6507 = vmatpush1.bf16.msra.mxu0 0
  %6508 = vmatprep.mubr.bf16.mxu0 0
  %6509 = vmatmul.mubr.bf16.gmra.mrb[0].mxu0 %v5922
  %v6510 = vpop.f32.mrb[0].mxu0
  %v6511 = vadd.f32 %v6422, %v6510
  %v6512 = vpop.f32.mrb[0].mxu0
  %v6513 = vpop.f32.mrb[0].mxu0
  %v6514 = vadd.f32 %v6425, %v6513
  %v6515 = vpop.f32.mrb[0].mxu0
  %6516 = vmatprep.mubr.bf16.mxu0 0
  %6517 = vmatmul.mubr.bf16.gmra.mrb[0].mxu0 %v5925
  %v6518 = vpop.f32.mrb[0].mxu0
  %v6519 = vadd.f32 %v6430, %v6518
  %v6520 = vpop.f32.mrb[0].mxu0
  %v6521 = vpop.f32.mrb[0].mxu0
  %v6522 = vadd.f32 %v6433, %v6521
  %v6523 = vpop.f32.mrb[0].mxu0
  %6524 = vmatprep.mubr.bf16.mxu0 0
  %6525 = vmatmul.mubr.bf16.gmra.mrb[0].mxu0 %v5928
  %v6526 = vpop.f32.mrb[0].mxu0
  %v6527 = vadd.f32 %v6438, %v6526
  %v6528 = vpop.f32.mrb[0].mxu0
  %v6529 = vpop.f32.mrb[0].mxu0
  %v6530 = vadd.f32 %v6441, %v6529
  %v6531 = vpop.f32.mrb[0].mxu0
  %6532 = vmatprep.mubr.bf16.mxu0 0
  %6533 = vmatmul.mubr.bf16.gmra.mrb[0].mxu0 %v5931
  %v6534 = vpop.f32.mrb[0].mxu0
  %v6535 = vadd.f32 %v6446, %v6534
  %v6536 = vpop.f32.mrb[0].mxu0
  %v6537 = vpop.f32.mrb[0].mxu0
  %v6538 = vadd.f32 %v6449, %v6537
  %v6539 = vpop.f32.mrb[0].mxu0
  %6540 = vmatprep.mubr.bf16.mxu0 0
  %6541 = vmatmul.mubr.bf16.gmra.mrb[0].mxu0 %v5934
  %v6542 = vpop.f32.mrb[0].mxu0
  %v6543 = vadd.f32 %v6454, %v6542
  %v6544 = vpop.f32.mrb[0].mxu0
  %v6545 = vpop.f32.mrb[0].mxu0
  %v6546 = vadd.f32 %v6457, %v6545
  %v6547 = vpop.f32.mrb[0].mxu0
  %6548 = vmatprep.mubr.bf16.mxu0 0
  %6549 = vmatmul.mubr.bf16.gmra.mrb[0].mxu0 %v5937
  %v6550 = vpop.f32.mrb[0].mxu0
  %v6551 = vadd.f32 %v6462, %v6550
  %v6552 = vpop.f32.mrb[0].mxu0
  %v6553 = vpop.f32.mrb[0].mxu0
  %v6554 = vadd.f32 %v6465, %v6553
  %v6555 = vpop.f32.mrb[0].mxu0
  %6556 = vmatprep.mubr.bf16.mxu0 0
  %6557 = vmatmul.mubr.bf16.gmra.mrb[0].mxu0 %v5940
  %v6558 = vpop.f32.mrb[0].mxu0
  %v6559 = vadd.f32 %v6470, %v6558
  %v6560 = vpop.f32.mrb[0].mxu0
  %v6561 = vpop.f32.mrb[0].mxu0
  %v6562 = vadd.f32 %v6473, %v6561
  %v6563 = vpop.f32.mrb[0].mxu0
  %6564 = vdwg.mxu0
  %v6565 = vmax.f32 %v6511, 0.0
  %v6566 = vmax.f32 %v6514, 0.0
  %v6567 = vmax.f32 %v6519, 0.0
  %v6568 = vmax.f32 %v6522, 0.0
  %v6569 = vmax.f32 %v6527, 0.0
  %v6570 = vmax.f32 %v6530, 0.0
  %v6571 = vmax.f32 %v6535, 0.0
  %v6572 = vmax.f32 %v6538, 0.0
  %v6573 = vmax.f32 %v6543, 0.0
  %v6574 = vmax.f32 %v6546, 0.0
  %v6575 = vmax.f32 %v6551, 0.0
  %v6576 = vmax.f32 %v6554, 0.0
  %v6577 = vmax.f32 %v6559, 0.0
  %v6578 = vmax.f32 %v6562, 0.0
  %v6579 = vpack.c.bf16 %v6565, %v6565
  %v6580 = vpack.c.bf16 %v6566, %v6566
  %v6581 = vpack.c.bf16 %v6567, %v6567
  %v6582 = vpack.c.bf16 %v6568, %v6568
  %v6583 = vpack.c.bf16 %v6569, %v6569
  %v6584 = vpack.c.bf16 %v6570, %v6570
  %v6585 = vpack.c.bf16 %v6571, %v6571
  %v6586 = vpack.c.bf16 %v6572, %v6572
  %v6587 = vpack.c.bf16 %v6573, %v6573
  %v6588 = vpack.c.bf16 %v6574, %v6574
  %v6589 = vpack.c.bf16 %v6575, %v6575
  %v6590 = vpack.c.bf16 %v6576, %v6576
  %v6591 = vpack.c.bf16 %v6577, %v6577
  %v6592 = vpack.c.bf16 %v6578, %v6578
  %v6594 = vshrl.u32 %v5046, 16
  %v6596 = vrot.slane %v6594, 7
  %v6597 = vshll.u32 %v5046, 16
  %v6599 = vor.u32 %v6596, %v6597
  %v6601 = vshrl.u32 %v5053, 16
  %v6603 = vrot.slane %v6601, 7
  %v6604 = vshll.u32 %v5053, 16
  %v6606 = vor.u32 %v6603, %v6604
  %vm6609 = vcmask 1040384
  %vm6610 = vsmask.f32 256
  %vm6611 = vmand %vm6609, %vm6610
  %v6612 = vsel %vm6611, 0, %v6599
  %v6613 = vsel %vm6611, 0, %v6606
  %vm6614 = vcmask 1042432
  %vm6615 = vsmask.f32 2304
  %vm6616 = vmand %vm6614, %vm6615
  %v6617 = vsel %vm6616, %v6612, 0
  %v6618 = vsel %vm6616, %v6613, 0
  %v6620 = vshrl.u32 %v5047, 16
  %v6622 = vrot.slane %v6620, 7
  %v6623 = vshll.u32 %v5047, 16
  %v6625 = vor.u32 %v6622, %v6623
  %v6627 = vshrl.u32 %v5054, 16
  %v6629 = vrot.slane %v6627, 7
  %v6630 = vshll.u32 %v5054, 16
  %v6632 = vor.u32 %v6629, %v6630
  %v6635 = vsel %vm6611, 0, %v6625
  %v6636 = vsel %vm6611, 0, %v6632
  %v6637 = vsel %vm6616, %v6635, 0
  %v6638 = vsel %vm6616, %v6636, 0
  %v6640 = vshrl.u32 %v5048, 16
  %v6642 = vrot.slane %v6640, 7
  %v6643 = vshll.u32 %v5048, 16
  %v6645 = vor.u32 %v6642, %v6643
  %v6647 = vshrl.u32 %v5055, 16
  %v6649 = vrot.slane %v6647, 7
  %v6650 = vshll.u32 %v5055, 16
  %v6652 = vor.u32 %v6649, %v6650
  %v6655 = vsel %vm6611, 0, %v6645
  %v6656 = vsel %vm6611, 0, %v6652
  %v6657 = vsel %vm6616, %v6655, 0
  %v6658 = vsel %vm6616, %v6656, 0
  %v6660 = vshrl.u32 %v5049, 16
  %v6662 = vrot.slane %v6660, 7
  %v6663 = vshll.u32 %v5049, 16
  %v6665 = vor.u32 %v6662, %v6663
  %v6667 = vshrl.u32 %v5056, 16
  %v6669 = vrot.slane %v6667, 7
  %v6670 = vshll.u32 %v5056, 16
  %v6672 = vor.u32 %v6669, %v6670
  %v6675 = vsel %vm6611, 0, %v6665
  %v6676 = vsel %vm6611, 0, %v6672
  %v6677 = vsel %vm6616, %v6675, 0
  %v6678 = vsel %vm6616, %v6676, 0
  %v6680 = vshrl.u32 %v5050, 16
  %v6682 = vrot.slane %v6680, 7
  %v6683 = vshll.u32 %v5050, 16
  %v6685 = vor.u32 %v6682, %v6683
  %v6687 = vshrl.u32 %v5057, 16
  %v6689 = vrot.slane %v6687, 7
  %v6690 = vshll.u32 %v5057, 16
  %v6692 = vor.u32 %v6689, %v6690
  %v6695 = vsel %vm6611, 0, %v6685
  %v6696 = vsel %vm6611, 0, %v6692
  %v6697 = vsel %vm6616, %v6695, 0
  %v6698 = vsel %vm6616, %v6696, 0
  %v6700 = vshrl.u32 %v5051, 16
  %v6702 = vrot.slane %v6700, 7
  %v6703 = vshll.u32 %v5051, 16
  %v6705 = vor.u32 %v6702, %v6703
  %v6707 = vshrl.u32 %v5058, 16
  %v6709 = vrot.slane %v6707, 7
  %v6710 = vshll.u32 %v5058, 16
  %v6712 = vor.u32 %v6709, %v6710
  %v6715 = vsel %vm6611, 0, %v6705
  %v6716 = vsel %vm6611, 0, %v6712
  %v6717 = vsel %vm6616, %v6715, 0
  %v6718 = vsel %vm6616, %v6716, 0
  %v6720 = vshrl.u32 %v5052, 16
  %v6722 = vrot.slane %v6720, 7
  %v6723 = vshll.u32 %v5052, 16
  %v6725 = vor.u32 %v6722, %v6723
  %v6727 = vshrl.u32 %v5059, 16
  %v6729 = vrot.slane %v6727, 7
  %v6730 = vshll.u32 %v5059, 16
  %v6732 = vor.u32 %v6729, %v6730
  %v6735 = vsel %vm6611, 0, %v6725
  %v6736 = vsel %vm6611, 0, %v6732
  %v6737 = vsel %vm6616, %v6735, 0
  %v6738 = vsel %vm6616, %v6736, 0
  %v6740 = vshrl.u32 %v6579, 16
  %v6742 = vrot.slane %v6740, 7
  %v6743 = vshll.u32 %v6579, 16
  %v6745 = vor.u32 %v6742, %v6743
  %v6747 = vshrl.u32 %v6586, 16
  %v6749 = vrot.slane %v6747, 7
  %v6750 = vshll.u32 %v6586, 16
  %v6752 = vor.u32 %v6749, %v6750
  %v6755 = vsel %vm6611, 0, %v6745
  %v6756 = vsel %vm6611, 0, %v6752
  %vm6757 = vcmask 1041408
  %v6760 = vsel %vm6757, %v6755, 0
  %v6762 = vsel %vm6757, %v6756, 0
  %v6764 = vshrl.u32 %v6580, 16
  %v6766 = vrot.slane %v6764, 7
  %v6767 = vshll.u32 %v6580, 16
  %v6769 = vor.u32 %v6766, %v6767
  %v6771 = vshrl.u32 %v6587, 16
  %v6773 = vrot.slane %v6771, 7
  %v6774 = vshll.u32 %v6587, 16
  %v6776 = vor.u32 %v6773, %v6774
  %v6779 = vsel %vm6611, 0, %v6769
  %v6780 = vsel %vm6611, 0, %v6776
  %v6782 = vsel %vm6757, %v6779, 0
  %v6784 = vsel %vm6757, %v6780, 0
  %v6786 = vshrl.u32 %v6581, 16
  %v6788 = vrot.slane %v6786, 7
  %v6789 = vshll.u32 %v6581, 16
  %v6791 = vor.u32 %v6788, %v6789
  %v6793 = vshrl.u32 %v6588, 16
  %v6795 = vrot.slane %v6793, 7
  %v6796 = vshll.u32 %v6588, 16
  %v6798 = vor.u32 %v6795, %v6796
  %v6801 = vsel %vm6611, 0, %v6791
  %v6802 = vsel %vm6611, 0, %v6798
  %v6804 = vsel %vm6757, %v6801, 0
  %v6806 = vsel %vm6757, %v6802, 0
  %v6808 = vshrl.u32 %v6582, 16
  %v6810 = vrot.slane %v6808, 7
  %v6811 = vshll.u32 %v6582, 16
  %v6813 = vor.u32 %v6810, %v6811
  %v6815 = vshrl.u32 %v6589, 16
  %v6817 = vrot.slane %v6815, 7
  %v6818 = vshll.u32 %v6589, 16
  %v6820 = vor.u32 %v6817, %v6818
  %v6823 = vsel %vm6611, 0, %v6813
  %v6824 = vsel %vm6611, 0, %v6820
  %v6826 = vsel %vm6757, %v6823, 0
  %v6828 = vsel %vm6757, %v6824, 0
  %v6830 = vshrl.u32 %v6583, 16
  %v6832 = vrot.slane %v6830, 7
  %v6833 = vshll.u32 %v6583, 16
  %v6835 = vor.u32 %v6832, %v6833
  %v6837 = vshrl.u32 %v6590, 16
  %v6839 = vrot.slane %v6837, 7
  %v6840 = vshll.u32 %v6590, 16
  %v6842 = vor.u32 %v6839, %v6840
  %v6845 = vsel %vm6611, 0, %v6835
  %v6846 = vsel %vm6611, 0, %v6842
  %v6848 = vsel %vm6757, %v6845, 0
  %v6850 = vsel %vm6757, %v6846, 0
  %v6852 = vshrl.u32 %v6584, 16
  %v6854 = vrot.slane %v6852, 7
  %v6855 = vshll.u32 %v6584, 16
  %v6857 = vor.u32 %v6854, %v6855
  %v6859 = vshrl.u32 %v6591, 16
  %v6861 = vrot.slane %v6859, 7
  %v6862 = vshll.u32 %v6591, 16
  %v6864 = vor.u32 %v6861, %v6862
  %v6867 = vsel %vm6611, 0, %v6857
  %v6868 = vsel %vm6611, 0, %v6864
  %v6870 = vsel %vm6757, %v6867, 0
  %v6872 = vsel %vm6757, %v6868, 0
  %v6874 = vshrl.u32 %v6585, 16
  %v6876 = vrot.slane %v6874, 7
  %v6877 = vshll.u32 %v6585, 16
  %v6879 = vor.u32 %v6876, %v6877
  %v6881 = vshrl.u32 %v6592, 16
  %v6883 = vrot.slane %v6881, 7
  %v6884 = vshll.u32 %v6592, 16
  %v6886 = vor.u32 %v6883, %v6884
  %v6889 = vsel %vm6611, 0, %v6879
  %v6890 = vsel %vm6611, 0, %v6886
  %v6892 = vsel %vm6757, %v6889, 0
  %v6894 = vsel %vm6757, %v6890, 0
  %v6897 = vrot.slane %v6617, 4
  %v6898 = vrot.slane %v6618, 4
  %v6901 = vrot.slane %v6697, 4
  %v6902 = vrot.slane %v6698, 4
  %v6904 = vsel %vm856, 0, %v6897
  %v6907 = vsel %vm856, 0, %v6898
  %v6911 = vsel %vm856, %v6657, %v6901
  %v6915 = vsel %vm856, %v6658, %v6902
  %v6918 = vsel %vm856, %v6737, 0
  %v6920 = vsel %vm856, %v6738, 0
  %v6923 = vrot.slane %v6760, 4
  %v6924 = vrot.slane %v6762, 4
  %v6927 = vrot.slane %v6848, 4
  %v6928 = vrot.slane %v6850, 4
  %v6930 = vsel %vm856, 0, %v6923
  %v6933 = vsel %vm856, 0, %v6924
  %v6936 = vsel %vm856, %v6804, %v6927
  %v6939 = vsel %vm856, %v6806, %v6928
  %v6941 = vsel %vm856, %v6892, 0
  %v6942 = vsel %vm856, %v6894, 0
  %v6945 = vrot.slane %v6637, 4
  %v6946 = vrot.slane %v6638, 4
  %v6949 = vrot.slane %v6717, 4
  %v6950 = vrot.slane %v6718, 4
  %v6952 = vsel %vm856, 0, %v6945
  %v6955 = vsel %vm856, 0, %v6946
  %v6959 = vsel %vm856, %v6677, %v6949
  %v6963 = vsel %vm856, %v6678, %v6950
  %v6967 = vrot.slane %v6782, 4
  %v6968 = vrot.slane %v6784, 4
  %v6971 = vrot.slane %v6870, 4
  %v6972 = vrot.slane %v6872, 4
  %v6974 = vsel %vm856, 0, %v6967
  %v6977 = vsel %vm856, 0, %v6968
  %v6980 = vsel %vm856, %v6826, %v6971
  %v6983 = vsel %vm856, %v6828, %v6972
  %v6985 = vshrl.u32 %v6904, 16
  %v6987 = vshll.u32 %v6904, 16
  %v6989 = vrot.slane %v6987, 1
  %v6990 = vor.u32 %v6985, %v6989
  %v6991 = vshll.u32 %v6911, 16
  %v6993 = vrot.slane %v6991, 1
  %v6994 = vsel %vm2438, %v6990, %v6993
  %v6995 = vshrl.u32 %v6911, 16
  %v6997 = vor.u32 %v6995, %v6993
  %v6998 = vshll.u32 %v6918, 16
  %v7000 = vrot.slane %v6998, 1
  %v7001 = vsel %vm2438, %v6997, %v7000
  %v7002 = vshrl.u32 %v6907, 16
  %v7004 = vshll.u32 %v6907, 16
  %v7006 = vrot.slane %v7004, 1
  %v7007 = vor.u32 %v7002, %v7006
  %v7008 = vshll.u32 %v6915, 16
  %v7010 = vrot.slane %v7008, 1
  %v7011 = vsel %vm2438, %v7007, %v7010
  %v7012 = vshrl.u32 %v6915, 16
  %v7014 = vor.u32 %v7012, %v7010
  %v7015 = vshll.u32 %v6920, 16
  %v7017 = vrot.slane %v7015, 1
  %v7018 = vsel %vm2438, %v7014, %v7017
  %v7023 = vshrl.u32 %v6930, 16
  %v7025 = vshll.u32 %v6930, 16
  %v7027 = vrot.slane %v7025, 1
  %v7028 = vor.u32 %v7023, %v7027
  %v7029 = vshll.u32 %v6936, 16
  %v7031 = vrot.slane %v7029, 1
  %v7032 = vsel %vm2438, %v7028, %v7031
  %v7033 = vshrl.u32 %v6936, 16
  %v7035 = vor.u32 %v7033, %v7031
  %v7036 = vshll.u32 %v6941, 16
  %v7038 = vrot.slane %v7036, 1
  %v7039 = vsel %vm2438, %v7035, %v7038
  %v7040 = vshrl.u32 %v6933, 16
  %v7042 = vshll.u32 %v6933, 16
  %v7044 = vrot.slane %v7042, 1
  %v7045 = vor.u32 %v7040, %v7044
  %v7046 = vshll.u32 %v6939, 16
  %v7048 = vrot.slane %v7046, 1
  %v7049 = vsel %vm2438, %v7045, %v7048
  %v7050 = vshrl.u32 %v6939, 16
  %v7052 = vor.u32 %v7050, %v7048
  %v7053 = vshll.u32 %v6942, 16
  %v7055 = vrot.slane %v7053, 1
  %v7056 = vsel %vm2438, %v7052, %v7055
  %vm7067 = vcmask 1046528
  %v7068 = vrot.slane %v6904, 1
  %v7069 = vrot.slane %v6911, 1
  %v7070 = vsel %vm7067, %v7068, %v7069
  %v7071 = vrot.slane %v6918, 1
  %v7072 = vsel %vm7067, %v7069, %v7071
  %v7073 = vrot.slane %v6907, 1
  %v7074 = vrot.slane %v6915, 1
  %v7075 = vsel %vm7067, %v7073, %v7074
  %v7076 = vrot.slane %v6920, 1
  %v7077 = vsel %vm7067, %v7074, %v7076
  %v7082 = vshrl.u32 %v6952, 16
  %v7084 = vshll.u32 %v6952, 16
  %v7086 = vrot.slane %v7084, 1
  %v7087 = vor.u32 %v7082, %v7086
  %v7088 = vshll.u32 %v6959, 16
  %v7090 = vrot.slane %v7088, 1
  %v7091 = vsel %vm2438, %v7087, %v7090
  %v7092 = vshrl.u32 %v6959, 16
  %v7094 = vor.u32 %v7092, %v7090
  %v7095 = vshll.u32 0, 16
  %v7097 = vrot.slane %v7095, 1
  %v7098 = vsel %vm2438, %v7094, %v7097
  %v7099 = vshrl.u32 %v6955, 16
  %v7101 = vshll.u32 %v6955, 16
  %v7103 = vrot.slane %v7101, 1
  %v7104 = vor.u32 %v7099, %v7103
  %v7105 = vshll.u32 %v6963, 16
  %v7107 = vrot.slane %v7105, 1
  %v7108 = vsel %vm2438, %v7104, %v7107
  %v7109 = vshrl.u32 %v6963, 16
  %v7111 = vor.u32 %v7109, %v7107
  %v7112 = vsel %vm2438, %v7111, %v7097
  %v7117 = vshrl.u32 %v6974, 16
  %v7119 = vshll.u32 %v6974, 16
  %v7121 = vrot.slane %v7119, 1
  %v7122 = vor.u32 %v7117, %v7121
  %v7123 = vshll.u32 %v6980, 16
  %v7125 = vrot.slane %v7123, 1
  %v7126 = vsel %vm2438, %v7122, %v7125
  %v7127 = vshrl.u32 %v6980, 16
  %v7129 = vor.u32 %v7127, %v7125
  %v7130 = vsel %vm2438, %v7129, %v7097
  %v7131 = vshrl.u32 %v6977, 16
  %v7133 = vshll.u32 %v6977, 16
  %v7135 = vrot.slane %v7133, 1
  %v7136 = vor.u32 %v7131, %v7135
  %v7137 = vshll.u32 %v6983, 16
  %v7139 = vrot.slane %v7137, 1
  %v7140 = vsel %vm2438, %v7136, %v7139
  %v7141 = vshrl.u32 %v6983, 16
  %v7143 = vor.u32 %v7141, %v7139
  %v7144 = vsel %vm2438, %v7143, %v7097
  %v7154 = vrot.slane %v6952, 1
  %v7155 = vrot.slane %v6959, 1
  %v7156 = vsel %vm7067, %v7154, %v7155
  %v7157 = vrot.slane 0, 1
  %v7158 = vsel %vm7067, %v7155, %v7157
  %v7159 = vrot.slane %v6955, 1
  %v7160 = vrot.slane %v6963, 1
  %v7161 = vsel %vm7067, %v7159, %v7160
  %v7162 = vsel %vm7067, %v7160, %v7157
  %v7167 = vrot.slane %v6904, 4
  %v7168 = vrot.slane %v6911, 4
  %v7169 = vsel %vm2635, %v7167, %v7168
  %v7170 = vrot.slane %v6918, 4
  %v7171 = vsel %vm2635, %v7168, %v7170
  %v7172 = vrot.slane %v6907, 4
  %v7173 = vrot.slane %v6915, 4
  %v7174 = vsel %vm2635, %v7172, %v7173
  %v7175 = vrot.slane %v6920, 4
  %v7176 = vsel %vm2635, %v7173, %v7175
  %v7187 = vrot.slane %v6930, 4
  %v7188 = vrot.slane %v6936, 4
  %v7189 = vsel %vm2635, %v7187, %v7188
  %v7190 = vrot.slane %v6941, 4
  %v7191 = vsel %vm2635, %v7188, %v7190
  %v7192 = vrot.slane %v6933, 4
  %v7193 = vrot.slane %v6939, 4
  %v7194 = vsel %vm2635, %v7192, %v7193
  %v7195 = vrot.slane %v6942, 4
  %v7196 = vsel %vm2635, %v7193, %v7195
  %v7201 = vrot.slane %v6985, 4
  %v7202 = vrot.slane %v6987, 5
  %v7203 = vor.u32 %v7201, %v7202
  %v7204 = vrot.slane %v6995, 4
  %v7205 = vrot.slane %v6991, 5
  %v7206 = vor.u32 %v7204, %v7205
  %v7207 = vsel %vm2732, %v7203, %v7206
  %v7208 = vshrl.u32 %v6918, 16
  %v7210 = vrot.slane %v7208, 4
  %v7211 = vrot.slane %v6998, 5
  %v7212 = vor.u32 %v7210, %v7211
  %v7213 = vsel %vm2732, %v7206, %v7212
  %v7214 = vrot.slane %v7002, 4
  %v7215 = vrot.slane %v7004, 5
  %v7216 = vor.u32 %v7214, %v7215
  %v7217 = vrot.slane %v7012, 4
  %v7218 = vrot.slane %v7008, 5
  %v7219 = vor.u32 %v7217, %v7218
  %v7220 = vsel %vm2732, %v7216, %v7219
  %v7221 = vshrl.u32 %v6920, 16
  %v7223 = vrot.slane %v7221, 4
  %v7224 = vrot.slane %v7015, 5
  %v7225 = vor.u32 %v7223, %v7224
  %v7226 = vsel %vm2732, %v7219, %v7225
  %v7231 = vrot.slane %v7023, 4
  %v7232 = vrot.slane %v7025, 5
  %v7233 = vor.u32 %v7231, %v7232
  %v7234 = vrot.slane %v7033, 4
  %v7235 = vrot.slane %v7029, 5
  %v7236 = vor.u32 %v7234, %v7235
  %v7237 = vsel %vm2732, %v7233, %v7236
  %v7238 = vshrl.u32 %v6941, 16
  %v7240 = vrot.slane %v7238, 4
  %v7241 = vrot.slane %v7036, 5
  %v7242 = vor.u32 %v7240, %v7241
  %v7243 = vsel %vm2732, %v7236, %v7242
  %v7244 = vrot.slane %v7040, 4
  %v7245 = vrot.slane %v7042, 5
  %v7246 = vor.u32 %v7244, %v7245
  %v7247 = vrot.slane %v7050, 4
  %v7248 = vrot.slane %v7046, 5
  %v7249 = vor.u32 %v7247, %v7248
  %v7250 = vsel %vm2732, %v7246, %v7249
  %v7251 = vshrl.u32 %v6942, 16
  %v7253 = vrot.slane %v7251, 4
  %v7254 = vrot.slane %v7053, 5
  %v7255 = vor.u32 %v7253, %v7254
  %v7256 = vsel %vm2732, %v7249, %v7255
  %v7261 = vrot.slane %v6904, 5
  %v7262 = vrot.slane %v6911, 5
  %v7263 = vsel %vm6614, %v7261, %v7262
  %v7264 = vrot.slane %v6918, 5
  %v7265 = vsel %vm6614, %v7262, %v7264
  %v7266 = vrot.slane %v6907, 5
  %v7267 = vrot.slane %v6915, 5
  %v7268 = vsel %vm6614, %v7266, %v7267
  %v7269 = vrot.slane %v6920, 5
  %v7270 = vsel %vm6614, %v7267, %v7269
  %v7275 = vrot.slane %v6952, 4
  %v7276 = vrot.slane %v6959, 4
  %v7277 = vsel %vm2635, %v7275, %v7276
  %v7278 = vrot.slane 0, 4
  %v7279 = vsel %vm2635, %v7276, %v7278
  %v7280 = vrot.slane %v6955, 4
  %v7281 = vrot.slane %v6963, 4
  %v7282 = vsel %vm2635, %v7280, %v7281
  %v7283 = vsel %vm2635, %v7281, %v7278
  %v7288 = vshrl.u32 0, 16
  %v7290 = vor.u32 %v7288, %v7097
  %v7291 = vrot.slane %v7095, 5
  %v7292 = vsel %vm2732, %v7212, %v7291
  %v7293 = vsel %vm2732, %v7225, %v7291
  %v7294 = vsel %vm2732, %v7242, %v7291
  %v7295 = vsel %vm2732, %v7255, %v7291
  %v7297 = vrot.slane 0, 5
  %v7298 = vsel %vm6614, %v7264, %v7297
  %v7299 = vsel %vm6614, %v7269, %v7297
  %v7304 = vrot.slane %v6974, 4
  %v7305 = vrot.slane %v6980, 4
  %v7306 = vsel %vm2635, %v7304, %v7305
  %v7307 = vrot.slane %v7091, 4
  %v7308 = vrot.slane %v7098, 4
  %v7309 = vsel %vm2635, %v7307, %v7308
  %v7310 = vrot.slane %v7126, 4
  %v7311 = vrot.slane %v7130, 4
  %v7312 = vsel %vm2635, %v7310, %v7311
  %v7313 = vrot.slane %v7156, 4
  %v7314 = vrot.slane %v7158, 4
  %v7315 = vsel %vm2635, %v7313, %v7314
  %v7316 = vrot.slane %v7168, 4
  %v7317 = vrot.slane %v7171, 4
  %v7318 = vsel %vm2635, %v7316, %v7317
  %v7319 = vrot.slane %v7188, 4
  %v7320 = vrot.slane %v7191, 4
  %v7321 = vsel %vm2635, %v7319, %v7320
  %v7322 = vrot.slane %v7206, 4
  %v7323 = vrot.slane %v7213, 4
  %v7324 = vsel %vm2635, %v7322, %v7323
  %v7325 = vrot.slane %v7236, 4
  %v7326 = vrot.slane %v7243, 4
  %v7327 = vsel %vm2635, %v7325, %v7326
  %v7328 = vrot.slane %v7262, 4
  %v7329 = vrot.slane %v7265, 4
  %v7330 = vsel %vm2635, %v7328, %v7329
  %v7331 = vsel %vm2635, %v7305, %v7278
  %v7332 = vrot.slane %v7290, 4
  %v7333 = vsel %vm2635, %v7308, %v7332
  %v7334 = vsel %vm2635, %v7311, %v7332
  %v7335 = vrot.slane %v7157, 4
  %v7336 = vsel %vm2635, %v7314, %v7335
  %v7337 = vrot.slane %v7170, 4
  %v7338 = vsel %vm2635, %v7317, %v7337
  %v7339 = vrot.slane %v7190, 4
  %v7340 = vsel %vm2635, %v7320, %v7339
  %v7341 = vrot.slane %v7292, 4
  %v7342 = vsel %vm2635, %v7323, %v7341
  %v7343 = vrot.slane %v7294, 4
  %v7344 = vsel %vm2635, %v7326, %v7343
  %v7345 = vrot.slane %v7298, 4
  %v7346 = vsel %vm2635, %v7329, %v7345
  %v7347 = vrot.slane %v6977, 4
  %v7348 = vrot.slane %v6983, 4
  %v7349 = vsel %vm2635, %v7347, %v7348
  %v7350 = vrot.slane %v7108, 4
  %v7351 = vrot.slane %v7112, 4
  %v7352 = vsel %vm2635, %v7350, %v7351
  %v7353 = vrot.slane %v7140, 4
  %v7354 = vrot.slane %v7144, 4
  %v7355 = vsel %vm2635, %v7353, %v7354
  %v7356 = vrot.slane %v7161, 4
  %v7357 = vrot.slane %v7162, 4
  %v7358 = vsel %vm2635, %v7356, %v7357
  %v7359 = vrot.slane %v7173, 4
  %v7360 = vrot.slane %v7176, 4
  %v7361 = vsel %vm2635, %v7359, %v7360
  %v7362 = vrot.slane %v7193, 4
  %v7363 = vrot.slane %v7196, 4
  %v7364 = vsel %vm2635, %v7362, %v7363
  %v7365 = vrot.slane %v7219, 4
  %v7366 = vrot.slane %v7226, 4
  %v7367 = vsel %vm2635, %v7365, %v7366
  %v7368 = vrot.slane %v7249, 4
  %v7369 = vrot.slane %v7256, 4
  %v7370 = vsel %vm2635, %v7368, %v7369
  %v7371 = vrot.slane %v7267, 4
  %v7372 = vrot.slane %v7270, 4
  %v7373 = vsel %vm2635, %v7371, %v7372
  %v7374 = vsel %vm2635, %v7348, %v7278
  %v7375 = vsel %vm2635, %v7351, %v7332
  %v7376 = vsel %vm2635, %v7354, %v7332
  %v7377 = vsel %vm2635, %v7357, %v7335
  %v7378 = vrot.slane %v7175, 4
  %v7379 = vsel %vm2635, %v7360, %v7378
  %v7380 = vrot.slane %v7195, 4
  %v7381 = vsel %vm2635, %v7363, %v7380
  %v7382 = vrot.slane %v7293, 4
  %v7383 = vsel %vm2635, %v7366, %v7382
  %v7384 = vrot.slane %v7295, 4
  %v7385 = vsel %vm2635, %v7369, %v7384
  %v7386 = vrot.slane %v7299, 4
  %v7387 = vsel %vm2635, %v7372, %v7386
  %v7424 = vld [vmem:[%s6] sm:$0xff]
  %v7425 = vld [vmem:[%s6 + $0x8] sm:$0xff]
  %v7426 = vld [vmem:[%s6 + $0x10] sm:$0xff]
  %v7427 = vld [vmem:[%s6 + $0x18] sm:$0xff]
  %v7428 = vld [vmem:[%s6 + $0x20] sm:$0xff]
  %v7429 = vld [vmem:[%s6 + $0x28] sm:$0xff]
  %v7430 = vld [vmem:[%s6 + $0x30] sm:$0xff]
  %v7431 = vld [vmem:[%s6 + $0x38] sm:$0xff]
  %v7432 = vld [vmem:[%s6 + $0x40] sm:$0xff]
  %v7433 = vld [vmem:[%s6 + $0x48] sm:$0xff]
  %v7434 = vld [vmem:[%s6 + $0x50] sm:$0xff]
  %v7435 = vld [vmem:[%s6 + $0x58] sm:$0xff]
  %v7436 = vld [vmem:[%s6 + $0x60] sm:$0xff]
  %v7437 = vld [vmem:[%s6 + $0x68] sm:$0xff]
  %v7438 = vld [vmem:[%s6 + $0x70] sm:$0xff]
  %v7439 = vld [vmem:[%s6 + $0x78] sm:$0xff]
  %v7440 = vld [vmem:[%s6 + $0x80] sm:$0xff]
  %v7441 = vld [vmem:[%s6 + $0x88] sm:$0xff]
  %v7442 = vld [vmem:[%s6 + $0x90] sm:$0xff]
  %v7443 = vld [vmem:[%s6 + $0x98] sm:$0xff]
  %v7444 = vld [vmem:[%s6 + $0xa0] sm:$0xff]
  %v7445 = vld [vmem:[%s6 + $0xa8] sm:$0xff]
  %v7446 = vld [vmem:[%s6 + $0xb0] sm:$0xff]
  %v7447 = vld [vmem:[%s6 + $0xb8] sm:$0xff]
  %v7448 = vld [vmem:[%s6 + $0xc0] sm:$0xff]
  %v7449 = vld [vmem:[%s6 + $0xc8] sm:$0xff]
  %v7450 = vld [vmem:[%s6 + $0xd0] sm:$0xff]
  %v7451 = vld [vmem:[%s6 + $0xd8] sm:$0xff]
  %v7452 = vld [vmem:[%s6 + $0xe0] sm:$0xff]
  %v7453 = vld [vmem:[%s6 + $0xe8] sm:$0xff]
  %v7454 = vld [vmem:[%s6 + $0xf0] sm:$0xff]
  %v7455 = vld [vmem:[%s6 + $0xf8] sm:$0xff]
  %v7456 = vld [vmem:[%s6 + $0x100] sm:$0xff]
  %v7457 = vld [vmem:[%s6 + $0x108] sm:$0xff]
  %v7458 = vld [vmem:[%s6 + $0x110] sm:$0xff]
  %v7459 = vld [vmem:[%s6 + $0x118] sm:$0xff]
  %v7460 = vld [vmem:[%s6 + $0x120] sm:$0xff]
  %v7461 = vld [vmem:[%s6 + $0x128] sm:$0xff]
  %v7462 = vld [vmem:[%s6 + $0x130] sm:$0xff]
  %v7463 = vld [vmem:[%s6 + $0x138] sm:$0xff]
  %v7464 = vld [vmem:[%s6 + $0x140] sm:$0xff]
  %v7465 = vld [vmem:[%s6 + $0x148] sm:$0xff]
  %v7466 = vld [vmem:[%s6 + $0x150] sm:$0xff]
  %v7467 = vld [vmem:[%s6 + $0x158] sm:$0xff]
  %v7468 = vld [vmem:[%s6 + $0x160] sm:$0xff]
  %v7469 = vld [vmem:[%s6 + $0x168] sm:$0xff]
  %v7470 = vld [vmem:[%s6 + $0x170] sm:$0xff]
  %v7471 = vld [vmem:[%s6 + $0x178] sm:$0xff]
  %v7472 = vld [vmem:[%s6 + $0x180] sm:$0xff]
  %v7473 = vld [vmem:[%s6 + $0x188] sm:$0xff]
  %v7474 = vld [vmem:[%s6 + $0x190] sm:$0xff]
  %v7475 = vld [vmem:[%s6 + $0x198] sm:$0xff]
  %v7476 = vld [vmem:[%s6 + $0x1a0] sm:$0xff]
  %v7477 = vld [vmem:[%s6 + $0x1a8] sm:$0xff]
  %v7478 = vld [vmem:[%s6 + $0x1b0] sm:$0xff]
  %v7479 = vld [vmem:[%s6 + $0x1b8] sm:$0xff]
  %v7480 = vld [vmem:[%s6 + $0x1c0] sm:$0xff]
  %v7481 = vld [vmem:[%s6 + $0x1c8] sm:$0xff]
  %v7482 = vld [vmem:[%s6 + $0x1d0] sm:$0xff]
  %v7483 = vld [vmem:[%s6 + $0x1d8] sm:$0xff]
  %v7484 = vld [vmem:[%s6 + $0x1e0] sm:$0xff]
  %v7485 = vld [vmem:[%s6 + $0x1e8] sm:$0xff]
  %v7486 = vld [vmem:[%s6 + $0x1f0] sm:$0xff]
  %v7487 = vld [vmem:[%s6 + $0x1f8] sm:$0xff]
  %v7488 = vld [vmem:[%s6 + $0x200] sm:$0xff]
  %v7489 = vld [vmem:[%s6 + $0x208] sm:$0xff]
  %v7490 = vld [vmem:[%s6 + $0x210] sm:$0xff]
  %v7491 = vld [vmem:[%s6 + $0x218] sm:$0xff]
  %v7492 = vld [vmem:[%s6 + $0x220] sm:$0xff]
  %v7493 = vld [vmem:[%s6 + $0x228] sm:$0xff]
  %v7494 = vld [vmem:[%s6 + $0x230] sm:$0xff]
  %v7495 = vld [vmem:[%s6 + $0x238] sm:$0xff]
  %v7496 = vld [vmem:[%s6 + $0x240] sm:$0xff]
  %v7497 = vld [vmem:[%s6 + $0x248] sm:$0xff]
  %v7498 = vld [vmem:[%s6 + $0x250] sm:$0xff]
  %v7499 = vld [vmem:[%s6 + $0x258] sm:$0xff]
  %v7500 = vld [vmem:[%s6 + $0x260] sm:$0xff]
  %v7501 = vld [vmem:[%s6 + $0x268] sm:$0xff]
  %v7502 = vld [vmem:[%s6 + $0x270] sm:$0xff]
  %v7503 = vld [vmem:[%s6 + $0x278] sm:$0xff]
  %v7504 = vld [vmem:[%s6 + $0x280] sm:$0xff]
  %v7505 = vld [vmem:[%s6 + $0x288] sm:$0xff]
  %v7506 = vld [vmem:[%s6 + $0x290] sm:$0xff]
  %v7507 = vld [vmem:[%s6 + $0x298] sm:$0xff]
  %v7508 = vld [vmem:[%s6 + $0x2a0] sm:$0xff]
  %v7509 = vld [vmem:[%s6 + $0x2a8] sm:$0xff]
  %v7510 = vld [vmem:[%s6 + $0x2b0] sm:$0xff]
  %v7511 = vld [vmem:[%s6 + $0x2b8] sm:$0xff]
  %v7512 = vld [vmem:[%s6 + $0x2c0] sm:$0xff]
  %v7513 = vld [vmem:[%s6 + $0x2c8] sm:$0xff]
  %v7514 = vld [vmem:[%s6 + $0x2d0] sm:$0xff]
  %v7515 = vld [vmem:[%s6 + $0x2d8] sm:$0xff]
  %v7516 = vld [vmem:[%s6 + $0x2e0] sm:$0xff]
  %v7517 = vld [vmem:[%s6 + $0x2e8] sm:$0xff]
  %v7518 = vld [vmem:[%s6 + $0x2f0] sm:$0xff]
  %v7519 = vld [vmem:[%s6 + $0x2f8] sm:$0xff]
  %v7520 = vld [vmem:[%s6 + $0x300] sm:$0xff]
  %v7521 = vld [vmem:[%s6 + $0x308] sm:$0xff]
  %v7522 = vld [vmem:[%s6 + $0x310] sm:$0xff]
  %v7523 = vld [vmem:[%s6 + $0x318] sm:$0xff]
  %v7524 = vld [vmem:[%s6 + $0x320] sm:$0xff]
  %v7525 = vld [vmem:[%s6 + $0x328] sm:$0xff]
  %v7526 = vld [vmem:[%s6 + $0x330] sm:$0xff]
  %v7527 = vld [vmem:[%s6 + $0x338] sm:$0xff]
  %v7528 = vld [vmem:[%s6 + $0x340] sm:$0xff]
  %v7529 = vld [vmem:[%s6 + $0x348] sm:$0xff]
  %v7530 = vld [vmem:[%s6 + $0x350] sm:$0xff]
  %v7531 = vld [vmem:[%s6 + $0x358] sm:$0xff]
  %v7532 = vld [vmem:[%s6 + $0x360] sm:$0xff]
  %v7533 = vld [vmem:[%s6 + $0x368] sm:$0xff]
  %v7534 = vld [vmem:[%s6 + $0x370] sm:$0xff]
  %v7535 = vld [vmem:[%s6 + $0x378] sm:$0xff]
  %v7536 = vld [vmem:[%s6 + $0x380] sm:$0xff]
  %v7537 = vld [vmem:[%s6 + $0x388] sm:$0xff]
  %v7538 = vld [vmem:[%s6 + $0x390] sm:$0xff]
  %v7539 = vld [vmem:[%s6 + $0x398] sm:$0xff]
  %v7540 = vld [vmem:[%s6 + $0x3a0] sm:$0xff]
  %v7541 = vld [vmem:[%s6 + $0x3a8] sm:$0xff]
  %v7542 = vld [vmem:[%s6 + $0x3b0] sm:$0xff]
  %v7543 = vld [vmem:[%s6 + $0x3b8] sm:$0xff]
  %v7544 = vld [vmem:[%s6 + $0x3c0] sm:$0xff]
  %v7545 = vld [vmem:[%s6 + $0x3c8] sm:$0xff]
  %v7546 = vld [vmem:[%s6 + $0x3d0] sm:$0xff]
  %v7547 = vld [vmem:[%s6 + $0x3d8] sm:$0xff]
  %v7548 = vld [vmem:[%s6 + $0x3e0] sm:$0xff]
  %v7549 = vld [vmem:[%s6 + $0x3e8] sm:$0xff]
  %v7550 = vld [vmem:[%s6 + $0x3f0] sm:$0xff]
  %v7551 = vld [vmem:[%s6 + $0x3f8] sm:$0xff]
  %v7552 = vld [vmem:[%s6 + $0x400] sm:$0xff]
  %v7553 = vld [vmem:[%s6 + $0x408] sm:$0xff]
  %v7554 = vld [vmem:[%s6 + $0x410] sm:$0xff]
  %v7555 = vld [vmem:[%s6 + $0x418] sm:$0xff]
  %v7556 = vld [vmem:[%s6 + $0x420] sm:$0xff]
  %v7557 = vld [vmem:[%s6 + $0x428] sm:$0xff]
  %v7558 = vld [vmem:[%s6 + $0x430] sm:$0xff]
  %v7559 = vld [vmem:[%s6 + $0x438] sm:$0xff]
  %v7560 = vld [vmem:[%s6 + $0x440] sm:$0xff]
  %v7561 = vld [vmem:[%s6 + $0x448] sm:$0xff]
  %v7562 = vld [vmem:[%s6 + $0x450] sm:$0xff]
  %v7563 = vld [vmem:[%s6 + $0x458] sm:$0xff]
  %v7564 = vld [vmem:[%s6 + $0x460] sm:$0xff]
  %v7565 = vld [vmem:[%s6 + $0x468] sm:$0xff]
  %v7566 = vld [vmem:[%s6 + $0x470] sm:$0xff]
  %v7567 = vld [vmem:[%s6 + $0x478] sm:$0xff]
  %v7568 = vld [vmem:[%s6 + $0x480] sm:$0xff]
  %v7569 = vld [vmem:[%s6 + $0x488] sm:$0xff]
  %v7570 = vld [vmem:[%s6 + $0x490] sm:$0xff]
  %v7571 = vld [vmem:[%s6 + $0x498] sm:$0xff]
  %v7572 = vld [vmem:[%s6 + $0x4a0] sm:$0xff]
  %v7573 = vld [vmem:[%s6 + $0x4a8] sm:$0xff]
  %v7574 = vld [vmem:[%s6 + $0x4b0] sm:$0xff]
  %v7575 = vld [vmem:[%s6 + $0x4b8] sm:$0xff]
  %v7576 = vld [vmem:[%s6 + $0x4c0] sm:$0xff]
  %v7577 = vld [vmem:[%s6 + $0x4c8] sm:$0xff]
  %v7578 = vld [vmem:[%s6 + $0x4d0] sm:$0xff]
  %v7579 = vld [vmem:[%s6 + $0x4d8] sm:$0xff]
  %v7580 = vld [vmem:[%s6 + $0x4e0] sm:$0xff]
  %v7581 = vld [vmem:[%s6 + $0x4e8] sm:$0xff]
  %v7582 = vld [vmem:[%s6 + $0x4f0] sm:$0xff]
  %v7583 = vld [vmem:[%s6 + $0x4f8] sm:$0xff]
  %v7584 = vld [vmem:[%s6 + $0x500] sm:$0xff]
  %v7585 = vld [vmem:[%s6 + $0x508] sm:$0xff]
  %v7586 = vld [vmem:[%s6 + $0x510] sm:$0xff]
  %v7587 = vld [vmem:[%s6 + $0x518] sm:$0xff]
  %v7588 = vld [vmem:[%s6 + $0x520] sm:$0xff]
  %v7589 = vld [vmem:[%s6 + $0x528] sm:$0xff]
  %v7590 = vld [vmem:[%s6 + $0x530] sm:$0xff]
  %v7591 = vld [vmem:[%s6 + $0x538] sm:$0xff]
  %v7592 = vld [vmem:[%s6 + $0x540] sm:$0xff]
  %v7593 = vld [vmem:[%s6 + $0x548] sm:$0xff]
  %v7594 = vld [vmem:[%s6 + $0x550] sm:$0xff]
  %v7595 = vld [vmem:[%s6 + $0x558] sm:$0xff]
  %v7596 = vld [vmem:[%s6 + $0x560] sm:$0xff]
  %v7597 = vld [vmem:[%s6 + $0x568] sm:$0xff]
  %v7598 = vld [vmem:[%s6 + $0x570] sm:$0xff]
  %v7599 = vld [vmem:[%s6 + $0x578] sm:$0xff]
  %v7600 = vld [vmem:[%s6 + $0x580] sm:$0xff]
  %v7601 = vld [vmem:[%s6 + $0x588] sm:$0xff]
  %v7602 = vld [vmem:[%s6 + $0x590] sm:$0xff]
  %v7603 = vld [vmem:[%s6 + $0x598] sm:$0xff]
  %v7604 = vld [vmem:[%s6 + $0x5a0] sm:$0xff]
  %v7605 = vld [vmem:[%s6 + $0x5a8] sm:$0xff]
  %v7606 = vld [vmem:[%s6 + $0x5b0] sm:$0xff]
  %v7607 = vld [vmem:[%s6 + $0x5b8] sm:$0xff]
  %v7608 = vld [vmem:[%s6 + $0x5c0] sm:$0xff]
  %v7609 = vld [vmem:[%s6 + $0x5c8] sm:$0xff]
  %v7610 = vld [vmem:[%s6 + $0x5d0] sm:$0xff]
  %v7611 = vld [vmem:[%s6 + $0x5d8] sm:$0xff]
  %v7612 = vld [vmem:[%s6 + $0x5e0] sm:$0xff]
  %v7613 = vld [vmem:[%s6 + $0x5e8] sm:$0xff]
  %v7614 = vld [vmem:[%s6 + $0x5f0] sm:$0xff]
  %v7615 = vld [vmem:[%s6 + $0x5f8] sm:$0xff]
  %v7616 = vld [vmem:[%s6 + $0x600] sm:$0xff]
  %v7617 = vld [vmem:[%s6 + $0x608] sm:$0xff]
  %v7618 = vld [vmem:[%s6 + $0x610] sm:$0xff]
  %v7619 = vld [vmem:[%s6 + $0x618] sm:$0xff]
  %v7620 = vld [vmem:[%s6 + $0x620] sm:$0xff]
  %v7621 = vld [vmem:[%s6 + $0x628] sm:$0xff]
  %v7622 = vld [vmem:[%s6 + $0x630] sm:$0xff]
  %v7623 = vld [vmem:[%s6 + $0x638] sm:$0xff]
  %v7624 = vld [vmem:[%s6 + $0x640] sm:$0xff]
  %v7625 = vld [vmem:[%s6 + $0x648] sm:$0xff]
  %v7626 = vld [vmem:[%s6 + $0x650] sm:$0xff]
  %v7627 = vld [vmem:[%s6 + $0x658] sm:$0xff]
  %v7628 = vld [vmem:[%s6 + $0x660] sm:$0xff]
  %v7629 = vld [vmem:[%s6 + $0x668] sm:$0xff]
  %v7630 = vld [vmem:[%s6 + $0x670] sm:$0xff]
  %v7631 = vld [vmem:[%s6 + $0x678] sm:$0xff]
  %v7632 = vld [vmem:[%s6 + $0x680] sm:$0xff]
  %v7633 = vld [vmem:[%s6 + $0x688] sm:$0xff]
  %v7634 = vld [vmem:[%s6 + $0x690] sm:$0xff]
  %v7635 = vld [vmem:[%s6 + $0x698] sm:$0xff]
  %v7636 = vld [vmem:[%s6 + $0x6a0] sm:$0xff]
  %v7637 = vld [vmem:[%s6 + $0x6a8] sm:$0xff]
  %v7638 = vld [vmem:[%s6 + $0x6b0] sm:$0xff]
  %v7639 = vld [vmem:[%s6 + $0x6b8] sm:$0xff]
  %v7640 = vld [vmem:[%s6 + $0x6c0] sm:$0xff]
  %v7641 = vld [vmem:[%s6 + $0x6c8] sm:$0xff]
  %v7642 = vld [vmem:[%s6 + $0x6d0] sm:$0xff]
  %v7643 = vld [vmem:[%s6 + $0x6d8] sm:$0xff]
  %v7644 = vld [vmem:[%s6 + $0x6e0] sm:$0xff]
  %v7645 = vld [vmem:[%s6 + $0x6e8] sm:$0xff]
  %v7646 = vld [vmem:[%s6 + $0x6f0] sm:$0xff]
  %v7647 = vld [vmem:[%s6 + $0x6f8] sm:$0xff]
  %v7648 = vld [vmem:[%s6 + $0x700] sm:$0xff]
  %v7649 = vld [vmem:[%s6 + $0x708] sm:$0xff]
  %v7650 = vld [vmem:[%s6 + $0x710] sm:$0xff]
  %v7651 = vld [vmem:[%s6 + $0x718] sm:$0xff]
  %v7652 = vld [vmem:[%s6 + $0x720] sm:$0xff]
  %v7653 = vld [vmem:[%s6 + $0x728] sm:$0xff]
  %v7654 = vld [vmem:[%s6 + $0x730] sm:$0xff]
  %v7655 = vld [vmem:[%s6 + $0x738] sm:$0xff]
  %v7656 = vld [vmem:[%s6 + $0x740] sm:$0xff]
  %v7657 = vld [vmem:[%s6 + $0x748] sm:$0xff]
  %v7658 = vld [vmem:[%s6 + $0x750] sm:$0xff]
  %v7659 = vld [vmem:[%s6 + $0x758] sm:$0xff]
  %v7660 = vld [vmem:[%s6 + $0x760] sm:$0xff]
  %v7661 = vld [vmem:[%s6 + $0x768] sm:$0xff]
  %v7662 = vld [vmem:[%s6 + $0x770] sm:$0xff]
  %v7663 = vld [vmem:[%s6 + $0x778] sm:$0xff]
  %v7664 = vld [vmem:[%s6 + $0x780] sm:$0xff]
  %v7665 = vld [vmem:[%s6 + $0x788] sm:$0xff]
  %v7666 = vld [vmem:[%s6 + $0x790] sm:$0xff]
  %v7667 = vld [vmem:[%s6 + $0x798] sm:$0xff]
  %v7668 = vld [vmem:[%s6 + $0x7a0] sm:$0xff]
  %v7669 = vld [vmem:[%s6 + $0x7a8] sm:$0xff]
  %v7670 = vld [vmem:[%s6 + $0x7b0] sm:$0xff]
  %v7671 = vld [vmem:[%s6 + $0x7b8] sm:$0xff]
  %v7672 = vld [vmem:[%s6 + $0x7c0] sm:$0xff]
  %v7673 = vld [vmem:[%s6 + $0x7c8] sm:$0xff]
  %v7674 = vld [vmem:[%s6 + $0x7d0] sm:$0xff]
  %v7675 = vld [vmem:[%s6 + $0x7d8] sm:$0xff]
  %v7676 = vld [vmem:[%s6 + $0x7e0] sm:$0xff]
  %v7677 = vld [vmem:[%s6 + $0x7e8] sm:$0xff]
  %v7678 = vld [vmem:[%s6 + $0x7f0] sm:$0xff]
  %v7679 = vld [vmem:[%s6 + $0x7f8] sm:$0xff]
  %v7680 = vld [vmem:[%s6 + $0x800] sm:$0xff]
  %v7681 = vld [vmem:[%s6 + $0x808] sm:$0xff]
  %v7682 = vld [vmem:[%s6 + $0x810] sm:$0xff]
  %v7683 = vld [vmem:[%s6 + $0x818] sm:$0xff]
  %v7684 = vld [vmem:[%s6 + $0x820] sm:$0xff]
  %v7685 = vld [vmem:[%s6 + $0x828] sm:$0xff]
  %v7686 = vld [vmem:[%s6 + $0x830] sm:$0xff]
  %v7687 = vld [vmem:[%s6 + $0x838] sm:$0xff]
  %v7688 = vld [vmem:[%s6 + $0x840] sm:$0xff]
  %v7689 = vld [vmem:[%s6 + $0x848] sm:$0xff]
  %v7690 = vld [vmem:[%s6 + $0x850] sm:$0xff]
  %v7691 = vld [vmem:[%s6 + $0x858] sm:$0xff]
  %v7692 = vld [vmem:[%s6 + $0x860] sm:$0xff]
  %v7693 = vld [vmem:[%s6 + $0x868] sm:$0xff]
  %v7694 = vld [vmem:[%s6 + $0x870] sm:$0xff]
  %v7695 = vld [vmem:[%s6 + $0x878] sm:$0xff]
  %v7696 = vld [vmem:[%s6 + $0x880] sm:$0xff]
  %v7697 = vld [vmem:[%s6 + $0x888] sm:$0xff]
  %v7698 = vld [vmem:[%s6 + $0x890] sm:$0xff]
  %v7699 = vld [vmem:[%s6 + $0x898] sm:$0xff]
  %v7700 = vld [vmem:[%s6 + $0x8a0] sm:$0xff]
  %v7701 = vld [vmem:[%s6 + $0x8a8] sm:$0xff]
  %v7702 = vld [vmem:[%s6 + $0x8b0] sm:$0xff]
  %v7703 = vld [vmem:[%s6 + $0x8b8] sm:$0xff]
  %v7704 = vld [vmem:[%s6 + $0x8c0] sm:$0xff]
  %v7705 = vld [vmem:[%s6 + $0x8c8] sm:$0xff]
  %v7706 = vld [vmem:[%s6 + $0x8d0] sm:$0xff]
  %v7707 = vld [vmem:[%s6 + $0x8d8] sm:$0xff]
  %v7708 = vld [vmem:[%s6 + $0x8e0] sm:$0xff]
  %v7709 = vld [vmem:[%s6 + $0x8e8] sm:$0xff]
  %v7710 = vld [vmem:[%s6 + $0x8f0] sm:$0xff]
  %v7711 = vld [vmem:[%s6 + $0x8f8] sm:$0xff]
  %v7712 = vld [vmem:[%s6 + $0x900] sm:$0xff]
  %v7713 = vld [vmem:[%s6 + $0x908] sm:$0xff]
  %v7714 = vld [vmem:[%s6 + $0x910] sm:$0xff]
  %v7715 = vld [vmem:[%s6 + $0x918] sm:$0xff]
  %v7716 = vld [vmem:[%s6 + $0x920] sm:$0xff]
  %v7717 = vld [vmem:[%s6 + $0x928] sm:$0xff]
  %v7718 = vld [vmem:[%s6 + $0x930] sm:$0xff]
  %v7719 = vld [vmem:[%s6 + $0x938] sm:$0xff]
  %v7720 = vld [vmem:[%s6 + $0x940] sm:$0xff]
  %v7721 = vld [vmem:[%s6 + $0x948] sm:$0xff]
  %v7722 = vld [vmem:[%s6 + $0x950] sm:$0xff]
  %v7723 = vld [vmem:[%s6 + $0x958] sm:$0xff]
  %v7724 = vld [vmem:[%s6 + $0x960] sm:$0xff]
  %v7725 = vld [vmem:[%s6 + $0x968] sm:$0xff]
  %v7726 = vld [vmem:[%s6 + $0x970] sm:$0xff]
  %v7727 = vld [vmem:[%s6 + $0x978] sm:$0xff]
  %v7728 = vld [vmem:[%s6 + $0x980] sm:$0xff]
  %v7729 = vld [vmem:[%s6 + $0x988] sm:$0xff]
  %v7730 = vld [vmem:[%s6 + $0x990] sm:$0xff]
  %v7731 = vld [vmem:[%s6 + $0x998] sm:$0xff]
  %v7732 = vld [vmem:[%s6 + $0x9a0] sm:$0xff]
  %v7733 = vld [vmem:[%s6 + $0x9a8] sm:$0xff]
  %v7734 = vld [vmem:[%s6 + $0x9b0] sm:$0xff]
  %v7735 = vld [vmem:[%s6 + $0x9b8] sm:$0xff]
  %v7736 = vld [vmem:[%s6 + $0x9c0] sm:$0xff]
  %v7737 = vld [vmem:[%s6 + $0x9c8] sm:$0xff]
  %v7738 = vld [vmem:[%s6 + $0x9d0] sm:$0xff]
  %v7739 = vld [vmem:[%s6 + $0x9d8] sm:$0xff]
  %v7740 = vld [vmem:[%s6 + $0x9e0] sm:$0xff]
  %v7741 = vld [vmem:[%s6 + $0x9e8] sm:$0xff]
  %v7742 = vld [vmem:[%s6 + $0x9f0] sm:$0xff]
  %v7743 = vld [vmem:[%s6 + $0x9f8] sm:$0xff]
  %v7744 = vld [vmem:[%s6 + $0xa00] sm:$0xff]
  %v7745 = vld [vmem:[%s6 + $0xa08] sm:$0xff]
  %v7746 = vld [vmem:[%s6 + $0xa10] sm:$0xff]
  %v7747 = vld [vmem:[%s6 + $0xa18] sm:$0xff]
  %v7748 = vld [vmem:[%s6 + $0xa20] sm:$0xff]
  %v7749 = vld [vmem:[%s6 + $0xa28] sm:$0xff]
  %v7750 = vld [vmem:[%s6 + $0xa30] sm:$0xff]
  %v7751 = vld [vmem:[%s6 + $0xa38] sm:$0xff]
  %v7752 = vld [vmem:[%s6 + $0xa40] sm:$0xff]
  %v7753 = vld [vmem:[%s6 + $0xa48] sm:$0xff]
  %v7754 = vld [vmem:[%s6 + $0xa50] sm:$0xff]
  %v7755 = vld [vmem:[%s6 + $0xa58] sm:$0xff]
  %v7756 = vld [vmem:[%s6 + $0xa60] sm:$0xff]
  %v7757 = vld [vmem:[%s6 + $0xa68] sm:$0xff]
  %v7758 = vld [vmem:[%s6 + $0xa70] sm:$0xff]
  %v7759 = vld [vmem:[%s6 + $0xa78] sm:$0xff]
  %v7760 = vld [vmem:[%s6 + $0xa80] sm:$0xff]
  %v7761 = vld [vmem:[%s6 + $0xa88] sm:$0xff]
  %v7762 = vld [vmem:[%s6 + $0xa90] sm:$0xff]
  %v7763 = vld [vmem:[%s6 + $0xa98] sm:$0xff]
  %v7764 = vld [vmem:[%s6 + $0xaa0] sm:$0xff]
  %v7765 = vld [vmem:[%s6 + $0xaa8] sm:$0xff]
  %v7766 = vld [vmem:[%s6 + $0xab0] sm:$0xff]
  %v7767 = vld [vmem:[%s6 + $0xab8] sm:$0xff]
  %v7768 = vld [vmem:[%s6 + $0xac0] sm:$0xff]
  %v7769 = vld [vmem:[%s6 + $0xac8] sm:$0xff]
  %v7770 = vld [vmem:[%s6 + $0xad0] sm:$0xff]
  %v7771 = vld [vmem:[%s6 + $0xad8] sm:$0xff]
  %v7772 = vld [vmem:[%s6 + $0xae0] sm:$0xff]
  %v7773 = vld [vmem:[%s6 + $0xae8] sm:$0xff]
  %v7774 = vld [vmem:[%s6 + $0xaf0] sm:$0xff]
  %v7775 = vld [vmem:[%s6 + $0xaf8] sm:$0xff]
  %v7776 = vld [vmem:[%s6 + $0xb00] sm:$0xff]
  %v7777 = vld [vmem:[%s6 + $0xb08] sm:$0xff]
  %v7778 = vld [vmem:[%s6 + $0xb10] sm:$0xff]
  %v7779 = vld [vmem:[%s6 + $0xb18] sm:$0xff]
  %v7780 = vld [vmem:[%s6 + $0xb20] sm:$0xff]
  %v7781 = vld [vmem:[%s6 + $0xb28] sm:$0xff]
  %v7782 = vld [vmem:[%s6 + $0xb30] sm:$0xff]
  %v7783 = vld [vmem:[%s6 + $0xb38] sm:$0xff]
  %v7784 = vld [vmem:[%s6 + $0xb40] sm:$0xff]
  %v7785 = vld [vmem:[%s6 + $0xb48] sm:$0xff]
  %v7786 = vld [vmem:[%s6 + $0xb50] sm:$0xff]
  %v7787 = vld [vmem:[%s6 + $0xb58] sm:$0xff]
  %v7788 = vld [vmem:[%s6 + $0xb60] sm:$0xff]
  %v7789 = vld [vmem:[%s6 + $0xb68] sm:$0xff]
  %v7790 = vld [vmem:[%s6 + $0xb70] sm:$0xff]
  %v7791 = vld [vmem:[%s6 + $0xb78] sm:$0xff]
  %v7792 = vld [vmem:[%s6 + $0xb80] sm:$0xff]
  %v7793 = vld [vmem:[%s6 + $0xb88] sm:$0xff]
  %v7794 = vld [vmem:[%s6 + $0xb90] sm:$0xff]
  %v7795 = vld [vmem:[%s6 + $0xb98] sm:$0xff]
  %v7796 = vld [vmem:[%s6 + $0xba0] sm:$0xff]
  %v7797 = vld [vmem:[%s6 + $0xba8] sm:$0xff]
  %v7798 = vld [vmem:[%s6 + $0xbb0] sm:$0xff]
  %v7799 = vld [vmem:[%s6 + $0xbb8] sm:$0xff]
  %v7800 = vld [vmem:[%s6 + $0xbc0] sm:$0xff]
  %v7801 = vld [vmem:[%s6 + $0xbc8] sm:$0xff]
  %v7802 = vld [vmem:[%s6 + $0xbd0] sm:$0xff]
  %v7803 = vld [vmem:[%s6 + $0xbd8] sm:$0xff]
  %v7804 = vld [vmem:[%s6 + $0xbe0] sm:$0xff]
  %v7805 = vld [vmem:[%s6 + $0xbe8] sm:$0xff]
  %v7806 = vld [vmem:[%s6 + $0xbf0] sm:$0xff]
  %v7807 = vld [vmem:[%s6 + $0xbf8] sm:$0xff]
  %v7808 = vld [vmem:[%s6 + $0xc00] sm:$0xff]
  %v7809 = vld [vmem:[%s6 + $0xc08] sm:$0xff]
  %v7810 = vld [vmem:[%s6 + $0xc10] sm:$0xff]
  %v7811 = vld [vmem:[%s6 + $0xc18] sm:$0xff]
  %v7812 = vld [vmem:[%s6 + $0xc20] sm:$0xff]
  %v7813 = vld [vmem:[%s6 + $0xc28] sm:$0xff]
  %v7814 = vld [vmem:[%s6 + $0xc30] sm:$0xff]
  %v7815 = vld [vmem:[%s6 + $0xc38] sm:$0xff]
  %v7816 = vld [vmem:[%s6 + $0xc40] sm:$0xff]
  %v7817 = vld [vmem:[%s6 + $0xc48] sm:$0xff]
  %v7818 = vld [vmem:[%s6 + $0xc50] sm:$0xff]
  %v7819 = vld [vmem:[%s6 + $0xc58] sm:$0xff]
  %v7820 = vld [vmem:[%s6 + $0xc60] sm:$0xff]
  %v7821 = vld [vmem:[%s6 + $0xc68] sm:$0xff]
  %v7822 = vld [vmem:[%s6 + $0xc70] sm:$0xff]
  %v7823 = vld [vmem:[%s6 + $0xc78] sm:$0xff]
  %v7824 = vld [vmem:[%s7] sm:$0x3]
  %v7826 = vlaneseq
  %v7827 = vshrl.u32 %v7826, 7
  %v7828 = vsub.s32 0, %v7827
  %v7829 = vrot.slane %v7824, %v7828
  %v7830 = vlaneseq
  %v7831 = vshrl.u32 %v7830, 7
  %v7832 = vsub.s32 1, %v7831
  %v7833 = vrot.slane %v7824, %v7832
  %v8236 = vunpack.c.l.b16 %v7424
  %v8237 = vunpack.c.h.b16 %v7424
  %v8238 = vunpack.c.l.b16 %v7425
  %v8239 = vunpack.c.h.b16 %v7425
  %v8240 = vunpack.c.l.b16 %v7426
  %v8241 = vunpack.c.h.b16 %v7426
  %v8242 = vunpack.c.l.b16 %v7427
  %v8243 = vunpack.c.h.b16 %v7427
  %v8244 = vunpack.c.l.b16 %v7428
  %v8245 = vunpack.c.h.b16 %v7428
  %v8246 = vunpack.c.l.b16 %v7429
  %v8247 = vunpack.c.h.b16 %v7429
  %v8248 = vunpack.c.l.b16 %v7430
  %v8249 = vunpack.c.h.b16 %v7430
  %v8250 = vunpack.c.l.b16 %v7431
  %v8251 = vunpack.c.h.b16 %v7431
  %v8252 = vunpack.c.l.b16 %v7432
  %v8253 = vunpack.c.h.b16 %v7432
  %v8254 = vunpack.c.l.b16 %v7433
  %v8255 = vunpack.c.h.b16 %v7433
  %v8256 = vunpack.c.l.b16 %v7434
  %v8257 = vunpack.c.h.b16 %v7434
  %v8258 = vunpack.c.l.b16 %v7435
  %v8259 = vunpack.c.h.b16 %v7435
  %v8260 = vunpack.c.l.b16 %v7436
  %v8261 = vunpack.c.h.b16 %v7436
  %v8262 = vunpack.c.l.b16 %v7437
  %v8263 = vunpack.c.h.b16 %v7437
  %v8264 = vunpack.c.l.b16 %v7438
  %v8265 = vunpack.c.h.b16 %v7438
  %v8266 = vunpack.c.l.b16 %v7439
  %v8267 = vunpack.c.h.b16 %v7439
  %v8268 = vunpack.c.l.b16 %v7440
  %v8269 = vunpack.c.h.b16 %v7440
  %v8270 = vunpack.c.l.b16 %v7441
  %v8271 = vunpack.c.h.b16 %v7441
  %v8272 = vunpack.c.l.b16 %v7442
  %v8273 = vunpack.c.h.b16 %v7442
  %v8274 = vunpack.c.l.b16 %v7443
  %v8275 = vunpack.c.h.b16 %v7443
  %v8276 = vunpack.c.l.b16 %v7444
  %v8277 = vunpack.c.h.b16 %v7444
  %v8278 = vunpack.c.l.b16 %v7445
  %v8279 = vunpack.c.h.b16 %v7445
  %v8280 = vunpack.c.l.b16 %v7446
  %v8281 = vunpack.c.h.b16 %v7446
  %v8282 = vunpack.c.l.b16 %v7447
  %v8283 = vunpack.c.h.b16 %v7447
  %v8284 = vunpack.c.l.b16 %v7448
  %v8285 = vunpack.c.h.b16 %v7448
  %v8286 = vunpack.c.l.b16 %v7449
  %v8287 = vunpack.c.h.b16 %v7449
  %v8288 = vunpack.c.l.b16 %v7450
  %v8289 = vunpack.c.h.b16 %v7450
  %v8290 = vunpack.c.l.b16 %v7451
  %v8291 = vunpack.c.h.b16 %v7451
  %v8292 = vunpack.c.l.b16 %v7452
  %v8293 = vunpack.c.h.b16 %v7452
  %v8294 = vunpack.c.l.b16 %v7453
  %v8295 = vunpack.c.h.b16 %v7453
  %v8296 = vunpack.c.l.b16 %v7454
  %v8297 = vunpack.c.h.b16 %v7454
  %v8298 = vunpack.c.l.b16 %v7455
  %v8299 = vunpack.c.h.b16 %v7455
  %v8300 = vunpack.c.l.b16 %v7456
  %v8301 = vunpack.c.h.b16 %v7456
  %v8302 = vunpack.c.l.b16 %v7457
  %v8303 = vunpack.c.h.b16 %v7457
  %v8304 = vunpack.c.l.b16 %v7458
  %v8305 = vunpack.c.h.b16 %v7458
  %v8306 = vunpack.c.l.b16 %v7459
  %v8307 = vunpack.c.h.b16 %v7459
  %v8308 = vunpack.c.l.b16 %v7460
  %v8309 = vunpack.c.h.b16 %v7460
  %v8310 = vunpack.c.l.b16 %v7461
  %v8311 = vunpack.c.h.b16 %v7461
  %v8312 = vunpack.c.l.b16 %v7462
  %v8313 = vunpack.c.h.b16 %v7462
  %v8314 = vunpack.c.l.b16 %v7463
  %v8315 = vunpack.c.h.b16 %v7463
  %v8316 = vunpack.c.l.b16 %v7464
  %v8317 = vunpack.c.h.b16 %v7464
  %v8318 = vunpack.c.l.b16 %v7465
  %v8319 = vunpack.c.h.b16 %v7465
  %v8320 = vunpack.c.l.b16 %v7466
  %v8321 = vunpack.c.h.b16 %v7466
  %v8322 = vunpack.c.l.b16 %v7467
  %v8323 = vunpack.c.h.b16 %v7467
  %v8324 = vunpack.c.l.b16 %v7468
  %v8325 = vunpack.c.h.b16 %v7468
  %v8326 = vunpack.c.l.b16 %v7469
  %v8327 = vunpack.c.h.b16 %v7469
  %v8328 = vunpack.c.l.b16 %v7470
  %v8329 = vunpack.c.h.b16 %v7470
  %v8330 = vunpack.c.l.b16 %v7471
  %v8331 = vunpack.c.h.b16 %v7471
  %v8332 = vunpack.c.l.b16 %v7472
  %v8333 = vunpack.c.h.b16 %v7472
  %v8334 = vunpack.c.l.b16 %v7473
  %v8335 = vunpack.c.h.b16 %v7473
  %v8336 = vunpack.c.l.b16 %v7474
  %v8337 = vunpack.c.h.b16 %v7474
  %v8338 = vunpack.c.l.b16 %v7475
  %v8339 = vunpack.c.h.b16 %v7475
  %v8340 = vunpack.c.l.b16 %v7476
  %v8341 = vunpack.c.h.b16 %v7476
  %v8342 = vunpack.c.l.b16 %v7477
  %v8343 = vunpack.c.h.b16 %v7477
  %v8344 = vunpack.c.l.b16 %v7478
  %v8345 = vunpack.c.h.b16 %v7478
  %v8346 = vunpack.c.l.b16 %v7479
  %v8347 = vunpack.c.h.b16 %v7479
  %v8348 = vunpack.c.l.b16 %v7480
  %v8349 = vunpack.c.h.b16 %v7480
  %v8350 = vunpack.c.l.b16 %v7481
  %v8351 = vunpack.c.h.b16 %v7481
  %v8352 = vunpack.c.l.b16 %v7482
  %v8353 = vunpack.c.h.b16 %v7482
  %v8354 = vunpack.c.l.b16 %v7483
  %v8355 = vunpack.c.h.b16 %v7483
  %v8356 = vunpack.c.l.b16 %v7484
  %v8357 = vunpack.c.h.b16 %v7484
  %v8358 = vunpack.c.l.b16 %v7485
  %v8359 = vunpack.c.h.b16 %v7485
  %v8360 = vunpack.c.l.b16 %v7486
  %v8361 = vunpack.c.h.b16 %v7486
  %v8362 = vunpack.c.l.b16 %v7487
  %v8363 = vunpack.c.h.b16 %v7487
  %v8364 = vunpack.c.l.b16 %v7488
  %v8365 = vunpack.c.h.b16 %v7488
  %v8366 = vunpack.c.l.b16 %v7489
  %v8367 = vunpack.c.h.b16 %v7489
  %v8368 = vunpack.c.l.b16 %v7490
  %v8369 = vunpack.c.h.b16 %v7490
  %v8370 = vunpack.c.l.b16 %v7491
  %v8371 = vunpack.c.h.b16 %v7491
  %v8372 = vunpack.c.l.b16 %v7492
  %v8373 = vunpack.c.h.b16 %v7492
  %v8374 = vunpack.c.l.b16 %v7493
  %v8375 = vunpack.c.h.b16 %v7493
  %v8376 = vunpack.c.l.b16 %v7494
  %v8377 = vunpack.c.h.b16 %v7494
  %v8378 = vunpack.c.l.b16 %v7495
  %v8379 = vunpack.c.h.b16 %v7495
  %v8380 = vunpack.c.l.b16 %v7496
  %v8381 = vunpack.c.h.b16 %v7496
  %v8382 = vunpack.c.l.b16 %v7497
  %v8383 = vunpack.c.h.b16 %v7497
  %v8384 = vunpack.c.l.b16 %v7498
  %v8385 = vunpack.c.h.b16 %v7498
  %v8386 = vunpack.c.l.b16 %v7499
  %v8387 = vunpack.c.h.b16 %v7499
  %v8388 = vunpack.c.l.b16 %v7500
  %v8389 = vunpack.c.h.b16 %v7500
  %v8390 = vunpack.c.l.b16 %v7501
  %v8391 = vunpack.c.h.b16 %v7501
  %v8392 = vunpack.c.l.b16 %v7502
  %v8393 = vunpack.c.h.b16 %v7502
  %v8394 = vunpack.c.l.b16 %v7503
  %v8395 = vunpack.c.h.b16 %v7503
  %v8396 = vunpack.c.l.b16 %v7504
  %v8397 = vunpack.c.h.b16 %v7504
  %v8398 = vunpack.c.l.b16 %v7505
  %v8399 = vunpack.c.h.b16 %v7505
  %v8400 = vunpack.c.l.b16 %v7506
  %v8401 = vunpack.c.h.b16 %v7506
  %v8402 = vunpack.c.l.b16 %v7507
  %v8403 = vunpack.c.h.b16 %v7507
  %v8404 = vunpack.c.l.b16 %v7508
  %v8405 = vunpack.c.h.b16 %v7508
  %v8406 = vunpack.c.l.b16 %v7509
  %v8407 = vunpack.c.h.b16 %v7509
  %v8408 = vunpack.c.l.b16 %v7510
  %v8409 = vunpack.c.h.b16 %v7510
  %v8410 = vunpack.c.l.b16 %v7511
  %v8411 = vunpack.c.h.b16 %v7511
  %v8412 = vunpack.c.l.b16 %v7512
  %v8413 = vunpack.c.h.b16 %v7512
  %v8414 = vunpack.c.l.b16 %v7513
  %v8415 = vunpack.c.h.b16 %v7513
  %v8416 = vunpack.c.l.b16 %v7514
  %v8417 = vunpack.c.h.b16 %v7514
  %v8418 = vunpack.c.l.b16 %v7515
  %v8419 = vunpack.c.h.b16 %v7515
  %v8420 = vunpack.c.l.b16 %v7516
  %v8421 = vunpack.c.h.b16 %v7516
  %v8422 = vunpack.c.l.b16 %v7517
  %v8423 = vunpack.c.h.b16 %v7517
  %v8424 = vunpack.c.l.b16 %v7518
  %v8425 = vunpack.c.h.b16 %v7518
  %v8426 = vunpack.c.l.b16 %v7519
  %v8427 = vunpack.c.h.b16 %v7519
  %v8428 = vunpack.c.l.b16 %v7520
  %v8429 = vunpack.c.h.b16 %v7520
  %v8430 = vunpack.c.l.b16 %v7521
  %v8431 = vunpack.c.h.b16 %v7521
  %v8432 = vunpack.c.l.b16 %v7522
  %v8433 = vunpack.c.h.b16 %v7522
  %v8434 = vunpack.c.l.b16 %v7523
  %v8435 = vunpack.c.h.b16 %v7523
  %v8436 = vunpack.c.l.b16 %v7524
  %v8437 = vunpack.c.h.b16 %v7524
  %v8438 = vunpack.c.l.b16 %v7525
  %v8439 = vunpack.c.h.b16 %v7525
  %v8440 = vunpack.c.l.b16 %v7526
  %v8441 = vunpack.c.h.b16 %v7526
  %v8442 = vunpack.c.l.b16 %v7527
  %v8443 = vunpack.c.h.b16 %v7527
  %v8444 = vunpack.c.l.b16 %v7528
  %v8445 = vunpack.c.h.b16 %v7528
  %v8446 = vunpack.c.l.b16 %v7529
  %v8447 = vunpack.c.h.b16 %v7529
  %v8448 = vunpack.c.l.b16 %v7530
  %v8449 = vunpack.c.h.b16 %v7530
  %v8450 = vunpack.c.l.b16 %v7531
  %v8451 = vunpack.c.h.b16 %v7531
  %v8452 = vunpack.c.l.b16 %v7532
  %v8453 = vunpack.c.h.b16 %v7532
  %v8454 = vunpack.c.l.b16 %v7533
  %v8455 = vunpack.c.h.b16 %v7533
  %v8456 = vunpack.c.l.b16 %v7534
  %v8457 = vunpack.c.h.b16 %v7534
  %v8458 = vunpack.c.l.b16 %v7535
  %v8459 = vunpack.c.h.b16 %v7535
  %v8460 = vunpack.c.l.b16 %v7536
  %v8461 = vunpack.c.h.b16 %v7536
  %v8462 = vunpack.c.l.b16 %v7537
  %v8463 = vunpack.c.h.b16 %v7537
  %v8464 = vunpack.c.l.b16 %v7538
  %v8465 = vunpack.c.h.b16 %v7538
  %v8466 = vunpack.c.l.b16 %v7539
  %v8467 = vunpack.c.h.b16 %v7539
  %v8468 = vunpack.c.l.b16 %v7540
  %v8469 = vunpack.c.h.b16 %v7540
  %v8470 = vunpack.c.l.b16 %v7541
  %v8471 = vunpack.c.h.b16 %v7541
  %v8472 = vunpack.c.l.b16 %v7542
  %v8473 = vunpack.c.h.b16 %v7542
  %v8474 = vunpack.c.l.b16 %v7543
  %v8475 = vunpack.c.h.b16 %v7543
  %v8476 = vunpack.c.l.b16 %v7544
  %v8477 = vunpack.c.h.b16 %v7544
  %v8478 = vunpack.c.l.b16 %v7545
  %v8479 = vunpack.c.h.b16 %v7545
  %v8480 = vunpack.c.l.b16 %v7546
  %v8481 = vunpack.c.h.b16 %v7546
  %v8482 = vunpack.c.l.b16 %v7547
  %v8483 = vunpack.c.h.b16 %v7547
  %v8484 = vunpack.c.l.b16 %v7548
  %v8485 = vunpack.c.h.b16 %v7548
  %v8486 = vunpack.c.l.b16 %v7549
  %v8487 = vunpack.c.h.b16 %v7549
  %v8488 = vunpack.c.l.b16 %v7550
  %v8489 = vunpack.c.h.b16 %v7550
  %v8490 = vunpack.c.l.b16 %v7551
  %v8491 = vunpack.c.h.b16 %v7551
  %v8492 = vunpack.c.l.b16 %v7552
  %v8493 = vunpack.c.h.b16 %v7552
  %v8494 = vunpack.c.l.b16 %v7553
  %v8495 = vunpack.c.h.b16 %v7553
  %v8496 = vunpack.c.l.b16 %v7554
  %v8497 = vunpack.c.h.b16 %v7554
  %v8498 = vunpack.c.l.b16 %v7555
  %v8499 = vunpack.c.h.b16 %v7555
  %v8500 = vunpack.c.l.b16 %v7556
  %v8501 = vunpack.c.h.b16 %v7556
  %v8502 = vunpack.c.l.b16 %v7557
  %v8503 = vunpack.c.h.b16 %v7557
  %v8504 = vunpack.c.l.b16 %v7558
  %v8505 = vunpack.c.h.b16 %v7558
  %v8506 = vunpack.c.l.b16 %v7559
  %v8507 = vunpack.c.h.b16 %v7559
  %v8508 = vunpack.c.l.b16 %v7560
  %v8509 = vunpack.c.h.b16 %v7560
  %v8510 = vunpack.c.l.b16 %v7561
  %v8511 = vunpack.c.h.b16 %v7561
  %v8512 = vunpack.c.l.b16 %v7562
  %v8513 = vunpack.c.h.b16 %v7562
  %v8514 = vunpack.c.l.b16 %v7563
  %v8515 = vunpack.c.h.b16 %v7563
  %v8516 = vunpack.c.l.b16 %v7564
  %v8517 = vunpack.c.h.b16 %v7564
  %v8518 = vunpack.c.l.b16 %v7565
  %v8519 = vunpack.c.h.b16 %v7565
  %v8520 = vunpack.c.l.b16 %v7566
  %v8521 = vunpack.c.h.b16 %v7566
  %v8522 = vunpack.c.l.b16 %v7567
  %v8523 = vunpack.c.h.b16 %v7567
  %v8524 = vunpack.c.l.b16 %v7568
  %v8525 = vunpack.c.h.b16 %v7568
  %v8526 = vunpack.c.l.b16 %v7569
  %v8527 = vunpack.c.h.b16 %v7569
  %v8528 = vunpack.c.l.b16 %v7570
  %v8529 = vunpack.c.h.b16 %v7570
  %v8530 = vunpack.c.l.b16 %v7571
  %v8531 = vunpack.c.h.b16 %v7571
  %v8532 = vunpack.c.l.b16 %v7572
  %v8533 = vunpack.c.h.b16 %v7572
  %v8534 = vunpack.c.l.b16 %v7573
  %v8535 = vunpack.c.h.b16 %v7573
  %v8536 = vunpack.c.l.b16 %v7574
  %v8537 = vunpack.c.h.b16 %v7574
  %v8538 = vunpack.c.l.b16 %v7575
  %v8539 = vunpack.c.h.b16 %v7575
  %v8540 = vunpack.c.l.b16 %v7576
  %v8541 = vunpack.c.h.b16 %v7576
  %v8542 = vunpack.c.l.b16 %v7577
  %v8543 = vunpack.c.h.b16 %v7577
  %v8544 = vunpack.c.l.b16 %v7578
  %v8545 = vunpack.c.h.b16 %v7578
  %v8546 = vunpack.c.l.b16 %v7579
  %v8547 = vunpack.c.h.b16 %v7579
  %v8548 = vunpack.c.l.b16 %v7580
  %v8549 = vunpack.c.h.b16 %v7580
  %v8550 = vunpack.c.l.b16 %v7581
  %v8551 = vunpack.c.h.b16 %v7581
  %v8552 = vunpack.c.l.b16 %v7582
  %v8553 = vunpack.c.h.b16 %v7582
  %v8554 = vunpack.c.l.b16 %v7583
  %v8555 = vunpack.c.h.b16 %v7583
  %v8556 = vunpack.c.l.b16 %v7584
  %v8557 = vunpack.c.h.b16 %v7584
  %v8558 = vunpack.c.l.b16 %v7585
  %v8559 = vunpack.c.h.b16 %v7585
  %v8560 = vunpack.c.l.b16 %v7586
  %v8561 = vunpack.c.h.b16 %v7586
  %v8562 = vunpack.c.l.b16 %v7587
  %v8563 = vunpack.c.h.b16 %v7587
  %v8564 = vunpack.c.l.b16 %v7588
  %v8565 = vunpack.c.h.b16 %v7588
  %v8566 = vunpack.c.l.b16 %v7589
  %v8567 = vunpack.c.h.b16 %v7589
  %v8568 = vunpack.c.l.b16 %v7590
  %v8569 = vunpack.c.h.b16 %v7590
  %v8570 = vunpack.c.l.b16 %v7591
  %v8571 = vunpack.c.h.b16 %v7591
  %v8572 = vunpack.c.l.b16 %v7592
  %v8573 = vunpack.c.h.b16 %v7592
  %v8574 = vunpack.c.l.b16 %v7593
  %v8575 = vunpack.c.h.b16 %v7593
  %v8576 = vunpack.c.l.b16 %v7594
  %v8577 = vunpack.c.h.b16 %v7594
  %v8578 = vunpack.c.l.b16 %v7595
  %v8579 = vunpack.c.h.b16 %v7595
  %v8580 = vunpack.c.l.b16 %v7596
  %v8581 = vunpack.c.h.b16 %v7596
  %v8582 = vunpack.c.l.b16 %v7597
  %v8583 = vunpack.c.h.b16 %v7597
  %v8584 = vunpack.c.l.b16 %v7598
  %v8585 = vunpack.c.h.b16 %v7598
  %v8586 = vunpack.c.l.b16 %v7599
  %v8587 = vunpack.c.h.b16 %v7599
  %v8588 = vunpack.c.l.b16 %v7600
  %v8589 = vunpack.c.h.b16 %v7600
  %v8590 = vunpack.c.l.b16 %v7601
  %v8591 = vunpack.c.h.b16 %v7601
  %v8592 = vunpack.c.l.b16 %v7602
  %v8593 = vunpack.c.h.b16 %v7602
  %v8594 = vunpack.c.l.b16 %v7603
  %v8595 = vunpack.c.h.b16 %v7603
  %v8596 = vunpack.c.l.b16 %v7604
  %v8597 = vunpack.c.h.b16 %v7604
  %v8598 = vunpack.c.l.b16 %v7605
  %v8599 = vunpack.c.h.b16 %v7605
  %v8600 = vunpack.c.l.b16 %v7606
  %v8601 = vunpack.c.h.b16 %v7606
  %v8602 = vunpack.c.l.b16 %v7607
  %v8603 = vunpack.c.h.b16 %v7607
  %v8604 = vunpack.c.l.b16 %v7608
  %v8605 = vunpack.c.h.b16 %v7608
  %v8606 = vunpack.c.l.b16 %v7609
  %v8607 = vunpack.c.h.b16 %v7609
  %v8608 = vunpack.c.l.b16 %v7610
  %v8609 = vunpack.c.h.b16 %v7610
  %v8610 = vunpack.c.l.b16 %v7611
  %v8611 = vunpack.c.h.b16 %v7611
  %v8612 = vunpack.c.l.b16 %v7612
  %v8613 = vunpack.c.h.b16 %v7612
  %v8614 = vunpack.c.l.b16 %v7613
  %v8615 = vunpack.c.h.b16 %v7613
  %v8616 = vunpack.c.l.b16 %v7614
  %v8617 = vunpack.c.h.b16 %v7614
  %v8618 = vunpack.c.l.b16 %v7615
  %v8619 = vunpack.c.h.b16 %v7615
  %v8620 = vunpack.c.l.b16 %v7616
  %v8621 = vunpack.c.h.b16 %v7616
  %v8622 = vunpack.c.l.b16 %v7617
  %v8623 = vunpack.c.h.b16 %v7617
  %v8624 = vunpack.c.l.b16 %v7618
  %v8625 = vunpack.c.h.b16 %v7618
  %v8626 = vunpack.c.l.b16 %v7619
  %v8627 = vunpack.c.h.b16 %v7619
  %v8628 = vunpack.c.l.b16 %v7620
  %v8629 = vunpack.c.h.b16 %v7620
  %v8630 = vunpack.c.l.b16 %v7621
  %v8631 = vunpack.c.h.b16 %v7621
  %v8632 = vunpack.c.l.b16 %v7622
  %v8633 = vunpack.c.h.b16 %v7622
  %v8634 = vunpack.c.l.b16 %v7623
  %v8635 = vunpack.c.h.b16 %v7623
  %v8636 = vunpack.c.l.b16 %v7624
  %v8637 = vunpack.c.h.b16 %v7624
  %v8638 = vunpack.c.l.b16 %v7625
  %v8639 = vunpack.c.h.b16 %v7625
  %v8640 = vunpack.c.l.b16 %v7626
  %v8641 = vunpack.c.h.b16 %v7626
  %v8642 = vunpack.c.l.b16 %v7627
  %v8643 = vunpack.c.h.b16 %v7627
  %v8644 = vunpack.c.l.b16 %v7628
  %v8645 = vunpack.c.h.b16 %v7628
  %v8646 = vunpack.c.l.b16 %v7629
  %v8647 = vunpack.c.h.b16 %v7629
  %v8648 = vunpack.c.l.b16 %v7630
  %v8649 = vunpack.c.h.b16 %v7630
  %v8650 = vunpack.c.l.b16 %v7631
  %v8651 = vunpack.c.h.b16 %v7631
  %v8652 = vunpack.c.l.b16 %v7632
  %v8653 = vunpack.c.h.b16 %v7632
  %v8654 = vunpack.c.l.b16 %v7633
  %v8655 = vunpack.c.h.b16 %v7633
  %v8656 = vunpack.c.l.b16 %v7634
  %v8657 = vunpack.c.h.b16 %v7634
  %v8658 = vunpack.c.l.b16 %v7635
  %v8659 = vunpack.c.h.b16 %v7635
  %v8660 = vunpack.c.l.b16 %v7636
  %v8661 = vunpack.c.h.b16 %v7636
  %v8662 = vunpack.c.l.b16 %v7637
  %v8663 = vunpack.c.h.b16 %v7637
  %v8664 = vunpack.c.l.b16 %v7638
  %v8665 = vunpack.c.h.b16 %v7638
  %v8666 = vunpack.c.l.b16 %v7639
  %v8667 = vunpack.c.h.b16 %v7639
  %v8668 = vunpack.c.l.b16 %v7640
  %v8669 = vunpack.c.h.b16 %v7640
  %v8670 = vunpack.c.l.b16 %v7641
  %v8671 = vunpack.c.h.b16 %v7641
  %v8672 = vunpack.c.l.b16 %v7642
  %v8673 = vunpack.c.h.b16 %v7642
  %v8674 = vunpack.c.l.b16 %v7643
  %v8675 = vunpack.c.h.b16 %v7643
  %v8676 = vunpack.c.l.b16 %v7644
  %v8677 = vunpack.c.h.b16 %v7644
  %v8678 = vunpack.c.l.b16 %v7645
  %v8679 = vunpack.c.h.b16 %v7645
  %v8680 = vunpack.c.l.b16 %v7646
  %v8681 = vunpack.c.h.b16 %v7646
  %v8682 = vunpack.c.l.b16 %v7647
  %v8683 = vunpack.c.h.b16 %v7647
  %v8684 = vunpack.c.l.b16 %v7648
  %v8685 = vunpack.c.h.b16 %v7648
  %v8686 = vunpack.c.l.b16 %v7649
  %v8687 = vunpack.c.h.b16 %v7649
  %v8688 = vunpack.c.l.b16 %v7650
  %v8689 = vunpack.c.h.b16 %v7650
  %v8690 = vunpack.c.l.b16 %v7651
  %v8691 = vunpack.c.h.b16 %v7651
  %v8692 = vunpack.c.l.b16 %v7652
  %v8693 = vunpack.c.h.b16 %v7652
  %v8694 = vunpack.c.l.b16 %v7653
  %v8695 = vunpack.c.h.b16 %v7653
  %v8696 = vunpack.c.l.b16 %v7654
  %v8697 = vunpack.c.h.b16 %v7654
  %v8698 = vunpack.c.l.b16 %v7655
  %v8699 = vunpack.c.h.b16 %v7655
  %v8700 = vunpack.c.l.b16 %v7656
  %v8701 = vunpack.c.h.b16 %v7656
  %v8702 = vunpack.c.l.b16 %v7657
  %v8703 = vunpack.c.h.b16 %v7657
  %v8704 = vunpack.c.l.b16 %v7658
  %v8705 = vunpack.c.h.b16 %v7658
  %v8706 = vunpack.c.l.b16 %v7659
  %v8707 = vunpack.c.h.b16 %v7659
  %v8708 = vunpack.c.l.b16 %v7660
  %v8709 = vunpack.c.h.b16 %v7660
  %v8710 = vunpack.c.l.b16 %v7661
  %v8711 = vunpack.c.h.b16 %v7661
  %v8712 = vunpack.c.l.b16 %v7662
  %v8713 = vunpack.c.h.b16 %v7662
  %v8714 = vunpack.c.l.b16 %v7663
  %v8715 = vunpack.c.h.b16 %v7663
  %v8716 = vunpack.c.l.b16 %v7664
  %v8717 = vunpack.c.h.b16 %v7664
  %v8718 = vunpack.c.l.b16 %v7665
  %v8719 = vunpack.c.h.b16 %v7665
  %v8720 = vunpack.c.l.b16 %v7666
  %v8721 = vunpack.c.h.b16 %v7666
  %v8722 = vunpack.c.l.b16 %v7667
  %v8723 = vunpack.c.h.b16 %v7667
  %v8724 = vunpack.c.l.b16 %v7668
  %v8725 = vunpack.c.h.b16 %v7668
  %v8726 = vunpack.c.l.b16 %v7669
  %v8727 = vunpack.c.h.b16 %v7669
  %v8728 = vunpack.c.l.b16 %v7670
  %v8729 = vunpack.c.h.b16 %v7670
  %v8730 = vunpack.c.l.b16 %v7671
  %v8731 = vunpack.c.h.b16 %v7671
  %v8732 = vunpack.c.l.b16 %v7672
  %v8733 = vunpack.c.h.b16 %v7672
  %v8734 = vunpack.c.l.b16 %v7673
  %v8735 = vunpack.c.h.b16 %v7673
  %v8736 = vunpack.c.l.b16 %v7674
  %v8737 = vunpack.c.h.b16 %v7674
  %v8738 = vunpack.c.l.b16 %v7675
  %v8739 = vunpack.c.h.b16 %v7675
  %v8740 = vunpack.c.l.b16 %v7676
  %v8741 = vunpack.c.h.b16 %v7676
  %v8742 = vunpack.c.l.b16 %v7677
  %v8743 = vunpack.c.h.b16 %v7677
  %v8744 = vunpack.c.l.b16 %v7678
  %v8745 = vunpack.c.h.b16 %v7678
  %v8746 = vunpack.c.l.b16 %v7679
  %v8747 = vunpack.c.h.b16 %v7679
  %v8748 = vunpack.c.l.b16 %v7680
  %v8749 = vunpack.c.h.b16 %v7680
  %v8750 = vunpack.c.l.b16 %v7681
  %v8751 = vunpack.c.h.b16 %v7681
  %v8752 = vunpack.c.l.b16 %v7682
  %v8753 = vunpack.c.h.b16 %v7682
  %v8754 = vunpack.c.l.b16 %v7683
  %v8755 = vunpack.c.h.b16 %v7683
  %v8756 = vunpack.c.l.b16 %v7684
  %v8757 = vunpack.c.h.b16 %v7684
  %v8758 = vunpack.c.l.b16 %v7685
  %v8759 = vunpack.c.h.b16 %v7685
  %v8760 = vunpack.c.l.b16 %v7686
  %v8761 = vunpack.c.h.b16 %v7686
  %v8762 = vunpack.c.l.b16 %v7687
  %v8763 = vunpack.c.h.b16 %v7687
  %v8764 = vunpack.c.l.b16 %v7688
  %v8765 = vunpack.c.h.b16 %v7688
  %v8766 = vunpack.c.l.b16 %v7689
  %v8767 = vunpack.c.h.b16 %v7689
  %v8768 = vunpack.c.l.b16 %v7690
  %v8769 = vunpack.c.h.b16 %v7690
  %v8770 = vunpack.c.l.b16 %v7691
  %v8771 = vunpack.c.h.b16 %v7691
  %v8772 = vunpack.c.l.b16 %v7692
  %v8773 = vunpack.c.h.b16 %v7692
  %v8774 = vunpack.c.l.b16 %v7693
  %v8775 = vunpack.c.h.b16 %v7693
  %v8776 = vunpack.c.l.b16 %v7694
  %v8777 = vunpack.c.h.b16 %v7694
  %v8778 = vunpack.c.l.b16 %v7695
  %v8779 = vunpack.c.h.b16 %v7695
  %v8780 = vunpack.c.l.b16 %v7696
  %v8781 = vunpack.c.h.b16 %v7696
  %v8782 = vunpack.c.l.b16 %v7697
  %v8783 = vunpack.c.h.b16 %v7697
  %v8784 = vunpack.c.l.b16 %v7698
  %v8785 = vunpack.c.h.b16 %v7698
  %v8786 = vunpack.c.l.b16 %v7699
  %v8787 = vunpack.c.h.b16 %v7699
  %v8788 = vunpack.c.l.b16 %v7700
  %v8789 = vunpack.c.h.b16 %v7700
  %v8790 = vunpack.c.l.b16 %v7701
  %v8791 = vunpack.c.h.b16 %v7701
  %v8792 = vunpack.c.l.b16 %v7702
  %v8793 = vunpack.c.h.b16 %v7702
  %v8794 = vunpack.c.l.b16 %v7703
  %v8795 = vunpack.c.h.b16 %v7703
  %v8796 = vunpack.c.l.b16 %v7704
  %v8797 = vunpack.c.h.b16 %v7704
  %v8798 = vunpack.c.l.b16 %v7705
  %v8799 = vunpack.c.h.b16 %v7705
  %v8800 = vunpack.c.l.b16 %v7706
  %v8801 = vunpack.c.h.b16 %v7706
  %v8802 = vunpack.c.l.b16 %v7707
  %v8803 = vunpack.c.h.b16 %v7707
  %v8804 = vunpack.c.l.b16 %v7708
  %v8805 = vunpack.c.h.b16 %v7708
  %v8806 = vunpack.c.l.b16 %v7709
  %v8807 = vunpack.c.h.b16 %v7709
  %v8808 = vunpack.c.l.b16 %v7710
  %v8809 = vunpack.c.h.b16 %v7710
  %v8810 = vunpack.c.l.b16 %v7711
  %v8811 = vunpack.c.h.b16 %v7711
  %v8812 = vunpack.c.l.b16 %v7712
  %v8813 = vunpack.c.h.b16 %v7712
  %v8814 = vunpack.c.l.b16 %v7713
  %v8815 = vunpack.c.h.b16 %v7713
  %v8816 = vunpack.c.l.b16 %v7714
  %v8817 = vunpack.c.h.b16 %v7714
  %v8818 = vunpack.c.l.b16 %v7715
  %v8819 = vunpack.c.h.b16 %v7715
  %v8820 = vunpack.c.l.b16 %v7716
  %v8821 = vunpack.c.h.b16 %v7716
  %v8822 = vunpack.c.l.b16 %v7717
  %v8823 = vunpack.c.h.b16 %v7717
  %v8824 = vunpack.c.l.b16 %v7718
  %v8825 = vunpack.c.h.b16 %v7718
  %v8826 = vunpack.c.l.b16 %v7719
  %v8827 = vunpack.c.h.b16 %v7719
  %v8828 = vunpack.c.l.b16 %v7720
  %v8829 = vunpack.c.h.b16 %v7720
  %v8830 = vunpack.c.l.b16 %v7721
  %v8831 = vunpack.c.h.b16 %v7721
  %v8832 = vunpack.c.l.b16 %v7722
  %v8833 = vunpack.c.h.b16 %v7722
  %v8834 = vunpack.c.l.b16 %v7723
  %v8835 = vunpack.c.h.b16 %v7723
  %v8836 = vunpack.c.l.b16 %v7724
  %v8837 = vunpack.c.h.b16 %v7724
  %v8838 = vunpack.c.l.b16 %v7725
  %v8839 = vunpack.c.h.b16 %v7725
  %v8840 = vunpack.c.l.b16 %v7726
  %v8841 = vunpack.c.h.b16 %v7726
  %v8842 = vunpack.c.l.b16 %v7727
  %v8843 = vunpack.c.h.b16 %v7727
  %v8844 = vunpack.c.l.b16 %v7728
  %v8845 = vunpack.c.h.b16 %v7728
  %v8846 = vunpack.c.l.b16 %v7729
  %v8847 = vunpack.c.h.b16 %v7729
  %v8848 = vunpack.c.l.b16 %v7730
  %v8849 = vunpack.c.h.b16 %v7730
  %v8850 = vunpack.c.l.b16 %v7731
  %v8851 = vunpack.c.h.b16 %v7731
  %v8852 = vunpack.c.l.b16 %v7732
  %v8853 = vunpack.c.h.b16 %v7732
  %v8854 = vunpack.c.l.b16 %v7733
  %v8855 = vunpack.c.h.b16 %v7733
  %v8856 = vunpack.c.l.b16 %v7734
  %v8857 = vunpack.c.h.b16 %v7734
  %v8858 = vunpack.c.l.b16 %v7735
  %v8859 = vunpack.c.h.b16 %v7735
  %v8860 = vunpack.c.l.b16 %v7736
  %v8861 = vunpack.c.h.b16 %v7736
  %v8862 = vunpack.c.l.b16 %v7737
  %v8863 = vunpack.c.h.b16 %v7737
  %v8864 = vunpack.c.l.b16 %v7738
  %v8865 = vunpack.c.h.b16 %v7738
  %v8866 = vunpack.c.l.b16 %v7739
  %v8867 = vunpack.c.h.b16 %v7739
  %v8868 = vunpack.c.l.b16 %v7740
  %v8869 = vunpack.c.h.b16 %v7740
  %v8870 = vunpack.c.l.b16 %v7741
  %v8871 = vunpack.c.h.b16 %v7741
  %v8872 = vunpack.c.l.b16 %v7742
  %v8873 = vunpack.c.h.b16 %v7742
  %v8874 = vunpack.c.l.b16 %v7743
  %v8875 = vunpack.c.h.b16 %v7743
  %v8876 = vunpack.c.l.b16 %v7744
  %v8877 = vunpack.c.h.b16 %v7744
  %v8878 = vunpack.c.l.b16 %v7745
  %v8879 = vunpack.c.h.b16 %v7745
  %v8880 = vunpack.c.l.b16 %v7746
  %v8881 = vunpack.c.h.b16 %v7746
  %v8882 = vunpack.c.l.b16 %v7747
  %v8883 = vunpack.c.h.b16 %v7747
  %v8884 = vunpack.c.l.b16 %v7748
  %v8885 = vunpack.c.h.b16 %v7748
  %v8886 = vunpack.c.l.b16 %v7749
  %v8887 = vunpack.c.h.b16 %v7749
  %v8888 = vunpack.c.l.b16 %v7750
  %v8889 = vunpack.c.h.b16 %v7750
  %v8890 = vunpack.c.l.b16 %v7751
  %v8891 = vunpack.c.h.b16 %v7751
  %v8892 = vunpack.c.l.b16 %v7752
  %v8893 = vunpack.c.h.b16 %v7752
  %v8894 = vunpack.c.l.b16 %v7753
  %v8895 = vunpack.c.h.b16 %v7753
  %v8896 = vunpack.c.l.b16 %v7754
  %v8897 = vunpack.c.h.b16 %v7754
  %v8898 = vunpack.c.l.b16 %v7755
  %v8899 = vunpack.c.h.b16 %v7755
  %v8900 = vunpack.c.l.b16 %v7756
  %v8901 = vunpack.c.h.b16 %v7756
  %v8902 = vunpack.c.l.b16 %v7757
  %v8903 = vunpack.c.h.b16 %v7757
  %v8904 = vunpack.c.l.b16 %v7758
  %v8905 = vunpack.c.h.b16 %v7758
  %v8906 = vunpack.c.l.b16 %v7759
  %v8907 = vunpack.c.h.b16 %v7759
  %v8908 = vunpack.c.l.b16 %v7760
  %v8909 = vunpack.c.h.b16 %v7760
  %v8910 = vunpack.c.l.b16 %v7761
  %v8911 = vunpack.c.h.b16 %v7761
  %v8912 = vunpack.c.l.b16 %v7762
  %v8913 = vunpack.c.h.b16 %v7762
  %v8914 = vunpack.c.l.b16 %v7763
  %v8915 = vunpack.c.h.b16 %v7763
  %v8916 = vunpack.c.l.b16 %v7764
  %v8917 = vunpack.c.h.b16 %v7764
  %v8918 = vunpack.c.l.b16 %v7765
  %v8919 = vunpack.c.h.b16 %v7765
  %v8920 = vunpack.c.l.b16 %v7766
  %v8921 = vunpack.c.h.b16 %v7766
  %v8922 = vunpack.c.l.b16 %v7767
  %v8923 = vunpack.c.h.b16 %v7767
  %v8924 = vunpack.c.l.b16 %v7768
  %v8925 = vunpack.c.h.b16 %v7768
  %v8926 = vunpack.c.l.b16 %v7769
  %v8927 = vunpack.c.h.b16 %v7769
  %v8928 = vunpack.c.l.b16 %v7770
  %v8929 = vunpack.c.h.b16 %v7770
  %v8930 = vunpack.c.l.b16 %v7771
  %v8931 = vunpack.c.h.b16 %v7771
  %v8932 = vunpack.c.l.b16 %v7772
  %v8933 = vunpack.c.h.b16 %v7772
  %v8934 = vunpack.c.l.b16 %v7773
  %v8935 = vunpack.c.h.b16 %v7773
  %v8936 = vunpack.c.l.b16 %v7774
  %v8937 = vunpack.c.h.b16 %v7774
  %v8938 = vunpack.c.l.b16 %v7775
  %v8939 = vunpack.c.h.b16 %v7775
  %v8940 = vunpack.c.l.b16 %v7776
  %v8941 = vunpack.c.h.b16 %v7776
  %v8942 = vunpack.c.l.b16 %v7777
  %v8943 = vunpack.c.h.b16 %v7777
  %v8944 = vunpack.c.l.b16 %v7778
  %v8945 = vunpack.c.h.b16 %v7778
  %v8946 = vunpack.c.l.b16 %v7779
  %v8947 = vunpack.c.h.b16 %v7779
  %v8948 = vunpack.c.l.b16 %v7780
  %v8949 = vunpack.c.h.b16 %v7780
  %v8950 = vunpack.c.l.b16 %v7781
  %v8951 = vunpack.c.h.b16 %v7781
  %v8952 = vunpack.c.l.b16 %v7782
  %v8953 = vunpack.c.h.b16 %v7782
  %v8954 = vunpack.c.l.b16 %v7783
  %v8955 = vunpack.c.h.b16 %v7783
  %v8956 = vunpack.c.l.b16 %v7784
  %v8957 = vunpack.c.h.b16 %v7784
  %v8958 = vunpack.c.l.b16 %v7785
  %v8959 = vunpack.c.h.b16 %v7785
  %v8960 = vunpack.c.l.b16 %v7786
  %v8961 = vunpack.c.h.b16 %v7786
  %v8962 = vunpack.c.l.b16 %v7787
  %v8963 = vunpack.c.h.b16 %v7787
  %v8964 = vunpack.c.l.b16 %v7788
  %v8965 = vunpack.c.h.b16 %v7788
  %v8966 = vunpack.c.l.b16 %v7789
  %v8967 = vunpack.c.h.b16 %v7789
  %v8968 = vunpack.c.l.b16 %v7790
  %v8969 = vunpack.c.h.b16 %v7790
  %v8970 = vunpack.c.l.b16 %v7791
  %v8971 = vunpack.c.h.b16 %v7791
  %v8972 = vunpack.c.l.b16 %v7792
  %v8973 = vunpack.c.h.b16 %v7792
  %v8974 = vunpack.c.l.b16 %v7793
  %v8975 = vunpack.c.h.b16 %v7793
  %v8976 = vunpack.c.l.b16 %v7794
  %v8977 = vunpack.c.h.b16 %v7794
  %v8978 = vunpack.c.l.b16 %v7795
  %v8979 = vunpack.c.h.b16 %v7795
  %v8980 = vunpack.c.l.b16 %v7796
  %v8981 = vunpack.c.h.b16 %v7796
  %v8982 = vunpack.c.l.b16 %v7797
  %v8983 = vunpack.c.h.b16 %v7797
  %v8984 = vunpack.c.l.b16 %v7798
  %v8985 = vunpack.c.h.b16 %v7798
  %v8986 = vunpack.c.l.b16 %v7799
  %v8987 = vunpack.c.h.b16 %v7799
  %v8988 = vunpack.c.l.b16 %v7800
  %v8989 = vunpack.c.h.b16 %v7800
  %v8990 = vunpack.c.l.b16 %v7801
  %v8991 = vunpack.c.h.b16 %v7801
  %v8992 = vunpack.c.l.b16 %v7802
  %v8993 = vunpack.c.h.b16 %v7802
  %v8994 = vunpack.c.l.b16 %v7803
  %v8995 = vunpack.c.h.b16 %v7803
  %v8996 = vunpack.c.l.b16 %v7804
  %v8997 = vunpack.c.h.b16 %v7804
  %v8998 = vunpack.c.l.b16 %v7805
  %v8999 = vunpack.c.h.b16 %v7805
  %v9000 = vunpack.c.l.b16 %v7806
  %v9001 = vunpack.c.h.b16 %v7806
  %v9002 = vunpack.c.l.b16 %v7807
  %v9003 = vunpack.c.h.b16 %v7807
  %v9004 = vunpack.c.l.b16 %v7808
  %v9005 = vunpack.c.h.b16 %v7808
  %v9006 = vunpack.c.l.b16 %v7809
  %v9007 = vunpack.c.h.b16 %v7809
  %v9008 = vunpack.c.l.b16 %v7810
  %v9009 = vunpack.c.h.b16 %v7810
  %v9010 = vunpack.c.l.b16 %v7811
  %v9011 = vunpack.c.h.b16 %v7811
  %v9012 = vunpack.c.l.b16 %v7812
  %v9013 = vunpack.c.h.b16 %v7812
  %v9014 = vunpack.c.l.b16 %v7813
  %v9015 = vunpack.c.h.b16 %v7813
  %v9016 = vunpack.c.l.b16 %v7814
  %v9017 = vunpack.c.h.b16 %v7814
  %v9018 = vunpack.c.l.b16 %v7815
  %v9019 = vunpack.c.h.b16 %v7815
  %v9020 = vunpack.c.l.b16 %v7816
  %v9021 = vunpack.c.h.b16 %v7816
  %v9022 = vunpack.c.l.b16 %v7817
  %v9023 = vunpack.c.h.b16 %v7817
  %v9024 = vunpack.c.l.b16 %v7818
  %v9025 = vunpack.c.h.b16 %v7818
  %v9026 = vunpack.c.l.b16 %v7819
  %v9027 = vunpack.c.h.b16 %v7819
  %v9028 = vunpack.c.l.b16 %v7820
  %v9029 = vunpack.c.h.b16 %v7820
  %v9030 = vunpack.c.l.b16 %v7821
  %v9031 = vunpack.c.h.b16 %v7821
  %v9032 = vunpack.c.l.b16 %v7822
  %v9033 = vunpack.c.h.b16 %v7822
  %v9034 = vunpack.c.l.b16 %v7823
  %v9035 = vunpack.c.h.b16 %v7823
  %v9036 = vpack.c.b16 %v8238, %v8236
  %v9037 = vpack.c.b16 %v8239, %v8237
  %v9038 = vpack.c.b16 %v8242, %v8240
  %v9039 = vpack.c.b16 %v8243, %v8241
  %v9040 = vpack.c.b16 %v8246, %v8244
  %v9041 = vpack.c.b16 %v8247, %v8245
  %v9042 = vpack.c.b16 %v8250, %v8248
  %v9043 = vpack.c.b16 %v8251, %v8249
  %v9044 = vpack.c.b16 %v8254, %v8252
  %v9045 = vpack.c.b16 %v8255, %v8253
  %v9046 = vpack.c.b16 %v8258, %v8256
  %v9047 = vpack.c.b16 %v8259, %v8257
  %v9048 = vpack.c.b16 %v8262, %v8260
  %v9049 = vpack.c.b16 %v8263, %v8261
  %v9050 = vpack.c.b16 %v8266, %v8264
  %v9051 = vpack.c.b16 %v8267, %v8265
  %v9052 = vpack.c.b16 %v8270, %v8268
  %v9053 = vpack.c.b16 %v8271, %v8269
  %v9054 = vpack.c.b16 %v8274, %v8272
  %v9055 = vpack.c.b16 %v8275, %v8273
  %v9056 = vpack.c.b16 %v8278, %v8276
  %v9057 = vpack.c.b16 %v8279, %v8277
  %v9058 = vpack.c.b16 %v8282, %v8280
  %v9059 = vpack.c.b16 %v8283, %v8281
  %v9060 = vpack.c.b16 %v8286, %v8284
  %v9061 = vpack.c.b16 %v8287, %v8285
  %v9062 = vpack.c.b16 %v8290, %v8288
  %v9063 = vpack.c.b16 %v8291, %v8289
  %v9064 = vpack.c.b16 %v8294, %v8292
  %v9065 = vpack.c.b16 %v8295, %v8293
  %v9066 = vpack.c.b16 %v8298, %v8296
  %v9067 = vpack.c.b16 %v8299, %v8297
  %v9068 = vpack.c.b16 %v8302, %v8300
  %v9069 = vpack.c.b16 %v8303, %v8301
  %v9070 = vpack.c.b16 %v8306, %v8304
  %v9071 = vpack.c.b16 %v8307, %v8305
  %v9072 = vpack.c.b16 %v8310, %v8308
  %v9073 = vpack.c.b16 %v8311, %v8309
  %v9074 = vpack.c.b16 %v8314, %v8312
  %v9075 = vpack.c.b16 %v8315, %v8313
  %v9076 = vpack.c.b16 %v8318, %v8316
  %v9077 = vpack.c.b16 %v8319, %v8317
  %v9078 = vpack.c.b16 %v8322, %v8320
  %v9079 = vpack.c.b16 %v8323, %v8321
  %v9080 = vpack.c.b16 %v8326, %v8324
  %v9081 = vpack.c.b16 %v8327, %v8325
  %v9082 = vpack.c.b16 %v8330, %v8328
  %v9083 = vpack.c.b16 %v8331, %v8329
  %v9084 = vpack.c.b16 %v8334, %v8332
  %v9085 = vpack.c.b16 %v8335, %v8333
  %v9086 = vpack.c.b16 %v8338, %v8336
  %v9087 = vpack.c.b16 %v8339, %v8337
  %v9088 = vpack.c.b16 %v8342, %v8340
  %v9089 = vpack.c.b16 %v8343, %v8341
  %v9090 = vpack.c.b16 %v8346, %v8344
  %v9091 = vpack.c.b16 %v8347, %v8345
  %v9092 = vpack.c.b16 %v8350, %v8348
  %v9093 = vpack.c.b16 %v8351, %v8349
  %v9094 = vpack.c.b16 %v8354, %v8352
  %v9095 = vpack.c.b16 %v8355, %v8353
  %v9096 = vpack.c.b16 %v8358, %v8356
  %v9097 = vpack.c.b16 %v8359, %v8357
  %v9098 = vpack.c.b16 %v8362, %v8360
  %v9099 = vpack.c.b16 %v8363, %v8361
  %v9100 = vpack.c.b16 %v8366, %v8364
  %v9101 = vpack.c.b16 %v8367, %v8365
  %v9102 = vpack.c.b16 %v8370, %v8368
  %v9103 = vpack.c.b16 %v8371, %v8369
  %v9104 = vpack.c.b16 %v8374, %v8372
  %v9105 = vpack.c.b16 %v8375, %v8373
  %v9106 = vpack.c.b16 %v8378, %v8376
  %v9107 = vpack.c.b16 %v8379, %v8377
  %v9108 = vpack.c.b16 %v8382, %v8380
  %v9109 = vpack.c.b16 %v8383, %v8381
  %v9110 = vpack.c.b16 %v8386, %v8384
  %v9111 = vpack.c.b16 %v8387, %v8385
  %v9112 = vpack.c.b16 %v8390, %v8388
  %v9113 = vpack.c.b16 %v8391, %v8389
  %v9114 = vpack.c.b16 %v8394, %v8392
  %v9115 = vpack.c.b16 %v8395, %v8393
  %v9116 = vpack.c.b16 %v8398, %v8396
  %v9117 = vpack.c.b16 %v8399, %v8397
  %v9118 = vpack.c.b16 %v8402, %v8400
  %v9119 = vpack.c.b16 %v8403, %v8401
  %v9120 = vpack.c.b16 %v8406, %v8404
  %v9121 = vpack.c.b16 %v8407, %v8405
  %v9122 = vpack.c.b16 %v8410, %v8408
  %v9123 = vpack.c.b16 %v8411, %v8409
  %v9124 = vpack.c.b16 %v8414, %v8412
  %v9125 = vpack.c.b16 %v8415, %v8413
  %v9126 = vpack.c.b16 %v8418, %v8416
  %v9127 = vpack.c.b16 %v8419, %v8417
  %v9128 = vpack.c.b16 %v8422, %v8420
  %v9129 = vpack.c.b16 %v8423, %v8421
  %v9130 = vpack.c.b16 %v8426, %v8424
  %v9131 = vpack.c.b16 %v8427, %v8425
  %v9132 = vpack.c.b16 %v8430, %v8428
  %v9133 = vpack.c.b16 %v8431, %v8429
  %v9134 = vpack.c.b16 %v8434, %v8432
  %v9135 = vpack.c.b16 %v8435, %v8433
  %v9136 = vpack.c.b16 %v8438, %v8436
  %v9137 = vpack.c.b16 %v8439, %v8437
  %v9138 = vpack.c.b16 %v8442, %v8440
  %v9139 = vpack.c.b16 %v8443, %v8441
  %v9140 = vpack.c.b16 %v8446, %v8444
  %v9141 = vpack.c.b16 %v8447, %v8445
  %v9142 = vpack.c.b16 %v8450, %v8448
  %v9143 = vpack.c.b16 %v8451, %v8449
  %v9144 = vpack.c.b16 %v8454, %v8452
  %v9145 = vpack.c.b16 %v8455, %v8453
  %v9146 = vpack.c.b16 %v8458, %v8456
  %v9147 = vpack.c.b16 %v8459, %v8457
  %v9148 = vpack.c.b16 %v8462, %v8460
  %v9149 = vpack.c.b16 %v8463, %v8461
  %v9150 = vpack.c.b16 %v8466, %v8464
  %v9151 = vpack.c.b16 %v8467, %v8465
  %v9152 = vpack.c.b16 %v8470, %v8468
  %v9153 = vpack.c.b16 %v8471, %v8469
  %v9154 = vpack.c.b16 %v8474, %v8472
  %v9155 = vpack.c.b16 %v8475, %v8473
  %v9156 = vpack.c.b16 %v8478, %v8476
  %v9157 = vpack.c.b16 %v8479, %v8477
  %v9158 = vpack.c.b16 %v8482, %v8480
  %v9159 = vpack.c.b16 %v8483, %v8481
  %v9160 = vpack.c.b16 %v8486, %v8484
  %v9161 = vpack.c.b16 %v8487, %v8485
  %v9162 = vpack.c.b16 %v8490, %v8488
  %v9163 = vpack.c.b16 %v8491, %v8489
  %v9164 = vpack.c.b16 %v8494, %v8492
  %v9165 = vpack.c.b16 %v8495, %v8493
  %v9166 = vpack.c.b16 %v8498, %v8496
  %v9167 = vpack.c.b16 %v8499, %v8497
  %v9168 = vpack.c.b16 %v8502, %v8500
  %v9169 = vpack.c.b16 %v8503, %v8501
  %v9170 = vpack.c.b16 %v8506, %v8504
  %v9171 = vpack.c.b16 %v8507, %v8505
  %v9172 = vpack.c.b16 %v8510, %v8508
  %v9173 = vpack.c.b16 %v8511, %v8509
  %v9174 = vpack.c.b16 %v8514, %v8512
  %v9175 = vpack.c.b16 %v8515, %v8513
  %v9176 = vpack.c.b16 %v8518, %v8516
  %v9177 = vpack.c.b16 %v8519, %v8517
  %v9178 = vpack.c.b16 %v8522, %v8520
  %v9179 = vpack.c.b16 %v8523, %v8521
  %v9180 = vpack.c.b16 %v8526, %v8524
  %v9181 = vpack.c.b16 %v8527, %v8525
  %v9182 = vpack.c.b16 %v8530, %v8528
  %v9183 = vpack.c.b16 %v8531, %v8529
  %v9184 = vpack.c.b16 %v8534, %v8532
  %v9185 = vpack.c.b16 %v8535, %v8533
  %v9186 = vpack.c.b16 %v8538, %v8536
  %v9187 = vpack.c.b16 %v8539, %v8537
  %v9188 = vpack.c.b16 %v8542, %v8540
  %v9189 = vpack.c.b16 %v8543, %v8541
  %v9190 = vpack.c.b16 %v8546, %v8544
  %v9191 = vpack.c.b16 %v8547, %v8545
  %v9192 = vpack.c.b16 %v8550, %v8548
  %v9193 = vpack.c.b16 %v8551, %v8549
  %v9194 = vpack.c.b16 %v8554, %v8552
  %v9195 = vpack.c.b16 %v8555, %v8553
  %v9196 = vpack.c.b16 %v8558, %v8556
  %v9197 = vpack.c.b16 %v8559, %v8557
  %v9198 = vpack.c.b16 %v8562, %v8560
  %v9199 = vpack.c.b16 %v8563, %v8561
  %v9200 = vpack.c.b16 %v8566, %v8564
  %v9201 = vpack.c.b16 %v8567, %v8565
  %v9202 = vpack.c.b16 %v8570, %v8568
  %v9203 = vpack.c.b16 %v8571, %v8569
  %v9204 = vpack.c.b16 %v8574, %v8572
  %v9205 = vpack.c.b16 %v8575, %v8573
  %v9206 = vpack.c.b16 %v8578, %v8576
  %v9207 = vpack.c.b16 %v8579, %v8577
  %v9208 = vpack.c.b16 %v8582, %v8580
  %v9209 = vpack.c.b16 %v8583, %v8581
  %v9210 = vpack.c.b16 %v8586, %v8584
  %v9211 = vpack.c.b16 %v8587, %v8585
  %v9212 = vpack.c.b16 %v8590, %v8588
  %v9213 = vpack.c.b16 %v8591, %v8589
  %v9214 = vpack.c.b16 %v8594, %v8592
  %v9215 = vpack.c.b16 %v8595, %v8593
  %v9216 = vpack.c.b16 %v8598, %v8596
  %v9217 = vpack.c.b16 %v8599, %v8597
  %v9218 = vpack.c.b16 %v8602, %v8600
  %v9219 = vpack.c.b16 %v8603, %v8601
  %v9220 = vpack.c.b16 %v8606, %v8604
  %v9221 = vpack.c.b16 %v8607, %v8605
  %v9222 = vpack.c.b16 %v8610, %v8608
  %v9223 = vpack.c.b16 %v8611, %v8609
  %v9224 = vpack.c.b16 %v8614, %v8612
  %v9225 = vpack.c.b16 %v8615, %v8613
  %v9226 = vpack.c.b16 %v8618, %v8616
  %v9227 = vpack.c.b16 %v8619, %v8617
  %v9228 = vpack.c.b16 %v8622, %v8620
  %v9229 = vpack.c.b16 %v8623, %v8621
  %v9230 = vpack.c.b16 %v8626, %v8624
  %v9231 = vpack.c.b16 %v8627, %v8625
  %v9232 = vpack.c.b16 %v8630, %v8628
  %v9233 = vpack.c.b16 %v8631, %v8629
  %v9234 = vpack.c.b16 %v8634, %v8632
  %v9235 = vpack.c.b16 %v8635, %v8633
  %v9236 = vpack.c.b16 %v8638, %v8636
  %v9237 = vpack.c.b16 %v8639, %v8637
  %v9238 = vpack.c.b16 %v8642, %v8640
  %v9239 = vpack.c.b16 %v8643, %v8641
  %v9240 = vpack.c.b16 %v8646, %v8644
  %v9241 = vpack.c.b16 %v8647, %v8645
  %v9242 = vpack.c.b16 %v8650, %v8648
  %v9243 = vpack.c.b16 %v8651, %v8649
  %v9244 = vpack.c.b16 %v8654, %v8652
  %v9245 = vpack.c.b16 %v8655, %v8653
  %v9246 = vpack.c.b16 %v8658, %v8656
  %v9247 = vpack.c.b16 %v8659, %v8657
  %v9248 = vpack.c.b16 %v8662, %v8660
  %v9249 = vpack.c.b16 %v8663, %v8661
  %v9250 = vpack.c.b16 %v8666, %v8664
  %v9251 = vpack.c.b16 %v8667, %v8665
  %v9252 = vpack.c.b16 %v8670, %v8668
  %v9253 = vpack.c.b16 %v8671, %v8669
  %v9254 = vpack.c.b16 %v8674, %v8672
  %v9255 = vpack.c.b16 %v8675, %v8673
  %v9256 = vpack.c.b16 %v8678, %v8676
  %v9257 = vpack.c.b16 %v8679, %v8677
  %v9258 = vpack.c.b16 %v8682, %v8680
  %v9259 = vpack.c.b16 %v8683, %v8681
  %v9260 = vpack.c.b16 %v8686, %v8684
  %v9261 = vpack.c.b16 %v8687, %v8685
  %v9262 = vpack.c.b16 %v8690, %v8688
  %v9263 = vpack.c.b16 %v8691, %v8689
  %v9264 = vpack.c.b16 %v8694, %v8692
  %v9265 = vpack.c.b16 %v8695, %v8693
  %v9266 = vpack.c.b16 %v8698, %v8696
  %v9267 = vpack.c.b16 %v8699, %v8697
  %v9268 = vpack.c.b16 %v8702, %v8700
  %v9269 = vpack.c.b16 %v8703, %v8701
  %v9270 = vpack.c.b16 %v8706, %v8704
  %v9271 = vpack.c.b16 %v8707, %v8705
  %v9272 = vpack.c.b16 %v8710, %v8708
  %v9273 = vpack.c.b16 %v8711, %v8709
  %v9274 = vpack.c.b16 %v8714, %v8712
  %v9275 = vpack.c.b16 %v8715, %v8713
  %v9276 = vpack.c.b16 %v8718, %v8716
  %v9277 = vpack.c.b16 %v8719, %v8717
  %v9278 = vpack.c.b16 %v8722, %v8720
  %v9279 = vpack.c.b16 %v8723, %v8721
  %v9280 = vpack.c.b16 %v8726, %v8724
  %v9281 = vpack.c.b16 %v8727, %v8725
  %v9282 = vpack.c.b16 %v8730, %v8728
  %v9283 = vpack.c.b16 %v8731, %v8729
  %v9284 = vpack.c.b16 %v8734, %v8732
  %v9285 = vpack.c.b16 %v8735, %v8733
  %v9286 = vpack.c.b16 %v8738, %v8736
  %v9287 = vpack.c.b16 %v8739, %v8737
  %v9288 = vpack.c.b16 %v8742, %v8740
  %v9289 = vpack.c.b16 %v8743, %v8741
  %v9290 = vpack.c.b16 %v8746, %v8744
  %v9291 = vpack.c.b16 %v8747, %v8745
  %v9292 = vpack.c.b16 %v8750, %v8748
  %v9293 = vpack.c.b16 %v8751, %v8749
  %v9294 = vpack.c.b16 %v8754, %v8752
  %v9295 = vpack.c.b16 %v8755, %v8753
  %v9296 = vpack.c.b16 %v8758, %v8756
  %v9297 = vpack.c.b16 %v8759, %v8757
  %v9298 = vpack.c.b16 %v8762, %v8760
  %v9299 = vpack.c.b16 %v8763, %v8761
  %v9300 = vpack.c.b16 %v8766, %v8764
  %v9301 = vpack.c.b16 %v8767, %v8765
  %v9302 = vpack.c.b16 %v8770, %v8768
  %v9303 = vpack.c.b16 %v8771, %v8769
  %v9304 = vpack.c.b16 %v8774, %v8772
  %v9305 = vpack.c.b16 %v8775, %v8773
  %v9306 = vpack.c.b16 %v8778, %v8776
  %v9307 = vpack.c.b16 %v8779, %v8777
  %v9308 = vpack.c.b16 %v8782, %v8780
  %v9309 = vpack.c.b16 %v8783, %v8781
  %v9310 = vpack.c.b16 %v8786, %v8784
  %v9311 = vpack.c.b16 %v8787, %v8785
  %v9312 = vpack.c.b16 %v8790, %v8788
  %v9313 = vpack.c.b16 %v8791, %v8789
  %v9314 = vpack.c.b16 %v8794, %v8792
  %v9315 = vpack.c.b16 %v8795, %v8793
  %v9316 = vpack.c.b16 %v8798, %v8796
  %v9317 = vpack.c.b16 %v8799, %v8797
  %v9318 = vpack.c.b16 %v8802, %v8800
  %v9319 = vpack.c.b16 %v8803, %v8801
  %v9320 = vpack.c.b16 %v8806, %v8804
  %v9321 = vpack.c.b16 %v8807, %v8805
  %v9322 = vpack.c.b16 %v8810, %v8808
  %v9323 = vpack.c.b16 %v8811, %v8809
  %v9324 = vpack.c.b16 %v8814, %v8812
  %v9325 = vpack.c.b16 %v8815, %v8813
  %v9326 = vpack.c.b16 %v8818, %v8816
  %v9327 = vpack.c.b16 %v8819, %v8817
  %v9328 = vpack.c.b16 %v8822, %v8820
  %v9329 = vpack.c.b16 %v8823, %v8821
  %v9330 = vpack.c.b16 %v8826, %v8824
  %v9331 = vpack.c.b16 %v8827, %v8825
  %v9332 = vpack.c.b16 %v8830, %v8828
  %v9333 = vpack.c.b16 %v8831, %v8829
  %v9334 = vpack.c.b16 %v8834, %v8832
  %v9335 = vpack.c.b16 %v8835, %v8833
  %v9336 = vpack.c.b16 %v8838, %v8836
  %v9337 = vpack.c.b16 %v8839, %v8837
  %v9338 = vpack.c.b16 %v8842, %v8840
  %v9339 = vpack.c.b16 %v8843, %v8841
  %v9340 = vpack.c.b16 %v8846, %v8844
  %v9341 = vpack.c.b16 %v8847, %v8845
  %v9342 = vpack.c.b16 %v8850, %v8848
  %v9343 = vpack.c.b16 %v8851, %v8849
  %v9344 = vpack.c.b16 %v8854, %v8852
  %v9345 = vpack.c.b16 %v8855, %v8853
  %v9346 = vpack.c.b16 %v8858, %v8856
  %v9347 = vpack.c.b16 %v8859, %v8857
  %v9348 = vpack.c.b16 %v8862, %v8860
  %v9349 = vpack.c.b16 %v8863, %v8861
  %v9350 = vpack.c.b16 %v8866, %v8864
  %v9351 = vpack.c.b16 %v8867, %v8865
  %v9352 = vpack.c.b16 %v8870, %v8868
  %v9353 = vpack.c.b16 %v8871, %v8869
  %v9354 = vpack.c.b16 %v8874, %v8872
  %v9355 = vpack.c.b16 %v8875, %v8873
  %v9356 = vpack.c.b16 %v8878, %v8876
  %v9357 = vpack.c.b16 %v8879, %v8877
  %v9358 = vpack.c.b16 %v8882, %v8880
  %v9359 = vpack.c.b16 %v8883, %v8881
  %v9360 = vpack.c.b16 %v8886, %v8884
  %v9361 = vpack.c.b16 %v8887, %v8885
  %v9362 = vpack.c.b16 %v8890, %v8888
  %v9363 = vpack.c.b16 %v8891, %v8889
  %v9364 = vpack.c.b16 %v8894, %v8892
  %v9365 = vpack.c.b16 %v8895, %v8893
  %v9366 = vpack.c.b16 %v8898, %v8896
  %v9367 = vpack.c.b16 %v8899, %v8897
  %v9368 = vpack.c.b16 %v8902, %v8900
  %v9369 = vpack.c.b16 %v8903, %v8901
  %v9370 = vpack.c.b16 %v8906, %v8904
  %v9371 = vpack.c.b16 %v8907, %v8905
  %v9372 = vpack.c.b16 %v8910, %v8908
  %v9373 = vpack.c.b16 %v8911, %v8909
  %v9374 = vpack.c.b16 %v8914, %v8912
  %v9375 = vpack.c.b16 %v8915, %v8913
  %v9376 = vpack.c.b16 %v8918, %v8916
  %v9377 = vpack.c.b16 %v8919, %v8917
  %v9378 = vpack.c.b16 %v8922, %v8920
  %v9379 = vpack.c.b16 %v8923, %v8921
  %v9380 = vpack.c.b16 %v8926, %v8924
  %v9381 = vpack.c.b16 %v8927, %v8925
  %v9382 = vpack.c.b16 %v8930, %v8928
  %v9383 = vpack.c.b16 %v8931, %v8929
  %v9384 = vpack.c.b16 %v8934, %v8932
  %v9385 = vpack.c.b16 %v8935, %v8933
  %v9386 = vpack.c.b16 %v8938, %v8936
  %v9387 = vpack.c.b16 %v8939, %v8937
  %v9388 = vpack.c.b16 %v8942, %v8940
  %v9389 = vpack.c.b16 %v8943, %v8941
  %v9390 = vpack.c.b16 %v8946, %v8944
  %v9391 = vpack.c.b16 %v8947, %v8945
  %v9392 = vpack.c.b16 %v8950, %v8948
  %v9393 = vpack.c.b16 %v8951, %v8949
  %v9394 = vpack.c.b16 %v8954, %v8952
  %v9395 = vpack.c.b16 %v8955, %v8953
  %v9396 = vpack.c.b16 %v8958, %v8956
  %v9397 = vpack.c.b16 %v8959, %v8957
  %v9398 = vpack.c.b16 %v8962, %v8960
  %v9399 = vpack.c.b16 %v8963, %v8961
  %v9400 = vpack.c.b16 %v8966, %v8964
  %v9401 = vpack.c.b16 %v8967, %v8965
  %v9402 = vpack.c.b16 %v8970, %v8968
  %v9403 = vpack.c.b16 %v8971, %v8969
  %v9404 = vpack.c.b16 %v8974, %v8972
  %v9405 = vpack.c.b16 %v8975, %v8973
  %v9406 = vpack.c.b16 %v8978, %v8976
  %v9407 = vpack.c.b16 %v8979, %v8977
  %v9408 = vpack.c.b16 %v8982, %v8980
  %v9409 = vpack.c.b16 %v8983, %v8981
  %v9410 = vpack.c.b16 %v8986, %v8984
  %v9411 = vpack.c.b16 %v8987, %v8985
  %v9412 = vpack.c.b16 %v8990, %v8988
  %v9413 = vpack.c.b16 %v8991, %v8989
  %v9414 = vpack.c.b16 %v8994, %v8992
  %v9415 = vpack.c.b16 %v8995, %v8993
  %v9416 = vpack.c.b16 %v8998, %v8996
  %v9417 = vpack.c.b16 %v8999, %v8997
  %v9418 = vpack.c.b16 %v9002, %v9000
  %v9419 = vpack.c.b16 %v9003, %v9001
  %v9420 = vpack.c.b16 %v9006, %v9004
  %v9421 = vpack.c.b16 %v9007, %v9005
  %v9422 = vpack.c.b16 %v9010, %v9008
  %v9423 = vpack.c.b16 %v9011, %v9009
  %v9424 = vpack.c.b16 %v9014, %v9012
  %v9425 = vpack.c.b16 %v9015, %v9013
  %v9426 = vpack.c.b16 %v9018, %v9016
  %v9427 = vpack.c.b16 %v9019, %v9017
  %v9428 = vpack.c.b16 %v9022, %v9020
  %v9429 = vpack.c.b16 %v9023, %v9021
  %v9430 = vpack.c.b16 %v9026, %v9024
  %v9431 = vpack.c.b16 %v9027, %v9025
  %v9432 = vpack.c.b16 %v9030, %v9028
  %v9433 = vpack.c.b16 %v9031, %v9029
  %v9434 = vpack.c.b16 %v9034, %v9032
  %v9435 = vpack.c.b16 %v9035, %v9033
  %9836 = vmatprep.subr.bf16.mxu0 %v9037
  %9837 = vmatpush1.bf16.msra.mxu0 %v9036
  %9838 = vmatprep.subr.bf16.mxu0 %v9039
  %9839 = vmatpush1.bf16.msra.mxu0 %v9038
  %9840 = vmatprep.subr.bf16.mxu0 %v9041
  %9841 = vmatpush1.bf16.msra.mxu0 %v9040
  %9842 = vmatprep.subr.bf16.mxu0 %v9043
  %9843 = vmatpush1.bf16.msra.mxu0 %v9042
  %9844 = vmatprep.subr.bf16.mxu0 %v9045
  %9845 = vmatpush1.bf16.msra.mxu0 %v9044
  %9846 = vmatprep.subr.bf16.mxu0 %v9047
  %9847 = vmatpush1.bf16.msra.mxu0 %v9046
  %9848 = vmatprep.subr.bf16.mxu0 %v9049
  %9849 = vmatpush1.bf16.msra.mxu0 %v9048
  %9850 = vmatprep.subr.bf16.mxu0 %v9051
  %9851 = vmatpush1.bf16.msra.mxu0 %v9050
  %9852 = vmatprep.subr.bf16.mxu0 %v9053
  %9853 = vmatpush1.bf16.msra.mxu0 %v9052
  %9854 = vmatprep.subr.bf16.mxu0 %v9055
  %9855 = vmatpush1.bf16.msra.mxu0 %v9054
  %9856 = vmatprep.subr.bf16.mxu0 %v9057
  %9857 = vmatpush1.bf16.msra.mxu0 %v9056
  %9858 = vmatprep.subr.bf16.mxu0 %v9059
  %9859 = vmatpush1.bf16.msra.mxu0 %v9058
  %9860 = vmatprep.subr.bf16.mxu0 %v9061
  %9861 = vmatpush1.bf16.msra.mxu0 %v9060
  %9862 = vmatprep.subr.bf16.mxu0 %v9063
  %9863 = vmatpush1.bf16.msra.mxu0 %v9062
  %9864 = vmatprep.subr.bf16.mxu0 %v9065
  %9865 = vmatpush1.bf16.msra.mxu0 %v9064
  %9866 = vmatprep.subr.bf16.mxu0 %v9067
  %9867 = vmatpush1.bf16.msra.mxu0 %v9066
  %9868 = vmatprep.mubr.bf16.mxu0 %v6930
  %9869 = vmatmul.mubr.bf16.gmra.mrb[0].mxu0 %v6904
  %v9870 = vpop.f32.mrb[0].mxu0
  %v9871 = vadd.f32 %v7829, %v9870
  %v9872 = vpop.f32.mrb[0].mxu0
  %v9873 = vadd.f32 %v7833, %v9872
  %v9874 = vpop.f32.mrb[0].mxu0
  %v9875 = vadd.f32 %v7829, %v9874
  %v9876 = vpop.f32.mrb[0].mxu0
  %v9877 = vadd.f32 %v7833, %v9876
  %9878 = vmatprep.mubr.bf16.mxu0 %v6936
  %9879 = vmatmul.mubr.bf16.gmra.mrb[0].mxu0 %v6911
  %v9880 = vpop.f32.mrb[0].mxu0
  %v9881 = vadd.f32 %v7829, %v9880
  %v9882 = vpop.f32.mrb[0].mxu0
  %v9883 = vadd.f32 %v7833, %v9882
  %v9884 = vpop.f32.mrb[0].mxu0
  %v9885 = vadd.f32 %v7829, %v9884
  %v9886 = vpop.f32.mrb[0].mxu0
  %v9887 = vadd.f32 %v7833, %v9886
  %9888 = vmatprep.mubr.bf16.mxu0 %v6933
  %9889 = vmatmul.mubr.bf16.gmra.mrb[0].mxu0 %v6907
  %v9890 = vpop.f32.mrb[0].mxu0
  %v9891 = vadd.f32 %v7829, %v9890
  %v9892 = vpop.f32.mrb[0].mxu0
  %v9893 = vadd.f32 %v7833, %v9892
  %v9894 = vpop.f32.mrb[0].mxu0
  %v9895 = vadd.f32 %v7829, %v9894
  %v9896 = vpop.f32.mrb[0].mxu0
  %v9897 = vadd.f32 %v7833, %v9896
  %9898 = vmatprep.mubr.bf16.mxu0 %v6939
  %9899 = vmatmul.mubr.bf16.gmra.mrb[0].mxu0 %v6915
  %v9900 = vpop.f32.mrb[0].mxu0
  %v9901 = vadd.f32 %v7829, %v9900
  %v9902 = vpop.f32.mrb[0].mxu0
  %v9903 = vadd.f32 %v7833, %v9902
  %v9904 = vpop.f32.mrb[0].mxu0
  %v9905 = vadd.f32 %v7829, %v9904
  %v9906 = vpop.f32.mrb[0].mxu0
  %v9907 = vadd.f32 %v7833, %v9906
  %9908 = vdwg.mxu0
  %9909 = vmatprep.subr.bf16.mxu0 %v9069
  %9910 = vmatpush1.bf16.msra.mxu0 %v9068
  %9911 = vmatprep.subr.bf16.mxu0 %v9071
  %9912 = vmatpush1.bf16.msra.mxu0 %v9070
  %9913 = vmatprep.subr.bf16.mxu0 %v9073
  %9914 = vmatpush1.bf16.msra.mxu0 %v9072
  %9915 = vmatprep.subr.bf16.mxu0 %v9075
  %9916 = vmatpush1.bf16.msra.mxu0 %v9074
  %9917 = vmatprep.subr.bf16.mxu0 %v9077
  %9918 = vmatpush1.bf16.msra.mxu0 %v9076
  %9919 = vmatprep.subr.bf16.mxu0 %v9079
  %9920 = vmatpush1.bf16.msra.mxu0 %v9078
  %9921 = vmatprep.subr.bf16.mxu0 %v9081
  %9922 = vmatpush1.bf16.msra.mxu0 %v9080
  %9923 = vmatprep.subr.bf16.mxu0 %v9083
  %9924 = vmatpush1.bf16.msra.mxu0 %v9082
  %9925 = vmatprep.subr.bf16.mxu0 %v9085
  %9926 = vmatpush1.bf16.msra.mxu0 %v9084
  %9927 = vmatprep.subr.bf16.mxu0 %v9087
  %9928 = vmatpush1.bf16.msra.mxu0 %v9086
  %9929 = vmatprep.subr.bf16.mxu0 %v9089
  %9930 = vmatpush1.bf16.msra.mxu0 %v9088
  %9931 = vmatprep.subr.bf16.mxu0 %v9091
  %9932 = vmatpush1.bf16.msra.mxu0 %v9090
  %9933 = vmatprep.subr.bf16.mxu0 %v9093
  %9934 = vmatpush1.bf16.msra.mxu0 %v9092
  %9935 = vmatprep.subr.bf16.mxu0 %v9095
  %9936 = vmatpush1.bf16.msra.mxu0 %v9094
  %9937 = vmatprep.subr.bf16.mxu0 %v9097
  %9938 = vmatpush1.bf16.msra.mxu0 %v9096
  %9939 = vmatprep.subr.bf16.mxu0 %v9099
  %9940 = vmatpush1.bf16.msra.mxu0 %v9098
  %9941 = vmatprep.mubr.bf16.mxu0 %v7032
  %9942 = vmatmul.mubr.bf16.gmra.mrb[0].mxu0 %v6994
  %v9943 = vpop.f32.mrb[0].mxu0
  %v9944 = vadd.f32 %v9871, %v9943
  %v9945 = vpop.f32.mrb[0].mxu0
  %v9946 = vadd.f32 %v9873, %v9945
  %v9947 = vpop.f32.mrb[0].mxu0
  %v9948 = vadd.f32 %v9875, %v9947
  %v9949 = vpop.f32.mrb[0].mxu0
  %v9950 = vadd.f32 %v9877, %v9949
  %9951 = vmatprep.mubr.bf16.mxu0 %v7039
  %9952 = vmatmul.mubr.bf16.gmra.mrb[0].mxu0 %v7001
  %v9953 = vpop.f32.mrb[0].mxu0
  %v9954 = vadd.f32 %v9881, %v9953
  %v9955 = vpop.f32.mrb[0].mxu0
  %v9956 = vadd.f32 %v9883, %v9955
  %v9957 = vpop.f32.mrb[0].mxu0
  %v9958 = vadd.f32 %v9885, %v9957
  %v9959 = vpop.f32.mrb[0].mxu0
  %v9960 = vadd.f32 %v9887, %v9959
  %9961 = vmatprep.mubr.bf16.mxu0 %v7049
  %9962 = vmatmul.mubr.bf16.gmra.mrb[0].mxu0 %v7011
  %v9963 = vpop.f32.mrb[0].mxu0
  %v9964 = vadd.f32 %v9891, %v9963
  %v9965 = vpop.f32.mrb[0].mxu0
  %v9966 = vadd.f32 %v9893, %v9965
  %v9967 = vpop.f32.mrb[0].mxu0
  %v9968 = vadd.f32 %v9895, %v9967
  %v9969 = vpop.f32.mrb[0].mxu0
  %v9970 = vadd.f32 %v9897, %v9969
  %9971 = vmatprep.mubr.bf16.mxu0 %v7056
  %9972 = vmatmul.mubr.bf16.gmra.mrb[0].mxu0 %v7018
  %v9973 = vpop.f32.mrb[0].mxu0
  %v9974 = vadd.f32 %v9901, %v9973
  %v9975 = vpop.f32.mrb[0].mxu0
  %v9976 = vadd.f32 %v9903, %v9975
  %v9977 = vpop.f32.mrb[0].mxu0
  %v9978 = vadd.f32 %v9905, %v9977
  %v9979 = vpop.f32.mrb[0].mxu0
  %v9980 = vadd.f32 %v9907, %v9979
  %9981 = vdwg.mxu0
  %9982 = vmatprep.subr.bf16.mxu0 %v9101
  %9983 = vmatpush1.bf16.msra.mxu0 %v9100
  %9984 = vmatprep.subr.bf16.mxu0 %v9103
  %9985 = vmatpush1.bf16.msra.mxu0 %v9102
  %9986 = vmatprep.subr.bf16.mxu0 %v9105
  %9987 = vmatpush1.bf16.msra.mxu0 %v9104
  %9988 = vmatprep.subr.bf16.mxu0 %v9107
  %9989 = vmatpush1.bf16.msra.mxu0 %v9106
  %9990 = vmatprep.subr.bf16.mxu0 %v9109
  %9991 = vmatpush1.bf16.msra.mxu0 %v9108
  %9992 = vmatprep.subr.bf16.mxu0 %v9111
  %9993 = vmatpush1.bf16.msra.mxu0 %v9110
  %9994 = vmatprep.subr.bf16.mxu0 %v9113
  %9995 = vmatpush1.bf16.msra.mxu0 %v9112
  %9996 = vmatprep.subr.bf16.mxu0 %v9115
  %9997 = vmatpush1.bf16.msra.mxu0 %v9114
  %9998 = vmatprep.subr.bf16.mxu0 %v9117
  %9999 = vmatpush1.bf16.msra.mxu0 %v9116
  %10000 = vmatprep.subr.bf16.mxu0 %v9119
  %10001 = vmatpush1.bf16.msra.mxu0 %v9118
  %10002 = vmatprep.subr.bf16.mxu0 %v9121
  %10003 = vmatpush1.bf16.msra.mxu0 %v9120
  %10004 = vmatprep.subr.bf16.mxu0 %v9123
  %10005 = vmatpush1.bf16.msra.mxu0 %v9122
  %10006 = vmatprep.subr.bf16.mxu0 %v9125
  %10007 = vmatpush1.bf16.msra.mxu0 %v9124
  %10008 = vmatprep.subr.bf16.mxu0 %v9127
  %10009 = vmatpush1.bf16.msra.mxu0 %v9126
  %10010 = vmatprep.subr.bf16.mxu0 %v9129
  %10011 = vmatpush1.bf16.msra.mxu0 %v9128
  %10012 = vmatprep.subr.bf16.mxu0 %v9131
  %10013 = vmatpush1.bf16.msra.mxu0 %v9130
  %10014 = vmatprep.mubr.bf16.mxu0 %v6952
  %10015 = vmatmul.mubr.bf16.gmra.mrb[0].mxu0 %v7070
  %v10016 = vpop.f32.mrb[0].mxu0
  %v10017 = vadd.f32 %v9944, %v10016
  %v10018 = vpop.f32.mrb[0].mxu0
  %v10019 = vadd.f32 %v9946, %v10018
  %v10020 = vpop.f32.mrb[0].mxu0
  %v10021 = vadd.f32 %v9948, %v10020
  %v10022 = vpop.f32.mrb[0].mxu0
  %v10023 = vadd.f32 %v9950, %v10022
  %10024 = vmatprep.mubr.bf16.mxu0 %v6959
  %10025 = vmatmul.mubr.bf16.gmra.mrb[0].mxu0 %v7072
  %v10026 = vpop.f32.mrb[0].mxu0
  %v10027 = vadd.f32 %v9954, %v10026
  %v10028 = vpop.f32.mrb[0].mxu0
  %v10029 = vadd.f32 %v9956, %v10028
  %v10030 = vpop.f32.mrb[0].mxu0
  %v10031 = vadd.f32 %v9958, %v10030
  %v10032 = vpop.f32.mrb[0].mxu0
  %v10033 = vadd.f32 %v9960, %v10032
  %10034 = vmatprep.mubr.bf16.mxu0 %v6955
  %10035 = vmatmul.mubr.bf16.gmra.mrb[0].mxu0 %v7075
  %v10036 = vpop.f32.mrb[0].mxu0
  %v10037 = vadd.f32 %v9964, %v10036
  %v10038 = vpop.f32.mrb[0].mxu0
  %v10039 = vadd.f32 %v9966, %v10038
  %v10040 = vpop.f32.mrb[0].mxu0
  %v10041 = vadd.f32 %v9968, %v10040
  %v10042 = vpop.f32.mrb[0].mxu0
  %v10043 = vadd.f32 %v9970, %v10042
  %10044 = vmatprep.mubr.bf16.mxu0 %v6963
  %10045 = vmatmul.mubr.bf16.gmra.mrb[0].mxu0 %v7077
  %v10046 = vpop.f32.mrb[0].mxu0
  %v10047 = vadd.f32 %v9974, %v10046
  %v10048 = vpop.f32.mrb[0].mxu0
  %v10049 = vadd.f32 %v9976, %v10048
  %v10050 = vpop.f32.mrb[0].mxu0
  %v10051 = vadd.f32 %v9978, %v10050
  %v10052 = vpop.f32.mrb[0].mxu0
  %v10053 = vadd.f32 %v9980, %v10052
  %10054 = vdwg.mxu0
  %10055 = vmatprep.subr.bf16.mxu0 %v9133
  %10056 = vmatpush1.bf16.msra.mxu0 %v9132
  %10057 = vmatprep.subr.bf16.mxu0 %v9135
  %10058 = vmatpush1.bf16.msra.mxu0 %v9134
  %10059 = vmatprep.subr.bf16.mxu0 %v9137
  %10060 = vmatpush1.bf16.msra.mxu0 %v9136
  %10061 = vmatprep.subr.bf16.mxu0 %v9139
  %10062 = vmatpush1.bf16.msra.mxu0 %v9138
  %10063 = vmatprep.subr.bf16.mxu0 %v9141
  %10064 = vmatpush1.bf16.msra.mxu0 %v9140
  %10065 = vmatprep.subr.bf16.mxu0 %v9143
  %10066 = vmatpush1.bf16.msra.mxu0 %v9142
  %10067 = vmatprep.subr.bf16.mxu0 %v9145
  %10068 = vmatpush1.bf16.msra.mxu0 %v9144
  %10069 = vmatprep.subr.bf16.mxu0 %v9147
  %10070 = vmatpush1.bf16.msra.mxu0 %v9146
  %10071 = vmatprep.subr.bf16.mxu0 %v9149
  %10072 = vmatpush1.bf16.msra.mxu0 %v9148
  %10073 = vmatprep.subr.bf16.mxu0 %v9151
  %10074 = vmatpush1.bf16.msra.mxu0 %v9150
  %10075 = vmatprep.subr.bf16.mxu0 %v9153
  %10076 = vmatpush1.bf16.msra.mxu0 %v9152
  %10077 = vmatprep.subr.bf16.mxu0 %v9155
  %10078 = vmatpush1.bf16.msra.mxu0 %v9154
  %10079 = vmatprep.subr.bf16.mxu0 %v9157
  %10080 = vmatpush1.bf16.msra.mxu0 %v9156
  %10081 = vmatprep.subr.bf16.mxu0 %v9159
  %10082 = vmatpush1.bf16.msra.mxu0 %v9158
  %10083 = vmatprep.subr.bf16.mxu0 %v9161
  %10084 = vmatpush1.bf16.msra.mxu0 %v9160
  %10085 = vmatprep.subr.bf16.mxu0 %v9163
  %10086 = vmatpush1.bf16.msra.mxu0 %v9162
  %10087 = vmatprep.mubr.bf16.mxu0 %v7091
  %10088 = vmatmul.mubr.bf16.gmra.mrb[0].mxu0 %v6974
  %v10089 = vpop.f32.mrb[0].mxu0
  %v10090 = vadd.f32 %v10017, %v10089
  %v10091 = vpop.f32.mrb[0].mxu0
  %v10092 = vadd.f32 %v10019, %v10091
  %v10093 = vpop.f32.mrb[0].mxu0
  %v10094 = vadd.f32 %v10021, %v10093
  %v10095 = vpop.f32.mrb[0].mxu0
  %v10096 = vadd.f32 %v10023, %v10095
  %10097 = vmatprep.mubr.bf16.mxu0 %v7098
  %10098 = vmatmul.mubr.bf16.gmra.mrb[0].mxu0 %v6980
  %v10099 = vpop.f32.mrb[0].mxu0
  %v10100 = vadd.f32 %v10027, %v10099
  %v10101 = vpop.f32.mrb[0].mxu0
  %v10102 = vadd.f32 %v10029, %v10101
  %v10103 = vpop.f32.mrb[0].mxu0
  %v10104 = vadd.f32 %v10031, %v10103
  %v10105 = vpop.f32.mrb[0].mxu0
  %v10106 = vadd.f32 %v10033, %v10105
  %10107 = vmatprep.mubr.bf16.mxu0 %v7108
  %10108 = vmatmul.mubr.bf16.gmra.mrb[0].mxu0 %v6977
  %v10109 = vpop.f32.mrb[0].mxu0
  %v10110 = vadd.f32 %v10037, %v10109
  %v10111 = vpop.f32.mrb[0].mxu0
  %v10112 = vadd.f32 %v10039, %v10111
  %v10113 = vpop.f32.mrb[0].mxu0
  %v10114 = vadd.f32 %v10041, %v10113
  %v10115 = vpop.f32.mrb[0].mxu0
  %v10116 = vadd.f32 %v10043, %v10115
  %10117 = vmatprep.mubr.bf16.mxu0 %v7112
  %10118 = vmatmul.mubr.bf16.gmra.mrb[0].mxu0 %v6983
  %v10119 = vpop.f32.mrb[0].mxu0
  %v10120 = vadd.f32 %v10047, %v10119
  %v10121 = vpop.f32.mrb[0].mxu0
  %v10122 = vadd.f32 %v10049, %v10121
  %v10123 = vpop.f32.mrb[0].mxu0
  %v10124 = vadd.f32 %v10051, %v10123
  %v10125 = vpop.f32.mrb[0].mxu0
  %v10126 = vadd.f32 %v10053, %v10125
  %10127 = vdwg.mxu0
  %10128 = vmatprep.subr.bf16.mxu0 %v9165
  %10129 = vmatpush1.bf16.msra.mxu0 %v9164
  %10130 = vmatprep.subr.bf16.mxu0 %v9167
  %10131 = vmatpush1.bf16.msra.mxu0 %v9166
  %10132 = vmatprep.subr.bf16.mxu0 %v9169
  %10133 = vmatpush1.bf16.msra.mxu0 %v9168
  %10134 = vmatprep.subr.bf16.mxu0 %v9171
  %10135 = vmatpush1.bf16.msra.mxu0 %v9170
  %10136 = vmatprep.subr.bf16.mxu0 %v9173
  %10137 = vmatpush1.bf16.msra.mxu0 %v9172
  %10138 = vmatprep.subr.bf16.mxu0 %v9175
  %10139 = vmatpush1.bf16.msra.mxu0 %v9174
  %10140 = vmatprep.subr.bf16.mxu0 %v9177
  %10141 = vmatpush1.bf16.msra.mxu0 %v9176
  %10142 = vmatprep.subr.bf16.mxu0 %v9179
  %10143 = vmatpush1.bf16.msra.mxu0 %v9178
  %10144 = vmatprep.subr.bf16.mxu0 %v9181
  %10145 = vmatpush1.bf16.msra.mxu0 %v9180
  %10146 = vmatprep.subr.bf16.mxu0 %v9183
  %10147 = vmatpush1.bf16.msra.mxu0 %v9182
  %10148 = vmatprep.subr.bf16.mxu0 %v9185
  %10149 = vmatpush1.bf16.msra.mxu0 %v9184
  %10150 = vmatprep.subr.bf16.mxu0 %v9187
  %10151 = vmatpush1.bf16.msra.mxu0 %v9186
  %10152 = vmatprep.subr.bf16.mxu0 %v9189
  %10153 = vmatpush1.bf16.msra.mxu0 %v9188
  %10154 = vmatprep.subr.bf16.mxu0 %v9191
  %10155 = vmatpush1.bf16.msra.mxu0 %v9190
  %10156 = vmatprep.subr.bf16.mxu0 %v9193
  %10157 = vmatpush1.bf16.msra.mxu0 %v9192
  %10158 = vmatprep.subr.bf16.mxu0 %v9195
  %10159 = vmatpush1.bf16.msra.mxu0 %v9194
  %10160 = vmatprep.mubr.bf16.mxu0 %v7156
  %10161 = vmatmul.mubr.bf16.gmra.mrb[0].mxu0 %v7126
  %v10162 = vpop.f32.mrb[0].mxu0
  %v10163 = vadd.f32 %v10090, %v10162
  %v10164 = vpop.f32.mrb[0].mxu0
  %v10165 = vadd.f32 %v10092, %v10164
  %v10166 = vpop.f32.mrb[0].mxu0
  %v10167 = vadd.f32 %v10094, %v10166
  %v10168 = vpop.f32.mrb[0].mxu0
  %v10169 = vadd.f32 %v10096, %v10168
  %10170 = vmatprep.mubr.bf16.mxu0 %v7158
  %10171 = vmatmul.mubr.bf16.gmra.mrb[0].mxu0 %v7130
  %v10172 = vpop.f32.mrb[0].mxu0
  %v10173 = vadd.f32 %v10100, %v10172
  %v10174 = vpop.f32.mrb[0].mxu0
  %v10175 = vadd.f32 %v10102, %v10174
  %v10176 = vpop.f32.mrb[0].mxu0
  %v10177 = vadd.f32 %v10104, %v10176
  %v10178 = vpop.f32.mrb[0].mxu0
  %v10179 = vadd.f32 %v10106, %v10178
  %10180 = vmatprep.mubr.bf16.mxu0 %v7161
  %10181 = vmatmul.mubr.bf16.gmra.mrb[0].mxu0 %v7140
  %v10182 = vpop.f32.mrb[0].mxu0
  %v10183 = vadd.f32 %v10110, %v10182
  %v10184 = vpop.f32.mrb[0].mxu0
  %v10185 = vadd.f32 %v10112, %v10184
  %v10186 = vpop.f32.mrb[0].mxu0
  %v10187 = vadd.f32 %v10114, %v10186
  %v10188 = vpop.f32.mrb[0].mxu0
  %v10189 = vadd.f32 %v10116, %v10188
  %10190 = vmatprep.mubr.bf16.mxu0 %v7162
  %10191 = vmatmul.mubr.bf16.gmra.mrb[0].mxu0 %v7144
  %v10192 = vpop.f32.mrb[0].mxu0
  %v10193 = vadd.f32 %v10120, %v10192
  %v10194 = vpop.f32.mrb[0].mxu0
  %v10195 = vadd.f32 %v10122, %v10194
  %v10196 = vpop.f32.mrb[0].mxu0
  %v10197 = vadd.f32 %v10124, %v10196
  %v10198 = vpop.f32.mrb[0].mxu0
  %v10199 = vadd.f32 %v10126, %v10198
  %10200 = vdwg.mxu0
  %10201 = vmatprep.subr.bf16.mxu0 %v9197
  %10202 = vmatpush1.bf16.msra.mxu0 %v9196
  %10203 = vmatprep.subr.bf16.mxu0 %v9199
  %10204 = vmatpush1.bf16.msra.mxu0 %v9198
  %10205 = vmatprep.subr.bf16.mxu0 %v9201
  %10206 = vmatpush1.bf16.msra.mxu0 %v9200
  %10207 = vmatprep.subr.bf16.mxu0 %v9203
  %10208 = vmatpush1.bf16.msra.mxu0 %v9202
  %10209 = vmatprep.subr.bf16.mxu0 %v9205
  %10210 = vmatpush1.bf16.msra.mxu0 %v9204
  %10211 = vmatprep.subr.bf16.mxu0 %v9207
  %10212 = vmatpush1.bf16.msra.mxu0 %v9206
  %10213 = vmatprep.subr.bf16.mxu0 %v9209
  %10214 = vmatpush1.bf16.msra.mxu0 %v9208
  %10215 = vmatprep.subr.bf16.mxu0 %v9211
  %10216 = vmatpush1.bf16.msra.mxu0 %v9210
  %10217 = vmatprep.subr.bf16.mxu0 %v9213
  %10218 = vmatpush1.bf16.msra.mxu0 %v9212
  %10219 = vmatprep.subr.bf16.mxu0 %v9215
  %10220 = vmatpush1.bf16.msra.mxu0 %v9214
  %10221 = vmatprep.subr.bf16.mxu0 %v9217
  %10222 = vmatpush1.bf16.msra.mxu0 %v9216
  %10223 = vmatprep.subr.bf16.mxu0 %v9219
  %10224 = vmatpush1.bf16.msra.mxu0 %v9218
  %10225 = vmatprep.subr.bf16.mxu0 %v9221
  %10226 = vmatpush1.bf16.msra.mxu0 %v9220
  %10227 = vmatprep.subr.bf16.mxu0 %v9223
  %10228 = vmatpush1.bf16.msra.mxu0 %v9222
  %10229 = vmatprep.subr.bf16.mxu0 %v9225
  %10230 = vmatpush1.bf16.msra.mxu0 %v9224
  %10231 = vmatprep.subr.bf16.mxu0 %v9227
  %10232 = vmatpush1.bf16.msra.mxu0 %v9226
  %10233 = vmatprep.mubr.bf16.mxu0 %v7189
  %10234 = vmatmul.mubr.bf16.gmra.mrb[0].mxu0 %v7169
  %v10235 = vpop.f32.mrb[0].mxu0
  %v10236 = vadd.f32 %v10163, %v10235
  %v10237 = vpop.f32.mrb[0].mxu0
  %v10238 = vadd.f32 %v10165, %v10237
  %v10239 = vpop.f32.mrb[0].mxu0
  %v10240 = vadd.f32 %v10167, %v10239
  %v10241 = vpop.f32.mrb[0].mxu0
  %v10242 = vadd.f32 %v10169, %v10241
  %10243 = vmatprep.mubr.bf16.mxu0 %v7191
  %10244 = vmatmul.mubr.bf16.gmra.mrb[0].mxu0 %v7171
  %v10245 = vpop.f32.mrb[0].mxu0
  %v10246 = vadd.f32 %v10173, %v10245
  %v10247 = vpop.f32.mrb[0].mxu0
  %v10248 = vadd.f32 %v10175, %v10247
  %v10249 = vpop.f32.mrb[0].mxu0
  %v10250 = vadd.f32 %v10177, %v10249
  %v10251 = vpop.f32.mrb[0].mxu0
  %v10252 = vadd.f32 %v10179, %v10251
  %10253 = vmatprep.mubr.bf16.mxu0 %v7194
  %10254 = vmatmul.mubr.bf16.gmra.mrb[0].mxu0 %v7174
  %v10255 = vpop.f32.mrb[0].mxu0
  %v10256 = vadd.f32 %v10183, %v10255
  %v10257 = vpop.f32.mrb[0].mxu0
  %v10258 = vadd.f32 %v10185, %v10257
  %v10259 = vpop.f32.mrb[0].mxu0
  %v10260 = vadd.f32 %v10187, %v10259
  %v10261 = vpop.f32.mrb[0].mxu0
  %v10262 = vadd.f32 %v10189, %v10261
  %10263 = vmatprep.mubr.bf16.mxu0 %v7196
  %10264 = vmatmul.mubr.bf16.gmra.mrb[0].mxu0 %v7176
  %v10265 = vpop.f32.mrb[0].mxu0
  %v10266 = vadd.f32 %v10193, %v10265
  %v10267 = vpop.f32.mrb[0].mxu0
  %v10268 = vadd.f32 %v10195, %v10267
  %v10269 = vpop.f32.mrb[0].mxu0
  %v10270 = vadd.f32 %v10197, %v10269
  %v10271 = vpop.f32.mrb[0].mxu0
  %v10272 = vadd.f32 %v10199, %v10271
  %10273 = vdwg.mxu0
  %10274 = vmatprep.subr.bf16.mxu0 %v9229
  %10275 = vmatpush1.bf16.msra.mxu0 %v9228
  %10276 = vmatprep.subr.bf16.mxu0 %v9231
  %10277 = vmatpush1.bf16.msra.mxu0 %v9230
  %10278 = vmatprep.subr.bf16.mxu0 %v9233
  %10279 = vmatpush1.bf16.msra.mxu0 %v9232
  %10280 = vmatprep.subr.bf16.mxu0 %v9235
  %10281 = vmatpush1.bf16.msra.mxu0 %v9234
  %10282 = vmatprep.subr.bf16.mxu0 %v9237
  %10283 = vmatpush1.bf16.msra.mxu0 %v9236
  %10284 = vmatprep.subr.bf16.mxu0 %v9239
  %10285 = vmatpush1.bf16.msra.mxu0 %v9238
  %10286 = vmatprep.subr.bf16.mxu0 %v9241
  %10287 = vmatpush1.bf16.msra.mxu0 %v9240
  %10288 = vmatprep.subr.bf16.mxu0 %v9243
  %10289 = vmatpush1.bf16.msra.mxu0 %v9242
  %10290 = vmatprep.subr.bf16.mxu0 %v9245
  %10291 = vmatpush1.bf16.msra.mxu0 %v9244
  %10292 = vmatprep.subr.bf16.mxu0 %v9247
  %10293 = vmatpush1.bf16.msra.mxu0 %v9246
  %10294 = vmatprep.subr.bf16.mxu0 %v9249
  %10295 = vmatpush1.bf16.msra.mxu0 %v9248
  %10296 = vmatprep.subr.bf16.mxu0 %v9251
  %10297 = vmatpush1.bf16.msra.mxu0 %v9250
  %10298 = vmatprep.subr.bf16.mxu0 %v9253
  %10299 = vmatpush1.bf16.msra.mxu0 %v9252
  %10300 = vmatprep.subr.bf16.mxu0 %v9255
  %10301 = vmatpush1.bf16.msra.mxu0 %v9254
  %10302 = vmatprep.subr.bf16.mxu0 %v9257
  %10303 = vmatpush1.bf16.msra.mxu0 %v9256
  %10304 = vmatprep.subr.bf16.mxu0 %v9259
  %10305 = vmatpush1.bf16.msra.mxu0 %v9258
  %10306 = vmatprep.mubr.bf16.mxu0 %v7237
  %10307 = vmatmul.mubr.bf16.gmra.mrb[0].mxu0 %v7207
  %v10308 = vpop.f32.mrb[0].mxu0
  %v10309 = vadd.f32 %v10236, %v10308
  %v10310 = vpop.f32.mrb[0].mxu0
  %v10311 = vadd.f32 %v10238, %v10310
  %v10312 = vpop.f32.mrb[0].mxu0
  %v10313 = vadd.f32 %v10240, %v10312
  %v10314 = vpop.f32.mrb[0].mxu0
  %v10315 = vadd.f32 %v10242, %v10314
  %10316 = vmatprep.mubr.bf16.mxu0 %v7243
  %10317 = vmatmul.mubr.bf16.gmra.mrb[0].mxu0 %v7213
  %v10318 = vpop.f32.mrb[0].mxu0
  %v10319 = vadd.f32 %v10246, %v10318
  %v10320 = vpop.f32.mrb[0].mxu0
  %v10321 = vadd.f32 %v10248, %v10320
  %v10322 = vpop.f32.mrb[0].mxu0
  %v10323 = vadd.f32 %v10250, %v10322
  %v10324 = vpop.f32.mrb[0].mxu0
  %v10325 = vadd.f32 %v10252, %v10324
  %10326 = vmatprep.mubr.bf16.mxu0 %v7250
  %10327 = vmatmul.mubr.bf16.gmra.mrb[0].mxu0 %v7220
  %v10328 = vpop.f32.mrb[0].mxu0
  %v10329 = vadd.f32 %v10256, %v10328
  %v10330 = vpop.f32.mrb[0].mxu0
  %v10331 = vadd.f32 %v10258, %v10330
  %v10332 = vpop.f32.mrb[0].mxu0
  %v10333 = vadd.f32 %v10260, %v10332
  %v10334 = vpop.f32.mrb[0].mxu0
  %v10335 = vadd.f32 %v10262, %v10334
  %10336 = vmatprep.mubr.bf16.mxu0 %v7256
  %10337 = vmatmul.mubr.bf16.gmra.mrb[0].mxu0 %v7226
  %v10338 = vpop.f32.mrb[0].mxu0
  %v10339 = vadd.f32 %v10266, %v10338
  %v10340 = vpop.f32.mrb[0].mxu0
  %v10341 = vadd.f32 %v10268, %v10340
  %v10342 = vpop.f32.mrb[0].mxu0
  %v10343 = vadd.f32 %v10270, %v10342
  %v10344 = vpop.f32.mrb[0].mxu0
  %v10345 = vadd.f32 %v10272, %v10344
  %10346 = vdwg.mxu0
  %10347 = vmatprep.subr.bf16.mxu0 %v9261
  %10348 = vmatpush1.bf16.msra.mxu0 %v9260
  %10349 = vmatprep.subr.bf16.mxu0 %v9263
  %10350 = vmatpush1.bf16.msra.mxu0 %v9262
  %10351 = vmatprep.subr.bf16.mxu0 %v9265
  %10352 = vmatpush1.bf16.msra.mxu0 %v9264
  %10353 = vmatprep.subr.bf16.mxu0 %v9267
  %10354 = vmatpush1.bf16.msra.mxu0 %v9266
  %10355 = vmatprep.subr.bf16.mxu0 %v9269
  %10356 = vmatpush1.bf16.msra.mxu0 %v9268
  %10357 = vmatprep.subr.bf16.mxu0 %v9271
  %10358 = vmatpush1.bf16.msra.mxu0 %v9270
  %10359 = vmatprep.subr.bf16.mxu0 %v9273
  %10360 = vmatpush1.bf16.msra.mxu0 %v9272
  %10361 = vmatprep.subr.bf16.mxu0 %v9275
  %10362 = vmatpush1.bf16.msra.mxu0 %v9274
  %10363 = vmatprep.subr.bf16.mxu0 %v9277
  %10364 = vmatpush1.bf16.msra.mxu0 %v9276
  %10365 = vmatprep.subr.bf16.mxu0 %v9279
  %10366 = vmatpush1.bf16.msra.mxu0 %v9278
  %10367 = vmatprep.subr.bf16.mxu0 %v9281
  %10368 = vmatpush1.bf16.msra.mxu0 %v9280
  %10369 = vmatprep.subr.bf16.mxu0 %v9283
  %10370 = vmatpush1.bf16.msra.mxu0 %v9282
  %10371 = vmatprep.subr.bf16.mxu0 %v9285
  %10372 = vmatpush1.bf16.msra.mxu0 %v9284
  %10373 = vmatprep.subr.bf16.mxu0 %v9287
  %10374 = vmatpush1.bf16.msra.mxu0 %v9286
  %10375 = vmatprep.subr.bf16.mxu0 %v9289
  %10376 = vmatpush1.bf16.msra.mxu0 %v9288
  %10377 = vmatprep.subr.bf16.mxu0 %v9291
  %10378 = vmatpush1.bf16.msra.mxu0 %v9290
  %10379 = vmatprep.mubr.bf16.mxu0 %v7277
  %10380 = vmatmul.mubr.bf16.gmra.mrb[0].mxu0 %v7263
  %v10381 = vpop.f32.mrb[0].mxu0
  %v10382 = vadd.f32 %v10309, %v10381
  %v10383 = vpop.f32.mrb[0].mxu0
  %v10384 = vadd.f32 %v10311, %v10383
  %v10385 = vpop.f32.mrb[0].mxu0
  %v10386 = vadd.f32 %v10313, %v10385
  %v10387 = vpop.f32.mrb[0].mxu0
  %v10388 = vadd.f32 %v10315, %v10387
  %10389 = vmatprep.mubr.bf16.mxu0 %v7279
  %10390 = vmatmul.mubr.bf16.gmra.mrb[0].mxu0 %v7265
  %v10391 = vpop.f32.mrb[0].mxu0
  %v10392 = vadd.f32 %v10319, %v10391
  %v10393 = vpop.f32.mrb[0].mxu0
  %v10394 = vadd.f32 %v10321, %v10393
  %v10395 = vpop.f32.mrb[0].mxu0
  %v10396 = vadd.f32 %v10323, %v10395
  %v10397 = vpop.f32.mrb[0].mxu0
  %v10398 = vadd.f32 %v10325, %v10397
  %10399 = vmatprep.mubr.bf16.mxu0 %v7282
  %10400 = vmatmul.mubr.bf16.gmra.mrb[0].mxu0 %v7268
  %v10401 = vpop.f32.mrb[0].mxu0
  %v10402 = vadd.f32 %v10329, %v10401
  %v10403 = vpop.f32.mrb[0].mxu0
  %v10404 = vadd.f32 %v10331, %v10403
  %v10405 = vpop.f32.mrb[0].mxu0
  %v10406 = vadd.f32 %v10333, %v10405
  %v10407 = vpop.f32.mrb[0].mxu0
  %v10408 = vadd.f32 %v10335, %v10407
  %10409 = vmatprep.mubr.bf16.mxu0 %v7283
  %10410 = vmatmul.mubr.bf16.gmra.mrb[0].mxu0 %v7270
  %v10411 = vpop.f32.mrb[0].mxu0
  %v10412 = vadd.f32 %v10339, %v10411
  %v10413 = vpop.f32.mrb[0].mxu0
  %v10414 = vadd.f32 %v10341, %v10413
  %v10415 = vpop.f32.mrb[0].mxu0
  %v10416 = vadd.f32 %v10343, %v10415
  %v10417 = vpop.f32.mrb[0].mxu0
  %v10418 = vadd.f32 %v10345, %v10417
  %10419 = vdwg.mxu0
  %10420 = vmatprep.subr.bf16.mxu0 %v9293
  %10421 = vmatpush1.bf16.msra.mxu0 %v9292
  %10422 = vmatprep.subr.bf16.mxu0 %v9295
  %10423 = vmatpush1.bf16.msra.mxu0 %v9294
  %10424 = vmatprep.subr.bf16.mxu0 %v9297
  %10425 = vmatpush1.bf16.msra.mxu0 %v9296
  %10426 = vmatprep.subr.bf16.mxu0 %v9299
  %10427 = vmatpush1.bf16.msra.mxu0 %v9298
  %10428 = vmatprep.subr.bf16.mxu0 %v9301
  %10429 = vmatpush1.bf16.msra.mxu0 %v9300
  %10430 = vmatprep.subr.bf16.mxu0 %v9303
  %10431 = vmatpush1.bf16.msra.mxu0 %v9302
  %10432 = vmatprep.subr.bf16.mxu0 %v9305
  %10433 = vmatpush1.bf16.msra.mxu0 %v9304
  %10434 = vmatprep.subr.bf16.mxu0 %v9307
  %10435 = vmatpush1.bf16.msra.mxu0 %v9306
  %10436 = vmatprep.subr.bf16.mxu0 %v9309
  %10437 = vmatpush1.bf16.msra.mxu0 %v9308
  %10438 = vmatprep.subr.bf16.mxu0 %v9311
  %10439 = vmatpush1.bf16.msra.mxu0 %v9310
  %10440 = vmatprep.subr.bf16.mxu0 %v9313
  %10441 = vmatpush1.bf16.msra.mxu0 %v9312
  %10442 = vmatprep.subr.bf16.mxu0 %v9315
  %10443 = vmatpush1.bf16.msra.mxu0 %v9314
  %10444 = vmatprep.subr.bf16.mxu0 %v9317
  %10445 = vmatpush1.bf16.msra.mxu0 %v9316
  %10446 = vmatprep.subr.bf16.mxu0 %v9319
  %10447 = vmatpush1.bf16.msra.mxu0 %v9318
  %10448 = vmatprep.subr.bf16.mxu0 %v9321
  %10449 = vmatpush1.bf16.msra.mxu0 %v9320
  %10450 = vmatprep.subr.bf16.mxu0 %v9323
  %10451 = vmatpush1.bf16.msra.mxu0 %v9322
  %10452 = vmatprep.mubr.bf16.mxu0 %v7309
  %10453 = vmatmul.mubr.bf16.gmra.mrb[0].mxu0 %v7306
  %v10454 = vpop.f32.mrb[0].mxu0
  %v10455 = vadd.f32 %v10382, %v10454
  %v10456 = vpop.f32.mrb[0].mxu0
  %v10457 = vadd.f32 %v10384, %v10456
  %v10458 = vpop.f32.mrb[0].mxu0
  %v10459 = vadd.f32 %v10386, %v10458
  %v10460 = vpop.f32.mrb[0].mxu0
  %v10461 = vadd.f32 %v10388, %v10460
  %10462 = vmatprep.mubr.bf16.mxu0 %v7333
  %10463 = vmatmul.mubr.bf16.gmra.mrb[0].mxu0 %v7331
  %v10464 = vpop.f32.mrb[0].mxu0
  %v10465 = vadd.f32 %v10392, %v10464
  %v10466 = vpop.f32.mrb[0].mxu0
  %v10467 = vadd.f32 %v10394, %v10466
  %v10468 = vpop.f32.mrb[0].mxu0
  %v10469 = vadd.f32 %v10396, %v10468
  %v10470 = vpop.f32.mrb[0].mxu0
  %v10471 = vadd.f32 %v10398, %v10470
  %10472 = vmatprep.mubr.bf16.mxu0 %v7352
  %10473 = vmatmul.mubr.bf16.gmra.mrb[0].mxu0 %v7349
  %v10474 = vpop.f32.mrb[0].mxu0
  %v10475 = vadd.f32 %v10402, %v10474
  %v10476 = vpop.f32.mrb[0].mxu0
  %v10477 = vadd.f32 %v10404, %v10476
  %v10478 = vpop.f32.mrb[0].mxu0
  %v10479 = vadd.f32 %v10406, %v10478
  %v10480 = vpop.f32.mrb[0].mxu0
  %v10481 = vadd.f32 %v10408, %v10480
  %10482 = vmatprep.mubr.bf16.mxu0 %v7375
  %10483 = vmatmul.mubr.bf16.gmra.mrb[0].mxu0 %v7374
  %v10484 = vpop.f32.mrb[0].mxu0
  %v10485 = vadd.f32 %v10412, %v10484
  %v10486 = vpop.f32.mrb[0].mxu0
  %v10487 = vadd.f32 %v10414, %v10486
  %v10488 = vpop.f32.mrb[0].mxu0
  %v10489 = vadd.f32 %v10416, %v10488
  %v10490 = vpop.f32.mrb[0].mxu0
  %v10491 = vadd.f32 %v10418, %v10490
  %10492 = vdwg.mxu0
  %10493 = vmatprep.subr.bf16.mxu0 %v9325
  %10494 = vmatpush1.bf16.msra.mxu0 %v9324
  %10495 = vmatprep.subr.bf16.mxu0 %v9327
  %10496 = vmatpush1.bf16.msra.mxu0 %v9326
  %10497 = vmatprep.subr.bf16.mxu0 %v9329
  %10498 = vmatpush1.bf16.msra.mxu0 %v9328
  %10499 = vmatprep.subr.bf16.mxu0 %v9331
  %10500 = vmatpush1.bf16.msra.mxu0 %v9330
  %10501 = vmatprep.subr.bf16.mxu0 %v9333
  %10502 = vmatpush1.bf16.msra.mxu0 %v9332
  %10503 = vmatprep.subr.bf16.mxu0 %v9335
  %10504 = vmatpush1.bf16.msra.mxu0 %v9334
  %10505 = vmatprep.subr.bf16.mxu0 %v9337
  %10506 = vmatpush1.bf16.msra.mxu0 %v9336
  %10507 = vmatprep.subr.bf16.mxu0 %v9339
  %10508 = vmatpush1.bf16.msra.mxu0 %v9338
  %10509 = vmatprep.subr.bf16.mxu0 %v9341
  %10510 = vmatpush1.bf16.msra.mxu0 %v9340
  %10511 = vmatprep.subr.bf16.mxu0 %v9343
  %10512 = vmatpush1.bf16.msra.mxu0 %v9342
  %10513 = vmatprep.subr.bf16.mxu0 %v9345
  %10514 = vmatpush1.bf16.msra.mxu0 %v9344
  %10515 = vmatprep.subr.bf16.mxu0 %v9347
  %10516 = vmatpush1.bf16.msra.mxu0 %v9346
  %10517 = vmatprep.subr.bf16.mxu0 %v9349
  %10518 = vmatpush1.bf16.msra.mxu0 %v9348
  %10519 = vmatprep.subr.bf16.mxu0 %v9351
  %10520 = vmatpush1.bf16.msra.mxu0 %v9350
  %10521 = vmatprep.subr.bf16.mxu0 %v9353
  %10522 = vmatpush1.bf16.msra.mxu0 %v9352
  %10523 = vmatprep.subr.bf16.mxu0 %v9355
  %10524 = vmatpush1.bf16.msra.mxu0 %v9354
  %10525 = vmatprep.mubr.bf16.mxu0 %v7315
  %10526 = vmatmul.mubr.bf16.gmra.mrb[0].mxu0 %v7312
  %v10527 = vpop.f32.mrb[0].mxu0
  %v10528 = vadd.f32 %v10455, %v10527
  %v10529 = vpop.f32.mrb[0].mxu0
  %v10530 = vadd.f32 %v10457, %v10529
  %v10531 = vpop.f32.mrb[0].mxu0
  %v10532 = vadd.f32 %v10459, %v10531
  %v10533 = vpop.f32.mrb[0].mxu0
  %v10534 = vadd.f32 %v10461, %v10533
  %10535 = vmatprep.mubr.bf16.mxu0 %v7336
  %10536 = vmatmul.mubr.bf16.gmra.mrb[0].mxu0 %v7334
  %v10537 = vpop.f32.mrb[0].mxu0
  %v10538 = vadd.f32 %v10465, %v10537
  %v10539 = vpop.f32.mrb[0].mxu0
  %v10540 = vadd.f32 %v10467, %v10539
  %v10541 = vpop.f32.mrb[0].mxu0
  %v10542 = vadd.f32 %v10469, %v10541
  %v10543 = vpop.f32.mrb[0].mxu0
  %v10544 = vadd.f32 %v10471, %v10543
  %10545 = vmatprep.mubr.bf16.mxu0 %v7358
  %10546 = vmatmul.mubr.bf16.gmra.mrb[0].mxu0 %v7355
  %v10547 = vpop.f32.mrb[0].mxu0
  %v10548 = vadd.f32 %v10475, %v10547
  %v10549 = vpop.f32.mrb[0].mxu0
  %v10550 = vadd.f32 %v10477, %v10549
  %v10551 = vpop.f32.mrb[0].mxu0
  %v10552 = vadd.f32 %v10479, %v10551
  %v10553 = vpop.f32.mrb[0].mxu0
  %v10554 = vadd.f32 %v10481, %v10553
  %10555 = vmatprep.mubr.bf16.mxu0 %v7377
  %10556 = vmatmul.mubr.bf16.gmra.mrb[0].mxu0 %v7376
  %v10557 = vpop.f32.mrb[0].mxu0
  %v10558 = vadd.f32 %v10485, %v10557
  %v10559 = vpop.f32.mrb[0].mxu0
  %v10560 = vadd.f32 %v10487, %v10559
  %v10561 = vpop.f32.mrb[0].mxu0
  %v10562 = vadd.f32 %v10489, %v10561
  %v10563 = vpop.f32.mrb[0].mxu0
  %v10564 = vadd.f32 %v10491, %v10563
  %10565 = vdwg.mxu0
  %10566 = vmatprep.subr.bf16.mxu0 %v9357
  %10567 = vmatpush1.bf16.msra.mxu0 %v9356
  %10568 = vmatprep.subr.bf16.mxu0 %v9359
  %10569 = vmatpush1.bf16.msra.mxu0 %v9358
  %10570 = vmatprep.subr.bf16.mxu0 %v9361
  %10571 = vmatpush1.bf16.msra.mxu0 %v9360
  %10572 = vmatprep.subr.bf16.mxu0 %v9363
  %10573 = vmatpush1.bf16.msra.mxu0 %v9362
  %10574 = vmatprep.subr.bf16.mxu0 %v9365
  %10575 = vmatpush1.bf16.msra.mxu0 %v9364
  %10576 = vmatprep.subr.bf16.mxu0 %v9367
  %10577 = vmatpush1.bf16.msra.mxu0 %v9366
  %10578 = vmatprep.subr.bf16.mxu0 %v9369
  %10579 = vmatpush1.bf16.msra.mxu0 %v9368
  %10580 = vmatprep.subr.bf16.mxu0 %v9371
  %10581 = vmatpush1.bf16.msra.mxu0 %v9370
  %10582 = vmatprep.subr.bf16.mxu0 %v9373
  %10583 = vmatpush1.bf16.msra.mxu0 %v9372
  %10584 = vmatprep.subr.bf16.mxu0 %v9375
  %10585 = vmatpush1.bf16.msra.mxu0 %v9374
  %10586 = vmatprep.subr.bf16.mxu0 %v9377
  %10587 = vmatpush1.bf16.msra.mxu0 %v9376
  %10588 = vmatprep.subr.bf16.mxu0 %v9379
  %10589 = vmatpush1.bf16.msra.mxu0 %v9378
  %10590 = vmatprep.subr.bf16.mxu0 %v9381
  %10591 = vmatpush1.bf16.msra.mxu0 %v9380
  %10592 = vmatprep.subr.bf16.mxu0 %v9383
  %10593 = vmatpush1.bf16.msra.mxu0 %v9382
  %10594 = vmatprep.subr.bf16.mxu0 %v9385
  %10595 = vmatpush1.bf16.msra.mxu0 %v9384
  %10596 = vmatprep.subr.bf16.mxu0 %v9387
  %10597 = vmatpush1.bf16.msra.mxu0 %v9386
  %10598 = vmatprep.mubr.bf16.mxu0 %v7321
  %10599 = vmatmul.mubr.bf16.gmra.mrb[0].mxu0 %v7318
  %v10600 = vpop.f32.mrb[0].mxu0
  %v10601 = vadd.f32 %v10528, %v10600
  %v10602 = vpop.f32.mrb[0].mxu0
  %v10603 = vadd.f32 %v10530, %v10602
  %v10604 = vpop.f32.mrb[0].mxu0
  %v10605 = vadd.f32 %v10532, %v10604
  %v10606 = vpop.f32.mrb[0].mxu0
  %v10607 = vadd.f32 %v10534, %v10606
  %10608 = vmatprep.mubr.bf16.mxu0 %v7340
  %10609 = vmatmul.mubr.bf16.gmra.mrb[0].mxu0 %v7338
  %v10610 = vpop.f32.mrb[0].mxu0
  %v10611 = vadd.f32 %v10538, %v10610
  %v10612 = vpop.f32.mrb[0].mxu0
  %v10613 = vadd.f32 %v10540, %v10612
  %v10614 = vpop.f32.mrb[0].mxu0
  %v10615 = vadd.f32 %v10542, %v10614
  %v10616 = vpop.f32.mrb[0].mxu0
  %v10617 = vadd.f32 %v10544, %v10616
  %10618 = vmatprep.mubr.bf16.mxu0 %v7364
  %10619 = vmatmul.mubr.bf16.gmra.mrb[0].mxu0 %v7361
  %v10620 = vpop.f32.mrb[0].mxu0
  %v10621 = vadd.f32 %v10548, %v10620
  %v10622 = vpop.f32.mrb[0].mxu0
  %v10623 = vadd.f32 %v10550, %v10622
  %v10624 = vpop.f32.mrb[0].mxu0
  %v10625 = vadd.f32 %v10552, %v10624
  %v10626 = vpop.f32.mrb[0].mxu0
  %v10627 = vadd.f32 %v10554, %v10626
  %10628 = vmatprep.mubr.bf16.mxu0 %v7381
  %10629 = vmatmul.mubr.bf16.gmra.mrb[0].mxu0 %v7379
  %v10630 = vpop.f32.mrb[0].mxu0
  %v10631 = vadd.f32 %v10558, %v10630
  %v10632 = vpop.f32.mrb[0].mxu0
  %v10633 = vadd.f32 %v10560, %v10632
  %v10634 = vpop.f32.mrb[0].mxu0
  %v10635 = vadd.f32 %v10562, %v10634
  %v10636 = vpop.f32.mrb[0].mxu0
  %v10637 = vadd.f32 %v10564, %v10636
  %10638 = vdwg.mxu0
  %10639 = vmatprep.subr.bf16.mxu0 %v9389
  %10640 = vmatpush1.bf16.msra.mxu0 %v9388
  %10641 = vmatprep.subr.bf16.mxu0 %v9391
  %10642 = vmatpush1.bf16.msra.mxu0 %v9390
  %10643 = vmatprep.subr.bf16.mxu0 %v9393
  %10644 = vmatpush1.bf16.msra.mxu0 %v9392
  %10645 = vmatprep.subr.bf16.mxu0 %v9395
  %10646 = vmatpush1.bf16.msra.mxu0 %v9394
  %10647 = vmatprep.subr.bf16.mxu0 %v9397
  %10648 = vmatpush1.bf16.msra.mxu0 %v9396
  %10649 = vmatprep.subr.bf16.mxu0 %v9399
  %10650 = vmatpush1.bf16.msra.mxu0 %v9398
  %10651 = vmatprep.subr.bf16.mxu0 %v9401
  %10652 = vmatpush1.bf16.msra.mxu0 %v9400
  %10653 = vmatprep.subr.bf16.mxu0 %v9403
  %10654 = vmatpush1.bf16.msra.mxu0 %v9402
  %10655 = vmatprep.subr.bf16.mxu0 %v9405
  %10656 = vmatpush1.bf16.msra.mxu0 %v9404
  %10657 = vmatprep.subr.bf16.mxu0 %v9407
  %10658 = vmatpush1.bf16.msra.mxu0 %v9406
  %10659 = vmatprep.subr.bf16.mxu0 %v9409
  %10660 = vmatpush1.bf16.msra.mxu0 %v9408
  %10661 = vmatprep.subr.bf16.mxu0 %v9411
  %10662 = vmatpush1.bf16.msra.mxu0 %v9410
  %10663 = vmatprep.subr.bf16.mxu0 %v9413
  %10664 = vmatpush1.bf16.msra.mxu0 %v9412
  %10665 = vmatprep.subr.bf16.mxu0 %v9415
  %10666 = vmatpush1.bf16.msra.mxu0 %v9414
  %10667 = vmatprep.subr.bf16.mxu0 %v9417
  %10668 = vmatpush1.bf16.msra.mxu0 %v9416
  %10669 = vmatprep.subr.bf16.mxu0 %v9419
  %10670 = vmatpush1.bf16.msra.mxu0 %v9418
  %10671 = vmatprep.mubr.bf16.mxu0 %v7327
  %10672 = vmatmul.mubr.bf16.gmra.mrb[0].mxu0 %v7324
  %v10673 = vpop.f32.mrb[0].mxu0
  %v10674 = vadd.f32 %v10601, %v10673
  %v10675 = vpop.f32.mrb[0].mxu0
  %v10676 = vadd.f32 %v10603, %v10675
  %v10677 = vpop.f32.mrb[0].mxu0
  %v10678 = vadd.f32 %v10605, %v10677
  %v10679 = vpop.f32.mrb[0].mxu0
  %v10680 = vadd.f32 %v10607, %v10679
  %10681 = vmatprep.mubr.bf16.mxu0 %v7344
  %10682 = vmatmul.mubr.bf16.gmra.mrb[0].mxu0 %v7342
  %v10683 = vpop.f32.mrb[0].mxu0
  %v10684 = vadd.f32 %v10611, %v10683
  %v10685 = vpop.f32.mrb[0].mxu0
  %v10686 = vadd.f32 %v10613, %v10685
  %v10687 = vpop.f32.mrb[0].mxu0
  %v10688 = vadd.f32 %v10615, %v10687
  %v10689 = vpop.f32.mrb[0].mxu0
  %v10690 = vadd.f32 %v10617, %v10689
  %10691 = vmatprep.mubr.bf16.mxu0 %v7370
  %10692 = vmatmul.mubr.bf16.gmra.mrb[0].mxu0 %v7367
  %v10693 = vpop.f32.mrb[0].mxu0
  %v10694 = vadd.f32 %v10621, %v10693
  %v10695 = vpop.f32.mrb[0].mxu0
  %v10696 = vadd.f32 %v10623, %v10695
  %v10697 = vpop.f32.mrb[0].mxu0
  %v10698 = vadd.f32 %v10625, %v10697
  %v10699 = vpop.f32.mrb[0].mxu0
  %v10700 = vadd.f32 %v10627, %v10699
  %10701 = vmatprep.mubr.bf16.mxu0 %v7385
  %10702 = vmatmul.mubr.bf16.gmra.mrb[0].mxu0 %v7383
  %v10703 = vpop.f32.mrb[0].mxu0
  %v10704 = vadd.f32 %v10631, %v10703
  %v10705 = vpop.f32.mrb[0].mxu0
  %v10706 = vadd.f32 %v10633, %v10705
  %v10707 = vpop.f32.mrb[0].mxu0
  %v10708 = vadd.f32 %v10635, %v10707
  %v10709 = vpop.f32.mrb[0].mxu0
  %v10710 = vadd.f32 %v10637, %v10709
  %10711 = vdwg.mxu0
  %10712 = vmatprep.subr.bf16.mxu0 %v9421
  %10713 = vmatpush1.bf16.msra.mxu0 %v9420
  %10714 = vmatprep.subr.bf16.mxu0 %v9423
  %10715 = vmatpush1.bf16.msra.mxu0 %v9422
  %10716 = vmatprep.subr.bf16.mxu0 %v9425
  %10717 = vmatpush1.bf16.msra.mxu0 %v9424
  %10718 = vmatprep.subr.bf16.mxu0 %v9427
  %10719 = vmatpush1.bf16.msra.mxu0 %v9426
  %10720 = vmatprep.subr.bf16.mxu0 %v9429
  %10721 = vmatpush1.bf16.msra.mxu0 %v9428
  %10722 = vmatprep.subr.bf16.mxu0 %v9431
  %10723 = vmatpush1.bf16.msra.mxu0 %v9430
  %10724 = vmatprep.subr.bf16.mxu0 %v9433
  %10725 = vmatpush1.bf16.msra.mxu0 %v9432
  %10726 = vmatprep.subr.bf16.mxu0 %v9435
  %10727 = vmatpush1.bf16.msra.mxu0 %v9434
  %10728 = vmatprep.subr.bf16.mxu0 0
  %10729 = vmatpush1.bf16.msra.mxu0 0
  %10730 = vmatprep.subr.bf16.mxu0 0
  %10731 = vmatpush1.bf16.msra.mxu0 0
  %10732 = vmatprep.subr.bf16.mxu0 0
  %10733 = vmatpush1.bf16.msra.mxu0 0
  %10734 = vmatprep.subr.bf16.mxu0 0
  %10735 = vmatpush1.bf16.msra.mxu0 0
  %10736 = vmatprep.subr.bf16.mxu0 0
  %10737 = vmatpush1.bf16.msra.mxu0 0
  %10738 = vmatprep.subr.bf16.mxu0 0
  %10739 = vmatpush1.bf16.msra.mxu0 0
  %10740 = vmatprep.subr.bf16.mxu0 0
  %10741 = vmatpush1.bf16.msra.mxu0 0
  %10742 = vmatprep.subr.bf16.mxu0 0
  %10743 = vmatpush1.bf16.msra.mxu0 0
  %10744 = vmatprep.mubr.bf16.mxu0 0
  %10745 = vmatmul.mubr.bf16.gmra.mrb[0].mxu0 %v7330
  %v10746 = vpop.f32.mrb[0].mxu0
  %v10747 = vadd.f32 %v10674, %v10746
  %v10748 = vpop.f32.mrb[0].mxu0
  %v10749 = vadd.f32 %v10676, %v10748
  %v10750 = vpop.f32.mrb[0].mxu0
  %v10751 = vadd.f32 %v10678, %v10750
  %v10752 = vpop.f32.mrb[0].mxu0
  %v10753 = vadd.f32 %v10680, %v10752
  %10754 = vmatprep.mubr.bf16.mxu0 0
  %10755 = vmatmul.mubr.bf16.gmra.mrb[0].mxu0 %v7346
  %v10756 = vpop.f32.mrb[0].mxu0
  %v10757 = vadd.f32 %v10684, %v10756
  %v10758 = vpop.f32.mrb[0].mxu0
  %v10759 = vadd.f32 %v10686, %v10758
  %v10760 = vpop.f32.mrb[0].mxu0
  %v10761 = vadd.f32 %v10688, %v10760
  %v10762 = vpop.f32.mrb[0].mxu0
  %v10763 = vadd.f32 %v10690, %v10762
  %10764 = vmatprep.mubr.bf16.mxu0 0
  %10765 = vmatmul.mubr.bf16.gmra.mrb[0].mxu0 %v7373
  %v10766 = vpop.f32.mrb[0].mxu0
  %v10767 = vadd.f32 %v10694, %v10766
  %v10768 = vpop.f32.mrb[0].mxu0
  %v10769 = vadd.f32 %v10696, %v10768
  %v10770 = vpop.f32.mrb[0].mxu0
  %v10771 = vadd.f32 %v10698, %v10770
  %v10772 = vpop.f32.mrb[0].mxu0
  %v10773 = vadd.f32 %v10700, %v10772
  %10774 = vmatprep.mubr.bf16.mxu0 0
  %10775 = vmatmul.mubr.bf16.gmra.mrb[0].mxu0 %v7387
  %v10776 = vpop.f32.mrb[0].mxu0
  %v10777 = vadd.f32 %v10704, %v10776
  %v10778 = vpop.f32.mrb[0].mxu0
  %v10779 = vadd.f32 %v10706, %v10778
  %v10780 = vpop.f32.mrb[0].mxu0
  %v10781 = vadd.f32 %v10708, %v10780
  %v10782 = vpop.f32.mrb[0].mxu0
  %v10783 = vadd.f32 %v10710, %v10782
  %10784 = vdwg.mxu0
  %v10785 = vmax.f32 %v10747, 0.0
  %v10786 = vmax.f32 %v10749, 0.0
  %v10787 = vmax.f32 %v10751, 0.0
  %v10788 = vmax.f32 %v10753, 0.0
  %v10789 = vmax.f32 %v10757, 0.0
  %v10790 = vmax.f32 %v10759, 0.0
  %v10791 = vmax.f32 %v10761, 0.0
  %v10792 = vmax.f32 %v10763, 0.0
  %v10793 = vmax.f32 %v10767, 0.0
  %v10794 = vmax.f32 %v10769, 0.0
  %v10795 = vmax.f32 %v10771, 0.0
  %v10796 = vmax.f32 %v10773, 0.0
  %v10797 = vmax.f32 %v10777, 0.0
  %v10798 = vmax.f32 %v10779, 0.0
  %v10799 = vmax.f32 %v10781, 0.0
  %v10800 = vmax.f32 %v10783, 0.0
  %v10801 = vld [vmem:[%s8] sm:$0xff]
  %v10802 = vld [vmem:[%s8 + $0x8] sm:$0xff]
  %v10803 = vld [vmem:[%s8 + $0x10] sm:$0xff]
  %v10804 = vld [vmem:[%s8 + $0x18] sm:$0xff]
  %v10805 = vld [vmem:[%s8 + $0x20] sm:$0xff]
  %v10806 = vld [vmem:[%s8 + $0x28] sm:$0xff]
  %v10807 = vld [vmem:[%s8 + $0x30] sm:$0xff]
  %v10808 = vld [vmem:[%s8 + $0x38] sm:$0xff]
  %v10809 = vmul.f32 %v10785, %v10801
  %v10810 = vmul.f32 %v10786, %v10802
  %v10811 = vmul.f32 %v10787, %v10803
  %v10812 = vmul.f32 %v10788, %v10804
  %v10813 = vmul.f32 %v10789, %v10805
  %v10814 = vmul.f32 %v10790, %v10806
  %v10815 = vmul.f32 %v10791, %v10807
  %v10816 = vmul.f32 %v10792, %v10808
  %v10817 = vmul.f32 %v10793, %v10801
  %v10818 = vmul.f32 %v10794, %v10802
  %v10819 = vmul.f32 %v10795, %v10803
  %v10820 = vmul.f32 %v10796, %v10804
  %v10821 = vmul.f32 %v10797, %v10805
  %v10822 = vmul.f32 %v10798, %v10806
  %v10823 = vmul.f32 %v10799, %v10807
  %v10824 = vmul.f32 %v10800, %v10808
  %v10825 = vadd.f32 %v10809, %v10810
  %10826 = vadd.xlane.f32.xlu0 %v10825
  %v10827 = vpop.xlane.xlu0 %10826
  %v10828 = vadd.f32 %v10811, %v10812
  %10829 = vadd.xlane.f32.xlu0 %v10828
  %v10830 = vpop.xlane.xlu0 %10829
  %v10831 = vadd.f32 %v10813, %v10814
  %10832 = vadd.xlane.f32.xlu0 %v10831
  %v10833 = vpop.xlane.xlu0 %10832
  %v10834 = vadd.f32 %v10815, %v10816
  %10835 = vadd.xlane.f32.xlu0 %v10834
  %v10836 = vpop.xlane.xlu0 %10835
  %v10837 = vadd.f32 %v10817, %v10818
  %10838 = vadd.xlane.f32.xlu0 %v10837
  %v10839 = vpop.xlane.xlu0 %10838
  %v10840 = vadd.f32 %v10819, %v10820
  %10841 = vadd.xlane.f32.xlu0 %v10840
  %v10842 = vpop.xlane.xlu0 %10841
  %v10843 = vadd.f32 %v10821, %v10822
  %10844 = vadd.xlane.f32.xlu0 %v10843
  %v10845 = vpop.xlane.xlu0 %10844
  %v10846 = vadd.f32 %v10823, %v10824
  %10847 = vadd.xlane.f32.xlu0 %v10846
  %v10848 = vpop.xlane.xlu0 %10847
  %v10849 = vadd.f32 %v10827, %v10830
  %v10850 = vadd.f32 %v10849, %v10833
  %v10851 = vadd.f32 %v10850, %v10836
  %v10852 = vrot.slane %v10851, 4
  %v10853 = vadd.f32 %v10851, %v10852
  %v10854 = vrot.slane %v10853, 2
  %v10855 = vadd.f32 %v10853, %v10854
  %v10856 = vrot.slane %v10855, 1
  %v10857 = vadd.f32 %v10855, %v10856
  %v10858 = vadd.f32 %v10839, %v10842
  %v10859 = vadd.f32 %v10858, %v10845
  %v10860 = vadd.f32 %v10859, %v10848
  %v10861 = vrot.slane %v10860, 4
  %v10862 = vadd.f32 %v10860, %v10861
  %v10863 = vrot.slane %v10862, 2
  %v10864 = vadd.f32 %v10862, %v10863
  %v10865 = vrot.slane %v10864, 1
  %v10866 = vadd.f32 %v10864, %v10865
  %vm10869 = vcmask 1041409
  %v10870 = vsel %vm10869, %v10866, %v10857
  %10872 = vst [vmem:[%s9] sm:$0x3] %v10870
  // Predicated region
  $region38: #{discriminator_forward.1} parent=0 // pred_check
    _
  $region39: #{discriminator_forward.1} parent=0 // pred_check_branch
    %10874 = sbr.rel (0) target = $region41
  $region40: #{discriminator_forward.1} parent=0 // pred_region
    _
  $region41: #{discriminator_forward.1} parent=0 // pred_fallthru
    _
  // Predicated region
  $region42: #{discriminator_forward.1} parent=0 // pred_check
    _
  $region43: #{discriminator_forward.1} parent=0 // pred_check_branch
    %10876 = sbr.rel (0) target = $region45
  $region44: #{discriminator_forward.1} parent=0 // pred_region
    _
  $region45: #{discriminator_forward.1} parent=0 // pred_fallthru
    _

</llo_original>
